<compile_context>
chip_gen: v7x
topology: tpu7x:2x2x1
jax: 0.10.0
libtpu: 0.0.40
codegen_flags: <defaults>
</compile_context>

<pallas_src>
import jax
import jax.numpy as jnp
from jax.experimental import pallas as pl
from jax.experimental.pallas import tpu as pltpu


# ------------------------------ constants ------------------------------------

_TILE_BUDGET_BYTES = 8 * 1024 * 1024    # per-operand tile target (4-8 MiB sweet spot)
_VMEM_LIMIT_BYTES = 48 * 1024 * 1024    # safe headroom under v7x's 64 MiB physical VMEM
_PALLAS_MIN_BYTES = 512 * 1024          # below this, a fused XLA add is cheaper
_LANE_FOLD_BIAS_MAX_BYTES = 2 * 1024 * 1024  # max size of a pre-repeated (1, C*H*W) bias row


# ------------------------------- kernel --------------------------------------

def _bias_add_kernel(x_ref, b_ref, o_ref):
    # Broadcast add: b_ref is (tile_r, 1), (1, tile_l) or (tile_c, 1) against
    # a (tile_r, tile_l) / (tile_c, HW) x block.
    o_ref[...] = x_ref[...] + b_ref[...]


# --------------------------- tiling helpers ----------------------------------

def _round_down_mult(v, m):
    return max(m, (v // m) * m)


def _pick_tiles_2d(R, L, itemsize):
    """(tile_r, tile_l) targeting ~_TILE_BUDGET_BYTES per operand tile.

    tile_l is a multiple of 128 (or full L); tile_r a multiple of 8 (or full R).
    No forced multi-block split: a problem that fits one tile is one grid step.
    """
    if 8 * L * itemsize > _TILE_BUDGET_BYTES and L > 128:
        tile_l = _round_down_mult(_TILE_BUDGET_BYTES // (8 * itemsize), 128)
        tile_l = min(tile_l, _round_down_mult(L, 128))
    else:
        tile_l = L

    if R <= 8:
        tile_r = R
    else:
        rows = _TILE_BUDGET_BYTES // max(1, tile_l * itemsize)
        tile_r = min(R, max(8, rows))
        if tile_r < R:
            tile_r = _round_down_mult(tile_r, 8)
    return tile_r, tile_l


def _pick_channel_tile(C, HW, itemsize):
    if C <= 8:
        return C
    rows = _TILE_BUDGET_BYTES // max(1, HW * itemsize)
    t = min(C, max(8, rows))
    if t < C:
        t = _round_down_mult(t, 8)
    return t


# ----------------------------- Pallas drivers --------------------------------

def _bias_add_2d(x2d, b2d):
    """x2d: (R, L); b2d: (R, 1) row-bias or (1, L) lane-bias. Returns x2d + b2d."""
    R, L = x2d.shape
    itemsize = jnp.dtype(x2d.dtype).itemsize
    tile_r, tile_l = _pick_tiles_2d(R, L, itemsize)
    grid = (pl.cdiv(R, tile_r), pl.cdiv(L, tile_l))

    x_spec = pl.BlockSpec((tile_r, tile_l), lambda i, j: (i, j))
    if b2d.shape[0] == 1:
        # Lane bias: resident (1, tile_l) row, reused across all row steps.
        b_spec = pl.BlockSpec((1, tile_l), lambda i, j: (0, j))
    else:
        # Row bias: tiny (tile_r, 1) column tiled along rows with x.
        b_spec = pl.BlockSpec((tile_r, 1), lambda i, j: (i, 0))

    return pl.pallas_call(
        _bias_add_kernel,
        out_shape=jax.ShapeDtypeStruct((R, L), x2d.dtype),
        grid_spec=pl.GridSpec(
            grid=grid,
            in_specs=[x_spec, b_spec],
            out_specs=pl.BlockSpec((tile_r, tile_l), lambda i, j: (i, j)),
        ),
        compiler_params=pltpu.CompilerParams(
            dimension_semantics=("parallel", "parallel"),
            vmem_limit_bytes=_VMEM_LIMIT_BYTES,
        ),
    )(x2d, b2d)


def _bias_add_nchw_grid(x3d, bcol, tile_c):
    """x3d: (N, C, HW); bcol: (C, 1). Grid (N, C-tiles); the (tile_c, 1) bias
    blocks are reused across the batch axis (no HBM bias materialization)."""
    N, C, HW = x3d.shape
    grid = (N, pl.cdiv(C, tile_c))
    return pl.pallas_call(
        _bias_add_kernel,
        out_shape=jax.ShapeDtypeStruct((N, C, HW), x3d.dtype),
        grid_spec=pl.GridSpec(
            grid=grid,
            in_specs=[
                pl.BlockSpec((None, tile_c, HW), lambda n, c: (n, c, 0)),
                pl.BlockSpec((tile_c, 1), lambda n, c: (c, 0)),
            ],
            out_specs=pl.BlockSpec((None, tile_c, HW), lambda n, c: (n, c, 0)),
        ),
        compiler_params=pltpu.CompilerParams(
            dimension_semantics=("parallel", "parallel"),
            vmem_limit_bytes=_VMEM_LIMIT_BYTES,
        ),
    )(x3d, bcol)


# ------------------------------- wrappers -------------------------------------

def _addbias_2d(x, bias_flat, out_dtype):
    N, C = x.shape
    itemsize = jnp.dtype(out_dtype).itemsize
    x = x.astype(out_dtype)
    b = bias_flat.astype(out_dtype)

    if x.size * itemsize < _PALLAS_MIN_BYTES:
        # Tiny input: launch overhead dominates; fused XLA add is cheaper.
        return x + b.reshape(1, C)

    # Lane-dense fast path for small C: fold rows into 128+-wide lanes and add
    # a pre-tiled (1, lanes) bias row (full vreg utilization instead of C/128).
    if C < 128 and 128 % C == 0:
        total = N * C
        for lanes in (2048, 1024, 512, 256, 128):
            if total % lanes == 0:
                xf = x.reshape(total // lanes, lanes)
                brow = jnp.tile(b, lanes // C).reshape(1, lanes)
                return _bias_add_2d(xf, brow).reshape(N, C)

    # General path: bias along the lane dim, rows tiled along N.
    return _bias_add_2d(x, b.reshape(1, C))


def _addbias_nchw(x, bias_flat, out_dtype):
    N, C, H, W = x.shape
    HW = H * W
    itemsize = jnp.dtype(out_dtype).itemsize
    x = x.astype(out_dtype)
    b = bias_flat.astype(out_dtype)

    if x.size * itemsize < _PALLAS_MIN_BYTES:
        return x + b.reshape(1, C, 1, 1)

    if 8 * HW * itemsize > _TILE_BUDGET_BYTES:
        # Very wide spatial slab: use the lane-tiled 2D driver. The (N*C, 1)
        # row bias is negligible relative to x in this regime.
        brows = jnp.tile(b, N).reshape(N * C, 1)
        return _bias_add_2d(x.reshape(N * C, HW), brows).reshape(N, C, H, W)

    chw = C * HW
    if (HW % 128 != 0 and chw % 128 == 0
            and chw * itemsize <= _LANE_FOLD_BIAS_MAX_BYTES):
        # H*W not 128-aligned -> masked partial stores; fold the whole
        # per-sample slab into the lane dim instead (unmasked full-width vst),
        # with a small resident (1, C*H*W) pre-repeated bias row.
        brow = jnp.repeat(b, HW).reshape(1, chw)
        return _bias_add_2d(x.reshape(N, chw), brow).reshape(N, C, H, W)

    # Default: grid (N, C-tiles); bias stays a raw (C, 1) column in HBM and its
    # tiny tiles are re-fetched/reused across the batch axis.
    tile_c = _pick_channel_tile(C, HW, itemsize)
    y = _bias_add_nchw_grid(x.reshape(N, C, HW), b.reshape(C, 1), tile_c)
    return y.reshape(N, C, H, W)


class AddBias:
    """JAX/Pallas port of the PyTorch AddBias module."""

    def __init__(self, bias):
        # bias: (C,) -> stored as (C, 1), matching nn.Parameter(bias.unsqueeze(1))
        self._bias = jnp.asarray(bias).reshape(-1, 1)

    def __call__(self, x):
        x = jnp.asarray(x)
        bias_flat = self._bias.reshape(-1)  # (C,)
        # Match torch type promotion (e.g. bf16 x + f32 bias -> f32 output).
        out_dtype = jnp.promote_types(x.dtype, self._bias.dtype)
        if x.ndim == 2:
            return _addbias_2d(x, bias_flat, out_dtype)
        elif x.ndim == 4:
            return _addbias_nchw(x, bias_flat, out_dtype)
        else:
            raise ValueError(f"Unsupported input rank: {x.ndim}")


# --------------------------------- main ---------------------------------------

if __name__ == "__main__":
    key = jax.random.PRNGKey(0)
    k_bias, k_x4, k_x2, k_a, k_b, k_c, k_d = jax.random.split(key, 7)

    # ---- MAPPO-sized inputs (spec shapes; tiny -> XLA-add fallback path) ----
    C = 4
    bias_param = jax.random.normal(k_bias, (C,), dtype=jnp.float32)
    module = AddBias(bias_param)

    x4 = jax.random.normal(k_x4, (2, C, 16, 16), dtype=jnp.float32)   # NCHW
    y4 = jax.block_until_ready(module(x4))
    assert y4.shape == x4.shape and y4.dtype == x4.dtype
    assert jnp.allclose(y4, x4 + bias_param.reshape(1, C, 1, 1), atol=1e-6)

    x2 = jax.random.normal(k_x2, (2, C), dtype=jnp.float32)           # (N, C)
    y2 = jax.block_until_ready(module(x2))
    assert y2.shape == x2.shape and y2.dtype == x2.dtype
    assert jnp.allclose(y2, x2 + bias_param.reshape(1, C), atol=1e-6)

    # ---- Larger shapes that exercise each Pallas path ----
    # 2D, wide C -> general (1, C) lane-bias path, single ~8 MiB tile.
    bias512 = jax.random.normal(k_bias, (512,), dtype=jnp.float32)
    mod512 = AddBias(bias512)
    xa = jax.random.normal(k_a, (4096, 512), dtype=jnp.float32)
    ya = jax.block_until_ready(mod512(xa))
    assert jnp.allclose(ya, xa + bias512.reshape(1, 512), atol=1e-6)

    # 2D, small C -> lane-fold (rows folded into 2048-wide lanes).
    bias32 = jax.random.normal(k_bias, (32,), dtype=jnp.float32)
    mod32 = AddBias(bias32)
    xb = jax.random.normal(k_b, (16384, 32), dtype=jnp.float32)
    yb = jax.block_until_ready(mod32(xb))
    assert jnp.allclose(yb, xb + bias32.reshape(1, 32), atol=1e-6)

    # NCHW, H*W % 128 == 0 -> 3D grid path, (C,1) bias reused across batch.
    bias64 = jax.random.normal(k_bias, (64,), dtype=jnp.float32)
    mod64 = AddBias(bias64)
    xc = jax.random.normal(k_c, (8, 64, 32, 32), dtype=jnp.float32)
    yc = jax.block_until_ready(mod64(xc))
    assert jnp.allclose(yc, xc + bias64.reshape(1, 64, 1, 1), atol=1e-6)

    # NCHW, H*W % 128 != 0 but C*H*W % 128 == 0 -> lane-fold per-sample slab.
    bias128 = jax.random.normal(k_bias, (128,), dtype=jnp.float32)
    mod128 = AddBias(bias128)
    xd = jax.random.normal(k_d, (32, 128, 7, 7), dtype=jnp.float32)
    yd = jax.block_until_ready(mod128(xd))
    assert jnp.allclose(yd, xd + bias128.reshape(1, 128, 1, 1), atol=1e-6)

    print("KERNEL_OK")
</pallas_src>

<mosaic_0001>
module attributes {stable_mosaic.version = 11 : i64} {
  func.func @_bias_add_kernel(%arg0: i32, %arg1: i32, %arg2: memref<4096x512xf32, #tpu.memory_space<vmem>>, %arg3: memref<1x512xf32, #tpu.memory_space<vmem>>, %arg4: memref<4096x512xf32, #tpu.memory_space<vmem>>) attributes {dimension_semantics = [#tpu.dimension_semantics<parallel>, #tpu.dimension_semantics<parallel>], iteration_bounds = array<i64: 1, 1>, scalar_prefetch = 0 : i64, scratch_operands = 0 : i64, tpu.core_type = #tpu.core_type<tc>, window_params = [{transform_indices = @transform_0, window_bounds = array<i64: 4096, 512>}, {transform_indices = @transform_1, window_bounds = array<i64: 1, 512>}, {transform_indices = @transform_2, window_bounds = array<i64: 4096, 512>}]} {
    %c0 = arith.constant 0 : index
    %c0_0 = arith.constant 0 : index
    %0 = vector.load %arg2[%c0, %c0_0] : memref<4096x512xf32, #tpu.memory_space<vmem>>, vector<4096x512xf32>
    %c0_1 = arith.constant 0 : index
    %c0_2 = arith.constant 0 : index
    %1 = vector.load %arg3[%c0_1, %c0_2] : memref<1x512xf32, #tpu.memory_space<vmem>>, vector<1x512xf32>
    %2 = vector.broadcast %1 : vector<1x512xf32> to vector<4096x512xf32>
    %3 = arith.addf %0, %2 : vector<4096x512xf32>
    %c0_3 = arith.constant 0 : index
    %c0_4 = arith.constant 0 : index
    %4 = vector.load %arg4[%c0_3, %c0_4] : memref<4096x512xf32, #tpu.memory_space<vmem>>, vector<4096x512xf32>
    tpu.vector_store %arg4[%c0_3, %c0_4], %3 {strides = array<i32>} : memref<4096x512xf32, #tpu.memory_space<vmem>>, vector<4096x512xf32>,
    return
  }
  func.func @transform_0(%arg0: i32, %arg1: i32) -> (i32, i32) {
    %c0_i32 = arith.constant 0 : i32
    return %arg0, %arg1 : i32, i32
  }
  func.func @transform_1(%arg0: i32, %arg1: i32) -> (i32, i32) {
    %c0_i32 = arith.constant 0 : i32
    %c0_i32_0 = arith.constant 0 : i32
    return %c0_i32, %arg1 : i32, i32
  }
  func.func @transform_2(%arg0: i32, %arg1: i32) -> (i32, i32) {
    %c0_i32 = arith.constant 0 : i32
    return %arg0, %arg1 : i32, i32
  }
}

</mosaic_0001>

<llo_original>
// kernel: tpu_custom_call.1
$region0: #{tpu_custom_call.1}
  #allocation0 [shape = 'u32[]', space=smem, size = 0x4, offset = 0x4, fixed_abs, tag = 'smem constant byte address 0x4 - core index']
  #allocation1 [shape = 'u32[144,128]{1,0:T(1,128)}', space=vmem, size = 0x12000, scoped, tag = 'internal scratch']
  %s0 = inlined_call_operand.hbm [shape: f32[4096,512], index: 0, kind: input, shape index: {}]
  %s1 = inlined_call_operand.hbm [shape: f32[1,512], index: 1, kind: input, shape index: {}]
  %s2 = inlined_call_operand.hbm [shape: f32[4096,512], index: 2, kind: output, shape index: {}]
  %s3 = sld [smem:[#allocation0]]
  $region26: #{tpu_custom_call.1} parent=0
    _
  %s5 = ssub.s32 1, %s3
  %s6 = scalar_select 0, %s5, %s3
  $region1: #{tpu_custom_call.1} parent=0
    #allocation2 [shape = 'u8[8388608]{0}', space=vmem, size = 0x800000, scoped, tag = 'input window, operand 0, single buffered']
    #allocation3 [shape = 's32[1]{0}', space=sflag, size = 0x4, scoped, tag = 'scoped memory for tpu_custom_call.1']
    #allocation4 [shape = 's32[1]{0}', space=sflag, size = 0x4, scoped, tag = 'scoped memory for tpu_custom_call.1']
    #allocation5 [shape = 'u8[2048]{0}', space=vmem, size = 0x800, scoped, tag = 'input window, operand 1, single buffered']
    #allocation6 [shape = 's32[1]{0}', space=sflag, size = 0x4, scoped, tag = 'scoped memory for tpu_custom_call.1']
    #allocation7 [shape = 'u8[8388608]{0}', space=vmem, size = 0x800000, scoped, tag = 'output window, operand 0, single buffered']
    %7 = vsyncpa [#allocation3], 0
    %8 = vsyncpa [#allocation6], 0
    %9 = vsyncpa [#allocation4], 0
    // Predicated region
    $region2: #{tpu_custom_call.1} parent=1 // pred_check
      _
    $region3: #{tpu_custom_call.1} parent=1 // pred_check_branch
      %11 = sbr.rel (0) target = $region5
    $region4: #{tpu_custom_call.1} parent=1 // pred_region
      %s13 = ssub.s32 262144, 262144
      %14 = vsyncadd [#allocation3], %s13
      %s15 = sshll.u32 [#allocation2], 4
      %s16 = int_to_ptr.vmem [resolvable:$true] %s15
      %21 = dma.hbm_to_vmem [thread:$0]  %s0, 262144, %s16, [#allocation3], 512, 512, 32
    $region5: #{tpu_custom_call.1} parent=1 // pred_fallthru
      _
    // Predicated region
    $region6: #{tpu_custom_call.1} parent=1 // pred_check
      _
    $region7: #{tpu_custom_call.1} parent=1 // pred_check_branch
      %23 = sbr.rel (0) target = $region9
    $region8: #{tpu_custom_call.1} parent=1 // pred_region
      %s25 = ssub.s32 64, 64
      %26 = vsyncadd [#allocation6], %s25
      %s28 = sshll.u32 [#allocation5], 4
      %s29 = int_to_ptr.vmem [resolvable:$true] %s28
      %31 = dma.hbm_to_vmem [thread:$0]  %s1, 64, %s29, [#allocation6]
    $region9: #{tpu_custom_call.1} parent=1 // pred_fallthru
      _
    // Predicated region
    $region10: #{tpu_custom_call.1} parent=1 // pred_check
      _
    $region11: #{tpu_custom_call.1} parent=1 // pred_check_branch
      %33 = sbr.rel (0) target = $region13
    $region12: #{tpu_custom_call.1} parent=1 // pred_region
      %34 = dma.done [#allocation3], 262144
    $region13: #{tpu_custom_call.1} parent=1 // pred_fallthru
      _
    // Predicated region
    $region14: #{tpu_custom_call.1} parent=1 // pred_check
      _
    $region15: #{tpu_custom_call.1} parent=1 // pred_check_branch
      %36 = sbr.rel (0) target = $region17
    $region16: #{tpu_custom_call.1} parent=1 // pred_region
      %37 = dma.done [#allocation6], 64
    $region17: #{tpu_custom_call.1} parent=1 // pred_fallthru
      _
    %v38 = vld [vmem:[#allocation2] sm:$0xff]
    %v39 = vld [vmem:[#allocation2 + $0x8] sm:$0xff]
    %v40 = vld [vmem:[#allocation2 + $0x10] sm:$0xff]
    %v41 = vld [vmem:[#allocation2 + $0x18] sm:$0xff]
    %v42 = vld [vmem:[#allocation2 + $0x20] sm:$0xff]
    %v43 = vld [vmem:[#allocation2 + $0x28] sm:$0xff]
    %v44 = vld [vmem:[#allocation2 + $0x30] sm:$0xff]
    %v45 = vld [vmem:[#allocation2 + $0x38] sm:$0xff]
    %v46 = vld [vmem:[#allocation2 + $0x40] sm:$0xff]
    %v47 = vld [vmem:[#allocation2 + $0x48] sm:$0xff]
    %v48 = vld [vmem:[#allocation2 + $0x50] sm:$0xff]
    %v49 = vld [vmem:[#allocation2 + $0x58] sm:$0xff]
    %v50 = vld [vmem:[#allocation2 + $0x60] sm:$0xff]
    %v51 = vld [vmem:[#allocation2 + $0x68] sm:$0xff]
    %v52 = vld [vmem:[#allocation2 + $0x70] sm:$0xff]
    %v53 = vld [vmem:[#allocation2 + $0x78] sm:$0xff]
    %v54 = vld [vmem:[#allocation2 + $0x80] sm:$0xff]
    %v55 = vld [vmem:[#allocation2 + $0x88] sm:$0xff]
    %v56 = vld [vmem:[#allocation2 + $0x90] sm:$0xff]
    %v57 = vld [vmem:[#allocation2 + $0x98] sm:$0xff]
    %v58 = vld [vmem:[#allocation2 + $0xa0] sm:$0xff]
    %v59 = vld [vmem:[#allocation2 + $0xa8] sm:$0xff]
    %v60 = vld [vmem:[#allocation2 + $0xb0] sm:$0xff]
    %v61 = vld [vmem:[#allocation2 + $0xb8] sm:$0xff]
    %v62 = vld [vmem:[#allocation2 + $0xc0] sm:$0xff]
    %v63 = vld [vmem:[#allocation2 + $0xc8] sm:$0xff]
    %v64 = vld [vmem:[#allocation2 + $0xd0] sm:$0xff]
    %v65 = vld [vmem:[#allocation2 + $0xd8] sm:$0xff]
    %v66 = vld [vmem:[#allocation2 + $0xe0] sm:$0xff]
    %v67 = vld [vmem:[#allocation2 + $0xe8] sm:$0xff]
    %v68 = vld [vmem:[#allocation2 + $0xf0] sm:$0xff]
    %v69 = vld [vmem:[#allocation2 + $0xf8] sm:$0xff]
    %v70 = vld [vmem:[#allocation2 + $0x100] sm:$0xff]
    %v71 = vld [vmem:[#allocation2 + $0x108] sm:$0xff]
    %v72 = vld [vmem:[#allocation2 + $0x110] sm:$0xff]
    %v73 = vld [vmem:[#allocation2 + $0x118] sm:$0xff]
    %v74 = vld [vmem:[#allocation2 + $0x120] sm:$0xff]
    %v75 = vld [vmem:[#allocation2 + $0x128] sm:$0xff]
    %v76 = vld [vmem:[#allocation2 + $0x130] sm:$0xff]
    %v77 = vld [vmem:[#allocation2 + $0x138] sm:$0xff]
    %v78 = vld [vmem:[#allocation2 + $0x140] sm:$0xff]
    %v79 = vld [vmem:[#allocation2 + $0x148] sm:$0xff]
    %v80 = vld [vmem:[#allocation2 + $0x150] sm:$0xff]
    %v81 = vld [vmem:[#allocation2 + $0x158] sm:$0xff]
    %v82 = vld [vmem:[#allocation2 + $0x160] sm:$0xff]
    %v83 = vld [vmem:[#allocation2 + $0x168] sm:$0xff]
    %v84 = vld [vmem:[#allocation2 + $0x170] sm:$0xff]
    %v85 = vld [vmem:[#allocation2 + $0x178] sm:$0xff]
    %v86 = vld [vmem:[#allocation2 + $0x180] sm:$0xff]
    %v87 = vld [vmem:[#allocation2 + $0x188] sm:$0xff]
    %v88 = vld [vmem:[#allocation2 + $0x190] sm:$0xff]
    %v89 = vld [vmem:[#allocation2 + $0x198] sm:$0xff]
    %v90 = vld [vmem:[#allocation2 + $0x1a0] sm:$0xff]
    %v91 = vld [vmem:[#allocation2 + $0x1a8] sm:$0xff]
    %v92 = vld [vmem:[#allocation2 + $0x1b0] sm:$0xff]
    %v93 = vld [vmem:[#allocation2 + $0x1b8] sm:$0xff]
    %v94 = vld [vmem:[#allocation2 + $0x1c0] sm:$0xff]
    %v95 = vld [vmem:[#allocation2 + $0x1c8] sm:$0xff]
    %v96 = vld [vmem:[#allocation2 + $0x1d0] sm:$0xff]
    %v97 = vld [vmem:[#allocation2 + $0x1d8] sm:$0xff]
    %v98 = vld [vmem:[#allocation2 + $0x1e0] sm:$0xff]
    %v99 = vld [vmem:[#allocation2 + $0x1e8] sm:$0xff]
    %v100 = vld [vmem:[#allocation2 + $0x1f0] sm:$0xff]
    %v101 = vld [vmem:[#allocation2 + $0x1f8] sm:$0xff]
    %v102 = vld [vmem:[#allocation2 + $0x200] sm:$0xff]
    %v103 = vld [vmem:[#allocation2 + $0x208] sm:$0xff]
    %v104 = vld [vmem:[#allocation2 + $0x210] sm:$0xff]
    %v105 = vld [vmem:[#allocation2 + $0x218] sm:$0xff]
    %v106 = vld [vmem:[#allocation2 + $0x220] sm:$0xff]
    %v107 = vld [vmem:[#allocation2 + $0x228] sm:$0xff]
    %v108 = vld [vmem:[#allocation2 + $0x230] sm:$0xff]
    %v109 = vld [vmem:[#allocation2 + $0x238] sm:$0xff]
    %v110 = vld [vmem:[#allocation2 + $0x240] sm:$0xff]
    %v111 = vld [vmem:[#allocation2 + $0x248] sm:$0xff]
    %v112 = vld [vmem:[#allocation2 + $0x250] sm:$0xff]
    %v113 = vld [vmem:[#allocation2 + $0x258] sm:$0xff]
    %v114 = vld [vmem:[#allocation2 + $0x260] sm:$0xff]
    %v115 = vld [vmem:[#allocation2 + $0x268] sm:$0xff]
    %v116 = vld [vmem:[#allocation2 + $0x270] sm:$0xff]
    %v117 = vld [vmem:[#allocation2 + $0x278] sm:$0xff]
    %v118 = vld [vmem:[#allocation2 + $0x280] sm:$0xff]
    %v119 = vld [vmem:[#allocation2 + $0x288] sm:$0xff]
    %v120 = vld [vmem:[#allocation2 + $0x290] sm:$0xff]
    %v121 = vld [vmem:[#allocation2 + $0x298] sm:$0xff]
    %v122 = vld [vmem:[#allocation2 + $0x2a0] sm:$0xff]
    %v123 = vld [vmem:[#allocation2 + $0x2a8] sm:$0xff]
    %v124 = vld [vmem:[#allocation2 + $0x2b0] sm:$0xff]
    %v125 = vld [vmem:[#allocation2 + $0x2b8] sm:$0xff]
    %v126 = vld [vmem:[#allocation2 + $0x2c0] sm:$0xff]
    %v127 = vld [vmem:[#allocation2 + $0x2c8] sm:$0xff]
    %v128 = vld [vmem:[#allocation2 + $0x2d0] sm:$0xff]
    %v129 = vld [vmem:[#allocation2 + $0x2d8] sm:$0xff]
    %v130 = vld [vmem:[#allocation2 + $0x2e0] sm:$0xff]
    %v131 = vld [vmem:[#allocation2 + $0x2e8] sm:$0xff]
    %v132 = vld [vmem:[#allocation2 + $0x2f0] sm:$0xff]
    %v133 = vld [vmem:[#allocation2 + $0x2f8] sm:$0xff]
    %v134 = vld [vmem:[#allocation2 + $0x300] sm:$0xff]
    %v135 = vld [vmem:[#allocation2 + $0x308] sm:$0xff]
    %v136 = vld [vmem:[#allocation2 + $0x310] sm:$0xff]
    %v137 = vld [vmem:[#allocation2 + $0x318] sm:$0xff]
    %v138 = vld [vmem:[#allocation2 + $0x320] sm:$0xff]
    %v139 = vld [vmem:[#allocation2 + $0x328] sm:$0xff]
    %v140 = vld [vmem:[#allocation2 + $0x330] sm:$0xff]
    %v141 = vld [vmem:[#allocation2 + $0x338] sm:$0xff]
    %v142 = vld [vmem:[#allocation2 + $0x340] sm:$0xff]
    %v143 = vld [vmem:[#allocation2 + $0x348] sm:$0xff]
    %v144 = vld [vmem:[#allocation2 + $0x350] sm:$0xff]
    %v145 = vld [vmem:[#allocation2 + $0x358] sm:$0xff]
    %v146 = vld [vmem:[#allocation2 + $0x360] sm:$0xff]
    %v147 = vld [vmem:[#allocation2 + $0x368] sm:$0xff]
    %v148 = vld [vmem:[#allocation2 + $0x370] sm:$0xff]
    %v149 = vld [vmem:[#allocation2 + $0x378] sm:$0xff]
    %v150 = vld [vmem:[#allocation2 + $0x380] sm:$0xff]
    %v151 = vld [vmem:[#allocation2 + $0x388] sm:$0xff]
    %v152 = vld [vmem:[#allocation2 + $0x390] sm:$0xff]
    %v153 = vld [vmem:[#allocation2 + $0x398] sm:$0xff]
    %v154 = vld [vmem:[#allocation2 + $0x3a0] sm:$0xff]
    %v155 = vld [vmem:[#allocation2 + $0x3a8] sm:$0xff]
    %v156 = vld [vmem:[#allocation2 + $0x3b0] sm:$0xff]
    %v157 = vld [vmem:[#allocation2 + $0x3b8] sm:$0xff]
    %v158 = vld [vmem:[#allocation2 + $0x3c0] sm:$0xff]
    %v159 = vld [vmem:[#allocation2 + $0x3c8] sm:$0xff]
    %v160 = vld [vmem:[#allocation2 + $0x3d0] sm:$0xff]
    %v161 = vld [vmem:[#allocation2 + $0x3d8] sm:$0xff]
    %v162 = vld [vmem:[#allocation2 + $0x3e0] sm:$0xff]
    %v163 = vld [vmem:[#allocation2 + $0x3e8] sm:$0xff]
    %v164 = vld [vmem:[#allocation2 + $0x3f0] sm:$0xff]
    %v165 = vld [vmem:[#allocation2 + $0x3f8] sm:$0xff]
    %v166 = vld [vmem:[#allocation2 + $0x400] sm:$0xff]
    %v167 = vld [vmem:[#allocation2 + $0x408] sm:$0xff]
    %v168 = vld [vmem:[#allocation2 + $0x410] sm:$0xff]
    %v169 = vld [vmem:[#allocation2 + $0x418] sm:$0xff]
    %v170 = vld [vmem:[#allocation2 + $0x420] sm:$0xff]
    %v171 = vld [vmem:[#allocation2 + $0x428] sm:$0xff]
    %v172 = vld [vmem:[#allocation2 + $0x430] sm:$0xff]
    %v173 = vld [vmem:[#allocation2 + $0x438] sm:$0xff]
    %v174 = vld [vmem:[#allocation2 + $0x440] sm:$0xff]
    %v175 = vld [vmem:[#allocation2 + $0x448] sm:$0xff]
    %v176 = vld [vmem:[#allocation2 + $0x450] sm:$0xff]
    %v177 = vld [vmem:[#allocation2 + $0x458] sm:$0xff]
    %v178 = vld [vmem:[#allocation2 + $0x460] sm:$0xff]
    %v179 = vld [vmem:[#allocation2 + $0x468] sm:$0xff]
    %v180 = vld [vmem:[#allocation2 + $0x470] sm:$0xff]
    %v181 = vld [vmem:[#allocation2 + $0x478] sm:$0xff]
    %v182 = vld [vmem:[#allocation2 + $0x480] sm:$0xff]
    %v183 = vld [vmem:[#allocation2 + $0x488] sm:$0xff]
    %v184 = vld [vmem:[#allocation2 + $0x490] sm:$0xff]
    %v185 = vld [vmem:[#allocation2 + $0x498] sm:$0xff]
    %v186 = vld [vmem:[#allocation2 + $0x4a0] sm:$0xff]
    %v187 = vld [vmem:[#allocation2 + $0x4a8] sm:$0xff]
    %v188 = vld [vmem:[#allocation2 + $0x4b0] sm:$0xff]
    %v189 = vld [vmem:[#allocation2 + $0x4b8] sm:$0xff]
    %v190 = vld [vmem:[#allocation2 + $0x4c0] sm:$0xff]
    %v191 = vld [vmem:[#allocation2 + $0x4c8] sm:$0xff]
    %v192 = vld [vmem:[#allocation2 + $0x4d0] sm:$0xff]
    %v193 = vld [vmem:[#allocation2 + $0x4d8] sm:$0xff]
    %v194 = vld [vmem:[#allocation2 + $0x4e0] sm:$0xff]
    %v195 = vld [vmem:[#allocation2 + $0x4e8] sm:$0xff]
    %v196 = vld [vmem:[#allocation2 + $0x4f0] sm:$0xff]
    %v197 = vld [vmem:[#allocation2 + $0x4f8] sm:$0xff]
    %v198 = vld [vmem:[#allocation2 + $0x500] sm:$0xff]
    %v199 = vld [vmem:[#allocation2 + $0x508] sm:$0xff]
    %v200 = vld [vmem:[#allocation2 + $0x510] sm:$0xff]
    %v201 = vld [vmem:[#allocation2 + $0x518] sm:$0xff]
    %v202 = vld [vmem:[#allocation2 + $0x520] sm:$0xff]
    %v203 = vld [vmem:[#allocation2 + $0x528] sm:$0xff]
    %v204 = vld [vmem:[#allocation2 + $0x530] sm:$0xff]
    %v205 = vld [vmem:[#allocation2 + $0x538] sm:$0xff]
    %v206 = vld [vmem:[#allocation2 + $0x540] sm:$0xff]
    %v207 = vld [vmem:[#allocation2 + $0x548] sm:$0xff]
    %v208 = vld [vmem:[#allocation2 + $0x550] sm:$0xff]
    %v209 = vld [vmem:[#allocation2 + $0x558] sm:$0xff]
    %v210 = vld [vmem:[#allocation2 + $0x560] sm:$0xff]
    %v211 = vld [vmem:[#allocation2 + $0x568] sm:$0xff]
    %v212 = vld [vmem:[#allocation2 + $0x570] sm:$0xff]
    %v213 = vld [vmem:[#allocation2 + $0x578] sm:$0xff]
    %v214 = vld [vmem:[#allocation2 + $0x580] sm:$0xff]
    %v215 = vld [vmem:[#allocation2 + $0x588] sm:$0xff]
    %v216 = vld [vmem:[#allocation2 + $0x590] sm:$0xff]
    %v217 = vld [vmem:[#allocation2 + $0x598] sm:$0xff]
    %v218 = vld [vmem:[#allocation2 + $0x5a0] sm:$0xff]
    %v219 = vld [vmem:[#allocation2 + $0x5a8] sm:$0xff]
    %v220 = vld [vmem:[#allocation2 + $0x5b0] sm:$0xff]
    %v221 = vld [vmem:[#allocation2 + $0x5b8] sm:$0xff]
    %v222 = vld [vmem:[#allocation2 + $0x5c0] sm:$0xff]
    %v223 = vld [vmem:[#allocation2 + $0x5c8] sm:$0xff]
    %v224 = vld [vmem:[#allocation2 + $0x5d0] sm:$0xff]
    %v225 = vld [vmem:[#allocation2 + $0x5d8] sm:$0xff]
    %v226 = vld [vmem:[#allocation2 + $0x5e0] sm:$0xff]
    %v227 = vld [vmem:[#allocation2 + $0x5e8] sm:$0xff]
    %v228 = vld [vmem:[#allocation2 + $0x5f0] sm:$0xff]
    %v229 = vld [vmem:[#allocation2 + $0x5f8] sm:$0xff]
    %v230 = vld [vmem:[#allocation2 + $0x600] sm:$0xff]
    %v231 = vld [vmem:[#allocation2 + $0x608] sm:$0xff]
    %v232 = vld [vmem:[#allocation2 + $0x610] sm:$0xff]
    %v233 = vld [vmem:[#allocation2 + $0x618] sm:$0xff]
    %v234 = vld [vmem:[#allocation2 + $0x620] sm:$0xff]
    %v235 = vld [vmem:[#allocation2 + $0x628] sm:$0xff]
    %v236 = vld [vmem:[#allocation2 + $0x630] sm:$0xff]
    %v237 = vld [vmem:[#allocation2 + $0x638] sm:$0xff]
    %v238 = vld [vmem:[#allocation2 + $0x640] sm:$0xff]
    %v239 = vld [vmem:[#allocation2 + $0x648] sm:$0xff]
    %v240 = vld [vmem:[#allocation2 + $0x650] sm:$0xff]
    %v241 = vld [vmem:[#allocation2 + $0x658] sm:$0xff]
    %v242 = vld [vmem:[#allocation2 + $0x660] sm:$0xff]
    %v243 = vld [vmem:[#allocation2 + $0x668] sm:$0xff]
    %v244 = vld [vmem:[#allocation2 + $0x670] sm:$0xff]
    %v245 = vld [vmem:[#allocation2 + $0x678] sm:$0xff]
    %v246 = vld [vmem:[#allocation2 + $0x680] sm:$0xff]
    %v247 = vld [vmem:[#allocation2 + $0x688] sm:$0xff]
    %v248 = vld [vmem:[#allocation2 + $0x690] sm:$0xff]
    %v249 = vld [vmem:[#allocation2 + $0x698] sm:$0xff]
    %v250 = vld [vmem:[#allocation2 + $0x6a0] sm:$0xff]
    %v251 = vld [vmem:[#allocation2 + $0x6a8] sm:$0xff]
    %v252 = vld [vmem:[#allocation2 + $0x6b0] sm:$0xff]
    %v253 = vld [vmem:[#allocation2 + $0x6b8] sm:$0xff]
    %v254 = vld [vmem:[#allocation2 + $0x6c0] sm:$0xff]
    %v255 = vld [vmem:[#allocation2 + $0x6c8] sm:$0xff]
    %v256 = vld [vmem:[#allocation2 + $0x6d0] sm:$0xff]
    %v257 = vld [vmem:[#allocation2 + $0x6d8] sm:$0xff]
    %v258 = vld [vmem:[#allocation2 + $0x6e0] sm:$0xff]
    %v259 = vld [vmem:[#allocation2 + $0x6e8] sm:$0xff]
    %v260 = vld [vmem:[#allocation2 + $0x6f0] sm:$0xff]
    %v261 = vld [vmem:[#allocation2 + $0x6f8] sm:$0xff]
    %v262 = vld [vmem:[#allocation2 + $0x700] sm:$0xff]
    %v263 = vld [vmem:[#allocation2 + $0x708] sm:$0xff]
    %v264 = vld [vmem:[#allocation2 + $0x710] sm:$0xff]
    %v265 = vld [vmem:[#allocation2 + $0x718] sm:$0xff]
    %v266 = vld [vmem:[#allocation2 + $0x720] sm:$0xff]
    %v267 = vld [vmem:[#allocation2 + $0x728] sm:$0xff]
    %v268 = vld [vmem:[#allocation2 + $0x730] sm:$0xff]
    %v269 = vld [vmem:[#allocation2 + $0x738] sm:$0xff]
    %v270 = vld [vmem:[#allocation2 + $0x740] sm:$0xff]
    %v271 = vld [vmem:[#allocation2 + $0x748] sm:$0xff]
    %v272 = vld [vmem:[#allocation2 + $0x750] sm:$0xff]
    %v273 = vld [vmem:[#allocation2 + $0x758] sm:$0xff]
    %v274 = vld [vmem:[#allocation2 + $0x760] sm:$0xff]
    %v275 = vld [vmem:[#allocation2 + $0x768] sm:$0xff]
    %v276 = vld [vmem:[#allocation2 + $0x770] sm:$0xff]
    %v277 = vld [vmem:[#allocation2 + $0x778] sm:$0xff]
    %v278 = vld [vmem:[#allocation2 + $0x780] sm:$0xff]
    %v279 = vld [vmem:[#allocation2 + $0x788] sm:$0xff]
    %v280 = vld [vmem:[#allocation2 + $0x790] sm:$0xff]
    %v281 = vld [vmem:[#allocation2 + $0x798] sm:$0xff]
    %v282 = vld [vmem:[#allocation2 + $0x7a0] sm:$0xff]
    %v283 = vld [vmem:[#allocation2 + $0x7a8] sm:$0xff]
    %v284 = vld [vmem:[#allocation2 + $0x7b0] sm:$0xff]
    %v285 = vld [vmem:[#allocation2 + $0x7b8] sm:$0xff]
    %v286 = vld [vmem:[#allocation2 + $0x7c0] sm:$0xff]
    %v287 = vld [vmem:[#allocation2 + $0x7c8] sm:$0xff]
    %v288 = vld [vmem:[#allocation2 + $0x7d0] sm:$0xff]
    %v289 = vld [vmem:[#allocation2 + $0x7d8] sm:$0xff]
    %v290 = vld [vmem:[#allocation2 + $0x7e0] sm:$0xff]
    %v291 = vld [vmem:[#allocation2 + $0x7e8] sm:$0xff]
    %v292 = vld [vmem:[#allocation2 + $0x7f0] sm:$0xff]
    %v293 = vld [vmem:[#allocation2 + $0x7f8] sm:$0xff]
    %v294 = vld [vmem:[#allocation2 + $0x800] sm:$0xff]
    %v295 = vld [vmem:[#allocation2 + $0x808] sm:$0xff]
    %v296 = vld [vmem:[#allocation2 + $0x810] sm:$0xff]
    %v297 = vld [vmem:[#allocation2 + $0x818] sm:$0xff]
    %v298 = vld [vmem:[#allocation2 + $0x820] sm:$0xff]
    %v299 = vld [vmem:[#allocation2 + $0x828] sm:$0xff]
    %v300 = vld [vmem:[#allocation2 + $0x830] sm:$0xff]
    %v301 = vld [vmem:[#allocation2 + $0x838] sm:$0xff]
    %v302 = vld [vmem:[#allocation2 + $0x840] sm:$0xff]
    %v303 = vld [vmem:[#allocation2 + $0x848] sm:$0xff]
    %v304 = vld [vmem:[#allocation2 + $0x850] sm:$0xff]
    %v305 = vld [vmem:[#allocation2 + $0x858] sm:$0xff]
    %v306 = vld [vmem:[#allocation2 + $0x860] sm:$0xff]
    %v307 = vld [vmem:[#allocation2 + $0x868] sm:$0xff]
    %v308 = vld [vmem:[#allocation2 + $0x870] sm:$0xff]
    %v309 = vld [vmem:[#allocation2 + $0x878] sm:$0xff]
    %v310 = vld [vmem:[#allocation2 + $0x880] sm:$0xff]
    %v311 = vld [vmem:[#allocation2 + $0x888] sm:$0xff]
    %v312 = vld [vmem:[#allocation2 + $0x890] sm:$0xff]
    %v313 = vld [vmem:[#allocation2 + $0x898] sm:$0xff]
    %v314 = vld [vmem:[#allocation2 + $0x8a0] sm:$0xff]
    %v315 = vld [vmem:[#allocation2 + $0x8a8] sm:$0xff]
    %v316 = vld [vmem:[#allocation2 + $0x8b0] sm:$0xff]
    %v317 = vld [vmem:[#allocation2 + $0x8b8] sm:$0xff]
    %v318 = vld [vmem:[#allocation2 + $0x8c0] sm:$0xff]
    %v319 = vld [vmem:[#allocation2 + $0x8c8] sm:$0xff]
    %v320 = vld [vmem:[#allocation2 + $0x8d0] sm:$0xff]
    %v321 = vld [vmem:[#allocation2 + $0x8d8] sm:$0xff]
    %v322 = vld [vmem:[#allocation2 + $0x8e0] sm:$0xff]
    %v323 = vld [vmem:[#allocation2 + $0x8e8] sm:$0xff]
    %v324 = vld [vmem:[#allocation2 + $0x8f0] sm:$0xff]
    %v325 = vld [vmem:[#allocation2 + $0x8f8] sm:$0xff]
    %v326 = vld [vmem:[#allocation2 + $0x900] sm:$0xff]
    %v327 = vld [vmem:[#allocation2 + $0x908] sm:$0xff]
    %v328 = vld [vmem:[#allocation2 + $0x910] sm:$0xff]
    %v329 = vld [vmem:[#allocation2 + $0x918] sm:$0xff]
    %v330 = vld [vmem:[#allocation2 + $0x920] sm:$0xff]
    %v331 = vld [vmem:[#allocation2 + $0x928] sm:$0xff]
    %v332 = vld [vmem:[#allocation2 + $0x930] sm:$0xff]
    %v333 = vld [vmem:[#allocation2 + $0x938] sm:$0xff]
    %v334 = vld [vmem:[#allocation2 + $0x940] sm:$0xff]
    %v335 = vld [vmem:[#allocation2 + $0x948] sm:$0xff]
    %v336 = vld [vmem:[#allocation2 + $0x950] sm:$0xff]
    %v337 = vld [vmem:[#allocation2 + $0x958] sm:$0xff]
    %v338 = vld [vmem:[#allocation2 + $0x960] sm:$0xff]
    %v339 = vld [vmem:[#allocation2 + $0x968] sm:$0xff]
    %v340 = vld [vmem:[#allocation2 + $0x970] sm:$0xff]
    %v341 = vld [vmem:[#allocation2 + $0x978] sm:$0xff]
    %v342 = vld [vmem:[#allocation2 + $0x980] sm:$0xff]
    %v343 = vld [vmem:[#allocation2 + $0x988] sm:$0xff]
    %v344 = vld [vmem:[#allocation2 + $0x990] sm:$0xff]
    %v345 = vld [vmem:[#allocation2 + $0x998] sm:$0xff]
    %v346 = vld [vmem:[#allocation2 + $0x9a0] sm:$0xff]
    %v347 = vld [vmem:[#allocation2 + $0x9a8] sm:$0xff]
    %v348 = vld [vmem:[#allocation2 + $0x9b0] sm:$0xff]
    %v349 = vld [vmem:[#allocation2 + $0x9b8] sm:$0xff]
    %v350 = vld [vmem:[#allocation2 + $0x9c0] sm:$0xff]
    %v351 = vld [vmem:[#allocation2 + $0x9c8] sm:$0xff]
    %v352 = vld [vmem:[#allocation2 + $0x9d0] sm:$0xff]
    %v353 = vld [vmem:[#allocation2 + $0x9d8] sm:$0xff]
    %v354 = vld [vmem:[#allocation2 + $0x9e0] sm:$0xff]
    %v355 = vld [vmem:[#allocation2 + $0x9e8] sm:$0xff]
    %v356 = vld [vmem:[#allocation2 + $0x9f0] sm:$0xff]
    %v357 = vld [vmem:[#allocation2 + $0x9f8] sm:$0xff]
    %v358 = vld [vmem:[#allocation2 + $0xa00] sm:$0xff]
    %v359 = vld [vmem:[#allocation2 + $0xa08] sm:$0xff]
    %v360 = vld [vmem:[#allocation2 + $0xa10] sm:$0xff]
    %v361 = vld [vmem:[#allocation2 + $0xa18] sm:$0xff]
    %v362 = vld [vmem:[#allocation2 + $0xa20] sm:$0xff]
    %v363 = vld [vmem:[#allocation2 + $0xa28] sm:$0xff]
    %v364 = vld [vmem:[#allocation2 + $0xa30] sm:$0xff]
    %v365 = vld [vmem:[#allocation2 + $0xa38] sm:$0xff]
    %v366 = vld [vmem:[#allocation2 + $0xa40] sm:$0xff]
    %v367 = vld [vmem:[#allocation2 + $0xa48] sm:$0xff]
    %v368 = vld [vmem:[#allocation2 + $0xa50] sm:$0xff]
    %v369 = vld [vmem:[#allocation2 + $0xa58] sm:$0xff]
    %v370 = vld [vmem:[#allocation2 + $0xa60] sm:$0xff]
    %v371 = vld [vmem:[#allocation2 + $0xa68] sm:$0xff]
    %v372 = vld [vmem:[#allocation2 + $0xa70] sm:$0xff]
    %v373 = vld [vmem:[#allocation2 + $0xa78] sm:$0xff]
    %v374 = vld [vmem:[#allocation2 + $0xa80] sm:$0xff]
    %v375 = vld [vmem:[#allocation2 + $0xa88] sm:$0xff]
    %v376 = vld [vmem:[#allocation2 + $0xa90] sm:$0xff]
    %v377 = vld [vmem:[#allocation2 + $0xa98] sm:$0xff]
    %v378 = vld [vmem:[#allocation2 + $0xaa0] sm:$0xff]
    %v379 = vld [vmem:[#allocation2 + $0xaa8] sm:$0xff]
    %v380 = vld [vmem:[#allocation2 + $0xab0] sm:$0xff]
    %v381 = vld [vmem:[#allocation2 + $0xab8] sm:$0xff]
    %v382 = vld [vmem:[#allocation2 + $0xac0] sm:$0xff]
    %v383 = vld [vmem:[#allocation2 + $0xac8] sm:$0xff]
    %v384 = vld [vmem:[#allocation2 + $0xad0] sm:$0xff]
    %v385 = vld [vmem:[#allocation2 + $0xad8] sm:$0xff]
    %v386 = vld [vmem:[#allocation2 + $0xae0] sm:$0xff]
    %v387 = vld [vmem:[#allocation2 + $0xae8] sm:$0xff]
    %v388 = vld [vmem:[#allocation2 + $0xaf0] sm:$0xff]
    %v389 = vld [vmem:[#allocation2 + $0xaf8] sm:$0xff]
    %v390 = vld [vmem:[#allocation2 + $0xb00] sm:$0xff]
    %v391 = vld [vmem:[#allocation2 + $0xb08] sm:$0xff]
    %v392 = vld [vmem:[#allocation2 + $0xb10] sm:$0xff]
    %v393 = vld [vmem:[#allocation2 + $0xb18] sm:$0xff]
    %v394 = vld [vmem:[#allocation2 + $0xb20] sm:$0xff]
    %v395 = vld [vmem:[#allocation2 + $0xb28] sm:$0xff]
    %v396 = vld [vmem:[#allocation2 + $0xb30] sm:$0xff]
    %v397 = vld [vmem:[#allocation2 + $0xb38] sm:$0xff]
    %v398 = vld [vmem:[#allocation2 + $0xb40] sm:$0xff]
    %v399 = vld [vmem:[#allocation2 + $0xb48] sm:$0xff]
    %v400 = vld [vmem:[#allocation2 + $0xb50] sm:$0xff]
    %v401 = vld [vmem:[#allocation2 + $0xb58] sm:$0xff]
    %v402 = vld [vmem:[#allocation2 + $0xb60] sm:$0xff]
    %v403 = vld [vmem:[#allocation2 + $0xb68] sm:$0xff]
    %v404 = vld [vmem:[#allocation2 + $0xb70] sm:$0xff]
    %v405 = vld [vmem:[#allocation2 + $0xb78] sm:$0xff]
    %v406 = vld [vmem:[#allocation2 + $0xb80] sm:$0xff]
    %v407 = vld [vmem:[#allocation2 + $0xb88] sm:$0xff]
    %v408 = vld [vmem:[#allocation2 + $0xb90] sm:$0xff]
    %v409 = vld [vmem:[#allocation2 + $0xb98] sm:$0xff]
    %v410 = vld [vmem:[#allocation2 + $0xba0] sm:$0xff]
    %v411 = vld [vmem:[#allocation2 + $0xba8] sm:$0xff]
    %v412 = vld [vmem:[#allocation2 + $0xbb0] sm:$0xff]
    %v413 = vld [vmem:[#allocation2 + $0xbb8] sm:$0xff]
    %v414 = vld [vmem:[#allocation2 + $0xbc0] sm:$0xff]
    %v415 = vld [vmem:[#allocation2 + $0xbc8] sm:$0xff]
    %v416 = vld [vmem:[#allocation2 + $0xbd0] sm:$0xff]
    %v417 = vld [vmem:[#allocation2 + $0xbd8] sm:$0xff]
    %v418 = vld [vmem:[#allocation2 + $0xbe0] sm:$0xff]
    %v419 = vld [vmem:[#allocation2 + $0xbe8] sm:$0xff]
    %v420 = vld [vmem:[#allocation2 + $0xbf0] sm:$0xff]
    %v421 = vld [vmem:[#allocation2 + $0xbf8] sm:$0xff]
    %v422 = vld [vmem:[#allocation2 + $0xc00] sm:$0xff]
    %v423 = vld [vmem:[#allocation2 + $0xc08] sm:$0xff]
    %v424 = vld [vmem:[#allocation2 + $0xc10] sm:$0xff]
    %v425 = vld [vmem:[#allocation2 + $0xc18] sm:$0xff]
    %v426 = vld [vmem:[#allocation2 + $0xc20] sm:$0xff]
    %v427 = vld [vmem:[#allocation2 + $0xc28] sm:$0xff]
    %v428 = vld [vmem:[#allocation2 + $0xc30] sm:$0xff]
    %v429 = vld [vmem:[#allocation2 + $0xc38] sm:$0xff]
    %v430 = vld [vmem:[#allocation2 + $0xc40] sm:$0xff]
    %v431 = vld [vmem:[#allocation2 + $0xc48] sm:$0xff]
    %v432 = vld [vmem:[#allocation2 + $0xc50] sm:$0xff]
    %v433 = vld [vmem:[#allocation2 + $0xc58] sm:$0xff]
    %v434 = vld [vmem:[#allocation2 + $0xc60] sm:$0xff]
    %v435 = vld [vmem:[#allocation2 + $0xc68] sm:$0xff]
    %v436 = vld [vmem:[#allocation2 + $0xc70] sm:$0xff]
    %v437 = vld [vmem:[#allocation2 + $0xc78] sm:$0xff]
    %v438 = vld [vmem:[#allocation2 + $0xc80] sm:$0xff]
    %v439 = vld [vmem:[#allocation2 + $0xc88] sm:$0xff]
    %v440 = vld [vmem:[#allocation2 + $0xc90] sm:$0xff]
    %v441 = vld [vmem:[#allocation2 + $0xc98] sm:$0xff]
    %v442 = vld [vmem:[#allocation2 + $0xca0] sm:$0xff]
    %v443 = vld [vmem:[#allocation2 + $0xca8] sm:$0xff]
    %v444 = vld [vmem:[#allocation2 + $0xcb0] sm:$0xff]
    %v445 = vld [vmem:[#allocation2 + $0xcb8] sm:$0xff]
    %v446 = vld [vmem:[#allocation2 + $0xcc0] sm:$0xff]
    %v447 = vld [vmem:[#allocation2 + $0xcc8] sm:$0xff]
    %v448 = vld [vmem:[#allocation2 + $0xcd0] sm:$0xff]
    %v449 = vld [vmem:[#allocation2 + $0xcd8] sm:$0xff]
    %v450 = vld [vmem:[#allocation2 + $0xce0] sm:$0xff]
    %v451 = vld [vmem:[#allocation2 + $0xce8] sm:$0xff]
    %v452 = vld [vmem:[#allocation2 + $0xcf0] sm:$0xff]
    %v453 = vld [vmem:[#allocation2 + $0xcf8] sm:$0xff]
    %v454 = vld [vmem:[#allocation2 + $0xd00] sm:$0xff]
    %v455 = vld [vmem:[#allocation2 + $0xd08] sm:$0xff]
    %v456 = vld [vmem:[#allocation2 + $0xd10] sm:$0xff]
    %v457 = vld [vmem:[#allocation2 + $0xd18] sm:$0xff]
    %v458 = vld [vmem:[#allocation2 + $0xd20] sm:$0xff]
    %v459 = vld [vmem:[#allocation2 + $0xd28] sm:$0xff]
    %v460 = vld [vmem:[#allocation2 + $0xd30] sm:$0xff]
    %v461 = vld [vmem:[#allocation2 + $0xd38] sm:$0xff]
    %v462 = vld [vmem:[#allocation2 + $0xd40] sm:$0xff]
    %v463 = vld [vmem:[#allocation2 + $0xd48] sm:$0xff]
    %v464 = vld [vmem:[#allocation2 + $0xd50] sm:$0xff]
    %v465 = vld [vmem:[#allocation2 + $0xd58] sm:$0xff]
    %v466 = vld [vmem:[#allocation2 + $0xd60] sm:$0xff]
    %v467 = vld [vmem:[#allocation2 + $0xd68] sm:$0xff]
    %v468 = vld [vmem:[#allocation2 + $0xd70] sm:$0xff]
    %v469 = vld [vmem:[#allocation2 + $0xd78] sm:$0xff]
    %v470 = vld [vmem:[#allocation2 + $0xd80] sm:$0xff]
    %v471 = vld [vmem:[#allocation2 + $0xd88] sm:$0xff]
    %v472 = vld [vmem:[#allocation2 + $0xd90] sm:$0xff]
    %v473 = vld [vmem:[#allocation2 + $0xd98] sm:$0xff]
    %v474 = vld [vmem:[#allocation2 + $0xda0] sm:$0xff]
    %v475 = vld [vmem:[#allocation2 + $0xda8] sm:$0xff]
    %v476 = vld [vmem:[#allocation2 + $0xdb0] sm:$0xff]
    %v477 = vld [vmem:[#allocation2 + $0xdb8] sm:$0xff]
    %v478 = vld [vmem:[#allocation2 + $0xdc0] sm:$0xff]
    %v479 = vld [vmem:[#allocation2 + $0xdc8] sm:$0xff]
    %v480 = vld [vmem:[#allocation2 + $0xdd0] sm:$0xff]
    %v481 = vld [vmem:[#allocation2 + $0xdd8] sm:$0xff]
    %v482 = vld [vmem:[#allocation2 + $0xde0] sm:$0xff]
    %v483 = vld [vmem:[#allocation2 + $0xde8] sm:$0xff]
    %v484 = vld [vmem:[#allocation2 + $0xdf0] sm:$0xff]
    %v485 = vld [vmem:[#allocation2 + $0xdf8] sm:$0xff]
    %v486 = vld [vmem:[#allocation2 + $0xe00] sm:$0xff]
    %v487 = vld [vmem:[#allocation2 + $0xe08] sm:$0xff]
    %v488 = vld [vmem:[#allocation2 + $0xe10] sm:$0xff]
    %v489 = vld [vmem:[#allocation2 + $0xe18] sm:$0xff]
    %v490 = vld [vmem:[#allocation2 + $0xe20] sm:$0xff]
    %v491 = vld [vmem:[#allocation2 + $0xe28] sm:$0xff]
    %v492 = vld [vmem:[#allocation2 + $0xe30] sm:$0xff]
    %v493 = vld [vmem:[#allocation2 + $0xe38] sm:$0xff]
    %v494 = vld [vmem:[#allocation2 + $0xe40] sm:$0xff]
    %v495 = vld [vmem:[#allocation2 + $0xe48] sm:$0xff]
    %v496 = vld [vmem:[#allocation2 + $0xe50] sm:$0xff]
    %v497 = vld [vmem:[#allocation2 + $0xe58] sm:$0xff]
    %v498 = vld [vmem:[#allocation2 + $0xe60] sm:$0xff]
    %v499 = vld [vmem:[#allocation2 + $0xe68] sm:$0xff]
    %v500 = vld [vmem:[#allocation2 + $0xe70] sm:$0xff]
    %v501 = vld [vmem:[#allocation2 + $0xe78] sm:$0xff]
    %v502 = vld [vmem:[#allocation2 + $0xe80] sm:$0xff]
    %v503 = vld [vmem:[#allocation2 + $0xe88] sm:$0xff]
    %v504 = vld [vmem:[#allocation2 + $0xe90] sm:$0xff]
    %v505 = vld [vmem:[#allocation2 + $0xe98] sm:$0xff]
    %v506 = vld [vmem:[#allocation2 + $0xea0] sm:$0xff]
    %v507 = vld [vmem:[#allocation2 + $0xea8] sm:$0xff]
    %v508 = vld [vmem:[#allocation2 + $0xeb0] sm:$0xff]
    %v509 = vld [vmem:[#allocation2 + $0xeb8] sm:$0xff]
    %v510 = vld [vmem:[#allocation2 + $0xec0] sm:$0xff]
    %v511 = vld [vmem:[#allocation2 + $0xec8] sm:$0xff]
    %v512 = vld [vmem:[#allocation2 + $0xed0] sm:$0xff]
    %v513 = vld [vmem:[#allocation2 + $0xed8] sm:$0xff]
    %v514 = vld [vmem:[#allocation2 + $0xee0] sm:$0xff]
    %v515 = vld [vmem:[#allocation2 + $0xee8] sm:$0xff]
    %v516 = vld [vmem:[#allocation2 + $0xef0] sm:$0xff]
    %v517 = vld [vmem:[#allocation2 + $0xef8] sm:$0xff]
    %v518 = vld [vmem:[#allocation2 + $0xf00] sm:$0xff]
    %v519 = vld [vmem:[#allocation2 + $0xf08] sm:$0xff]
    %v520 = vld [vmem:[#allocation2 + $0xf10] sm:$0xff]
    %v521 = vld [vmem:[#allocation2 + $0xf18] sm:$0xff]
    %v522 = vld [vmem:[#allocation2 + $0xf20] sm:$0xff]
    %v523 = vld [vmem:[#allocation2 + $0xf28] sm:$0xff]
    %v524 = vld [vmem:[#allocation2 + $0xf30] sm:$0xff]
    %v525 = vld [vmem:[#allocation2 + $0xf38] sm:$0xff]
    %v526 = vld [vmem:[#allocation2 + $0xf40] sm:$0xff]
    %v527 = vld [vmem:[#allocation2 + $0xf48] sm:$0xff]
    %v528 = vld [vmem:[#allocation2 + $0xf50] sm:$0xff]
    %v529 = vld [vmem:[#allocation2 + $0xf58] sm:$0xff]
    %v530 = vld [vmem:[#allocation2 + $0xf60] sm:$0xff]
    %v531 = vld [vmem:[#allocation2 + $0xf68] sm:$0xff]
    %v532 = vld [vmem:[#allocation2 + $0xf70] sm:$0xff]
    %v533 = vld [vmem:[#allocation2 + $0xf78] sm:$0xff]
    %v534 = vld [vmem:[#allocation2 + $0xf80] sm:$0xff]
    %v535 = vld [vmem:[#allocation2 + $0xf88] sm:$0xff]
    %v536 = vld [vmem:[#allocation2 + $0xf90] sm:$0xff]
    %v537 = vld [vmem:[#allocation2 + $0xf98] sm:$0xff]
    %v538 = vld [vmem:[#allocation2 + $0xfa0] sm:$0xff]
    %v539 = vld [vmem:[#allocation2 + $0xfa8] sm:$0xff]
    %v540 = vld [vmem:[#allocation2 + $0xfb0] sm:$0xff]
    %v541 = vld [vmem:[#allocation2 + $0xfb8] sm:$0xff]
    %v542 = vld [vmem:[#allocation2 + $0xfc0] sm:$0xff]
    %v543 = vld [vmem:[#allocation2 + $0xfc8] sm:$0xff]
    %v544 = vld [vmem:[#allocation2 + $0xfd0] sm:$0xff]
    %v545 = vld [vmem:[#allocation2 + $0xfd8] sm:$0xff]
    %v546 = vld [vmem:[#allocation2 + $0xfe0] sm:$0xff]
    %v547 = vld [vmem:[#allocation2 + $0xfe8] sm:$0xff]
    %v548 = vld [vmem:[#allocation2 + $0xff0] sm:$0xff]
    %v549 = vld [vmem:[#allocation2 + $0xff8] sm:$0xff]
    %v550 = vld [vmem:[#allocation2 + $0x1000] sm:$0xff]
    %v551 = vld [vmem:[#allocation2 + $0x1008] sm:$0xff]
    %v552 = vld [vmem:[#allocation2 + $0x1010] sm:$0xff]
    %v553 = vld [vmem:[#allocation2 + $0x1018] sm:$0xff]
    %v554 = vld [vmem:[#allocation2 + $0x1020] sm:$0xff]
    %v555 = vld [vmem:[#allocation2 + $0x1028] sm:$0xff]
    %v556 = vld [vmem:[#allocation2 + $0x1030] sm:$0xff]
    %v557 = vld [vmem:[#allocation2 + $0x1038] sm:$0xff]
    %v558 = vld [vmem:[#allocation2 + $0x1040] sm:$0xff]
    %v559 = vld [vmem:[#allocation2 + $0x1048] sm:$0xff]
    %v560 = vld [vmem:[#allocation2 + $0x1050] sm:$0xff]
    %v561 = vld [vmem:[#allocation2 + $0x1058] sm:$0xff]
    %v562 = vld [vmem:[#allocation2 + $0x1060] sm:$0xff]
    %v563 = vld [vmem:[#allocation2 + $0x1068] sm:$0xff]
    %v564 = vld [vmem:[#allocation2 + $0x1070] sm:$0xff]
    %v565 = vld [vmem:[#allocation2 + $0x1078] sm:$0xff]
    %v566 = vld [vmem:[#allocation2 + $0x1080] sm:$0xff]
    %v567 = vld [vmem:[#allocation2 + $0x1088] sm:$0xff]
    %v568 = vld [vmem:[#allocation2 + $0x1090] sm:$0xff]
    %v569 = vld [vmem:[#allocation2 + $0x1098] sm:$0xff]
    %v570 = vld [vmem:[#allocation2 + $0x10a0] sm:$0xff]
    %v571 = vld [vmem:[#allocation2 + $0x10a8] sm:$0xff]
    %v572 = vld [vmem:[#allocation2 + $0x10b0] sm:$0xff]
    %v573 = vld [vmem:[#allocation2 + $0x10b8] sm:$0xff]
    %v574 = vld [vmem:[#allocation2 + $0x10c0] sm:$0xff]
    %v575 = vld [vmem:[#allocation2 + $0x10c8] sm:$0xff]
    %v576 = vld [vmem:[#allocation2 + $0x10d0] sm:$0xff]
    %v577 = vld [vmem:[#allocation2 + $0x10d8] sm:$0xff]
    %v578 = vld [vmem:[#allocation2 + $0x10e0] sm:$0xff]
    %v579 = vld [vmem:[#allocation2 + $0x10e8] sm:$0xff]
    %v580 = vld [vmem:[#allocation2 + $0x10f0] sm:$0xff]
    %v581 = vld [vmem:[#allocation2 + $0x10f8] sm:$0xff]
    %v582 = vld [vmem:[#allocation2 + $0x1100] sm:$0xff]
    %v583 = vld [vmem:[#allocation2 + $0x1108] sm:$0xff]
    %v584 = vld [vmem:[#allocation2 + $0x1110] sm:$0xff]
    %v585 = vld [vmem:[#allocation2 + $0x1118] sm:$0xff]
    %v586 = vld [vmem:[#allocation2 + $0x1120] sm:$0xff]
    %v587 = vld [vmem:[#allocation2 + $0x1128] sm:$0xff]
    %v588 = vld [vmem:[#allocation2 + $0x1130] sm:$0xff]
    %v589 = vld [vmem:[#allocation2 + $0x1138] sm:$0xff]
    %v590 = vld [vmem:[#allocation2 + $0x1140] sm:$0xff]
    %v591 = vld [vmem:[#allocation2 + $0x1148] sm:$0xff]
    %v592 = vld [vmem:[#allocation2 + $0x1150] sm:$0xff]
    %v593 = vld [vmem:[#allocation2 + $0x1158] sm:$0xff]
    %v594 = vld [vmem:[#allocation2 + $0x1160] sm:$0xff]
    %v595 = vld [vmem:[#allocation2 + $0x1168] sm:$0xff]
    %v596 = vld [vmem:[#allocation2 + $0x1170] sm:$0xff]
    %v597 = vld [vmem:[#allocation2 + $0x1178] sm:$0xff]
    %v598 = vld [vmem:[#allocation2 + $0x1180] sm:$0xff]
    %v599 = vld [vmem:[#allocation2 + $0x1188] sm:$0xff]
    %v600 = vld [vmem:[#allocation2 + $0x1190] sm:$0xff]
    %v601 = vld [vmem:[#allocation2 + $0x1198] sm:$0xff]
    %v602 = vld [vmem:[#allocation2 + $0x11a0] sm:$0xff]
    %v603 = vld [vmem:[#allocation2 + $0x11a8] sm:$0xff]
    %v604 = vld [vmem:[#allocation2 + $0x11b0] sm:$0xff]
    %v605 = vld [vmem:[#allocation2 + $0x11b8] sm:$0xff]
    %v606 = vld [vmem:[#allocation2 + $0x11c0] sm:$0xff]
    %v607 = vld [vmem:[#allocation2 + $0x11c8] sm:$0xff]
    %v608 = vld [vmem:[#allocation2 + $0x11d0] sm:$0xff]
    %v609 = vld [vmem:[#allocation2 + $0x11d8] sm:$0xff]
    %v610 = vld [vmem:[#allocation2 + $0x11e0] sm:$0xff]
    %v611 = vld [vmem:[#allocation2 + $0x11e8] sm:$0xff]
    %v612 = vld [vmem:[#allocation2 + $0x11f0] sm:$0xff]
    %v613 = vld [vmem:[#allocation2 + $0x11f8] sm:$0xff]
    %v614 = vld [vmem:[#allocation2 + $0x1200] sm:$0xff]
    %v615 = vld [vmem:[#allocation2 + $0x1208] sm:$0xff]
    %v616 = vld [vmem:[#allocation2 + $0x1210] sm:$0xff]
    %v617 = vld [vmem:[#allocation2 + $0x1218] sm:$0xff]
    %v618 = vld [vmem:[#allocation2 + $0x1220] sm:$0xff]
    %v619 = vld [vmem:[#allocation2 + $0x1228] sm:$0xff]
    %v620 = vld [vmem:[#allocation2 + $0x1230] sm:$0xff]
    %v621 = vld [vmem:[#allocation2 + $0x1238] sm:$0xff]
    %v622 = vld [vmem:[#allocation2 + $0x1240] sm:$0xff]
    %v623 = vld [vmem:[#allocation2 + $0x1248] sm:$0xff]
    %v624 = vld [vmem:[#allocation2 + $0x1250] sm:$0xff]
    %v625 = vld [vmem:[#allocation2 + $0x1258] sm:$0xff]
    %v626 = vld [vmem:[#allocation2 + $0x1260] sm:$0xff]
    %v627 = vld [vmem:[#allocation2 + $0x1268] sm:$0xff]
    %v628 = vld [vmem:[#allocation2 + $0x1270] sm:$0xff]
    %v629 = vld [vmem:[#allocation2 + $0x1278] sm:$0xff]
    %v630 = vld [vmem:[#allocation2 + $0x1280] sm:$0xff]
    %v631 = vld [vmem:[#allocation2 + $0x1288] sm:$0xff]
    %v632 = vld [vmem:[#allocation2 + $0x1290] sm:$0xff]
    %v633 = vld [vmem:[#allocation2 + $0x1298] sm:$0xff]
    %v634 = vld [vmem:[#allocation2 + $0x12a0] sm:$0xff]
    %v635 = vld [vmem:[#allocation2 + $0x12a8] sm:$0xff]
    %v636 = vld [vmem:[#allocation2 + $0x12b0] sm:$0xff]
    %v637 = vld [vmem:[#allocation2 + $0x12b8] sm:$0xff]
    %v638 = vld [vmem:[#allocation2 + $0x12c0] sm:$0xff]
    %v639 = vld [vmem:[#allocation2 + $0x12c8] sm:$0xff]
    %v640 = vld [vmem:[#allocation2 + $0x12d0] sm:$0xff]
    %v641 = vld [vmem:[#allocation2 + $0x12d8] sm:$0xff]
    %v642 = vld [vmem:[#allocation2 + $0x12e0] sm:$0xff]
    %v643 = vld [vmem:[#allocation2 + $0x12e8] sm:$0xff]
    %v644 = vld [vmem:[#allocation2 + $0x12f0] sm:$0xff]
    %v645 = vld [vmem:[#allocation2 + $0x12f8] sm:$0xff]
    %v646 = vld [vmem:[#allocation2 + $0x1300] sm:$0xff]
    %v647 = vld [vmem:[#allocation2 + $0x1308] sm:$0xff]
    %v648 = vld [vmem:[#allocation2 + $0x1310] sm:$0xff]
    %v649 = vld [vmem:[#allocation2 + $0x1318] sm:$0xff]
    %v650 = vld [vmem:[#allocation2 + $0x1320] sm:$0xff]
    %v651 = vld [vmem:[#allocation2 + $0x1328] sm:$0xff]
    %v652 = vld [vmem:[#allocation2 + $0x1330] sm:$0xff]
    %v653 = vld [vmem:[#allocation2 + $0x1338] sm:$0xff]
    %v654 = vld [vmem:[#allocation2 + $0x1340] sm:$0xff]
    %v655 = vld [vmem:[#allocation2 + $0x1348] sm:$0xff]
    %v656 = vld [vmem:[#allocation2 + $0x1350] sm:$0xff]
    %v657 = vld [vmem:[#allocation2 + $0x1358] sm:$0xff]
    %v658 = vld [vmem:[#allocation2 + $0x1360] sm:$0xff]
    %v659 = vld [vmem:[#allocation2 + $0x1368] sm:$0xff]
    %v660 = vld [vmem:[#allocation2 + $0x1370] sm:$0xff]
    %v661 = vld [vmem:[#allocation2 + $0x1378] sm:$0xff]
    %v662 = vld [vmem:[#allocation2 + $0x1380] sm:$0xff]
    %v663 = vld [vmem:[#allocation2 + $0x1388] sm:$0xff]
    %v664 = vld [vmem:[#allocation2 + $0x1390] sm:$0xff]
    %v665 = vld [vmem:[#allocation2 + $0x1398] sm:$0xff]
    %v666 = vld [vmem:[#allocation2 + $0x13a0] sm:$0xff]
    %v667 = vld [vmem:[#allocation2 + $0x13a8] sm:$0xff]
    %v668 = vld [vmem:[#allocation2 + $0x13b0] sm:$0xff]
    %v669 = vld [vmem:[#allocation2 + $0x13b8] sm:$0xff]
    %v670 = vld [vmem:[#allocation2 + $0x13c0] sm:$0xff]
    %v671 = vld [vmem:[#allocation2 + $0x13c8] sm:$0xff]
    %v672 = vld [vmem:[#allocation2 + $0x13d0] sm:$0xff]
    %v673 = vld [vmem:[#allocation2 + $0x13d8] sm:$0xff]
    %v674 = vld [vmem:[#allocation2 + $0x13e0] sm:$0xff]
    %v675 = vld [vmem:[#allocation2 + $0x13e8] sm:$0xff]
    %v676 = vld [vmem:[#allocation2 + $0x13f0] sm:$0xff]
    %v677 = vld [vmem:[#allocation2 + $0x13f8] sm:$0xff]
    %v678 = vld [vmem:[#allocation2 + $0x1400] sm:$0xff]
    %v679 = vld [vmem:[#allocation2 + $0x1408] sm:$0xff]
    %v680 = vld [vmem:[#allocation2 + $0x1410] sm:$0xff]
    %v681 = vld [vmem:[#allocation2 + $0x1418] sm:$0xff]
    %v682 = vld [vmem:[#allocation2 + $0x1420] sm:$0xff]
    %v683 = vld [vmem:[#allocation2 + $0x1428] sm:$0xff]
    %v684 = vld [vmem:[#allocation2 + $0x1430] sm:$0xff]
    %v685 = vld [vmem:[#allocation2 + $0x1438] sm:$0xff]
    %v686 = vld [vmem:[#allocation2 + $0x1440] sm:$0xff]
    %v687 = vld [vmem:[#allocation2 + $0x1448] sm:$0xff]
    %v688 = vld [vmem:[#allocation2 + $0x1450] sm:$0xff]
    %v689 = vld [vmem:[#allocation2 + $0x1458] sm:$0xff]
    %v690 = vld [vmem:[#allocation2 + $0x1460] sm:$0xff]
    %v691 = vld [vmem:[#allocation2 + $0x1468] sm:$0xff]
    %v692 = vld [vmem:[#allocation2 + $0x1470] sm:$0xff]
    %v693 = vld [vmem:[#allocation2 + $0x1478] sm:$0xff]
    %v694 = vld [vmem:[#allocation2 + $0x1480] sm:$0xff]
    %v695 = vld [vmem:[#allocation2 + $0x1488] sm:$0xff]
    %v696 = vld [vmem:[#allocation2 + $0x1490] sm:$0xff]
    %v697 = vld [vmem:[#allocation2 + $0x1498] sm:$0xff]
    %v698 = vld [vmem:[#allocation2 + $0x14a0] sm:$0xff]
    %v699 = vld [vmem:[#allocation2 + $0x14a8] sm:$0xff]
    %v700 = vld [vmem:[#allocation2 + $0x14b0] sm:$0xff]
    %v701 = vld [vmem:[#allocation2 + $0x14b8] sm:$0xff]
    %v702 = vld [vmem:[#allocation2 + $0x14c0] sm:$0xff]
    %v703 = vld [vmem:[#allocation2 + $0x14c8] sm:$0xff]
    %v704 = vld [vmem:[#allocation2 + $0x14d0] sm:$0xff]
    %v705 = vld [vmem:[#allocation2 + $0x14d8] sm:$0xff]
    %v706 = vld [vmem:[#allocation2 + $0x14e0] sm:$0xff]
    %v707 = vld [vmem:[#allocation2 + $0x14e8] sm:$0xff]
    %v708 = vld [vmem:[#allocation2 + $0x14f0] sm:$0xff]
    %v709 = vld [vmem:[#allocation2 + $0x14f8] sm:$0xff]
    %v710 = vld [vmem:[#allocation2 + $0x1500] sm:$0xff]
    %v711 = vld [vmem:[#allocation2 + $0x1508] sm:$0xff]
    %v712 = vld [vmem:[#allocation2 + $0x1510] sm:$0xff]
    %v713 = vld [vmem:[#allocation2 + $0x1518] sm:$0xff]
    %v714 = vld [vmem:[#allocation2 + $0x1520] sm:$0xff]
    %v715 = vld [vmem:[#allocation2 + $0x1528] sm:$0xff]
    %v716 = vld [vmem:[#allocation2 + $0x1530] sm:$0xff]
    %v717 = vld [vmem:[#allocation2 + $0x1538] sm:$0xff]
    %v718 = vld [vmem:[#allocation2 + $0x1540] sm:$0xff]
    %v719 = vld [vmem:[#allocation2 + $0x1548] sm:$0xff]
    %v720 = vld [vmem:[#allocation2 + $0x1550] sm:$0xff]
    %v721 = vld [vmem:[#allocation2 + $0x1558] sm:$0xff]
    %v722 = vld [vmem:[#allocation2 + $0x1560] sm:$0xff]
    %v723 = vld [vmem:[#allocation2 + $0x1568] sm:$0xff]
    %v724 = vld [vmem:[#allocation2 + $0x1570] sm:$0xff]
    %v725 = vld [vmem:[#allocation2 + $0x1578] sm:$0xff]
    %v726 = vld [vmem:[#allocation2 + $0x1580] sm:$0xff]
    %v727 = vld [vmem:[#allocation2 + $0x1588] sm:$0xff]
    %v728 = vld [vmem:[#allocation2 + $0x1590] sm:$0xff]
    %v729 = vld [vmem:[#allocation2 + $0x1598] sm:$0xff]
    %v730 = vld [vmem:[#allocation2 + $0x15a0] sm:$0xff]
    %v731 = vld [vmem:[#allocation2 + $0x15a8] sm:$0xff]
    %v732 = vld [vmem:[#allocation2 + $0x15b0] sm:$0xff]
    %v733 = vld [vmem:[#allocation2 + $0x15b8] sm:$0xff]
    %v734 = vld [vmem:[#allocation2 + $0x15c0] sm:$0xff]
    %v735 = vld [vmem:[#allocation2 + $0x15c8] sm:$0xff]
    %v736 = vld [vmem:[#allocation2 + $0x15d0] sm:$0xff]
    %v737 = vld [vmem:[#allocation2 + $0x15d8] sm:$0xff]
    %v738 = vld [vmem:[#allocation2 + $0x15e0] sm:$0xff]
    %v739 = vld [vmem:[#allocation2 + $0x15e8] sm:$0xff]
    %v740 = vld [vmem:[#allocation2 + $0x15f0] sm:$0xff]
    %v741 = vld [vmem:[#allocation2 + $0x15f8] sm:$0xff]
    %v742 = vld [vmem:[#allocation2 + $0x1600] sm:$0xff]
    %v743 = vld [vmem:[#allocation2 + $0x1608] sm:$0xff]
    %v744 = vld [vmem:[#allocation2 + $0x1610] sm:$0xff]
    %v745 = vld [vmem:[#allocation2 + $0x1618] sm:$0xff]
    %v746 = vld [vmem:[#allocation2 + $0x1620] sm:$0xff]
    %v747 = vld [vmem:[#allocation2 + $0x1628] sm:$0xff]
    %v748 = vld [vmem:[#allocation2 + $0x1630] sm:$0xff]
    %v749 = vld [vmem:[#allocation2 + $0x1638] sm:$0xff]
    %v750 = vld [vmem:[#allocation2 + $0x1640] sm:$0xff]
    %v751 = vld [vmem:[#allocation2 + $0x1648] sm:$0xff]
    %v752 = vld [vmem:[#allocation2 + $0x1650] sm:$0xff]
    %v753 = vld [vmem:[#allocation2 + $0x1658] sm:$0xff]
    %v754 = vld [vmem:[#allocation2 + $0x1660] sm:$0xff]
    %v755 = vld [vmem:[#allocation2 + $0x1668] sm:$0xff]
    %v756 = vld [vmem:[#allocation2 + $0x1670] sm:$0xff]
    %v757 = vld [vmem:[#allocation2 + $0x1678] sm:$0xff]
    %v758 = vld [vmem:[#allocation2 + $0x1680] sm:$0xff]
    %v759 = vld [vmem:[#allocation2 + $0x1688] sm:$0xff]
    %v760 = vld [vmem:[#allocation2 + $0x1690] sm:$0xff]
    %v761 = vld [vmem:[#allocation2 + $0x1698] sm:$0xff]
    %v762 = vld [vmem:[#allocation2 + $0x16a0] sm:$0xff]
    %v763 = vld [vmem:[#allocation2 + $0x16a8] sm:$0xff]
    %v764 = vld [vmem:[#allocation2 + $0x16b0] sm:$0xff]
    %v765 = vld [vmem:[#allocation2 + $0x16b8] sm:$0xff]
    %v766 = vld [vmem:[#allocation2 + $0x16c0] sm:$0xff]
    %v767 = vld [vmem:[#allocation2 + $0x16c8] sm:$0xff]
    %v768 = vld [vmem:[#allocation2 + $0x16d0] sm:$0xff]
    %v769 = vld [vmem:[#allocation2 + $0x16d8] sm:$0xff]
    %v770 = vld [vmem:[#allocation2 + $0x16e0] sm:$0xff]
    %v771 = vld [vmem:[#allocation2 + $0x16e8] sm:$0xff]
    %v772 = vld [vmem:[#allocation2 + $0x16f0] sm:$0xff]
    %v773 = vld [vmem:[#allocation2 + $0x16f8] sm:$0xff]
    %v774 = vld [vmem:[#allocation2 + $0x1700] sm:$0xff]
    %v775 = vld [vmem:[#allocation2 + $0x1708] sm:$0xff]
    %v776 = vld [vmem:[#allocation2 + $0x1710] sm:$0xff]
    %v777 = vld [vmem:[#allocation2 + $0x1718] sm:$0xff]
    %v778 = vld [vmem:[#allocation2 + $0x1720] sm:$0xff]
    %v779 = vld [vmem:[#allocation2 + $0x1728] sm:$0xff]
    %v780 = vld [vmem:[#allocation2 + $0x1730] sm:$0xff]
    %v781 = vld [vmem:[#allocation2 + $0x1738] sm:$0xff]
    %v782 = vld [vmem:[#allocation2 + $0x1740] sm:$0xff]
    %v783 = vld [vmem:[#allocation2 + $0x1748] sm:$0xff]
    %v784 = vld [vmem:[#allocation2 + $0x1750] sm:$0xff]
    %v785 = vld [vmem:[#allocation2 + $0x1758] sm:$0xff]
    %v786 = vld [vmem:[#allocation2 + $0x1760] sm:$0xff]
    %v787 = vld [vmem:[#allocation2 + $0x1768] sm:$0xff]
    %v788 = vld [vmem:[#allocation2 + $0x1770] sm:$0xff]
    %v789 = vld [vmem:[#allocation2 + $0x1778] sm:$0xff]
    %v790 = vld [vmem:[#allocation2 + $0x1780] sm:$0xff]
    %v791 = vld [vmem:[#allocation2 + $0x1788] sm:$0xff]
    %v792 = vld [vmem:[#allocation2 + $0x1790] sm:$0xff]
    %v793 = vld [vmem:[#allocation2 + $0x1798] sm:$0xff]
    %v794 = vld [vmem:[#allocation2 + $0x17a0] sm:$0xff]
    %v795 = vld [vmem:[#allocation2 + $0x17a8] sm:$0xff]
    %v796 = vld [vmem:[#allocation2 + $0x17b0] sm:$0xff]
    %v797 = vld [vmem:[#allocation2 + $0x17b8] sm:$0xff]
    %v798 = vld [vmem:[#allocation2 + $0x17c0] sm:$0xff]
    %v799 = vld [vmem:[#allocation2 + $0x17c8] sm:$0xff]
    %v800 = vld [vmem:[#allocation2 + $0x17d0] sm:$0xff]
    %v801 = vld [vmem:[#allocation2 + $0x17d8] sm:$0xff]
    %v802 = vld [vmem:[#allocation2 + $0x17e0] sm:$0xff]
    %v803 = vld [vmem:[#allocation2 + $0x17e8] sm:$0xff]
    %v804 = vld [vmem:[#allocation2 + $0x17f0] sm:$0xff]
    %v805 = vld [vmem:[#allocation2 + $0x17f8] sm:$0xff]
    %v806 = vld [vmem:[#allocation2 + $0x1800] sm:$0xff]
    %v807 = vld [vmem:[#allocation2 + $0x1808] sm:$0xff]
    %v808 = vld [vmem:[#allocation2 + $0x1810] sm:$0xff]
    %v809 = vld [vmem:[#allocation2 + $0x1818] sm:$0xff]
    %v810 = vld [vmem:[#allocation2 + $0x1820] sm:$0xff]
    %v811 = vld [vmem:[#allocation2 + $0x1828] sm:$0xff]
    %v812 = vld [vmem:[#allocation2 + $0x1830] sm:$0xff]
    %v813 = vld [vmem:[#allocation2 + $0x1838] sm:$0xff]
    %v814 = vld [vmem:[#allocation2 + $0x1840] sm:$0xff]
    %v815 = vld [vmem:[#allocation2 + $0x1848] sm:$0xff]
    %v816 = vld [vmem:[#allocation2 + $0x1850] sm:$0xff]
    %v817 = vld [vmem:[#allocation2 + $0x1858] sm:$0xff]
    %v818 = vld [vmem:[#allocation2 + $0x1860] sm:$0xff]
    %v819 = vld [vmem:[#allocation2 + $0x1868] sm:$0xff]
    %v820 = vld [vmem:[#allocation2 + $0x1870] sm:$0xff]
    %v821 = vld [vmem:[#allocation2 + $0x1878] sm:$0xff]
    %v822 = vld [vmem:[#allocation2 + $0x1880] sm:$0xff]
    %v823 = vld [vmem:[#allocation2 + $0x1888] sm:$0xff]
    %v824 = vld [vmem:[#allocation2 + $0x1890] sm:$0xff]
    %v825 = vld [vmem:[#allocation2 + $0x1898] sm:$0xff]
    %v826 = vld [vmem:[#allocation2 + $0x18a0] sm:$0xff]
    %v827 = vld [vmem:[#allocation2 + $0x18a8] sm:$0xff]
    %v828 = vld [vmem:[#allocation2 + $0x18b0] sm:$0xff]
    %v829 = vld [vmem:[#allocation2 + $0x18b8] sm:$0xff]
    %v830 = vld [vmem:[#allocation2 + $0x18c0] sm:$0xff]
    %v831 = vld [vmem:[#allocation2 + $0x18c8] sm:$0xff]
    %v832 = vld [vmem:[#allocation2 + $0x18d0] sm:$0xff]
    %v833 = vld [vmem:[#allocation2 + $0x18d8] sm:$0xff]
    %v834 = vld [vmem:[#allocation2 + $0x18e0] sm:$0xff]
    %v835 = vld [vmem:[#allocation2 + $0x18e8] sm:$0xff]
    %v836 = vld [vmem:[#allocation2 + $0x18f0] sm:$0xff]
    %v837 = vld [vmem:[#allocation2 + $0x18f8] sm:$0xff]
    %v838 = vld [vmem:[#allocation2 + $0x1900] sm:$0xff]
    %v839 = vld [vmem:[#allocation2 + $0x1908] sm:$0xff]
    %v840 = vld [vmem:[#allocation2 + $0x1910] sm:$0xff]
    %v841 = vld [vmem:[#allocation2 + $0x1918] sm:$0xff]
    %v842 = vld [vmem:[#allocation2 + $0x1920] sm:$0xff]
    %v843 = vld [vmem:[#allocation2 + $0x1928] sm:$0xff]
    %v844 = vld [vmem:[#allocation2 + $0x1930] sm:$0xff]
    %v845 = vld [vmem:[#allocation2 + $0x1938] sm:$0xff]
    %v846 = vld [vmem:[#allocation2 + $0x1940] sm:$0xff]
    %v847 = vld [vmem:[#allocation2 + $0x1948] sm:$0xff]
    %v848 = vld [vmem:[#allocation2 + $0x1950] sm:$0xff]
    %v849 = vld [vmem:[#allocation2 + $0x1958] sm:$0xff]
    %v850 = vld [vmem:[#allocation2 + $0x1960] sm:$0xff]
    %v851 = vld [vmem:[#allocation2 + $0x1968] sm:$0xff]
    %v852 = vld [vmem:[#allocation2 + $0x1970] sm:$0xff]
    %v853 = vld [vmem:[#allocation2 + $0x1978] sm:$0xff]
    %v854 = vld [vmem:[#allocation2 + $0x1980] sm:$0xff]
    %v855 = vld [vmem:[#allocation2 + $0x1988] sm:$0xff]
    %v856 = vld [vmem:[#allocation2 + $0x1990] sm:$0xff]
    %v857 = vld [vmem:[#allocation2 + $0x1998] sm:$0xff]
    %v858 = vld [vmem:[#allocation2 + $0x19a0] sm:$0xff]
    %v859 = vld [vmem:[#allocation2 + $0x19a8] sm:$0xff]
    %v860 = vld [vmem:[#allocation2 + $0x19b0] sm:$0xff]
    %v861 = vld [vmem:[#allocation2 + $0x19b8] sm:$0xff]
    %v862 = vld [vmem:[#allocation2 + $0x19c0] sm:$0xff]
    %v863 = vld [vmem:[#allocation2 + $0x19c8] sm:$0xff]
    %v864 = vld [vmem:[#allocation2 + $0x19d0] sm:$0xff]
    %v865 = vld [vmem:[#allocation2 + $0x19d8] sm:$0xff]
    %v866 = vld [vmem:[#allocation2 + $0x19e0] sm:$0xff]
    %v867 = vld [vmem:[#allocation2 + $0x19e8] sm:$0xff]
    %v868 = vld [vmem:[#allocation2 + $0x19f0] sm:$0xff]
    %v869 = vld [vmem:[#allocation2 + $0x19f8] sm:$0xff]
    %v870 = vld [vmem:[#allocation2 + $0x1a00] sm:$0xff]
    %v871 = vld [vmem:[#allocation2 + $0x1a08] sm:$0xff]
    %v872 = vld [vmem:[#allocation2 + $0x1a10] sm:$0xff]
    %v873 = vld [vmem:[#allocation2 + $0x1a18] sm:$0xff]
    %v874 = vld [vmem:[#allocation2 + $0x1a20] sm:$0xff]
    %v875 = vld [vmem:[#allocation2 + $0x1a28] sm:$0xff]
    %v876 = vld [vmem:[#allocation2 + $0x1a30] sm:$0xff]
    %v877 = vld [vmem:[#allocation2 + $0x1a38] sm:$0xff]
    %v878 = vld [vmem:[#allocation2 + $0x1a40] sm:$0xff]
    %v879 = vld [vmem:[#allocation2 + $0x1a48] sm:$0xff]
    %v880 = vld [vmem:[#allocation2 + $0x1a50] sm:$0xff]
    %v881 = vld [vmem:[#allocation2 + $0x1a58] sm:$0xff]
    %v882 = vld [vmem:[#allocation2 + $0x1a60] sm:$0xff]
    %v883 = vld [vmem:[#allocation2 + $0x1a68] sm:$0xff]
    %v884 = vld [vmem:[#allocation2 + $0x1a70] sm:$0xff]
    %v885 = vld [vmem:[#allocation2 + $0x1a78] sm:$0xff]
    %v886 = vld [vmem:[#allocation2 + $0x1a80] sm:$0xff]
    %v887 = vld [vmem:[#allocation2 + $0x1a88] sm:$0xff]
    %v888 = vld [vmem:[#allocation2 + $0x1a90] sm:$0xff]
    %v889 = vld [vmem:[#allocation2 + $0x1a98] sm:$0xff]
    %v890 = vld [vmem:[#allocation2 + $0x1aa0] sm:$0xff]
    %v891 = vld [vmem:[#allocation2 + $0x1aa8] sm:$0xff]
    %v892 = vld [vmem:[#allocation2 + $0x1ab0] sm:$0xff]
    %v893 = vld [vmem:[#allocation2 + $0x1ab8] sm:$0xff]
    %v894 = vld [vmem:[#allocation2 + $0x1ac0] sm:$0xff]
    %v895 = vld [vmem:[#allocation2 + $0x1ac8] sm:$0xff]
    %v896 = vld [vmem:[#allocation2 + $0x1ad0] sm:$0xff]
    %v897 = vld [vmem:[#allocation2 + $0x1ad8] sm:$0xff]
    %v898 = vld [vmem:[#allocation2 + $0x1ae0] sm:$0xff]
    %v899 = vld [vmem:[#allocation2 + $0x1ae8] sm:$0xff]
    %v900 = vld [vmem:[#allocation2 + $0x1af0] sm:$0xff]
    %v901 = vld [vmem:[#allocation2 + $0x1af8] sm:$0xff]
    %v902 = vld [vmem:[#allocation2 + $0x1b00] sm:$0xff]
    %v903 = vld [vmem:[#allocation2 + $0x1b08] sm:$0xff]
    %v904 = vld [vmem:[#allocation2 + $0x1b10] sm:$0xff]
    %v905 = vld [vmem:[#allocation2 + $0x1b18] sm:$0xff]
    %v906 = vld [vmem:[#allocation2 + $0x1b20] sm:$0xff]
    %v907 = vld [vmem:[#allocation2 + $0x1b28] sm:$0xff]
    %v908 = vld [vmem:[#allocation2 + $0x1b30] sm:$0xff]
    %v909 = vld [vmem:[#allocation2 + $0x1b38] sm:$0xff]
    %v910 = vld [vmem:[#allocation2 + $0x1b40] sm:$0xff]
    %v911 = vld [vmem:[#allocation2 + $0x1b48] sm:$0xff]
    %v912 = vld [vmem:[#allocation2 + $0x1b50] sm:$0xff]
    %v913 = vld [vmem:[#allocation2 + $0x1b58] sm:$0xff]
    %v914 = vld [vmem:[#allocation2 + $0x1b60] sm:$0xff]
    %v915 = vld [vmem:[#allocation2 + $0x1b68] sm:$0xff]
    %v916 = vld [vmem:[#allocation2 + $0x1b70] sm:$0xff]
    %v917 = vld [vmem:[#allocation2 + $0x1b78] sm:$0xff]
    %v918 = vld [vmem:[#allocation2 + $0x1b80] sm:$0xff]
    %v919 = vld [vmem:[#allocation2 + $0x1b88] sm:$0xff]
    %v920 = vld [vmem:[#allocation2 + $0x1b90] sm:$0xff]
    %v921 = vld [vmem:[#allocation2 + $0x1b98] sm:$0xff]
    %v922 = vld [vmem:[#allocation2 + $0x1ba0] sm:$0xff]
    %v923 = vld [vmem:[#allocation2 + $0x1ba8] sm:$0xff]
    %v924 = vld [vmem:[#allocation2 + $0x1bb0] sm:$0xff]
    %v925 = vld [vmem:[#allocation2 + $0x1bb8] sm:$0xff]
    %v926 = vld [vmem:[#allocation2 + $0x1bc0] sm:$0xff]
    %v927 = vld [vmem:[#allocation2 + $0x1bc8] sm:$0xff]
    %v928 = vld [vmem:[#allocation2 + $0x1bd0] sm:$0xff]
    %v929 = vld [vmem:[#allocation2 + $0x1bd8] sm:$0xff]
    %v930 = vld [vmem:[#allocation2 + $0x1be0] sm:$0xff]
    %v931 = vld [vmem:[#allocation2 + $0x1be8] sm:$0xff]
    %v932 = vld [vmem:[#allocation2 + $0x1bf0] sm:$0xff]
    %v933 = vld [vmem:[#allocation2 + $0x1bf8] sm:$0xff]
    %v934 = vld [vmem:[#allocation2 + $0x1c00] sm:$0xff]
    %v935 = vld [vmem:[#allocation2 + $0x1c08] sm:$0xff]
    %v936 = vld [vmem:[#allocation2 + $0x1c10] sm:$0xff]
    %v937 = vld [vmem:[#allocation2 + $0x1c18] sm:$0xff]
    %v938 = vld [vmem:[#allocation2 + $0x1c20] sm:$0xff]
    %v939 = vld [vmem:[#allocation2 + $0x1c28] sm:$0xff]
    %v940 = vld [vmem:[#allocation2 + $0x1c30] sm:$0xff]
    %v941 = vld [vmem:[#allocation2 + $0x1c38] sm:$0xff]
    %v942 = vld [vmem:[#allocation2 + $0x1c40] sm:$0xff]
    %v943 = vld [vmem:[#allocation2 + $0x1c48] sm:$0xff]
    %v944 = vld [vmem:[#allocation2 + $0x1c50] sm:$0xff]
    %v945 = vld [vmem:[#allocation2 + $0x1c58] sm:$0xff]
    %v946 = vld [vmem:[#allocation2 + $0x1c60] sm:$0xff]
    %v947 = vld [vmem:[#allocation2 + $0x1c68] sm:$0xff]
    %v948 = vld [vmem:[#allocation2 + $0x1c70] sm:$0xff]
    %v949 = vld [vmem:[#allocation2 + $0x1c78] sm:$0xff]
    %v950 = vld [vmem:[#allocation2 + $0x1c80] sm:$0xff]
    %v951 = vld [vmem:[#allocation2 + $0x1c88] sm:$0xff]
    %v952 = vld [vmem:[#allocation2 + $0x1c90] sm:$0xff]
    %v953 = vld [vmem:[#allocation2 + $0x1c98] sm:$0xff]
    %v954 = vld [vmem:[#allocation2 + $0x1ca0] sm:$0xff]
    %v955 = vld [vmem:[#allocation2 + $0x1ca8] sm:$0xff]
    %v956 = vld [vmem:[#allocation2 + $0x1cb0] sm:$0xff]
    %v957 = vld [vmem:[#allocation2 + $0x1cb8] sm:$0xff]
    %v958 = vld [vmem:[#allocation2 + $0x1cc0] sm:$0xff]
    %v959 = vld [vmem:[#allocation2 + $0x1cc8] sm:$0xff]
    %v960 = vld [vmem:[#allocation2 + $0x1cd0] sm:$0xff]
    %v961 = vld [vmem:[#allocation2 + $0x1cd8] sm:$0xff]
    %v962 = vld [vmem:[#allocation2 + $0x1ce0] sm:$0xff]
    %v963 = vld [vmem:[#allocation2 + $0x1ce8] sm:$0xff]
    %v964 = vld [vmem:[#allocation2 + $0x1cf0] sm:$0xff]
    %v965 = vld [vmem:[#allocation2 + $0x1cf8] sm:$0xff]
    %v966 = vld [vmem:[#allocation2 + $0x1d00] sm:$0xff]
    %v967 = vld [vmem:[#allocation2 + $0x1d08] sm:$0xff]
    %v968 = vld [vmem:[#allocation2 + $0x1d10] sm:$0xff]
    %v969 = vld [vmem:[#allocation2 + $0x1d18] sm:$0xff]
    %v970 = vld [vmem:[#allocation2 + $0x1d20] sm:$0xff]
    %v971 = vld [vmem:[#allocation2 + $0x1d28] sm:$0xff]
    %v972 = vld [vmem:[#allocation2 + $0x1d30] sm:$0xff]
    %v973 = vld [vmem:[#allocation2 + $0x1d38] sm:$0xff]
    %v974 = vld [vmem:[#allocation2 + $0x1d40] sm:$0xff]
    %v975 = vld [vmem:[#allocation2 + $0x1d48] sm:$0xff]
    %v976 = vld [vmem:[#allocation2 + $0x1d50] sm:$0xff]
    %v977 = vld [vmem:[#allocation2 + $0x1d58] sm:$0xff]
    %v978 = vld [vmem:[#allocation2 + $0x1d60] sm:$0xff]
    %v979 = vld [vmem:[#allocation2 + $0x1d68] sm:$0xff]
    %v980 = vld [vmem:[#allocation2 + $0x1d70] sm:$0xff]
    %v981 = vld [vmem:[#allocation2 + $0x1d78] sm:$0xff]
    %v982 = vld [vmem:[#allocation2 + $0x1d80] sm:$0xff]
    %v983 = vld [vmem:[#allocation2 + $0x1d88] sm:$0xff]
    %v984 = vld [vmem:[#allocation2 + $0x1d90] sm:$0xff]
    %v985 = vld [vmem:[#allocation2 + $0x1d98] sm:$0xff]
    %v986 = vld [vmem:[#allocation2 + $0x1da0] sm:$0xff]
    %v987 = vld [vmem:[#allocation2 + $0x1da8] sm:$0xff]
    %v988 = vld [vmem:[#allocation2 + $0x1db0] sm:$0xff]
    %v989 = vld [vmem:[#allocation2 + $0x1db8] sm:$0xff]
    %v990 = vld [vmem:[#allocation2 + $0x1dc0] sm:$0xff]
    %v991 = vld [vmem:[#allocation2 + $0x1dc8] sm:$0xff]
    %v992 = vld [vmem:[#allocation2 + $0x1dd0] sm:$0xff]
    %v993 = vld [vmem:[#allocation2 + $0x1dd8] sm:$0xff]
    %v994 = vld [vmem:[#allocation2 + $0x1de0] sm:$0xff]
    %v995 = vld [vmem:[#allocation2 + $0x1de8] sm:$0xff]
    %v996 = vld [vmem:[#allocation2 + $0x1df0] sm:$0xff]
    %v997 = vld [vmem:[#allocation2 + $0x1df8] sm:$0xff]
    %v998 = vld [vmem:[#allocation2 + $0x1e00] sm:$0xff]
    %v999 = vld [vmem:[#allocation2 + $0x1e08] sm:$0xff]
    %v1000 = vld [vmem:[#allocation2 + $0x1e10] sm:$0xff]
    %v1001 = vld [vmem:[#allocation2 + $0x1e18] sm:$0xff]
    %v1002 = vld [vmem:[#allocation2 + $0x1e20] sm:$0xff]
    %v1003 = vld [vmem:[#allocation2 + $0x1e28] sm:$0xff]
    %v1004 = vld [vmem:[#allocation2 + $0x1e30] sm:$0xff]
    %v1005 = vld [vmem:[#allocation2 + $0x1e38] sm:$0xff]
    %v1006 = vld [vmem:[#allocation2 + $0x1e40] sm:$0xff]
    %v1007 = vld [vmem:[#allocation2 + $0x1e48] sm:$0xff]
    %v1008 = vld [vmem:[#allocation2 + $0x1e50] sm:$0xff]
    %v1009 = vld [vmem:[#allocation2 + $0x1e58] sm:$0xff]
    %v1010 = vld [vmem:[#allocation2 + $0x1e60] sm:$0xff]
    %v1011 = vld [vmem:[#allocation2 + $0x1e68] sm:$0xff]
    %v1012 = vld [vmem:[#allocation2 + $0x1e70] sm:$0xff]
    %v1013 = vld [vmem:[#allocation2 + $0x1e78] sm:$0xff]
    %v1014 = vld [vmem:[#allocation2 + $0x1e80] sm:$0xff]
    %v1015 = vld [vmem:[#allocation2 + $0x1e88] sm:$0xff]
    %v1016 = vld [vmem:[#allocation2 + $0x1e90] sm:$0xff]
    %v1017 = vld [vmem:[#allocation2 + $0x1e98] sm:$0xff]
    %v1018 = vld [vmem:[#allocation2 + $0x1ea0] sm:$0xff]
    %v1019 = vld [vmem:[#allocation2 + $0x1ea8] sm:$0xff]
    %v1020 = vld [vmem:[#allocation2 + $0x1eb0] sm:$0xff]
    %v1021 = vld [vmem:[#allocation2 + $0x1eb8] sm:$0xff]
    %v1022 = vld [vmem:[#allocation2 + $0x1ec0] sm:$0xff]
    %v1023 = vld [vmem:[#allocation2 + $0x1ec8] sm:$0xff]
    %v1024 = vld [vmem:[#allocation2 + $0x1ed0] sm:$0xff]
    %v1025 = vld [vmem:[#allocation2 + $0x1ed8] sm:$0xff]
    %v1026 = vld [vmem:[#allocation2 + $0x1ee0] sm:$0xff]
    %v1027 = vld [vmem:[#allocation2 + $0x1ee8] sm:$0xff]
    %v1028 = vld [vmem:[#allocation2 + $0x1ef0] sm:$0xff]
    %v1029 = vld [vmem:[#allocation2 + $0x1ef8] sm:$0xff]
    %v1030 = vld [vmem:[#allocation2 + $0x1f00] sm:$0xff]
    %v1031 = vld [vmem:[#allocation2 + $0x1f08] sm:$0xff]
    %v1032 = vld [vmem:[#allocation2 + $0x1f10] sm:$0xff]
    %v1033 = vld [vmem:[#allocation2 + $0x1f18] sm:$0xff]
    %v1034 = vld [vmem:[#allocation2 + $0x1f20] sm:$0xff]
    %v1035 = vld [vmem:[#allocation2 + $0x1f28] sm:$0xff]
    %v1036 = vld [vmem:[#allocation2 + $0x1f30] sm:$0xff]
    %v1037 = vld [vmem:[#allocation2 + $0x1f38] sm:$0xff]
    %v1038 = vld [vmem:[#allocation2 + $0x1f40] sm:$0xff]
    %v1039 = vld [vmem:[#allocation2 + $0x1f48] sm:$0xff]
    %v1040 = vld [vmem:[#allocation2 + $0x1f50] sm:$0xff]
    %v1041 = vld [vmem:[#allocation2 + $0x1f58] sm:$0xff]
    %v1042 = vld [vmem:[#allocation2 + $0x1f60] sm:$0xff]
    %v1043 = vld [vmem:[#allocation2 + $0x1f68] sm:$0xff]
    %v1044 = vld [vmem:[#allocation2 + $0x1f70] sm:$0xff]
    %v1045 = vld [vmem:[#allocation2 + $0x1f78] sm:$0xff]
    %v1046 = vld [vmem:[#allocation2 + $0x1f80] sm:$0xff]
    %v1047 = vld [vmem:[#allocation2 + $0x1f88] sm:$0xff]
    %v1048 = vld [vmem:[#allocation2 + $0x1f90] sm:$0xff]
    %v1049 = vld [vmem:[#allocation2 + $0x1f98] sm:$0xff]
    %v1050 = vld [vmem:[#allocation2 + $0x1fa0] sm:$0xff]
    %v1051 = vld [vmem:[#allocation2 + $0x1fa8] sm:$0xff]
    %v1052 = vld [vmem:[#allocation2 + $0x1fb0] sm:$0xff]
    %v1053 = vld [vmem:[#allocation2 + $0x1fb8] sm:$0xff]
    %v1054 = vld [vmem:[#allocation2 + $0x1fc0] sm:$0xff]
    %v1055 = vld [vmem:[#allocation2 + $0x1fc8] sm:$0xff]
    %v1056 = vld [vmem:[#allocation2 + $0x1fd0] sm:$0xff]
    %v1057 = vld [vmem:[#allocation2 + $0x1fd8] sm:$0xff]
    %v1058 = vld [vmem:[#allocation2 + $0x1fe0] sm:$0xff]
    %v1059 = vld [vmem:[#allocation2 + $0x1fe8] sm:$0xff]
    %v1060 = vld [vmem:[#allocation2 + $0x1ff0] sm:$0xff]
    %v1061 = vld [vmem:[#allocation2 + $0x1ff8] sm:$0xff]
    %v1062 = vld [vmem:[#allocation2 + $0x2000] sm:$0xff]
    %v1063 = vld [vmem:[#allocation2 + $0x2008] sm:$0xff]
    %v1064 = vld [vmem:[#allocation2 + $0x2010] sm:$0xff]
    %v1065 = vld [vmem:[#allocation2 + $0x2018] sm:$0xff]
    %v1066 = vld [vmem:[#allocation2 + $0x2020] sm:$0xff]
    %v1067 = vld [vmem:[#allocation2 + $0x2028] sm:$0xff]
    %v1068 = vld [vmem:[#allocation2 + $0x2030] sm:$0xff]
    %v1069 = vld [vmem:[#allocation2 + $0x2038] sm:$0xff]
    %v1070 = vld [vmem:[#allocation2 + $0x2040] sm:$0xff]
    %v1071 = vld [vmem:[#allocation2 + $0x2048] sm:$0xff]
    %v1072 = vld [vmem:[#allocation2 + $0x2050] sm:$0xff]
    %v1073 = vld [vmem:[#allocation2 + $0x2058] sm:$0xff]
    %v1074 = vld [vmem:[#allocation2 + $0x2060] sm:$0xff]
    %v1075 = vld [vmem:[#allocation2 + $0x2068] sm:$0xff]
    %v1076 = vld [vmem:[#allocation2 + $0x2070] sm:$0xff]
    %v1077 = vld [vmem:[#allocation2 + $0x2078] sm:$0xff]
    %v1078 = vld [vmem:[#allocation2 + $0x2080] sm:$0xff]
    %v1079 = vld [vmem:[#allocation2 + $0x2088] sm:$0xff]
    %v1080 = vld [vmem:[#allocation2 + $0x2090] sm:$0xff]
    %v1081 = vld [vmem:[#allocation2 + $0x2098] sm:$0xff]
    %v1082 = vld [vmem:[#allocation2 + $0x20a0] sm:$0xff]
    %v1083 = vld [vmem:[#allocation2 + $0x20a8] sm:$0xff]
    %v1084 = vld [vmem:[#allocation2 + $0x20b0] sm:$0xff]
    %v1085 = vld [vmem:[#allocation2 + $0x20b8] sm:$0xff]
    %v1086 = vld [vmem:[#allocation2 + $0x20c0] sm:$0xff]
    %v1087 = vld [vmem:[#allocation2 + $0x20c8] sm:$0xff]
    %v1088 = vld [vmem:[#allocation2 + $0x20d0] sm:$0xff]
    %v1089 = vld [vmem:[#allocation2 + $0x20d8] sm:$0xff]
    %v1090 = vld [vmem:[#allocation2 + $0x20e0] sm:$0xff]
    %v1091 = vld [vmem:[#allocation2 + $0x20e8] sm:$0xff]
    %v1092 = vld [vmem:[#allocation2 + $0x20f0] sm:$0xff]
    %v1093 = vld [vmem:[#allocation2 + $0x20f8] sm:$0xff]
    %v1094 = vld [vmem:[#allocation2 + $0x2100] sm:$0xff]
    %v1095 = vld [vmem:[#allocation2 + $0x2108] sm:$0xff]
    %v1096 = vld [vmem:[#allocation2 + $0x2110] sm:$0xff]
    %v1097 = vld [vmem:[#allocation2 + $0x2118] sm:$0xff]
    %v1098 = vld [vmem:[#allocation2 + $0x2120] sm:$0xff]
    %v1099 = vld [vmem:[#allocation2 + $0x2128] sm:$0xff]
    %v1100 = vld [vmem:[#allocation2 + $0x2130] sm:$0xff]
    %v1101 = vld [vmem:[#allocation2 + $0x2138] sm:$0xff]
    %v1102 = vld [vmem:[#allocation2 + $0x2140] sm:$0xff]
    %v1103 = vld [vmem:[#allocation2 + $0x2148] sm:$0xff]
    %v1104 = vld [vmem:[#allocation2 + $0x2150] sm:$0xff]
    %v1105 = vld [vmem:[#allocation2 + $0x2158] sm:$0xff]
    %v1106 = vld [vmem:[#allocation2 + $0x2160] sm:$0xff]
    %v1107 = vld [vmem:[#allocation2 + $0x2168] sm:$0xff]
    %v1108 = vld [vmem:[#allocation2 + $0x2170] sm:$0xff]
    %v1109 = vld [vmem:[#allocation2 + $0x2178] sm:$0xff]
    %v1110 = vld [vmem:[#allocation2 + $0x2180] sm:$0xff]
    %v1111 = vld [vmem:[#allocation2 + $0x2188] sm:$0xff]
    %v1112 = vld [vmem:[#allocation2 + $0x2190] sm:$0xff]
    %v1113 = vld [vmem:[#allocation2 + $0x2198] sm:$0xff]
    %v1114 = vld [vmem:[#allocation2 + $0x21a0] sm:$0xff]
    %v1115 = vld [vmem:[#allocation2 + $0x21a8] sm:$0xff]
    %v1116 = vld [vmem:[#allocation2 + $0x21b0] sm:$0xff]
    %v1117 = vld [vmem:[#allocation2 + $0x21b8] sm:$0xff]
    %v1118 = vld [vmem:[#allocation2 + $0x21c0] sm:$0xff]
    %v1119 = vld [vmem:[#allocation2 + $0x21c8] sm:$0xff]
    %v1120 = vld [vmem:[#allocation2 + $0x21d0] sm:$0xff]
    %v1121 = vld [vmem:[#allocation2 + $0x21d8] sm:$0xff]
    %v1122 = vld [vmem:[#allocation2 + $0x21e0] sm:$0xff]
    %v1123 = vld [vmem:[#allocation2 + $0x21e8] sm:$0xff]
    %v1124 = vld [vmem:[#allocation2 + $0x21f0] sm:$0xff]
    %v1125 = vld [vmem:[#allocation2 + $0x21f8] sm:$0xff]
    %v1126 = vld [vmem:[#allocation2 + $0x2200] sm:$0xff]
    %v1127 = vld [vmem:[#allocation2 + $0x2208] sm:$0xff]
    %v1128 = vld [vmem:[#allocation2 + $0x2210] sm:$0xff]
    %v1129 = vld [vmem:[#allocation2 + $0x2218] sm:$0xff]
    %v1130 = vld [vmem:[#allocation2 + $0x2220] sm:$0xff]
    %v1131 = vld [vmem:[#allocation2 + $0x2228] sm:$0xff]
    %v1132 = vld [vmem:[#allocation2 + $0x2230] sm:$0xff]
    %v1133 = vld [vmem:[#allocation2 + $0x2238] sm:$0xff]
    %v1134 = vld [vmem:[#allocation2 + $0x2240] sm:$0xff]
    %v1135 = vld [vmem:[#allocation2 + $0x2248] sm:$0xff]
    %v1136 = vld [vmem:[#allocation2 + $0x2250] sm:$0xff]
    %v1137 = vld [vmem:[#allocation2 + $0x2258] sm:$0xff]
    %v1138 = vld [vmem:[#allocation2 + $0x2260] sm:$0xff]
    %v1139 = vld [vmem:[#allocation2 + $0x2268] sm:$0xff]
    %v1140 = vld [vmem:[#allocation2 + $0x2270] sm:$0xff]
    %v1141 = vld [vmem:[#allocation2 + $0x2278] sm:$0xff]
    %v1142 = vld [vmem:[#allocation2 + $0x2280] sm:$0xff]
    %v1143 = vld [vmem:[#allocation2 + $0x2288] sm:$0xff]
    %v1144 = vld [vmem:[#allocation2 + $0x2290] sm:$0xff]
    %v1145 = vld [vmem:[#allocation2 + $0x2298] sm:$0xff]
    %v1146 = vld [vmem:[#allocation2 + $0x22a0] sm:$0xff]
    %v1147 = vld [vmem:[#allocation2 + $0x22a8] sm:$0xff]
    %v1148 = vld [vmem:[#allocation2 + $0x22b0] sm:$0xff]
    %v1149 = vld [vmem:[#allocation2 + $0x22b8] sm:$0xff]
    %v1150 = vld [vmem:[#allocation2 + $0x22c0] sm:$0xff]
    %v1151 = vld [vmem:[#allocation2 + $0x22c8] sm:$0xff]
    %v1152 = vld [vmem:[#allocation2 + $0x22d0] sm:$0xff]
    %v1153 = vld [vmem:[#allocation2 + $0x22d8] sm:$0xff]
    %v1154 = vld [vmem:[#allocation2 + $0x22e0] sm:$0xff]
    %v1155 = vld [vmem:[#allocation2 + $0x22e8] sm:$0xff]
    %v1156 = vld [vmem:[#allocation2 + $0x22f0] sm:$0xff]
    %v1157 = vld [vmem:[#allocation2 + $0x22f8] sm:$0xff]
    %v1158 = vld [vmem:[#allocation2 + $0x2300] sm:$0xff]
    %v1159 = vld [vmem:[#allocation2 + $0x2308] sm:$0xff]
    %v1160 = vld [vmem:[#allocation2 + $0x2310] sm:$0xff]
    %v1161 = vld [vmem:[#allocation2 + $0x2318] sm:$0xff]
    %v1162 = vld [vmem:[#allocation2 + $0x2320] sm:$0xff]
    %v1163 = vld [vmem:[#allocation2 + $0x2328] sm:$0xff]
    %v1164 = vld [vmem:[#allocation2 + $0x2330] sm:$0xff]
    %v1165 = vld [vmem:[#allocation2 + $0x2338] sm:$0xff]
    %v1166 = vld [vmem:[#allocation2 + $0x2340] sm:$0xff]
    %v1167 = vld [vmem:[#allocation2 + $0x2348] sm:$0xff]
    %v1168 = vld [vmem:[#allocation2 + $0x2350] sm:$0xff]
    %v1169 = vld [vmem:[#allocation2 + $0x2358] sm:$0xff]
    %v1170 = vld [vmem:[#allocation2 + $0x2360] sm:$0xff]
    %v1171 = vld [vmem:[#allocation2 + $0x2368] sm:$0xff]
    %v1172 = vld [vmem:[#allocation2 + $0x2370] sm:$0xff]
    %v1173 = vld [vmem:[#allocation2 + $0x2378] sm:$0xff]
    %v1174 = vld [vmem:[#allocation2 + $0x2380] sm:$0xff]
    %v1175 = vld [vmem:[#allocation2 + $0x2388] sm:$0xff]
    %v1176 = vld [vmem:[#allocation2 + $0x2390] sm:$0xff]
    %v1177 = vld [vmem:[#allocation2 + $0x2398] sm:$0xff]
    %v1178 = vld [vmem:[#allocation2 + $0x23a0] sm:$0xff]
    %v1179 = vld [vmem:[#allocation2 + $0x23a8] sm:$0xff]
    %v1180 = vld [vmem:[#allocation2 + $0x23b0] sm:$0xff]
    %v1181 = vld [vmem:[#allocation2 + $0x23b8] sm:$0xff]
    %v1182 = vld [vmem:[#allocation2 + $0x23c0] sm:$0xff]
    %v1183 = vld [vmem:[#allocation2 + $0x23c8] sm:$0xff]
    %v1184 = vld [vmem:[#allocation2 + $0x23d0] sm:$0xff]
    %v1185 = vld [vmem:[#allocation2 + $0x23d8] sm:$0xff]
    %v1186 = vld [vmem:[#allocation2 + $0x23e0] sm:$0xff]
    %v1187 = vld [vmem:[#allocation2 + $0x23e8] sm:$0xff]
    %v1188 = vld [vmem:[#allocation2 + $0x23f0] sm:$0xff]
    %v1189 = vld [vmem:[#allocation2 + $0x23f8] sm:$0xff]
    %v1190 = vld [vmem:[#allocation2 + $0x2400] sm:$0xff]
    %v1191 = vld [vmem:[#allocation2 + $0x2408] sm:$0xff]
    %v1192 = vld [vmem:[#allocation2 + $0x2410] sm:$0xff]
    %v1193 = vld [vmem:[#allocation2 + $0x2418] sm:$0xff]
    %v1194 = vld [vmem:[#allocation2 + $0x2420] sm:$0xff]
    %v1195 = vld [vmem:[#allocation2 + $0x2428] sm:$0xff]
    %v1196 = vld [vmem:[#allocation2 + $0x2430] sm:$0xff]
    %v1197 = vld [vmem:[#allocation2 + $0x2438] sm:$0xff]
    %v1198 = vld [vmem:[#allocation2 + $0x2440] sm:$0xff]
    %v1199 = vld [vmem:[#allocation2 + $0x2448] sm:$0xff]
    %v1200 = vld [vmem:[#allocation2 + $0x2450] sm:$0xff]
    %v1201 = vld [vmem:[#allocation2 + $0x2458] sm:$0xff]
    %v1202 = vld [vmem:[#allocation2 + $0x2460] sm:$0xff]
    %v1203 = vld [vmem:[#allocation2 + $0x2468] sm:$0xff]
    %v1204 = vld [vmem:[#allocation2 + $0x2470] sm:$0xff]
    %v1205 = vld [vmem:[#allocation2 + $0x2478] sm:$0xff]
    %v1206 = vld [vmem:[#allocation2 + $0x2480] sm:$0xff]
    %v1207 = vld [vmem:[#allocation2 + $0x2488] sm:$0xff]
    %v1208 = vld [vmem:[#allocation2 + $0x2490] sm:$0xff]
    %v1209 = vld [vmem:[#allocation2 + $0x2498] sm:$0xff]
    %v1210 = vld [vmem:[#allocation2 + $0x24a0] sm:$0xff]
    %v1211 = vld [vmem:[#allocation2 + $0x24a8] sm:$0xff]
    %v1212 = vld [vmem:[#allocation2 + $0x24b0] sm:$0xff]
    %v1213 = vld [vmem:[#allocation2 + $0x24b8] sm:$0xff]
    %v1214 = vld [vmem:[#allocation2 + $0x24c0] sm:$0xff]
    %v1215 = vld [vmem:[#allocation2 + $0x24c8] sm:$0xff]
    %v1216 = vld [vmem:[#allocation2 + $0x24d0] sm:$0xff]
    %v1217 = vld [vmem:[#allocation2 + $0x24d8] sm:$0xff]
    %v1218 = vld [vmem:[#allocation2 + $0x24e0] sm:$0xff]
    %v1219 = vld [vmem:[#allocation2 + $0x24e8] sm:$0xff]
    %v1220 = vld [vmem:[#allocation2 + $0x24f0] sm:$0xff]
    %v1221 = vld [vmem:[#allocation2 + $0x24f8] sm:$0xff]
    %v1222 = vld [vmem:[#allocation2 + $0x2500] sm:$0xff]
    %v1223 = vld [vmem:[#allocation2 + $0x2508] sm:$0xff]
    %v1224 = vld [vmem:[#allocation2 + $0x2510] sm:$0xff]
    %v1225 = vld [vmem:[#allocation2 + $0x2518] sm:$0xff]
    %v1226 = vld [vmem:[#allocation2 + $0x2520] sm:$0xff]
    %v1227 = vld [vmem:[#allocation2 + $0x2528] sm:$0xff]
    %v1228 = vld [vmem:[#allocation2 + $0x2530] sm:$0xff]
    %v1229 = vld [vmem:[#allocation2 + $0x2538] sm:$0xff]
    %v1230 = vld [vmem:[#allocation2 + $0x2540] sm:$0xff]
    %v1231 = vld [vmem:[#allocation2 + $0x2548] sm:$0xff]
    %v1232 = vld [vmem:[#allocation2 + $0x2550] sm:$0xff]
    %v1233 = vld [vmem:[#allocation2 + $0x2558] sm:$0xff]
    %v1234 = vld [vmem:[#allocation2 + $0x2560] sm:$0xff]
    %v1235 = vld [vmem:[#allocation2 + $0x2568] sm:$0xff]
    %v1236 = vld [vmem:[#allocation2 + $0x2570] sm:$0xff]
    %v1237 = vld [vmem:[#allocation2 + $0x2578] sm:$0xff]
    %v1238 = vld [vmem:[#allocation2 + $0x2580] sm:$0xff]
    %v1239 = vld [vmem:[#allocation2 + $0x2588] sm:$0xff]
    %v1240 = vld [vmem:[#allocation2 + $0x2590] sm:$0xff]
    %v1241 = vld [vmem:[#allocation2 + $0x2598] sm:$0xff]
    %v1242 = vld [vmem:[#allocation2 + $0x25a0] sm:$0xff]
    %v1243 = vld [vmem:[#allocation2 + $0x25a8] sm:$0xff]
    %v1244 = vld [vmem:[#allocation2 + $0x25b0] sm:$0xff]
    %v1245 = vld [vmem:[#allocation2 + $0x25b8] sm:$0xff]
    %v1246 = vld [vmem:[#allocation2 + $0x25c0] sm:$0xff]
    %v1247 = vld [vmem:[#allocation2 + $0x25c8] sm:$0xff]
    %v1248 = vld [vmem:[#allocation2 + $0x25d0] sm:$0xff]
    %v1249 = vld [vmem:[#allocation2 + $0x25d8] sm:$0xff]
    %v1250 = vld [vmem:[#allocation2 + $0x25e0] sm:$0xff]
    %v1251 = vld [vmem:[#allocation2 + $0x25e8] sm:$0xff]
    %v1252 = vld [vmem:[#allocation2 + $0x25f0] sm:$0xff]
    %v1253 = vld [vmem:[#allocation2 + $0x25f8] sm:$0xff]
    %v1254 = vld [vmem:[#allocation2 + $0x2600] sm:$0xff]
    %v1255 = vld [vmem:[#allocation2 + $0x2608] sm:$0xff]
    %v1256 = vld [vmem:[#allocation2 + $0x2610] sm:$0xff]
    %v1257 = vld [vmem:[#allocation2 + $0x2618] sm:$0xff]
    %v1258 = vld [vmem:[#allocation2 + $0x2620] sm:$0xff]
    %v1259 = vld [vmem:[#allocation2 + $0x2628] sm:$0xff]
    %v1260 = vld [vmem:[#allocation2 + $0x2630] sm:$0xff]
    %v1261 = vld [vmem:[#allocation2 + $0x2638] sm:$0xff]
    %v1262 = vld [vmem:[#allocation2 + $0x2640] sm:$0xff]
    %v1263 = vld [vmem:[#allocation2 + $0x2648] sm:$0xff]
    %v1264 = vld [vmem:[#allocation2 + $0x2650] sm:$0xff]
    %v1265 = vld [vmem:[#allocation2 + $0x2658] sm:$0xff]
    %v1266 = vld [vmem:[#allocation2 + $0x2660] sm:$0xff]
    %v1267 = vld [vmem:[#allocation2 + $0x2668] sm:$0xff]
    %v1268 = vld [vmem:[#allocation2 + $0x2670] sm:$0xff]
    %v1269 = vld [vmem:[#allocation2 + $0x2678] sm:$0xff]
    %v1270 = vld [vmem:[#allocation2 + $0x2680] sm:$0xff]
    %v1271 = vld [vmem:[#allocation2 + $0x2688] sm:$0xff]
    %v1272 = vld [vmem:[#allocation2 + $0x2690] sm:$0xff]
    %v1273 = vld [vmem:[#allocation2 + $0x2698] sm:$0xff]
    %v1274 = vld [vmem:[#allocation2 + $0x26a0] sm:$0xff]
    %v1275 = vld [vmem:[#allocation2 + $0x26a8] sm:$0xff]
    %v1276 = vld [vmem:[#allocation2 + $0x26b0] sm:$0xff]
    %v1277 = vld [vmem:[#allocation2 + $0x26b8] sm:$0xff]
    %v1278 = vld [vmem:[#allocation2 + $0x26c0] sm:$0xff]
    %v1279 = vld [vmem:[#allocation2 + $0x26c8] sm:$0xff]
    %v1280 = vld [vmem:[#allocation2 + $0x26d0] sm:$0xff]
    %v1281 = vld [vmem:[#allocation2 + $0x26d8] sm:$0xff]
    %v1282 = vld [vmem:[#allocation2 + $0x26e0] sm:$0xff]
    %v1283 = vld [vmem:[#allocation2 + $0x26e8] sm:$0xff]
    %v1284 = vld [vmem:[#allocation2 + $0x26f0] sm:$0xff]
    %v1285 = vld [vmem:[#allocation2 + $0x26f8] sm:$0xff]
    %v1286 = vld [vmem:[#allocation2 + $0x2700] sm:$0xff]
    %v1287 = vld [vmem:[#allocation2 + $0x2708] sm:$0xff]
    %v1288 = vld [vmem:[#allocation2 + $0x2710] sm:$0xff]
    %v1289 = vld [vmem:[#allocation2 + $0x2718] sm:$0xff]
    %v1290 = vld [vmem:[#allocation2 + $0x2720] sm:$0xff]
    %v1291 = vld [vmem:[#allocation2 + $0x2728] sm:$0xff]
    %v1292 = vld [vmem:[#allocation2 + $0x2730] sm:$0xff]
    %v1293 = vld [vmem:[#allocation2 + $0x2738] sm:$0xff]
    %v1294 = vld [vmem:[#allocation2 + $0x2740] sm:$0xff]
    %v1295 = vld [vmem:[#allocation2 + $0x2748] sm:$0xff]
    %v1296 = vld [vmem:[#allocation2 + $0x2750] sm:$0xff]
    %v1297 = vld [vmem:[#allocation2 + $0x2758] sm:$0xff]
    %v1298 = vld [vmem:[#allocation2 + $0x2760] sm:$0xff]
    %v1299 = vld [vmem:[#allocation2 + $0x2768] sm:$0xff]
    %v1300 = vld [vmem:[#allocation2 + $0x2770] sm:$0xff]
    %v1301 = vld [vmem:[#allocation2 + $0x2778] sm:$0xff]
    %v1302 = vld [vmem:[#allocation2 + $0x2780] sm:$0xff]
    %v1303 = vld [vmem:[#allocation2 + $0x2788] sm:$0xff]
    %v1304 = vld [vmem:[#allocation2 + $0x2790] sm:$0xff]
    %v1305 = vld [vmem:[#allocation2 + $0x2798] sm:$0xff]
    %v1306 = vld [vmem:[#allocation2 + $0x27a0] sm:$0xff]
    %v1307 = vld [vmem:[#allocation2 + $0x27a8] sm:$0xff]
    %v1308 = vld [vmem:[#allocation2 + $0x27b0] sm:$0xff]
    %v1309 = vld [vmem:[#allocation2 + $0x27b8] sm:$0xff]
    %v1310 = vld [vmem:[#allocation2 + $0x27c0] sm:$0xff]
    %v1311 = vld [vmem:[#allocation2 + $0x27c8] sm:$0xff]
    %v1312 = vld [vmem:[#allocation2 + $0x27d0] sm:$0xff]
    %v1313 = vld [vmem:[#allocation2 + $0x27d8] sm:$0xff]
    %v1314 = vld [vmem:[#allocation2 + $0x27e0] sm:$0xff]
    %v1315 = vld [vmem:[#allocation2 + $0x27e8] sm:$0xff]
    %v1316 = vld [vmem:[#allocation2 + $0x27f0] sm:$0xff]
    %v1317 = vld [vmem:[#allocation2 + $0x27f8] sm:$0xff]
    %v1318 = vld [vmem:[#allocation2 + $0x2800] sm:$0xff]
    %v1319 = vld [vmem:[#allocation2 + $0x2808] sm:$0xff]
    %v1320 = vld [vmem:[#allocation2 + $0x2810] sm:$0xff]
    %v1321 = vld [vmem:[#allocation2 + $0x2818] sm:$0xff]
    %v1322 = vld [vmem:[#allocation2 + $0x2820] sm:$0xff]
    %v1323 = vld [vmem:[#allocation2 + $0x2828] sm:$0xff]
    %v1324 = vld [vmem:[#allocation2 + $0x2830] sm:$0xff]
    %v1325 = vld [vmem:[#allocation2 + $0x2838] sm:$0xff]
    %v1326 = vld [vmem:[#allocation2 + $0x2840] sm:$0xff]
    %v1327 = vld [vmem:[#allocation2 + $0x2848] sm:$0xff]
    %v1328 = vld [vmem:[#allocation2 + $0x2850] sm:$0xff]
    %v1329 = vld [vmem:[#allocation2 + $0x2858] sm:$0xff]
    %v1330 = vld [vmem:[#allocation2 + $0x2860] sm:$0xff]
    %v1331 = vld [vmem:[#allocation2 + $0x2868] sm:$0xff]
    %v1332 = vld [vmem:[#allocation2 + $0x2870] sm:$0xff]
    %v1333 = vld [vmem:[#allocation2 + $0x2878] sm:$0xff]
    %v1334 = vld [vmem:[#allocation2 + $0x2880] sm:$0xff]
    %v1335 = vld [vmem:[#allocation2 + $0x2888] sm:$0xff]
    %v1336 = vld [vmem:[#allocation2 + $0x2890] sm:$0xff]
    %v1337 = vld [vmem:[#allocation2 + $0x2898] sm:$0xff]
    %v1338 = vld [vmem:[#allocation2 + $0x28a0] sm:$0xff]
    %v1339 = vld [vmem:[#allocation2 + $0x28a8] sm:$0xff]
    %v1340 = vld [vmem:[#allocation2 + $0x28b0] sm:$0xff]
    %v1341 = vld [vmem:[#allocation2 + $0x28b8] sm:$0xff]
    %v1342 = vld [vmem:[#allocation2 + $0x28c0] sm:$0xff]
    %v1343 = vld [vmem:[#allocation2 + $0x28c8] sm:$0xff]
    %v1344 = vld [vmem:[#allocation2 + $0x28d0] sm:$0xff]
    %v1345 = vld [vmem:[#allocation2 + $0x28d8] sm:$0xff]
    %v1346 = vld [vmem:[#allocation2 + $0x28e0] sm:$0xff]
    %v1347 = vld [vmem:[#allocation2 + $0x28e8] sm:$0xff]
    %v1348 = vld [vmem:[#allocation2 + $0x28f0] sm:$0xff]
    %v1349 = vld [vmem:[#allocation2 + $0x28f8] sm:$0xff]
    %v1350 = vld [vmem:[#allocation2 + $0x2900] sm:$0xff]
    %v1351 = vld [vmem:[#allocation2 + $0x2908] sm:$0xff]
    %v1352 = vld [vmem:[#allocation2 + $0x2910] sm:$0xff]
    %v1353 = vld [vmem:[#allocation2 + $0x2918] sm:$0xff]
    %v1354 = vld [vmem:[#allocation2 + $0x2920] sm:$0xff]
    %v1355 = vld [vmem:[#allocation2 + $0x2928] sm:$0xff]
    %v1356 = vld [vmem:[#allocation2 + $0x2930] sm:$0xff]
    %v1357 = vld [vmem:[#allocation2 + $0x2938] sm:$0xff]
    %v1358 = vld [vmem:[#allocation2 + $0x2940] sm:$0xff]
    %v1359 = vld [vmem:[#allocation2 + $0x2948] sm:$0xff]
    %v1360 = vld [vmem:[#allocation2 + $0x2950] sm:$0xff]
    %v1361 = vld [vmem:[#allocation2 + $0x2958] sm:$0xff]
    %v1362 = vld [vmem:[#allocation2 + $0x2960] sm:$0xff]
    %v1363 = vld [vmem:[#allocation2 + $0x2968] sm:$0xff]
    %v1364 = vld [vmem:[#allocation2 + $0x2970] sm:$0xff]
    %v1365 = vld [vmem:[#allocation2 + $0x2978] sm:$0xff]
    %v1366 = vld [vmem:[#allocation2 + $0x2980] sm:$0xff]
    %v1367 = vld [vmem:[#allocation2 + $0x2988] sm:$0xff]
    %v1368 = vld [vmem:[#allocation2 + $0x2990] sm:$0xff]
    %v1369 = vld [vmem:[#allocation2 + $0x2998] sm:$0xff]
    %v1370 = vld [vmem:[#allocation2 + $0x29a0] sm:$0xff]
    %v1371 = vld [vmem:[#allocation2 + $0x29a8] sm:$0xff]
    %v1372 = vld [vmem:[#allocation2 + $0x29b0] sm:$0xff]
    %v1373 = vld [vmem:[#allocation2 + $0x29b8] sm:$0xff]
    %v1374 = vld [vmem:[#allocation2 + $0x29c0] sm:$0xff]
    %v1375 = vld [vmem:[#allocation2 + $0x29c8] sm:$0xff]
    %v1376 = vld [vmem:[#allocation2 + $0x29d0] sm:$0xff]
    %v1377 = vld [vmem:[#allocation2 + $0x29d8] sm:$0xff]
    %v1378 = vld [vmem:[#allocation2 + $0x29e0] sm:$0xff]
    %v1379 = vld [vmem:[#allocation2 + $0x29e8] sm:$0xff]
    %v1380 = vld [vmem:[#allocation2 + $0x29f0] sm:$0xff]
    %v1381 = vld [vmem:[#allocation2 + $0x29f8] sm:$0xff]
    %v1382 = vld [vmem:[#allocation2 + $0x2a00] sm:$0xff]
    %v1383 = vld [vmem:[#allocation2 + $0x2a08] sm:$0xff]
    %v1384 = vld [vmem:[#allocation2 + $0x2a10] sm:$0xff]
    %v1385 = vld [vmem:[#allocation2 + $0x2a18] sm:$0xff]
    %v1386 = vld [vmem:[#allocation2 + $0x2a20] sm:$0xff]
    %v1387 = vld [vmem:[#allocation2 + $0x2a28] sm:$0xff]
    %v1388 = vld [vmem:[#allocation2 + $0x2a30] sm:$0xff]
    %v1389 = vld [vmem:[#allocation2 + $0x2a38] sm:$0xff]
    %v1390 = vld [vmem:[#allocation2 + $0x2a40] sm:$0xff]
    %v1391 = vld [vmem:[#allocation2 + $0x2a48] sm:$0xff]
    %v1392 = vld [vmem:[#allocation2 + $0x2a50] sm:$0xff]
    %v1393 = vld [vmem:[#allocation2 + $0x2a58] sm:$0xff]
    %v1394 = vld [vmem:[#allocation2 + $0x2a60] sm:$0xff]
    %v1395 = vld [vmem:[#allocation2 + $0x2a68] sm:$0xff]
    %v1396 = vld [vmem:[#allocation2 + $0x2a70] sm:$0xff]
    %v1397 = vld [vmem:[#allocation2 + $0x2a78] sm:$0xff]
    %v1398 = vld [vmem:[#allocation2 + $0x2a80] sm:$0xff]
    %v1399 = vld [vmem:[#allocation2 + $0x2a88] sm:$0xff]
    %v1400 = vld [vmem:[#allocation2 + $0x2a90] sm:$0xff]
    %v1401 = vld [vmem:[#allocation2 + $0x2a98] sm:$0xff]
    %v1402 = vld [vmem:[#allocation2 + $0x2aa0] sm:$0xff]
    %v1403 = vld [vmem:[#allocation2 + $0x2aa8] sm:$0xff]
    %v1404 = vld [vmem:[#allocation2 + $0x2ab0] sm:$0xff]
    %v1405 = vld [vmem:[#allocation2 + $0x2ab8] sm:$0xff]
    %v1406 = vld [vmem:[#allocation2 + $0x2ac0] sm:$0xff]
    %v1407 = vld [vmem:[#allocation2 + $0x2ac8] sm:$0xff]
    %v1408 = vld [vmem:[#allocation2 + $0x2ad0] sm:$0xff]
    %v1409 = vld [vmem:[#allocation2 + $0x2ad8] sm:$0xff]
    %v1410 = vld [vmem:[#allocation2 + $0x2ae0] sm:$0xff]
    %v1411 = vld [vmem:[#allocation2 + $0x2ae8] sm:$0xff]
    %v1412 = vld [vmem:[#allocation2 + $0x2af0] sm:$0xff]
    %v1413 = vld [vmem:[#allocation2 + $0x2af8] sm:$0xff]
    %v1414 = vld [vmem:[#allocation2 + $0x2b00] sm:$0xff]
    %v1415 = vld [vmem:[#allocation2 + $0x2b08] sm:$0xff]
    %v1416 = vld [vmem:[#allocation2 + $0x2b10] sm:$0xff]
    %v1417 = vld [vmem:[#allocation2 + $0x2b18] sm:$0xff]
    %v1418 = vld [vmem:[#allocation2 + $0x2b20] sm:$0xff]
    %v1419 = vld [vmem:[#allocation2 + $0x2b28] sm:$0xff]
    %v1420 = vld [vmem:[#allocation2 + $0x2b30] sm:$0xff]
    %v1421 = vld [vmem:[#allocation2 + $0x2b38] sm:$0xff]
    %v1422 = vld [vmem:[#allocation2 + $0x2b40] sm:$0xff]
    %v1423 = vld [vmem:[#allocation2 + $0x2b48] sm:$0xff]
    %v1424 = vld [vmem:[#allocation2 + $0x2b50] sm:$0xff]
    %v1425 = vld [vmem:[#allocation2 + $0x2b58] sm:$0xff]
    %v1426 = vld [vmem:[#allocation2 + $0x2b60] sm:$0xff]
    %v1427 = vld [vmem:[#allocation2 + $0x2b68] sm:$0xff]
    %v1428 = vld [vmem:[#allocation2 + $0x2b70] sm:$0xff]
    %v1429 = vld [vmem:[#allocation2 + $0x2b78] sm:$0xff]
    %v1430 = vld [vmem:[#allocation2 + $0x2b80] sm:$0xff]
    %v1431 = vld [vmem:[#allocation2 + $0x2b88] sm:$0xff]
    %v1432 = vld [vmem:[#allocation2 + $0x2b90] sm:$0xff]
    %v1433 = vld [vmem:[#allocation2 + $0x2b98] sm:$0xff]
    %v1434 = vld [vmem:[#allocation2 + $0x2ba0] sm:$0xff]
    %v1435 = vld [vmem:[#allocation2 + $0x2ba8] sm:$0xff]
    %v1436 = vld [vmem:[#allocation2 + $0x2bb0] sm:$0xff]
    %v1437 = vld [vmem:[#allocation2 + $0x2bb8] sm:$0xff]
    %v1438 = vld [vmem:[#allocation2 + $0x2bc0] sm:$0xff]
    %v1439 = vld [vmem:[#allocation2 + $0x2bc8] sm:$0xff]
    %v1440 = vld [vmem:[#allocation2 + $0x2bd0] sm:$0xff]
    %v1441 = vld [vmem:[#allocation2 + $0x2bd8] sm:$0xff]
    %v1442 = vld [vmem:[#allocation2 + $0x2be0] sm:$0xff]
    %v1443 = vld [vmem:[#allocation2 + $0x2be8] sm:$0xff]
    %v1444 = vld [vmem:[#allocation2 + $0x2bf0] sm:$0xff]
    %v1445 = vld [vmem:[#allocation2 + $0x2bf8] sm:$0xff]
    %v1446 = vld [vmem:[#allocation2 + $0x2c00] sm:$0xff]
    %v1447 = vld [vmem:[#allocation2 + $0x2c08] sm:$0xff]
    %v1448 = vld [vmem:[#allocation2 + $0x2c10] sm:$0xff]
    %v1449 = vld [vmem:[#allocation2 + $0x2c18] sm:$0xff]
    %v1450 = vld [vmem:[#allocation2 + $0x2c20] sm:$0xff]
    %v1451 = vld [vmem:[#allocation2 + $0x2c28] sm:$0xff]
    %v1452 = vld [vmem:[#allocation2 + $0x2c30] sm:$0xff]
    %v1453 = vld [vmem:[#allocation2 + $0x2c38] sm:$0xff]
    %v1454 = vld [vmem:[#allocation2 + $0x2c40] sm:$0xff]
    %v1455 = vld [vmem:[#allocation2 + $0x2c48] sm:$0xff]
    %v1456 = vld [vmem:[#allocation2 + $0x2c50] sm:$0xff]
    %v1457 = vld [vmem:[#allocation2 + $0x2c58] sm:$0xff]
    %v1458 = vld [vmem:[#allocation2 + $0x2c60] sm:$0xff]
    %v1459 = vld [vmem:[#allocation2 + $0x2c68] sm:$0xff]
    %v1460 = vld [vmem:[#allocation2 + $0x2c70] sm:$0xff]
    %v1461 = vld [vmem:[#allocation2 + $0x2c78] sm:$0xff]
    %v1462 = vld [vmem:[#allocation2 + $0x2c80] sm:$0xff]
    %v1463 = vld [vmem:[#allocation2 + $0x2c88] sm:$0xff]
    %v1464 = vld [vmem:[#allocation2 + $0x2c90] sm:$0xff]
    %v1465 = vld [vmem:[#allocation2 + $0x2c98] sm:$0xff]
    %v1466 = vld [vmem:[#allocation2 + $0x2ca0] sm:$0xff]
    %v1467 = vld [vmem:[#allocation2 + $0x2ca8] sm:$0xff]
    %v1468 = vld [vmem:[#allocation2 + $0x2cb0] sm:$0xff]
    %v1469 = vld [vmem:[#allocation2 + $0x2cb8] sm:$0xff]
    %v1470 = vld [vmem:[#allocation2 + $0x2cc0] sm:$0xff]
    %v1471 = vld [vmem:[#allocation2 + $0x2cc8] sm:$0xff]
    %v1472 = vld [vmem:[#allocation2 + $0x2cd0] sm:$0xff]
    %v1473 = vld [vmem:[#allocation2 + $0x2cd8] sm:$0xff]
    %v1474 = vld [vmem:[#allocation2 + $0x2ce0] sm:$0xff]
    %v1475 = vld [vmem:[#allocation2 + $0x2ce8] sm:$0xff]
    %v1476 = vld [vmem:[#allocation2 + $0x2cf0] sm:$0xff]
    %v1477 = vld [vmem:[#allocation2 + $0x2cf8] sm:$0xff]
    %v1478 = vld [vmem:[#allocation2 + $0x2d00] sm:$0xff]
    %v1479 = vld [vmem:[#allocation2 + $0x2d08] sm:$0xff]
    %v1480 = vld [vmem:[#allocation2 + $0x2d10] sm:$0xff]
    %v1481 = vld [vmem:[#allocation2 + $0x2d18] sm:$0xff]
    %v1482 = vld [vmem:[#allocation2 + $0x2d20] sm:$0xff]
    %v1483 = vld [vmem:[#allocation2 + $0x2d28] sm:$0xff]
    %v1484 = vld [vmem:[#allocation2 + $0x2d30] sm:$0xff]
    %v1485 = vld [vmem:[#allocation2 + $0x2d38] sm:$0xff]
    %v1486 = vld [vmem:[#allocation2 + $0x2d40] sm:$0xff]
    %v1487 = vld [vmem:[#allocation2 + $0x2d48] sm:$0xff]
    %v1488 = vld [vmem:[#allocation2 + $0x2d50] sm:$0xff]
    %v1489 = vld [vmem:[#allocation2 + $0x2d58] sm:$0xff]
    %v1490 = vld [vmem:[#allocation2 + $0x2d60] sm:$0xff]
    %v1491 = vld [vmem:[#allocation2 + $0x2d68] sm:$0xff]
    %v1492 = vld [vmem:[#allocation2 + $0x2d70] sm:$0xff]
    %v1493 = vld [vmem:[#allocation2 + $0x2d78] sm:$0xff]
    %v1494 = vld [vmem:[#allocation2 + $0x2d80] sm:$0xff]
    %v1495 = vld [vmem:[#allocation2 + $0x2d88] sm:$0xff]
    %v1496 = vld [vmem:[#allocation2 + $0x2d90] sm:$0xff]
    %v1497 = vld [vmem:[#allocation2 + $0x2d98] sm:$0xff]
    %v1498 = vld [vmem:[#allocation2 + $0x2da0] sm:$0xff]
    %v1499 = vld [vmem:[#allocation2 + $0x2da8] sm:$0xff]
    %v1500 = vld [vmem:[#allocation2 + $0x2db0] sm:$0xff]
    %v1501 = vld [vmem:[#allocation2 + $0x2db8] sm:$0xff]
    %v1502 = vld [vmem:[#allocation2 + $0x2dc0] sm:$0xff]
    %v1503 = vld [vmem:[#allocation2 + $0x2dc8] sm:$0xff]
    %v1504 = vld [vmem:[#allocation2 + $0x2dd0] sm:$0xff]
    %v1505 = vld [vmem:[#allocation2 + $0x2dd8] sm:$0xff]
    %v1506 = vld [vmem:[#allocation2 + $0x2de0] sm:$0xff]
    %v1507 = vld [vmem:[#allocation2 + $0x2de8] sm:$0xff]
    %v1508 = vld [vmem:[#allocation2 + $0x2df0] sm:$0xff]
    %v1509 = vld [vmem:[#allocation2 + $0x2df8] sm:$0xff]
    %v1510 = vld [vmem:[#allocation2 + $0x2e00] sm:$0xff]
    %v1511 = vld [vmem:[#allocation2 + $0x2e08] sm:$0xff]
    %v1512 = vld [vmem:[#allocation2 + $0x2e10] sm:$0xff]
    %v1513 = vld [vmem:[#allocation2 + $0x2e18] sm:$0xff]
    %v1514 = vld [vmem:[#allocation2 + $0x2e20] sm:$0xff]
    %v1515 = vld [vmem:[#allocation2 + $0x2e28] sm:$0xff]
    %v1516 = vld [vmem:[#allocation2 + $0x2e30] sm:$0xff]
    %v1517 = vld [vmem:[#allocation2 + $0x2e38] sm:$0xff]
    %v1518 = vld [vmem:[#allocation2 + $0x2e40] sm:$0xff]
    %v1519 = vld [vmem:[#allocation2 + $0x2e48] sm:$0xff]
    %v1520 = vld [vmem:[#allocation2 + $0x2e50] sm:$0xff]
    %v1521 = vld [vmem:[#allocation2 + $0x2e58] sm:$0xff]
    %v1522 = vld [vmem:[#allocation2 + $0x2e60] sm:$0xff]
    %v1523 = vld [vmem:[#allocation2 + $0x2e68] sm:$0xff]
    %v1524 = vld [vmem:[#allocation2 + $0x2e70] sm:$0xff]
    %v1525 = vld [vmem:[#allocation2 + $0x2e78] sm:$0xff]
    %v1526 = vld [vmem:[#allocation2 + $0x2e80] sm:$0xff]
    %v1527 = vld [vmem:[#allocation2 + $0x2e88] sm:$0xff]
    %v1528 = vld [vmem:[#allocation2 + $0x2e90] sm:$0xff]
    %v1529 = vld [vmem:[#allocation2 + $0x2e98] sm:$0xff]
    %v1530 = vld [vmem:[#allocation2 + $0x2ea0] sm:$0xff]
    %v1531 = vld [vmem:[#allocation2 + $0x2ea8] sm:$0xff]
    %v1532 = vld [vmem:[#allocation2 + $0x2eb0] sm:$0xff]
    %v1533 = vld [vmem:[#allocation2 + $0x2eb8] sm:$0xff]
    %v1534 = vld [vmem:[#allocation2 + $0x2ec0] sm:$0xff]
    %v1535 = vld [vmem:[#allocation2 + $0x2ec8] sm:$0xff]
    %v1536 = vld [vmem:[#allocation2 + $0x2ed0] sm:$0xff]
    %v1537 = vld [vmem:[#allocation2 + $0x2ed8] sm:$0xff]
    %v1538 = vld [vmem:[#allocation2 + $0x2ee0] sm:$0xff]
    %v1539 = vld [vmem:[#allocation2 + $0x2ee8] sm:$0xff]
    %v1540 = vld [vmem:[#allocation2 + $0x2ef0] sm:$0xff]
    %v1541 = vld [vmem:[#allocation2 + $0x2ef8] sm:$0xff]
    %v1542 = vld [vmem:[#allocation2 + $0x2f00] sm:$0xff]
    %v1543 = vld [vmem:[#allocation2 + $0x2f08] sm:$0xff]
    %v1544 = vld [vmem:[#allocation2 + $0x2f10] sm:$0xff]
    %v1545 = vld [vmem:[#allocation2 + $0x2f18] sm:$0xff]
    %v1546 = vld [vmem:[#allocation2 + $0x2f20] sm:$0xff]
    %v1547 = vld [vmem:[#allocation2 + $0x2f28] sm:$0xff]
    %v1548 = vld [vmem:[#allocation2 + $0x2f30] sm:$0xff]
    %v1549 = vld [vmem:[#allocation2 + $0x2f38] sm:$0xff]
    %v1550 = vld [vmem:[#allocation2 + $0x2f40] sm:$0xff]
    %v1551 = vld [vmem:[#allocation2 + $0x2f48] sm:$0xff]
    %v1552 = vld [vmem:[#allocation2 + $0x2f50] sm:$0xff]
    %v1553 = vld [vmem:[#allocation2 + $0x2f58] sm:$0xff]
    %v1554 = vld [vmem:[#allocation2 + $0x2f60] sm:$0xff]
    %v1555 = vld [vmem:[#allocation2 + $0x2f68] sm:$0xff]
    %v1556 = vld [vmem:[#allocation2 + $0x2f70] sm:$0xff]
    %v1557 = vld [vmem:[#allocation2 + $0x2f78] sm:$0xff]
    %v1558 = vld [vmem:[#allocation2 + $0x2f80] sm:$0xff]
    %v1559 = vld [vmem:[#allocation2 + $0x2f88] sm:$0xff]
    %v1560 = vld [vmem:[#allocation2 + $0x2f90] sm:$0xff]
    %v1561 = vld [vmem:[#allocation2 + $0x2f98] sm:$0xff]
    %v1562 = vld [vmem:[#allocation2 + $0x2fa0] sm:$0xff]
    %v1563 = vld [vmem:[#allocation2 + $0x2fa8] sm:$0xff]
    %v1564 = vld [vmem:[#allocation2 + $0x2fb0] sm:$0xff]
    %v1565 = vld [vmem:[#allocation2 + $0x2fb8] sm:$0xff]
    %v1566 = vld [vmem:[#allocation2 + $0x2fc0] sm:$0xff]
    %v1567 = vld [vmem:[#allocation2 + $0x2fc8] sm:$0xff]
    %v1568 = vld [vmem:[#allocation2 + $0x2fd0] sm:$0xff]
    %v1569 = vld [vmem:[#allocation2 + $0x2fd8] sm:$0xff]
    %v1570 = vld [vmem:[#allocation2 + $0x2fe0] sm:$0xff]
    %v1571 = vld [vmem:[#allocation2 + $0x2fe8] sm:$0xff]
    %v1572 = vld [vmem:[#allocation2 + $0x2ff0] sm:$0xff]
    %v1573 = vld [vmem:[#allocation2 + $0x2ff8] sm:$0xff]
    %v1574 = vld [vmem:[#allocation2 + $0x3000] sm:$0xff]
    %v1575 = vld [vmem:[#allocation2 + $0x3008] sm:$0xff]
    %v1576 = vld [vmem:[#allocation2 + $0x3010] sm:$0xff]
    %v1577 = vld [vmem:[#allocation2 + $0x3018] sm:$0xff]
    %v1578 = vld [vmem:[#allocation2 + $0x3020] sm:$0xff]
    %v1579 = vld [vmem:[#allocation2 + $0x3028] sm:$0xff]
    %v1580 = vld [vmem:[#allocation2 + $0x3030] sm:$0xff]
    %v1581 = vld [vmem:[#allocation2 + $0x3038] sm:$0xff]
    %v1582 = vld [vmem:[#allocation2 + $0x3040] sm:$0xff]
    %v1583 = vld [vmem:[#allocation2 + $0x3048] sm:$0xff]
    %v1584 = vld [vmem:[#allocation2 + $0x3050] sm:$0xff]
    %v1585 = vld [vmem:[#allocation2 + $0x3058] sm:$0xff]
    %v1586 = vld [vmem:[#allocation2 + $0x3060] sm:$0xff]
    %v1587 = vld [vmem:[#allocation2 + $0x3068] sm:$0xff]
    %v1588 = vld [vmem:[#allocation2 + $0x3070] sm:$0xff]
    %v1589 = vld [vmem:[#allocation2 + $0x3078] sm:$0xff]
    %v1590 = vld [vmem:[#allocation2 + $0x3080] sm:$0xff]
    %v1591 = vld [vmem:[#allocation2 + $0x3088] sm:$0xff]
    %v1592 = vld [vmem:[#allocation2 + $0x3090] sm:$0xff]
    %v1593 = vld [vmem:[#allocation2 + $0x3098] sm:$0xff]
    %v1594 = vld [vmem:[#allocation2 + $0x30a0] sm:$0xff]
    %v1595 = vld [vmem:[#allocation2 + $0x30a8] sm:$0xff]
    %v1596 = vld [vmem:[#allocation2 + $0x30b0] sm:$0xff]
    %v1597 = vld [vmem:[#allocation2 + $0x30b8] sm:$0xff]
    %v1598 = vld [vmem:[#allocation2 + $0x30c0] sm:$0xff]
    %v1599 = vld [vmem:[#allocation2 + $0x30c8] sm:$0xff]
    %v1600 = vld [vmem:[#allocation2 + $0x30d0] sm:$0xff]
    %v1601 = vld [vmem:[#allocation2 + $0x30d8] sm:$0xff]
    %v1602 = vld [vmem:[#allocation2 + $0x30e0] sm:$0xff]
    %v1603 = vld [vmem:[#allocation2 + $0x30e8] sm:$0xff]
    %v1604 = vld [vmem:[#allocation2 + $0x30f0] sm:$0xff]
    %v1605 = vld [vmem:[#allocation2 + $0x30f8] sm:$0xff]
    %v1606 = vld [vmem:[#allocation2 + $0x3100] sm:$0xff]
    %v1607 = vld [vmem:[#allocation2 + $0x3108] sm:$0xff]
    %v1608 = vld [vmem:[#allocation2 + $0x3110] sm:$0xff]
    %v1609 = vld [vmem:[#allocation2 + $0x3118] sm:$0xff]
    %v1610 = vld [vmem:[#allocation2 + $0x3120] sm:$0xff]
    %v1611 = vld [vmem:[#allocation2 + $0x3128] sm:$0xff]
    %v1612 = vld [vmem:[#allocation2 + $0x3130] sm:$0xff]
    %v1613 = vld [vmem:[#allocation2 + $0x3138] sm:$0xff]
    %v1614 = vld [vmem:[#allocation2 + $0x3140] sm:$0xff]
    %v1615 = vld [vmem:[#allocation2 + $0x3148] sm:$0xff]
    %v1616 = vld [vmem:[#allocation2 + $0x3150] sm:$0xff]
    %v1617 = vld [vmem:[#allocation2 + $0x3158] sm:$0xff]
    %v1618 = vld [vmem:[#allocation2 + $0x3160] sm:$0xff]
    %v1619 = vld [vmem:[#allocation2 + $0x3168] sm:$0xff]
    %v1620 = vld [vmem:[#allocation2 + $0x3170] sm:$0xff]
    %v1621 = vld [vmem:[#allocation2 + $0x3178] sm:$0xff]
    %v1622 = vld [vmem:[#allocation2 + $0x3180] sm:$0xff]
    %v1623 = vld [vmem:[#allocation2 + $0x3188] sm:$0xff]
    %v1624 = vld [vmem:[#allocation2 + $0x3190] sm:$0xff]
    %v1625 = vld [vmem:[#allocation2 + $0x3198] sm:$0xff]
    %v1626 = vld [vmem:[#allocation2 + $0x31a0] sm:$0xff]
    %v1627 = vld [vmem:[#allocation2 + $0x31a8] sm:$0xff]
    %v1628 = vld [vmem:[#allocation2 + $0x31b0] sm:$0xff]
    %v1629 = vld [vmem:[#allocation2 + $0x31b8] sm:$0xff]
    %v1630 = vld [vmem:[#allocation2 + $0x31c0] sm:$0xff]
    %v1631 = vld [vmem:[#allocation2 + $0x31c8] sm:$0xff]
    %v1632 = vld [vmem:[#allocation2 + $0x31d0] sm:$0xff]
    %v1633 = vld [vmem:[#allocation2 + $0x31d8] sm:$0xff]
    %v1634 = vld [vmem:[#allocation2 + $0x31e0] sm:$0xff]
    %v1635 = vld [vmem:[#allocation2 + $0x31e8] sm:$0xff]
    %v1636 = vld [vmem:[#allocation2 + $0x31f0] sm:$0xff]
    %v1637 = vld [vmem:[#allocation2 + $0x31f8] sm:$0xff]
    %v1638 = vld [vmem:[#allocation2 + $0x3200] sm:$0xff]
    %v1639 = vld [vmem:[#allocation2 + $0x3208] sm:$0xff]
    %v1640 = vld [vmem:[#allocation2 + $0x3210] sm:$0xff]
    %v1641 = vld [vmem:[#allocation2 + $0x3218] sm:$0xff]
    %v1642 = vld [vmem:[#allocation2 + $0x3220] sm:$0xff]
    %v1643 = vld [vmem:[#allocation2 + $0x3228] sm:$0xff]
    %v1644 = vld [vmem:[#allocation2 + $0x3230] sm:$0xff]
    %v1645 = vld [vmem:[#allocation2 + $0x3238] sm:$0xff]
    %v1646 = vld [vmem:[#allocation2 + $0x3240] sm:$0xff]
    %v1647 = vld [vmem:[#allocation2 + $0x3248] sm:$0xff]
    %v1648 = vld [vmem:[#allocation2 + $0x3250] sm:$0xff]
    %v1649 = vld [vmem:[#allocation2 + $0x3258] sm:$0xff]
    %v1650 = vld [vmem:[#allocation2 + $0x3260] sm:$0xff]
    %v1651 = vld [vmem:[#allocation2 + $0x3268] sm:$0xff]
    %v1652 = vld [vmem:[#allocation2 + $0x3270] sm:$0xff]
    %v1653 = vld [vmem:[#allocation2 + $0x3278] sm:$0xff]
    %v1654 = vld [vmem:[#allocation2 + $0x3280] sm:$0xff]
    %v1655 = vld [vmem:[#allocation2 + $0x3288] sm:$0xff]
    %v1656 = vld [vmem:[#allocation2 + $0x3290] sm:$0xff]
    %v1657 = vld [vmem:[#allocation2 + $0x3298] sm:$0xff]
    %v1658 = vld [vmem:[#allocation2 + $0x32a0] sm:$0xff]
    %v1659 = vld [vmem:[#allocation2 + $0x32a8] sm:$0xff]
    %v1660 = vld [vmem:[#allocation2 + $0x32b0] sm:$0xff]
    %v1661 = vld [vmem:[#allocation2 + $0x32b8] sm:$0xff]
    %v1662 = vld [vmem:[#allocation2 + $0x32c0] sm:$0xff]
    %v1663 = vld [vmem:[#allocation2 + $0x32c8] sm:$0xff]
    %v1664 = vld [vmem:[#allocation2 + $0x32d0] sm:$0xff]
    %v1665 = vld [vmem:[#allocation2 + $0x32d8] sm:$0xff]
    %v1666 = vld [vmem:[#allocation2 + $0x32e0] sm:$0xff]
    %v1667 = vld [vmem:[#allocation2 + $0x32e8] sm:$0xff]
    %v1668 = vld [vmem:[#allocation2 + $0x32f0] sm:$0xff]
    %v1669 = vld [vmem:[#allocation2 + $0x32f8] sm:$0xff]
    %v1670 = vld [vmem:[#allocation2 + $0x3300] sm:$0xff]
    %v1671 = vld [vmem:[#allocation2 + $0x3308] sm:$0xff]
    %v1672 = vld [vmem:[#allocation2 + $0x3310] sm:$0xff]
    %v1673 = vld [vmem:[#allocation2 + $0x3318] sm:$0xff]
    %v1674 = vld [vmem:[#allocation2 + $0x3320] sm:$0xff]
    %v1675 = vld [vmem:[#allocation2 + $0x3328] sm:$0xff]
    %v1676 = vld [vmem:[#allocation2 + $0x3330] sm:$0xff]
    %v1677 = vld [vmem:[#allocation2 + $0x3338] sm:$0xff]
    %v1678 = vld [vmem:[#allocation2 + $0x3340] sm:$0xff]
    %v1679 = vld [vmem:[#allocation2 + $0x3348] sm:$0xff]
    %v1680 = vld [vmem:[#allocation2 + $0x3350] sm:$0xff]
    %v1681 = vld [vmem:[#allocation2 + $0x3358] sm:$0xff]
    %v1682 = vld [vmem:[#allocation2 + $0x3360] sm:$0xff]
    %v1683 = vld [vmem:[#allocation2 + $0x3368] sm:$0xff]
    %v1684 = vld [vmem:[#allocation2 + $0x3370] sm:$0xff]
    %v1685 = vld [vmem:[#allocation2 + $0x3378] sm:$0xff]
    %v1686 = vld [vmem:[#allocation2 + $0x3380] sm:$0xff]
    %v1687 = vld [vmem:[#allocation2 + $0x3388] sm:$0xff]
    %v1688 = vld [vmem:[#allocation2 + $0x3390] sm:$0xff]
    %v1689 = vld [vmem:[#allocation2 + $0x3398] sm:$0xff]
    %v1690 = vld [vmem:[#allocation2 + $0x33a0] sm:$0xff]
    %v1691 = vld [vmem:[#allocation2 + $0x33a8] sm:$0xff]
    %v1692 = vld [vmem:[#allocation2 + $0x33b0] sm:$0xff]
    %v1693 = vld [vmem:[#allocation2 + $0x33b8] sm:$0xff]
    %v1694 = vld [vmem:[#allocation2 + $0x33c0] sm:$0xff]
    %v1695 = vld [vmem:[#allocation2 + $0x33c8] sm:$0xff]
    %v1696 = vld [vmem:[#allocation2 + $0x33d0] sm:$0xff]
    %v1697 = vld [vmem:[#allocation2 + $0x33d8] sm:$0xff]
    %v1698 = vld [vmem:[#allocation2 + $0x33e0] sm:$0xff]
    %v1699 = vld [vmem:[#allocation2 + $0x33e8] sm:$0xff]
    %v1700 = vld [vmem:[#allocation2 + $0x33f0] sm:$0xff]
    %v1701 = vld [vmem:[#allocation2 + $0x33f8] sm:$0xff]
    %v1702 = vld [vmem:[#allocation2 + $0x3400] sm:$0xff]
    %v1703 = vld [vmem:[#allocation2 + $0x3408] sm:$0xff]
    %v1704 = vld [vmem:[#allocation2 + $0x3410] sm:$0xff]
    %v1705 = vld [vmem:[#allocation2 + $0x3418] sm:$0xff]
    %v1706 = vld [vmem:[#allocation2 + $0x3420] sm:$0xff]
    %v1707 = vld [vmem:[#allocation2 + $0x3428] sm:$0xff]
    %v1708 = vld [vmem:[#allocation2 + $0x3430] sm:$0xff]
    %v1709 = vld [vmem:[#allocation2 + $0x3438] sm:$0xff]
    %v1710 = vld [vmem:[#allocation2 + $0x3440] sm:$0xff]
    %v1711 = vld [vmem:[#allocation2 + $0x3448] sm:$0xff]
    %v1712 = vld [vmem:[#allocation2 + $0x3450] sm:$0xff]
    %v1713 = vld [vmem:[#allocation2 + $0x3458] sm:$0xff]
    %v1714 = vld [vmem:[#allocation2 + $0x3460] sm:$0xff]
    %v1715 = vld [vmem:[#allocation2 + $0x3468] sm:$0xff]
    %v1716 = vld [vmem:[#allocation2 + $0x3470] sm:$0xff]
    %v1717 = vld [vmem:[#allocation2 + $0x3478] sm:$0xff]
    %v1718 = vld [vmem:[#allocation2 + $0x3480] sm:$0xff]
    %v1719 = vld [vmem:[#allocation2 + $0x3488] sm:$0xff]
    %v1720 = vld [vmem:[#allocation2 + $0x3490] sm:$0xff]
    %v1721 = vld [vmem:[#allocation2 + $0x3498] sm:$0xff]
    %v1722 = vld [vmem:[#allocation2 + $0x34a0] sm:$0xff]
    %v1723 = vld [vmem:[#allocation2 + $0x34a8] sm:$0xff]
    %v1724 = vld [vmem:[#allocation2 + $0x34b0] sm:$0xff]
    %v1725 = vld [vmem:[#allocation2 + $0x34b8] sm:$0xff]
    %v1726 = vld [vmem:[#allocation2 + $0x34c0] sm:$0xff]
    %v1727 = vld [vmem:[#allocation2 + $0x34c8] sm:$0xff]
    %v1728 = vld [vmem:[#allocation2 + $0x34d0] sm:$0xff]
    %v1729 = vld [vmem:[#allocation2 + $0x34d8] sm:$0xff]
    %v1730 = vld [vmem:[#allocation2 + $0x34e0] sm:$0xff]
    %v1731 = vld [vmem:[#allocation2 + $0x34e8] sm:$0xff]
    %v1732 = vld [vmem:[#allocation2 + $0x34f0] sm:$0xff]
    %v1733 = vld [vmem:[#allocation2 + $0x34f8] sm:$0xff]
    %v1734 = vld [vmem:[#allocation2 + $0x3500] sm:$0xff]
    %v1735 = vld [vmem:[#allocation2 + $0x3508] sm:$0xff]
    %v1736 = vld [vmem:[#allocation2 + $0x3510] sm:$0xff]
    %v1737 = vld [vmem:[#allocation2 + $0x3518] sm:$0xff]
    %v1738 = vld [vmem:[#allocation2 + $0x3520] sm:$0xff]
    %v1739 = vld [vmem:[#allocation2 + $0x3528] sm:$0xff]
    %v1740 = vld [vmem:[#allocation2 + $0x3530] sm:$0xff]
    %v1741 = vld [vmem:[#allocation2 + $0x3538] sm:$0xff]
    %v1742 = vld [vmem:[#allocation2 + $0x3540] sm:$0xff]
    %v1743 = vld [vmem:[#allocation2 + $0x3548] sm:$0xff]
    %v1744 = vld [vmem:[#allocation2 + $0x3550] sm:$0xff]
    %v1745 = vld [vmem:[#allocation2 + $0x3558] sm:$0xff]
    %v1746 = vld [vmem:[#allocation2 + $0x3560] sm:$0xff]
    %v1747 = vld [vmem:[#allocation2 + $0x3568] sm:$0xff]
    %v1748 = vld [vmem:[#allocation2 + $0x3570] sm:$0xff]
    %v1749 = vld [vmem:[#allocation2 + $0x3578] sm:$0xff]
    %v1750 = vld [vmem:[#allocation2 + $0x3580] sm:$0xff]
    %v1751 = vld [vmem:[#allocation2 + $0x3588] sm:$0xff]
    %v1752 = vld [vmem:[#allocation2 + $0x3590] sm:$0xff]
    %v1753 = vld [vmem:[#allocation2 + $0x3598] sm:$0xff]
    %v1754 = vld [vmem:[#allocation2 + $0x35a0] sm:$0xff]
    %v1755 = vld [vmem:[#allocation2 + $0x35a8] sm:$0xff]
    %v1756 = vld [vmem:[#allocation2 + $0x35b0] sm:$0xff]
    %v1757 = vld [vmem:[#allocation2 + $0x35b8] sm:$0xff]
    %v1758 = vld [vmem:[#allocation2 + $0x35c0] sm:$0xff]
    %v1759 = vld [vmem:[#allocation2 + $0x35c8] sm:$0xff]
    %v1760 = vld [vmem:[#allocation2 + $0x35d0] sm:$0xff]
    %v1761 = vld [vmem:[#allocation2 + $0x35d8] sm:$0xff]
    %v1762 = vld [vmem:[#allocation2 + $0x35e0] sm:$0xff]
    %v1763 = vld [vmem:[#allocation2 + $0x35e8] sm:$0xff]
    %v1764 = vld [vmem:[#allocation2 + $0x35f0] sm:$0xff]
    %v1765 = vld [vmem:[#allocation2 + $0x35f8] sm:$0xff]
    %v1766 = vld [vmem:[#allocation2 + $0x3600] sm:$0xff]
    %v1767 = vld [vmem:[#allocation2 + $0x3608] sm:$0xff]
    %v1768 = vld [vmem:[#allocation2 + $0x3610] sm:$0xff]
    %v1769 = vld [vmem:[#allocation2 + $0x3618] sm:$0xff]
    %v1770 = vld [vmem:[#allocation2 + $0x3620] sm:$0xff]
    %v1771 = vld [vmem:[#allocation2 + $0x3628] sm:$0xff]
    %v1772 = vld [vmem:[#allocation2 + $0x3630] sm:$0xff]
    %v1773 = vld [vmem:[#allocation2 + $0x3638] sm:$0xff]
    %v1774 = vld [vmem:[#allocation2 + $0x3640] sm:$0xff]
    %v1775 = vld [vmem:[#allocation2 + $0x3648] sm:$0xff]
    %v1776 = vld [vmem:[#allocation2 + $0x3650] sm:$0xff]
    %v1777 = vld [vmem:[#allocation2 + $0x3658] sm:$0xff]
    %v1778 = vld [vmem:[#allocation2 + $0x3660] sm:$0xff]
    %v1779 = vld [vmem:[#allocation2 + $0x3668] sm:$0xff]
    %v1780 = vld [vmem:[#allocation2 + $0x3670] sm:$0xff]
    %v1781 = vld [vmem:[#allocation2 + $0x3678] sm:$0xff]
    %v1782 = vld [vmem:[#allocation2 + $0x3680] sm:$0xff]
    %v1783 = vld [vmem:[#allocation2 + $0x3688] sm:$0xff]
    %v1784 = vld [vmem:[#allocation2 + $0x3690] sm:$0xff]
    %v1785 = vld [vmem:[#allocation2 + $0x3698] sm:$0xff]
    %v1786 = vld [vmem:[#allocation2 + $0x36a0] sm:$0xff]
    %v1787 = vld [vmem:[#allocation2 + $0x36a8] sm:$0xff]
    %v1788 = vld [vmem:[#allocation2 + $0x36b0] sm:$0xff]
    %v1789 = vld [vmem:[#allocation2 + $0x36b8] sm:$0xff]
    %v1790 = vld [vmem:[#allocation2 + $0x36c0] sm:$0xff]
    %v1791 = vld [vmem:[#allocation2 + $0x36c8] sm:$0xff]
    %v1792 = vld [vmem:[#allocation2 + $0x36d0] sm:$0xff]
    %v1793 = vld [vmem:[#allocation2 + $0x36d8] sm:$0xff]
    %v1794 = vld [vmem:[#allocation2 + $0x36e0] sm:$0xff]
    %v1795 = vld [vmem:[#allocation2 + $0x36e8] sm:$0xff]
    %v1796 = vld [vmem:[#allocation2 + $0x36f0] sm:$0xff]
    %v1797 = vld [vmem:[#allocation2 + $0x36f8] sm:$0xff]
    %v1798 = vld [vmem:[#allocation2 + $0x3700] sm:$0xff]
    %v1799 = vld [vmem:[#allocation2 + $0x3708] sm:$0xff]
    %v1800 = vld [vmem:[#allocation2 + $0x3710] sm:$0xff]
    %v1801 = vld [vmem:[#allocation2 + $0x3718] sm:$0xff]
    %v1802 = vld [vmem:[#allocation2 + $0x3720] sm:$0xff]
    %v1803 = vld [vmem:[#allocation2 + $0x3728] sm:$0xff]
    %v1804 = vld [vmem:[#allocation2 + $0x3730] sm:$0xff]
    %v1805 = vld [vmem:[#allocation2 + $0x3738] sm:$0xff]
    %v1806 = vld [vmem:[#allocation2 + $0x3740] sm:$0xff]
    %v1807 = vld [vmem:[#allocation2 + $0x3748] sm:$0xff]
    %v1808 = vld [vmem:[#allocation2 + $0x3750] sm:$0xff]
    %v1809 = vld [vmem:[#allocation2 + $0x3758] sm:$0xff]
    %v1810 = vld [vmem:[#allocation2 + $0x3760] sm:$0xff]
    %v1811 = vld [vmem:[#allocation2 + $0x3768] sm:$0xff]
    %v1812 = vld [vmem:[#allocation2 + $0x3770] sm:$0xff]
    %v1813 = vld [vmem:[#allocation2 + $0x3778] sm:$0xff]
    %v1814 = vld [vmem:[#allocation2 + $0x3780] sm:$0xff]
    %v1815 = vld [vmem:[#allocation2 + $0x3788] sm:$0xff]
    %v1816 = vld [vmem:[#allocation2 + $0x3790] sm:$0xff]
    %v1817 = vld [vmem:[#allocation2 + $0x3798] sm:$0xff]
    %v1818 = vld [vmem:[#allocation2 + $0x37a0] sm:$0xff]
    %v1819 = vld [vmem:[#allocation2 + $0x37a8] sm:$0xff]
    %v1820 = vld [vmem:[#allocation2 + $0x37b0] sm:$0xff]
    %v1821 = vld [vmem:[#allocation2 + $0x37b8] sm:$0xff]
    %v1822 = vld [vmem:[#allocation2 + $0x37c0] sm:$0xff]
    %v1823 = vld [vmem:[#allocation2 + $0x37c8] sm:$0xff]
    %v1824 = vld [vmem:[#allocation2 + $0x37d0] sm:$0xff]
    %v1825 = vld [vmem:[#allocation2 + $0x37d8] sm:$0xff]
    %v1826 = vld [vmem:[#allocation2 + $0x37e0] sm:$0xff]
    %v1827 = vld [vmem:[#allocation2 + $0x37e8] sm:$0xff]
    %v1828 = vld [vmem:[#allocation2 + $0x37f0] sm:$0xff]
    %v1829 = vld [vmem:[#allocation2 + $0x37f8] sm:$0xff]
    %v1830 = vld [vmem:[#allocation2 + $0x3800] sm:$0xff]
    %v1831 = vld [vmem:[#allocation2 + $0x3808] sm:$0xff]
    %v1832 = vld [vmem:[#allocation2 + $0x3810] sm:$0xff]
    %v1833 = vld [vmem:[#allocation2 + $0x3818] sm:$0xff]
    %v1834 = vld [vmem:[#allocation2 + $0x3820] sm:$0xff]
    %v1835 = vld [vmem:[#allocation2 + $0x3828] sm:$0xff]
    %v1836 = vld [vmem:[#allocation2 + $0x3830] sm:$0xff]
    %v1837 = vld [vmem:[#allocation2 + $0x3838] sm:$0xff]
    %v1838 = vld [vmem:[#allocation2 + $0x3840] sm:$0xff]
    %v1839 = vld [vmem:[#allocation2 + $0x3848] sm:$0xff]
    %v1840 = vld [vmem:[#allocation2 + $0x3850] sm:$0xff]
    %v1841 = vld [vmem:[#allocation2 + $0x3858] sm:$0xff]
    %v1842 = vld [vmem:[#allocation2 + $0x3860] sm:$0xff]
    %v1843 = vld [vmem:[#allocation2 + $0x3868] sm:$0xff]
    %v1844 = vld [vmem:[#allocation2 + $0x3870] sm:$0xff]
    %v1845 = vld [vmem:[#allocation2 + $0x3878] sm:$0xff]
    %v1846 = vld [vmem:[#allocation2 + $0x3880] sm:$0xff]
    %v1847 = vld [vmem:[#allocation2 + $0x3888] sm:$0xff]
    %v1848 = vld [vmem:[#allocation2 + $0x3890] sm:$0xff]
    %v1849 = vld [vmem:[#allocation2 + $0x3898] sm:$0xff]
    %v1850 = vld [vmem:[#allocation2 + $0x38a0] sm:$0xff]
    %v1851 = vld [vmem:[#allocation2 + $0x38a8] sm:$0xff]
    %v1852 = vld [vmem:[#allocation2 + $0x38b0] sm:$0xff]
    %v1853 = vld [vmem:[#allocation2 + $0x38b8] sm:$0xff]
    %v1854 = vld [vmem:[#allocation2 + $0x38c0] sm:$0xff]
    %v1855 = vld [vmem:[#allocation2 + $0x38c8] sm:$0xff]
    %v1856 = vld [vmem:[#allocation2 + $0x38d0] sm:$0xff]
    %v1857 = vld [vmem:[#allocation2 + $0x38d8] sm:$0xff]
    %v1858 = vld [vmem:[#allocation2 + $0x38e0] sm:$0xff]
    %v1859 = vld [vmem:[#allocation2 + $0x38e8] sm:$0xff]
    %v1860 = vld [vmem:[#allocation2 + $0x38f0] sm:$0xff]
    %v1861 = vld [vmem:[#allocation2 + $0x38f8] sm:$0xff]
    %v1862 = vld [vmem:[#allocation2 + $0x3900] sm:$0xff]
    %v1863 = vld [vmem:[#allocation2 + $0x3908] sm:$0xff]
    %v1864 = vld [vmem:[#allocation2 + $0x3910] sm:$0xff]
    %v1865 = vld [vmem:[#allocation2 + $0x3918] sm:$0xff]
    %v1866 = vld [vmem:[#allocation2 + $0x3920] sm:$0xff]
    %v1867 = vld [vmem:[#allocation2 + $0x3928] sm:$0xff]
    %v1868 = vld [vmem:[#allocation2 + $0x3930] sm:$0xff]
    %v1869 = vld [vmem:[#allocation2 + $0x3938] sm:$0xff]
    %v1870 = vld [vmem:[#allocation2 + $0x3940] sm:$0xff]
    %v1871 = vld [vmem:[#allocation2 + $0x3948] sm:$0xff]
    %v1872 = vld [vmem:[#allocation2 + $0x3950] sm:$0xff]
    %v1873 = vld [vmem:[#allocation2 + $0x3958] sm:$0xff]
    %v1874 = vld [vmem:[#allocation2 + $0x3960] sm:$0xff]
    %v1875 = vld [vmem:[#allocation2 + $0x3968] sm:$0xff]
    %v1876 = vld [vmem:[#allocation2 + $0x3970] sm:$0xff]
    %v1877 = vld [vmem:[#allocation2 + $0x3978] sm:$0xff]
    %v1878 = vld [vmem:[#allocation2 + $0x3980] sm:$0xff]
    %v1879 = vld [vmem:[#allocation2 + $0x3988] sm:$0xff]
    %v1880 = vld [vmem:[#allocation2 + $0x3990] sm:$0xff]
    %v1881 = vld [vmem:[#allocation2 + $0x3998] sm:$0xff]
    %v1882 = vld [vmem:[#allocation2 + $0x39a0] sm:$0xff]
    %v1883 = vld [vmem:[#allocation2 + $0x39a8] sm:$0xff]
    %v1884 = vld [vmem:[#allocation2 + $0x39b0] sm:$0xff]
    %v1885 = vld [vmem:[#allocation2 + $0x39b8] sm:$0xff]
    %v1886 = vld [vmem:[#allocation2 + $0x39c0] sm:$0xff]
    %v1887 = vld [vmem:[#allocation2 + $0x39c8] sm:$0xff]
    %v1888 = vld [vmem:[#allocation2 + $0x39d0] sm:$0xff]
    %v1889 = vld [vmem:[#allocation2 + $0x39d8] sm:$0xff]
    %v1890 = vld [vmem:[#allocation2 + $0x39e0] sm:$0xff]
    %v1891 = vld [vmem:[#allocation2 + $0x39e8] sm:$0xff]
    %v1892 = vld [vmem:[#allocation2 + $0x39f0] sm:$0xff]
    %v1893 = vld [vmem:[#allocation2 + $0x39f8] sm:$0xff]
    %v1894 = vld [vmem:[#allocation2 + $0x3a00] sm:$0xff]
    %v1895 = vld [vmem:[#allocation2 + $0x3a08] sm:$0xff]
    %v1896 = vld [vmem:[#allocation2 + $0x3a10] sm:$0xff]
    %v1897 = vld [vmem:[#allocation2 + $0x3a18] sm:$0xff]
    %v1898 = vld [vmem:[#allocation2 + $0x3a20] sm:$0xff]
    %v1899 = vld [vmem:[#allocation2 + $0x3a28] sm:$0xff]
    %v1900 = vld [vmem:[#allocation2 + $0x3a30] sm:$0xff]
    %v1901 = vld [vmem:[#allocation2 + $0x3a38] sm:$0xff]
    %v1902 = vld [vmem:[#allocation2 + $0x3a40] sm:$0xff]
    %v1903 = vld [vmem:[#allocation2 + $0x3a48] sm:$0xff]
    %v1904 = vld [vmem:[#allocation2 + $0x3a50] sm:$0xff]
    %v1905 = vld [vmem:[#allocation2 + $0x3a58] sm:$0xff]
    %v1906 = vld [vmem:[#allocation2 + $0x3a60] sm:$0xff]
    %v1907 = vld [vmem:[#allocation2 + $0x3a68] sm:$0xff]
    %v1908 = vld [vmem:[#allocation2 + $0x3a70] sm:$0xff]
    %v1909 = vld [vmem:[#allocation2 + $0x3a78] sm:$0xff]
    %v1910 = vld [vmem:[#allocation2 + $0x3a80] sm:$0xff]
    %v1911 = vld [vmem:[#allocation2 + $0x3a88] sm:$0xff]
    %v1912 = vld [vmem:[#allocation2 + $0x3a90] sm:$0xff]
    %v1913 = vld [vmem:[#allocation2 + $0x3a98] sm:$0xff]
    %v1914 = vld [vmem:[#allocation2 + $0x3aa0] sm:$0xff]
    %v1915 = vld [vmem:[#allocation2 + $0x3aa8] sm:$0xff]
    %v1916 = vld [vmem:[#allocation2 + $0x3ab0] sm:$0xff]
    %v1917 = vld [vmem:[#allocation2 + $0x3ab8] sm:$0xff]
    %v1918 = vld [vmem:[#allocation2 + $0x3ac0] sm:$0xff]
    %v1919 = vld [vmem:[#allocation2 + $0x3ac8] sm:$0xff]
    %v1920 = vld [vmem:[#allocation2 + $0x3ad0] sm:$0xff]
    %v1921 = vld [vmem:[#allocation2 + $0x3ad8] sm:$0xff]
    %v1922 = vld [vmem:[#allocation2 + $0x3ae0] sm:$0xff]
    %v1923 = vld [vmem:[#allocation2 + $0x3ae8] sm:$0xff]
    %v1924 = vld [vmem:[#allocation2 + $0x3af0] sm:$0xff]
    %v1925 = vld [vmem:[#allocation2 + $0x3af8] sm:$0xff]
    %v1926 = vld [vmem:[#allocation2 + $0x3b00] sm:$0xff]
    %v1927 = vld [vmem:[#allocation2 + $0x3b08] sm:$0xff]
    %v1928 = vld [vmem:[#allocation2 + $0x3b10] sm:$0xff]
    %v1929 = vld [vmem:[#allocation2 + $0x3b18] sm:$0xff]
    %v1930 = vld [vmem:[#allocation2 + $0x3b20] sm:$0xff]
    %v1931 = vld [vmem:[#allocation2 + $0x3b28] sm:$0xff]
    %v1932 = vld [vmem:[#allocation2 + $0x3b30] sm:$0xff]
    %v1933 = vld [vmem:[#allocation2 + $0x3b38] sm:$0xff]
    %v1934 = vld [vmem:[#allocation2 + $0x3b40] sm:$0xff]
    %v1935 = vld [vmem:[#allocation2 + $0x3b48] sm:$0xff]
    %v1936 = vld [vmem:[#allocation2 + $0x3b50] sm:$0xff]
    %v1937 = vld [vmem:[#allocation2 + $0x3b58] sm:$0xff]
    %v1938 = vld [vmem:[#allocation2 + $0x3b60] sm:$0xff]
    %v1939 = vld [vmem:[#allocation2 + $0x3b68] sm:$0xff]
    %v1940 = vld [vmem:[#allocation2 + $0x3b70] sm:$0xff]
    %v1941 = vld [vmem:[#allocation2 + $0x3b78] sm:$0xff]
    %v1942 = vld [vmem:[#allocation2 + $0x3b80] sm:$0xff]
    %v1943 = vld [vmem:[#allocation2 + $0x3b88] sm:$0xff]
    %v1944 = vld [vmem:[#allocation2 + $0x3b90] sm:$0xff]
    %v1945 = vld [vmem:[#allocation2 + $0x3b98] sm:$0xff]
    %v1946 = vld [vmem:[#allocation2 + $0x3ba0] sm:$0xff]
    %v1947 = vld [vmem:[#allocation2 + $0x3ba8] sm:$0xff]
    %v1948 = vld [vmem:[#allocation2 + $0x3bb0] sm:$0xff]
    %v1949 = vld [vmem:[#allocation2 + $0x3bb8] sm:$0xff]
    %v1950 = vld [vmem:[#allocation2 + $0x3bc0] sm:$0xff]
    %v1951 = vld [vmem:[#allocation2 + $0x3bc8] sm:$0xff]
    %v1952 = vld [vmem:[#allocation2 + $0x3bd0] sm:$0xff]
    %v1953 = vld [vmem:[#allocation2 + $0x3bd8] sm:$0xff]
    %v1954 = vld [vmem:[#allocation2 + $0x3be0] sm:$0xff]
    %v1955 = vld [vmem:[#allocation2 + $0x3be8] sm:$0xff]
    %v1956 = vld [vmem:[#allocation2 + $0x3bf0] sm:$0xff]
    %v1957 = vld [vmem:[#allocation2 + $0x3bf8] sm:$0xff]
    %v1958 = vld [vmem:[#allocation2 + $0x3c00] sm:$0xff]
    %v1959 = vld [vmem:[#allocation2 + $0x3c08] sm:$0xff]
    %v1960 = vld [vmem:[#allocation2 + $0x3c10] sm:$0xff]
    %v1961 = vld [vmem:[#allocation2 + $0x3c18] sm:$0xff]
    %v1962 = vld [vmem:[#allocation2 + $0x3c20] sm:$0xff]
    %v1963 = vld [vmem:[#allocation2 + $0x3c28] sm:$0xff]
    %v1964 = vld [vmem:[#allocation2 + $0x3c30] sm:$0xff]
    %v1965 = vld [vmem:[#allocation2 + $0x3c38] sm:$0xff]
    %v1966 = vld [vmem:[#allocation2 + $0x3c40] sm:$0xff]
    %v1967 = vld [vmem:[#allocation2 + $0x3c48] sm:$0xff]
    %v1968 = vld [vmem:[#allocation2 + $0x3c50] sm:$0xff]
    %v1969 = vld [vmem:[#allocation2 + $0x3c58] sm:$0xff]
    %v1970 = vld [vmem:[#allocation2 + $0x3c60] sm:$0xff]
    %v1971 = vld [vmem:[#allocation2 + $0x3c68] sm:$0xff]
    %v1972 = vld [vmem:[#allocation2 + $0x3c70] sm:$0xff]
    %v1973 = vld [vmem:[#allocation2 + $0x3c78] sm:$0xff]
    %v1974 = vld [vmem:[#allocation2 + $0x3c80] sm:$0xff]
    %v1975 = vld [vmem:[#allocation2 + $0x3c88] sm:$0xff]
    %v1976 = vld [vmem:[#allocation2 + $0x3c90] sm:$0xff]
    %v1977 = vld [vmem:[#allocation2 + $0x3c98] sm:$0xff]
    %v1978 = vld [vmem:[#allocation2 + $0x3ca0] sm:$0xff]
    %v1979 = vld [vmem:[#allocation2 + $0x3ca8] sm:$0xff]
    %v1980 = vld [vmem:[#allocation2 + $0x3cb0] sm:$0xff]
    %v1981 = vld [vmem:[#allocation2 + $0x3cb8] sm:$0xff]
    %v1982 = vld [vmem:[#allocation2 + $0x3cc0] sm:$0xff]
    %v1983 = vld [vmem:[#allocation2 + $0x3cc8] sm:$0xff]
    %v1984 = vld [vmem:[#allocation2 + $0x3cd0] sm:$0xff]
    %v1985 = vld [vmem:[#allocation2 + $0x3cd8] sm:$0xff]
    %v1986 = vld [vmem:[#allocation2 + $0x3ce0] sm:$0xff]
    %v1987 = vld [vmem:[#allocation2 + $0x3ce8] sm:$0xff]
    %v1988 = vld [vmem:[#allocation2 + $0x3cf0] sm:$0xff]
    %v1989 = vld [vmem:[#allocation2 + $0x3cf8] sm:$0xff]
    %v1990 = vld [vmem:[#allocation2 + $0x3d00] sm:$0xff]
    %v1991 = vld [vmem:[#allocation2 + $0x3d08] sm:$0xff]
    %v1992 = vld [vmem:[#allocation2 + $0x3d10] sm:$0xff]
    %v1993 = vld [vmem:[#allocation2 + $0x3d18] sm:$0xff]
    %v1994 = vld [vmem:[#allocation2 + $0x3d20] sm:$0xff]
    %v1995 = vld [vmem:[#allocation2 + $0x3d28] sm:$0xff]
    %v1996 = vld [vmem:[#allocation2 + $0x3d30] sm:$0xff]
    %v1997 = vld [vmem:[#allocation2 + $0x3d38] sm:$0xff]
    %v1998 = vld [vmem:[#allocation2 + $0x3d40] sm:$0xff]
    %v1999 = vld [vmem:[#allocation2 + $0x3d48] sm:$0xff]
    %v2000 = vld [vmem:[#allocation2 + $0x3d50] sm:$0xff]
    %v2001 = vld [vmem:[#allocation2 + $0x3d58] sm:$0xff]
    %v2002 = vld [vmem:[#allocation2 + $0x3d60] sm:$0xff]
    %v2003 = vld [vmem:[#allocation2 + $0x3d68] sm:$0xff]
    %v2004 = vld [vmem:[#allocation2 + $0x3d70] sm:$0xff]
    %v2005 = vld [vmem:[#allocation2 + $0x3d78] sm:$0xff]
    %v2006 = vld [vmem:[#allocation2 + $0x3d80] sm:$0xff]
    %v2007 = vld [vmem:[#allocation2 + $0x3d88] sm:$0xff]
    %v2008 = vld [vmem:[#allocation2 + $0x3d90] sm:$0xff]
    %v2009 = vld [vmem:[#allocation2 + $0x3d98] sm:$0xff]
    %v2010 = vld [vmem:[#allocation2 + $0x3da0] sm:$0xff]
    %v2011 = vld [vmem:[#allocation2 + $0x3da8] sm:$0xff]
    %v2012 = vld [vmem:[#allocation2 + $0x3db0] sm:$0xff]
    %v2013 = vld [vmem:[#allocation2 + $0x3db8] sm:$0xff]
    %v2014 = vld [vmem:[#allocation2 + $0x3dc0] sm:$0xff]
    %v2015 = vld [vmem:[#allocation2 + $0x3dc8] sm:$0xff]
    %v2016 = vld [vmem:[#allocation2 + $0x3dd0] sm:$0xff]
    %v2017 = vld [vmem:[#allocation2 + $0x3dd8] sm:$0xff]
    %v2018 = vld [vmem:[#allocation2 + $0x3de0] sm:$0xff]
    %v2019 = vld [vmem:[#allocation2 + $0x3de8] sm:$0xff]
    %v2020 = vld [vmem:[#allocation2 + $0x3df0] sm:$0xff]
    %v2021 = vld [vmem:[#allocation2 + $0x3df8] sm:$0xff]
    %v2022 = vld [vmem:[#allocation2 + $0x3e00] sm:$0xff]
    %v2023 = vld [vmem:[#allocation2 + $0x3e08] sm:$0xff]
    %v2024 = vld [vmem:[#allocation2 + $0x3e10] sm:$0xff]
    %v2025 = vld [vmem:[#allocation2 + $0x3e18] sm:$0xff]
    %v2026 = vld [vmem:[#allocation2 + $0x3e20] sm:$0xff]
    %v2027 = vld [vmem:[#allocation2 + $0x3e28] sm:$0xff]
    %v2028 = vld [vmem:[#allocation2 + $0x3e30] sm:$0xff]
    %v2029 = vld [vmem:[#allocation2 + $0x3e38] sm:$0xff]
    %v2030 = vld [vmem:[#allocation2 + $0x3e40] sm:$0xff]
    %v2031 = vld [vmem:[#allocation2 + $0x3e48] sm:$0xff]
    %v2032 = vld [vmem:[#allocation2 + $0x3e50] sm:$0xff]
    %v2033 = vld [vmem:[#allocation2 + $0x3e58] sm:$0xff]
    %v2034 = vld [vmem:[#allocation2 + $0x3e60] sm:$0xff]
    %v2035 = vld [vmem:[#allocation2 + $0x3e68] sm:$0xff]
    %v2036 = vld [vmem:[#allocation2 + $0x3e70] sm:$0xff]
    %v2037 = vld [vmem:[#allocation2 + $0x3e78] sm:$0xff]
    %v2038 = vld [vmem:[#allocation2 + $0x3e80] sm:$0xff]
    %v2039 = vld [vmem:[#allocation2 + $0x3e88] sm:$0xff]
    %v2040 = vld [vmem:[#allocation2 + $0x3e90] sm:$0xff]
    %v2041 = vld [vmem:[#allocation2 + $0x3e98] sm:$0xff]
    %v2042 = vld [vmem:[#allocation2 + $0x3ea0] sm:$0xff]
    %v2043 = vld [vmem:[#allocation2 + $0x3ea8] sm:$0xff]
    %v2044 = vld [vmem:[#allocation2 + $0x3eb0] sm:$0xff]
    %v2045 = vld [vmem:[#allocation2 + $0x3eb8] sm:$0xff]
    %v2046 = vld [vmem:[#allocation2 + $0x3ec0] sm:$0xff]
    %v2047 = vld [vmem:[#allocation2 + $0x3ec8] sm:$0xff]
    %v2048 = vld [vmem:[#allocation2 + $0x3ed0] sm:$0xff]
    %v2049 = vld [vmem:[#allocation2 + $0x3ed8] sm:$0xff]
    %v2050 = vld [vmem:[#allocation2 + $0x3ee0] sm:$0xff]
    %v2051 = vld [vmem:[#allocation2 + $0x3ee8] sm:$0xff]
    %v2052 = vld [vmem:[#allocation2 + $0x3ef0] sm:$0xff]
    %v2053 = vld [vmem:[#allocation2 + $0x3ef8] sm:$0xff]
    %v2054 = vld [vmem:[#allocation2 + $0x3f00] sm:$0xff]
    %v2055 = vld [vmem:[#allocation2 + $0x3f08] sm:$0xff]
    %v2056 = vld [vmem:[#allocation2 + $0x3f10] sm:$0xff]
    %v2057 = vld [vmem:[#allocation2 + $0x3f18] sm:$0xff]
    %v2058 = vld [vmem:[#allocation2 + $0x3f20] sm:$0xff]
    %v2059 = vld [vmem:[#allocation2 + $0x3f28] sm:$0xff]
    %v2060 = vld [vmem:[#allocation2 + $0x3f30] sm:$0xff]
    %v2061 = vld [vmem:[#allocation2 + $0x3f38] sm:$0xff]
    %v2062 = vld [vmem:[#allocation2 + $0x3f40] sm:$0xff]
    %v2063 = vld [vmem:[#allocation2 + $0x3f48] sm:$0xff]
    %v2064 = vld [vmem:[#allocation2 + $0x3f50] sm:$0xff]
    %v2065 = vld [vmem:[#allocation2 + $0x3f58] sm:$0xff]
    %v2066 = vld [vmem:[#allocation2 + $0x3f60] sm:$0xff]
    %v2067 = vld [vmem:[#allocation2 + $0x3f68] sm:$0xff]
    %v2068 = vld [vmem:[#allocation2 + $0x3f70] sm:$0xff]
    %v2069 = vld [vmem:[#allocation2 + $0x3f78] sm:$0xff]
    %v2070 = vld [vmem:[#allocation2 + $0x3f80] sm:$0xff]
    %v2071 = vld [vmem:[#allocation2 + $0x3f88] sm:$0xff]
    %v2072 = vld [vmem:[#allocation2 + $0x3f90] sm:$0xff]
    %v2073 = vld [vmem:[#allocation2 + $0x3f98] sm:$0xff]
    %v2074 = vld [vmem:[#allocation2 + $0x3fa0] sm:$0xff]
    %v2075 = vld [vmem:[#allocation2 + $0x3fa8] sm:$0xff]
    %v2076 = vld [vmem:[#allocation2 + $0x3fb0] sm:$0xff]
    %v2077 = vld [vmem:[#allocation2 + $0x3fb8] sm:$0xff]
    %v2078 = vld [vmem:[#allocation2 + $0x3fc0] sm:$0xff]
    %v2079 = vld [vmem:[#allocation2 + $0x3fc8] sm:$0xff]
    %v2080 = vld [vmem:[#allocation2 + $0x3fd0] sm:$0xff]
    %v2081 = vld [vmem:[#allocation2 + $0x3fd8] sm:$0xff]
    %v2082 = vld [vmem:[#allocation2 + $0x3fe0] sm:$0xff]
    %v2083 = vld [vmem:[#allocation2 + $0x3fe8] sm:$0xff]
    %v2084 = vld [vmem:[#allocation2 + $0x3ff0] sm:$0xff]
    %v2085 = vld [vmem:[#allocation2 + $0x3ff8] sm:$0xff]
    %v2086 = vld [vmem:[#allocation5] sm:$0xf]
    %v2088 = vlaneseq
    %v2089 = vshrl.u32 %v2088, 7
    %v2090 = vsub.s32 0, %v2089
    %v2091 = vrot.slane %v2086, %v2090
    %v2092 = vlaneseq
    %v2093 = vshrl.u32 %v2092, 7
    %v2094 = vsub.s32 1, %v2093
    %v2095 = vrot.slane %v2086, %v2094
    %v2096 = vlaneseq
    %v2097 = vshrl.u32 %v2096, 7
    %v2098 = vsub.s32 2, %v2097
    %v2099 = vrot.slane %v2086, %v2098
    %v2100 = vlaneseq
    %v2101 = vshrl.u32 %v2100, 7
    %v2102 = vsub.s32 3, %v2101
    %v2103 = vrot.slane %v2086, %v2102
    %v2108 = vadd.f32 %v38, %v2091
    %v2109 = vadd.f32 %v39, %v2095
    %v2110 = vadd.f32 %v40, %v2099
    %v2111 = vadd.f32 %v41, %v2103
    %v2112 = vadd.f32 %v42, %v2091
    %v2113 = vadd.f32 %v43, %v2095
    %v2114 = vadd.f32 %v44, %v2099
    %v2115 = vadd.f32 %v45, %v2103
    %v2116 = vadd.f32 %v46, %v2091
    %v2117 = vadd.f32 %v47, %v2095
    %v2118 = vadd.f32 %v48, %v2099
    %v2119 = vadd.f32 %v49, %v2103
    %v2120 = vadd.f32 %v50, %v2091
    %v2121 = vadd.f32 %v51, %v2095
    %v2122 = vadd.f32 %v52, %v2099
    %v2123 = vadd.f32 %v53, %v2103
    %v2124 = vadd.f32 %v54, %v2091
    %v2125 = vadd.f32 %v55, %v2095
    %v2126 = vadd.f32 %v56, %v2099
    %v2127 = vadd.f32 %v57, %v2103
    %v2128 = vadd.f32 %v58, %v2091
    %v2129 = vadd.f32 %v59, %v2095
    %v2130 = vadd.f32 %v60, %v2099
    %v2131 = vadd.f32 %v61, %v2103
    %v2132 = vadd.f32 %v62, %v2091
    %v2133 = vadd.f32 %v63, %v2095
    %v2134 = vadd.f32 %v64, %v2099
    %v2135 = vadd.f32 %v65, %v2103
    %v2136 = vadd.f32 %v66, %v2091
    %v2137 = vadd.f32 %v67, %v2095
    %v2138 = vadd.f32 %v68, %v2099
    %v2139 = vadd.f32 %v69, %v2103
    %v2140 = vadd.f32 %v70, %v2091
    %v2141 = vadd.f32 %v71, %v2095
    %v2142 = vadd.f32 %v72, %v2099
    %v2143 = vadd.f32 %v73, %v2103
    %v2144 = vadd.f32 %v74, %v2091
    %v2145 = vadd.f32 %v75, %v2095
    %v2146 = vadd.f32 %v76, %v2099
    %v2147 = vadd.f32 %v77, %v2103
    %v2148 = vadd.f32 %v78, %v2091
    %v2149 = vadd.f32 %v79, %v2095
    %v2150 = vadd.f32 %v80, %v2099
    %v2151 = vadd.f32 %v81, %v2103
    %v2152 = vadd.f32 %v82, %v2091
    %v2153 = vadd.f32 %v83, %v2095
    %v2154 = vadd.f32 %v84, %v2099
    %v2155 = vadd.f32 %v85, %v2103
    %v2156 = vadd.f32 %v86, %v2091
    %v2157 = vadd.f32 %v87, %v2095
    %v2158 = vadd.f32 %v88, %v2099
    %v2159 = vadd.f32 %v89, %v2103
    %v2160 = vadd.f32 %v90, %v2091
    %v2161 = vadd.f32 %v91, %v2095
    %v2162 = vadd.f32 %v92, %v2099
    %v2163 = vadd.f32 %v93, %v2103
    %v2164 = vadd.f32 %v94, %v2091
    %v2165 = vadd.f32 %v95, %v2095
    %v2166 = vadd.f32 %v96, %v2099
    %v2167 = vadd.f32 %v97, %v2103
    %v2168 = vadd.f32 %v98, %v2091
    %v2169 = vadd.f32 %v99, %v2095
    %v2170 = vadd.f32 %v100, %v2099
    %v2171 = vadd.f32 %v101, %v2103
    %v2172 = vadd.f32 %v102, %v2091
    %v2173 = vadd.f32 %v103, %v2095
    %v2174 = vadd.f32 %v104, %v2099
    %v2175 = vadd.f32 %v105, %v2103
    %v2176 = vadd.f32 %v106, %v2091
    %v2177 = vadd.f32 %v107, %v2095
    %v2178 = vadd.f32 %v108, %v2099
    %v2179 = vadd.f32 %v109, %v2103
    %v2180 = vadd.f32 %v110, %v2091
    %v2181 = vadd.f32 %v111, %v2095
    %v2182 = vadd.f32 %v112, %v2099
    %v2183 = vadd.f32 %v113, %v2103
    %v2184 = vadd.f32 %v114, %v2091
    %v2185 = vadd.f32 %v115, %v2095
    %v2186 = vadd.f32 %v116, %v2099
    %v2187 = vadd.f32 %v117, %v2103
    %v2188 = vadd.f32 %v118, %v2091
    %v2189 = vadd.f32 %v119, %v2095
    %v2190 = vadd.f32 %v120, %v2099
    %v2191 = vadd.f32 %v121, %v2103
    %v2192 = vadd.f32 %v122, %v2091
    %v2193 = vadd.f32 %v123, %v2095
    %v2194 = vadd.f32 %v124, %v2099
    %v2195 = vadd.f32 %v125, %v2103
    %v2196 = vadd.f32 %v126, %v2091
    %v2197 = vadd.f32 %v127, %v2095
    %v2198 = vadd.f32 %v128, %v2099
    %v2199 = vadd.f32 %v129, %v2103
    %v2200 = vadd.f32 %v130, %v2091
    %v2201 = vadd.f32 %v131, %v2095
    %v2202 = vadd.f32 %v132, %v2099
    %v2203 = vadd.f32 %v133, %v2103
    %v2204 = vadd.f32 %v134, %v2091
    %v2205 = vadd.f32 %v135, %v2095
    %v2206 = vadd.f32 %v136, %v2099
    %v2207 = vadd.f32 %v137, %v2103
    %v2208 = vadd.f32 %v138, %v2091
    %v2209 = vadd.f32 %v139, %v2095
    %v2210 = vadd.f32 %v140, %v2099
    %v2211 = vadd.f32 %v141, %v2103
    %v2212 = vadd.f32 %v142, %v2091
    %v2213 = vadd.f32 %v143, %v2095
    %v2214 = vadd.f32 %v144, %v2099
    %v2215 = vadd.f32 %v145, %v2103
    %v2216 = vadd.f32 %v146, %v2091
    %v2217 = vadd.f32 %v147, %v2095
    %v2218 = vadd.f32 %v148, %v2099
    %v2219 = vadd.f32 %v149, %v2103
    %v2220 = vadd.f32 %v150, %v2091
    %v2221 = vadd.f32 %v151, %v2095
    %v2222 = vadd.f32 %v152, %v2099
    %v2223 = vadd.f32 %v153, %v2103
    %v2224 = vadd.f32 %v154, %v2091
    %v2225 = vadd.f32 %v155, %v2095
    %v2226 = vadd.f32 %v156, %v2099
    %v2227 = vadd.f32 %v157, %v2103
    %v2228 = vadd.f32 %v158, %v2091
    %v2229 = vadd.f32 %v159, %v2095
    %v2230 = vadd.f32 %v160, %v2099
    %v2231 = vadd.f32 %v161, %v2103
    %v2232 = vadd.f32 %v162, %v2091
    %v2233 = vadd.f32 %v163, %v2095
    %v2234 = vadd.f32 %v164, %v2099
    %v2235 = vadd.f32 %v165, %v2103
    %v2236 = vadd.f32 %v166, %v2091
    %v2237 = vadd.f32 %v167, %v2095
    %v2238 = vadd.f32 %v168, %v2099
    %v2239 = vadd.f32 %v169, %v2103
    %v2240 = vadd.f32 %v170, %v2091
    %v2241 = vadd.f32 %v171, %v2095
    %v2242 = vadd.f32 %v172, %v2099
    %v2243 = vadd.f32 %v173, %v2103
    %v2244 = vadd.f32 %v174, %v2091
    %v2245 = vadd.f32 %v175, %v2095
    %v2246 = vadd.f32 %v176, %v2099
    %v2247 = vadd.f32 %v177, %v2103
    %v2248 = vadd.f32 %v178, %v2091
    %v2249 = vadd.f32 %v179, %v2095
    %v2250 = vadd.f32 %v180, %v2099
    %v2251 = vadd.f32 %v181, %v2103
    %v2252 = vadd.f32 %v182, %v2091
    %v2253 = vadd.f32 %v183, %v2095
    %v2254 = vadd.f32 %v184, %v2099
    %v2255 = vadd.f32 %v185, %v2103
    %v2256 = vadd.f32 %v186, %v2091
    %v2257 = vadd.f32 %v187, %v2095
    %v2258 = vadd.f32 %v188, %v2099
    %v2259 = vadd.f32 %v189, %v2103
    %v2260 = vadd.f32 %v190, %v2091
    %v2261 = vadd.f32 %v191, %v2095
    %v2262 = vadd.f32 %v192, %v2099
    %v2263 = vadd.f32 %v193, %v2103
    %v2264 = vadd.f32 %v194, %v2091
    %v2265 = vadd.f32 %v195, %v2095
    %v2266 = vadd.f32 %v196, %v2099
    %v2267 = vadd.f32 %v197, %v2103
    %v2268 = vadd.f32 %v198, %v2091
    %v2269 = vadd.f32 %v199, %v2095
    %v2270 = vadd.f32 %v200, %v2099
    %v2271 = vadd.f32 %v201, %v2103
    %v2272 = vadd.f32 %v202, %v2091
    %v2273 = vadd.f32 %v203, %v2095
    %v2274 = vadd.f32 %v204, %v2099
    %v2275 = vadd.f32 %v205, %v2103
    %v2276 = vadd.f32 %v206, %v2091
    %v2277 = vadd.f32 %v207, %v2095
    %v2278 = vadd.f32 %v208, %v2099
    %v2279 = vadd.f32 %v209, %v2103
    %v2280 = vadd.f32 %v210, %v2091
    %v2281 = vadd.f32 %v211, %v2095
    %v2282 = vadd.f32 %v212, %v2099
    %v2283 = vadd.f32 %v213, %v2103
    %v2284 = vadd.f32 %v214, %v2091
    %v2285 = vadd.f32 %v215, %v2095
    %v2286 = vadd.f32 %v216, %v2099
    %v2287 = vadd.f32 %v217, %v2103
    %v2288 = vadd.f32 %v218, %v2091
    %v2289 = vadd.f32 %v219, %v2095
    %v2290 = vadd.f32 %v220, %v2099
    %v2291 = vadd.f32 %v221, %v2103
    %v2292 = vadd.f32 %v222, %v2091
    %v2293 = vadd.f32 %v223, %v2095
    %v2294 = vadd.f32 %v224, %v2099
    %v2295 = vadd.f32 %v225, %v2103
    %v2296 = vadd.f32 %v226, %v2091
    %v2297 = vadd.f32 %v227, %v2095
    %v2298 = vadd.f32 %v228, %v2099
    %v2299 = vadd.f32 %v229, %v2103
    %v2300 = vadd.f32 %v230, %v2091
    %v2301 = vadd.f32 %v231, %v2095
    %v2302 = vadd.f32 %v232, %v2099
    %v2303 = vadd.f32 %v233, %v2103
    %v2304 = vadd.f32 %v234, %v2091
    %v2305 = vadd.f32 %v235, %v2095
    %v2306 = vadd.f32 %v236, %v2099
    %v2307 = vadd.f32 %v237, %v2103
    %v2308 = vadd.f32 %v238, %v2091
    %v2309 = vadd.f32 %v239, %v2095
    %v2310 = vadd.f32 %v240, %v2099
    %v2311 = vadd.f32 %v241, %v2103
    %v2312 = vadd.f32 %v242, %v2091
    %v2313 = vadd.f32 %v243, %v2095
    %v2314 = vadd.f32 %v244, %v2099
    %v2315 = vadd.f32 %v245, %v2103
    %v2316 = vadd.f32 %v246, %v2091
    %v2317 = vadd.f32 %v247, %v2095
    %v2318 = vadd.f32 %v248, %v2099
    %v2319 = vadd.f32 %v249, %v2103
    %v2320 = vadd.f32 %v250, %v2091
    %v2321 = vadd.f32 %v251, %v2095
    %v2322 = vadd.f32 %v252, %v2099
    %v2323 = vadd.f32 %v253, %v2103
    %v2324 = vadd.f32 %v254, %v2091
    %v2325 = vadd.f32 %v255, %v2095
    %v2326 = vadd.f32 %v256, %v2099
    %v2327 = vadd.f32 %v257, %v2103
    %v2328 = vadd.f32 %v258, %v2091
    %v2329 = vadd.f32 %v259, %v2095
    %v2330 = vadd.f32 %v260, %v2099
    %v2331 = vadd.f32 %v261, %v2103
    %v2332 = vadd.f32 %v262, %v2091
    %v2333 = vadd.f32 %v263, %v2095
    %v2334 = vadd.f32 %v264, %v2099
    %v2335 = vadd.f32 %v265, %v2103
    %v2336 = vadd.f32 %v266, %v2091
    %v2337 = vadd.f32 %v267, %v2095
    %v2338 = vadd.f32 %v268, %v2099
    %v2339 = vadd.f32 %v269, %v2103
    %v2340 = vadd.f32 %v270, %v2091
    %v2341 = vadd.f32 %v271, %v2095
    %v2342 = vadd.f32 %v272, %v2099
    %v2343 = vadd.f32 %v273, %v2103
    %v2344 = vadd.f32 %v274, %v2091
    %v2345 = vadd.f32 %v275, %v2095
    %v2346 = vadd.f32 %v276, %v2099
    %v2347 = vadd.f32 %v277, %v2103
    %v2348 = vadd.f32 %v278, %v2091
    %v2349 = vadd.f32 %v279, %v2095
    %v2350 = vadd.f32 %v280, %v2099
    %v2351 = vadd.f32 %v281, %v2103
    %v2352 = vadd.f32 %v282, %v2091
    %v2353 = vadd.f32 %v283, %v2095
    %v2354 = vadd.f32 %v284, %v2099
    %v2355 = vadd.f32 %v285, %v2103
    %v2356 = vadd.f32 %v286, %v2091
    %v2357 = vadd.f32 %v287, %v2095
    %v2358 = vadd.f32 %v288, %v2099
    %v2359 = vadd.f32 %v289, %v2103
    %v2360 = vadd.f32 %v290, %v2091
    %v2361 = vadd.f32 %v291, %v2095
    %v2362 = vadd.f32 %v292, %v2099
    %v2363 = vadd.f32 %v293, %v2103
    %v2364 = vadd.f32 %v294, %v2091
    %v2365 = vadd.f32 %v295, %v2095
    %v2366 = vadd.f32 %v296, %v2099
    %v2367 = vadd.f32 %v297, %v2103
    %v2368 = vadd.f32 %v298, %v2091
    %v2369 = vadd.f32 %v299, %v2095
    %v2370 = vadd.f32 %v300, %v2099
    %v2371 = vadd.f32 %v301, %v2103
    %v2372 = vadd.f32 %v302, %v2091
    %v2373 = vadd.f32 %v303, %v2095
    %v2374 = vadd.f32 %v304, %v2099
    %v2375 = vadd.f32 %v305, %v2103
    %v2376 = vadd.f32 %v306, %v2091
    %v2377 = vadd.f32 %v307, %v2095
    %v2378 = vadd.f32 %v308, %v2099
    %v2379 = vadd.f32 %v309, %v2103
    %v2380 = vadd.f32 %v310, %v2091
    %v2381 = vadd.f32 %v311, %v2095
    %v2382 = vadd.f32 %v312, %v2099
    %v2383 = vadd.f32 %v313, %v2103
    %v2384 = vadd.f32 %v314, %v2091
    %v2385 = vadd.f32 %v315, %v2095
    %v2386 = vadd.f32 %v316, %v2099
    %v2387 = vadd.f32 %v317, %v2103
    %v2388 = vadd.f32 %v318, %v2091
    %v2389 = vadd.f32 %v319, %v2095
    %v2390 = vadd.f32 %v320, %v2099
    %v2391 = vadd.f32 %v321, %v2103
    %v2392 = vadd.f32 %v322, %v2091
    %v2393 = vadd.f32 %v323, %v2095
    %v2394 = vadd.f32 %v324, %v2099
    %v2395 = vadd.f32 %v325, %v2103
    %v2396 = vadd.f32 %v326, %v2091
    %v2397 = vadd.f32 %v327, %v2095
    %v2398 = vadd.f32 %v328, %v2099
    %v2399 = vadd.f32 %v329, %v2103
    %v2400 = vadd.f32 %v330, %v2091
    %v2401 = vadd.f32 %v331, %v2095
    %v2402 = vadd.f32 %v332, %v2099
    %v2403 = vadd.f32 %v333, %v2103
    %v2404 = vadd.f32 %v334, %v2091
    %v2405 = vadd.f32 %v335, %v2095
    %v2406 = vadd.f32 %v336, %v2099
    %v2407 = vadd.f32 %v337, %v2103
    %v2408 = vadd.f32 %v338, %v2091
    %v2409 = vadd.f32 %v339, %v2095
    %v2410 = vadd.f32 %v340, %v2099
    %v2411 = vadd.f32 %v341, %v2103
    %v2412 = vadd.f32 %v342, %v2091
    %v2413 = vadd.f32 %v343, %v2095
    %v2414 = vadd.f32 %v344, %v2099
    %v2415 = vadd.f32 %v345, %v2103
    %v2416 = vadd.f32 %v346, %v2091
    %v2417 = vadd.f32 %v347, %v2095
    %v2418 = vadd.f32 %v348, %v2099
    %v2419 = vadd.f32 %v349, %v2103
    %v2420 = vadd.f32 %v350, %v2091
    %v2421 = vadd.f32 %v351, %v2095
    %v2422 = vadd.f32 %v352, %v2099
    %v2423 = vadd.f32 %v353, %v2103
    %v2424 = vadd.f32 %v354, %v2091
    %v2425 = vadd.f32 %v355, %v2095
    %v2426 = vadd.f32 %v356, %v2099
    %v2427 = vadd.f32 %v357, %v2103
    %v2428 = vadd.f32 %v358, %v2091
    %v2429 = vadd.f32 %v359, %v2095
    %v2430 = vadd.f32 %v360, %v2099
    %v2431 = vadd.f32 %v361, %v2103
    %v2432 = vadd.f32 %v362, %v2091
    %v2433 = vadd.f32 %v363, %v2095
    %v2434 = vadd.f32 %v364, %v2099
    %v2435 = vadd.f32 %v365, %v2103
    %v2436 = vadd.f32 %v366, %v2091
    %v2437 = vadd.f32 %v367, %v2095
    %v2438 = vadd.f32 %v368, %v2099
    %v2439 = vadd.f32 %v369, %v2103
    %v2440 = vadd.f32 %v370, %v2091
    %v2441 = vadd.f32 %v371, %v2095
    %v2442 = vadd.f32 %v372, %v2099
    %v2443 = vadd.f32 %v373, %v2103
    %v2444 = vadd.f32 %v374, %v2091
    %v2445 = vadd.f32 %v375, %v2095
    %v2446 = vadd.f32 %v376, %v2099
    %v2447 = vadd.f32 %v377, %v2103
    %v2448 = vadd.f32 %v378, %v2091
    %v2449 = vadd.f32 %v379, %v2095
    %v2450 = vadd.f32 %v380, %v2099
    %v2451 = vadd.f32 %v381, %v2103
    %v2452 = vadd.f32 %v382, %v2091
    %v2453 = vadd.f32 %v383, %v2095
    %v2454 = vadd.f32 %v384, %v2099
    %v2455 = vadd.f32 %v385, %v2103
    %v2456 = vadd.f32 %v386, %v2091
    %v2457 = vadd.f32 %v387, %v2095
    %v2458 = vadd.f32 %v388, %v2099
    %v2459 = vadd.f32 %v389, %v2103
    %v2460 = vadd.f32 %v390, %v2091
    %v2461 = vadd.f32 %v391, %v2095
    %v2462 = vadd.f32 %v392, %v2099
    %v2463 = vadd.f32 %v393, %v2103
    %v2464 = vadd.f32 %v394, %v2091
    %v2465 = vadd.f32 %v395, %v2095
    %v2466 = vadd.f32 %v396, %v2099
    %v2467 = vadd.f32 %v397, %v2103
    %v2468 = vadd.f32 %v398, %v2091
    %v2469 = vadd.f32 %v399, %v2095
    %v2470 = vadd.f32 %v400, %v2099
    %v2471 = vadd.f32 %v401, %v2103
    %v2472 = vadd.f32 %v402, %v2091
    %v2473 = vadd.f32 %v403, %v2095
    %v2474 = vadd.f32 %v404, %v2099
    %v2475 = vadd.f32 %v405, %v2103
    %v2476 = vadd.f32 %v406, %v2091
    %v2477 = vadd.f32 %v407, %v2095
    %v2478 = vadd.f32 %v408, %v2099
    %v2479 = vadd.f32 %v409, %v2103
    %v2480 = vadd.f32 %v410, %v2091
    %v2481 = vadd.f32 %v411, %v2095
    %v2482 = vadd.f32 %v412, %v2099
    %v2483 = vadd.f32 %v413, %v2103
    %v2484 = vadd.f32 %v414, %v2091
    %v2485 = vadd.f32 %v415, %v2095
    %v2486 = vadd.f32 %v416, %v2099
    %v2487 = vadd.f32 %v417, %v2103
    %v2488 = vadd.f32 %v418, %v2091
    %v2489 = vadd.f32 %v419, %v2095
    %v2490 = vadd.f32 %v420, %v2099
    %v2491 = vadd.f32 %v421, %v2103
    %v2492 = vadd.f32 %v422, %v2091
    %v2493 = vadd.f32 %v423, %v2095
    %v2494 = vadd.f32 %v424, %v2099
    %v2495 = vadd.f32 %v425, %v2103
    %v2496 = vadd.f32 %v426, %v2091
    %v2497 = vadd.f32 %v427, %v2095
    %v2498 = vadd.f32 %v428, %v2099
    %v2499 = vadd.f32 %v429, %v2103
    %v2500 = vadd.f32 %v430, %v2091
    %v2501 = vadd.f32 %v431, %v2095
    %v2502 = vadd.f32 %v432, %v2099
    %v2503 = vadd.f32 %v433, %v2103
    %v2504 = vadd.f32 %v434, %v2091
    %v2505 = vadd.f32 %v435, %v2095
    %v2506 = vadd.f32 %v436, %v2099
    %v2507 = vadd.f32 %v437, %v2103
    %v2508 = vadd.f32 %v438, %v2091
    %v2509 = vadd.f32 %v439, %v2095
    %v2510 = vadd.f32 %v440, %v2099
    %v2511 = vadd.f32 %v441, %v2103
    %v2512 = vadd.f32 %v442, %v2091
    %v2513 = vadd.f32 %v443, %v2095
    %v2514 = vadd.f32 %v444, %v2099
    %v2515 = vadd.f32 %v445, %v2103
    %v2516 = vadd.f32 %v446, %v2091
    %v2517 = vadd.f32 %v447, %v2095
    %v2518 = vadd.f32 %v448, %v2099
    %v2519 = vadd.f32 %v449, %v2103
    %v2520 = vadd.f32 %v450, %v2091
    %v2521 = vadd.f32 %v451, %v2095
    %v2522 = vadd.f32 %v452, %v2099
    %v2523 = vadd.f32 %v453, %v2103
    %v2524 = vadd.f32 %v454, %v2091
    %v2525 = vadd.f32 %v455, %v2095
    %v2526 = vadd.f32 %v456, %v2099
    %v2527 = vadd.f32 %v457, %v2103
    %v2528 = vadd.f32 %v458, %v2091
    %v2529 = vadd.f32 %v459, %v2095
    %v2530 = vadd.f32 %v460, %v2099
    %v2531 = vadd.f32 %v461, %v2103
    %v2532 = vadd.f32 %v462, %v2091
    %v2533 = vadd.f32 %v463, %v2095
    %v2534 = vadd.f32 %v464, %v2099
    %v2535 = vadd.f32 %v465, %v2103
    %v2536 = vadd.f32 %v466, %v2091
    %v2537 = vadd.f32 %v467, %v2095
    %v2538 = vadd.f32 %v468, %v2099
    %v2539 = vadd.f32 %v469, %v2103
    %v2540 = vadd.f32 %v470, %v2091
    %v2541 = vadd.f32 %v471, %v2095
    %v2542 = vadd.f32 %v472, %v2099
    %v2543 = vadd.f32 %v473, %v2103
    %v2544 = vadd.f32 %v474, %v2091
    %v2545 = vadd.f32 %v475, %v2095
    %v2546 = vadd.f32 %v476, %v2099
    %v2547 = vadd.f32 %v477, %v2103
    %v2548 = vadd.f32 %v478, %v2091
    %v2549 = vadd.f32 %v479, %v2095
    %v2550 = vadd.f32 %v480, %v2099
    %v2551 = vadd.f32 %v481, %v2103
    %v2552 = vadd.f32 %v482, %v2091
    %v2553 = vadd.f32 %v483, %v2095
    %v2554 = vadd.f32 %v484, %v2099
    %v2555 = vadd.f32 %v485, %v2103
    %v2556 = vadd.f32 %v486, %v2091
    %v2557 = vadd.f32 %v487, %v2095
    %v2558 = vadd.f32 %v488, %v2099
    %v2559 = vadd.f32 %v489, %v2103
    %v2560 = vadd.f32 %v490, %v2091
    %v2561 = vadd.f32 %v491, %v2095
    %v2562 = vadd.f32 %v492, %v2099
    %v2563 = vadd.f32 %v493, %v2103
    %v2564 = vadd.f32 %v494, %v2091
    %v2565 = vadd.f32 %v495, %v2095
    %v2566 = vadd.f32 %v496, %v2099
    %v2567 = vadd.f32 %v497, %v2103
    %v2568 = vadd.f32 %v498, %v2091
    %v2569 = vadd.f32 %v499, %v2095
    %v2570 = vadd.f32 %v500, %v2099
    %v2571 = vadd.f32 %v501, %v2103
    %v2572 = vadd.f32 %v502, %v2091
    %v2573 = vadd.f32 %v503, %v2095
    %v2574 = vadd.f32 %v504, %v2099
    %v2575 = vadd.f32 %v505, %v2103
    %v2576 = vadd.f32 %v506, %v2091
    %v2577 = vadd.f32 %v507, %v2095
    %v2578 = vadd.f32 %v508, %v2099
    %v2579 = vadd.f32 %v509, %v2103
    %v2580 = vadd.f32 %v510, %v2091
    %v2581 = vadd.f32 %v511, %v2095
    %v2582 = vadd.f32 %v512, %v2099
    %v2583 = vadd.f32 %v513, %v2103
    %v2584 = vadd.f32 %v514, %v2091
    %v2585 = vadd.f32 %v515, %v2095
    %v2586 = vadd.f32 %v516, %v2099
    %v2587 = vadd.f32 %v517, %v2103
    %v2588 = vadd.f32 %v518, %v2091
    %v2589 = vadd.f32 %v519, %v2095
    %v2590 = vadd.f32 %v520, %v2099
    %v2591 = vadd.f32 %v521, %v2103
    %v2592 = vadd.f32 %v522, %v2091
    %v2593 = vadd.f32 %v523, %v2095
    %v2594 = vadd.f32 %v524, %v2099
    %v2595 = vadd.f32 %v525, %v2103
    %v2596 = vadd.f32 %v526, %v2091
    %v2597 = vadd.f32 %v527, %v2095
    %v2598 = vadd.f32 %v528, %v2099
    %v2599 = vadd.f32 %v529, %v2103
    %v2600 = vadd.f32 %v530, %v2091
    %v2601 = vadd.f32 %v531, %v2095
    %v2602 = vadd.f32 %v532, %v2099
    %v2603 = vadd.f32 %v533, %v2103
    %v2604 = vadd.f32 %v534, %v2091
    %v2605 = vadd.f32 %v535, %v2095
    %v2606 = vadd.f32 %v536, %v2099
    %v2607 = vadd.f32 %v537, %v2103
    %v2608 = vadd.f32 %v538, %v2091
    %v2609 = vadd.f32 %v539, %v2095
    %v2610 = vadd.f32 %v540, %v2099
    %v2611 = vadd.f32 %v541, %v2103
    %v2612 = vadd.f32 %v542, %v2091
    %v2613 = vadd.f32 %v543, %v2095
    %v2614 = vadd.f32 %v544, %v2099
    %v2615 = vadd.f32 %v545, %v2103
    %v2616 = vadd.f32 %v546, %v2091
    %v2617 = vadd.f32 %v547, %v2095
    %v2618 = vadd.f32 %v548, %v2099
    %v2619 = vadd.f32 %v549, %v2103
    %v2620 = vadd.f32 %v550, %v2091
    %v2621 = vadd.f32 %v551, %v2095
    %v2622 = vadd.f32 %v552, %v2099
    %v2623 = vadd.f32 %v553, %v2103
    %v2624 = vadd.f32 %v554, %v2091
    %v2625 = vadd.f32 %v555, %v2095
    %v2626 = vadd.f32 %v556, %v2099
    %v2627 = vadd.f32 %v557, %v2103
    %v2628 = vadd.f32 %v558, %v2091
    %v2629 = vadd.f32 %v559, %v2095
    %v2630 = vadd.f32 %v560, %v2099
    %v2631 = vadd.f32 %v561, %v2103
    %v2632 = vadd.f32 %v562, %v2091
    %v2633 = vadd.f32 %v563, %v2095
    %v2634 = vadd.f32 %v564, %v2099
    %v2635 = vadd.f32 %v565, %v2103
    %v2636 = vadd.f32 %v566, %v2091
    %v2637 = vadd.f32 %v567, %v2095
    %v2638 = vadd.f32 %v568, %v2099
    %v2639 = vadd.f32 %v569, %v2103
    %v2640 = vadd.f32 %v570, %v2091
    %v2641 = vadd.f32 %v571, %v2095
    %v2642 = vadd.f32 %v572, %v2099
    %v2643 = vadd.f32 %v573, %v2103
    %v2644 = vadd.f32 %v574, %v2091
    %v2645 = vadd.f32 %v575, %v2095
    %v2646 = vadd.f32 %v576, %v2099
    %v2647 = vadd.f32 %v577, %v2103
    %v2648 = vadd.f32 %v578, %v2091
    %v2649 = vadd.f32 %v579, %v2095
    %v2650 = vadd.f32 %v580, %v2099
    %v2651 = vadd.f32 %v581, %v2103
    %v2652 = vadd.f32 %v582, %v2091
    %v2653 = vadd.f32 %v583, %v2095
    %v2654 = vadd.f32 %v584, %v2099
    %v2655 = vadd.f32 %v585, %v2103
    %v2656 = vadd.f32 %v586, %v2091
    %v2657 = vadd.f32 %v587, %v2095
    %v2658 = vadd.f32 %v588, %v2099
    %v2659 = vadd.f32 %v589, %v2103
    %v2660 = vadd.f32 %v590, %v2091
    %v2661 = vadd.f32 %v591, %v2095
    %v2662 = vadd.f32 %v592, %v2099
    %v2663 = vadd.f32 %v593, %v2103
    %v2664 = vadd.f32 %v594, %v2091
    %v2665 = vadd.f32 %v595, %v2095
    %v2666 = vadd.f32 %v596, %v2099
    %v2667 = vadd.f32 %v597, %v2103
    %v2668 = vadd.f32 %v598, %v2091
    %v2669 = vadd.f32 %v599, %v2095
    %v2670 = vadd.f32 %v600, %v2099
    %v2671 = vadd.f32 %v601, %v2103
    %v2672 = vadd.f32 %v602, %v2091
    %v2673 = vadd.f32 %v603, %v2095
    %v2674 = vadd.f32 %v604, %v2099
    %v2675 = vadd.f32 %v605, %v2103
    %v2676 = vadd.f32 %v606, %v2091
    %v2677 = vadd.f32 %v607, %v2095
    %v2678 = vadd.f32 %v608, %v2099
    %v2679 = vadd.f32 %v609, %v2103
    %v2680 = vadd.f32 %v610, %v2091
    %v2681 = vadd.f32 %v611, %v2095
    %v2682 = vadd.f32 %v612, %v2099
    %v2683 = vadd.f32 %v613, %v2103
    %v2684 = vadd.f32 %v614, %v2091
    %v2685 = vadd.f32 %v615, %v2095
    %v2686 = vadd.f32 %v616, %v2099
    %v2687 = vadd.f32 %v617, %v2103
    %v2688 = vadd.f32 %v618, %v2091
    %v2689 = vadd.f32 %v619, %v2095
    %v2690 = vadd.f32 %v620, %v2099
    %v2691 = vadd.f32 %v621, %v2103
    %v2692 = vadd.f32 %v622, %v2091
    %v2693 = vadd.f32 %v623, %v2095
    %v2694 = vadd.f32 %v624, %v2099
    %v2695 = vadd.f32 %v625, %v2103
    %v2696 = vadd.f32 %v626, %v2091
    %v2697 = vadd.f32 %v627, %v2095
    %v2698 = vadd.f32 %v628, %v2099
    %v2699 = vadd.f32 %v629, %v2103
    %v2700 = vadd.f32 %v630, %v2091
    %v2701 = vadd.f32 %v631, %v2095
    %v2702 = vadd.f32 %v632, %v2099
    %v2703 = vadd.f32 %v633, %v2103
    %v2704 = vadd.f32 %v634, %v2091
    %v2705 = vadd.f32 %v635, %v2095
    %v2706 = vadd.f32 %v636, %v2099
    %v2707 = vadd.f32 %v637, %v2103
    %v2708 = vadd.f32 %v638, %v2091
    %v2709 = vadd.f32 %v639, %v2095
    %v2710 = vadd.f32 %v640, %v2099
    %v2711 = vadd.f32 %v641, %v2103
    %v2712 = vadd.f32 %v642, %v2091
    %v2713 = vadd.f32 %v643, %v2095
    %v2714 = vadd.f32 %v644, %v2099
    %v2715 = vadd.f32 %v645, %v2103
    %v2716 = vadd.f32 %v646, %v2091
    %v2717 = vadd.f32 %v647, %v2095
    %v2718 = vadd.f32 %v648, %v2099
    %v2719 = vadd.f32 %v649, %v2103
    %v2720 = vadd.f32 %v650, %v2091
    %v2721 = vadd.f32 %v651, %v2095
    %v2722 = vadd.f32 %v652, %v2099
    %v2723 = vadd.f32 %v653, %v2103
    %v2724 = vadd.f32 %v654, %v2091
    %v2725 = vadd.f32 %v655, %v2095
    %v2726 = vadd.f32 %v656, %v2099
    %v2727 = vadd.f32 %v657, %v2103
    %v2728 = vadd.f32 %v658, %v2091
    %v2729 = vadd.f32 %v659, %v2095
    %v2730 = vadd.f32 %v660, %v2099
    %v2731 = vadd.f32 %v661, %v2103
    %v2732 = vadd.f32 %v662, %v2091
    %v2733 = vadd.f32 %v663, %v2095
    %v2734 = vadd.f32 %v664, %v2099
    %v2735 = vadd.f32 %v665, %v2103
    %v2736 = vadd.f32 %v666, %v2091
    %v2737 = vadd.f32 %v667, %v2095
    %v2738 = vadd.f32 %v668, %v2099
    %v2739 = vadd.f32 %v669, %v2103
    %v2740 = vadd.f32 %v670, %v2091
    %v2741 = vadd.f32 %v671, %v2095
    %v2742 = vadd.f32 %v672, %v2099
    %v2743 = vadd.f32 %v673, %v2103
    %v2744 = vadd.f32 %v674, %v2091
    %v2745 = vadd.f32 %v675, %v2095
    %v2746 = vadd.f32 %v676, %v2099
    %v2747 = vadd.f32 %v677, %v2103
    %v2748 = vadd.f32 %v678, %v2091
    %v2749 = vadd.f32 %v679, %v2095
    %v2750 = vadd.f32 %v680, %v2099
    %v2751 = vadd.f32 %v681, %v2103
    %v2752 = vadd.f32 %v682, %v2091
    %v2753 = vadd.f32 %v683, %v2095
    %v2754 = vadd.f32 %v684, %v2099
    %v2755 = vadd.f32 %v685, %v2103
    %v2756 = vadd.f32 %v686, %v2091
    %v2757 = vadd.f32 %v687, %v2095
    %v2758 = vadd.f32 %v688, %v2099
    %v2759 = vadd.f32 %v689, %v2103
    %v2760 = vadd.f32 %v690, %v2091
    %v2761 = vadd.f32 %v691, %v2095
    %v2762 = vadd.f32 %v692, %v2099
    %v2763 = vadd.f32 %v693, %v2103
    %v2764 = vadd.f32 %v694, %v2091
    %v2765 = vadd.f32 %v695, %v2095
    %v2766 = vadd.f32 %v696, %v2099
    %v2767 = vadd.f32 %v697, %v2103
    %v2768 = vadd.f32 %v698, %v2091
    %v2769 = vadd.f32 %v699, %v2095
    %v2770 = vadd.f32 %v700, %v2099
    %v2771 = vadd.f32 %v701, %v2103
    %v2772 = vadd.f32 %v702, %v2091
    %v2773 = vadd.f32 %v703, %v2095
    %v2774 = vadd.f32 %v704, %v2099
    %v2775 = vadd.f32 %v705, %v2103
    %v2776 = vadd.f32 %v706, %v2091
    %v2777 = vadd.f32 %v707, %v2095
    %v2778 = vadd.f32 %v708, %v2099
    %v2779 = vadd.f32 %v709, %v2103
    %v2780 = vadd.f32 %v710, %v2091
    %v2781 = vadd.f32 %v711, %v2095
    %v2782 = vadd.f32 %v712, %v2099
    %v2783 = vadd.f32 %v713, %v2103
    %v2784 = vadd.f32 %v714, %v2091
    %v2785 = vadd.f32 %v715, %v2095
    %v2786 = vadd.f32 %v716, %v2099
    %v2787 = vadd.f32 %v717, %v2103
    %v2788 = vadd.f32 %v718, %v2091
    %v2789 = vadd.f32 %v719, %v2095
    %v2790 = vadd.f32 %v720, %v2099
    %v2791 = vadd.f32 %v721, %v2103
    %v2792 = vadd.f32 %v722, %v2091
    %v2793 = vadd.f32 %v723, %v2095
    %v2794 = vadd.f32 %v724, %v2099
    %v2795 = vadd.f32 %v725, %v2103
    %v2796 = vadd.f32 %v726, %v2091
    %v2797 = vadd.f32 %v727, %v2095
    %v2798 = vadd.f32 %v728, %v2099
    %v2799 = vadd.f32 %v729, %v2103
    %v2800 = vadd.f32 %v730, %v2091
    %v2801 = vadd.f32 %v731, %v2095
    %v2802 = vadd.f32 %v732, %v2099
    %v2803 = vadd.f32 %v733, %v2103
    %v2804 = vadd.f32 %v734, %v2091
    %v2805 = vadd.f32 %v735, %v2095
    %v2806 = vadd.f32 %v736, %v2099
    %v2807 = vadd.f32 %v737, %v2103
    %v2808 = vadd.f32 %v738, %v2091
    %v2809 = vadd.f32 %v739, %v2095
    %v2810 = vadd.f32 %v740, %v2099
    %v2811 = vadd.f32 %v741, %v2103
    %v2812 = vadd.f32 %v742, %v2091
    %v2813 = vadd.f32 %v743, %v2095
    %v2814 = vadd.f32 %v744, %v2099
    %v2815 = vadd.f32 %v745, %v2103
    %v2816 = vadd.f32 %v746, %v2091
    %v2817 = vadd.f32 %v747, %v2095
    %v2818 = vadd.f32 %v748, %v2099
    %v2819 = vadd.f32 %v749, %v2103
    %v2820 = vadd.f32 %v750, %v2091
    %v2821 = vadd.f32 %v751, %v2095
    %v2822 = vadd.f32 %v752, %v2099
    %v2823 = vadd.f32 %v753, %v2103
    %v2824 = vadd.f32 %v754, %v2091
    %v2825 = vadd.f32 %v755, %v2095
    %v2826 = vadd.f32 %v756, %v2099
    %v2827 = vadd.f32 %v757, %v2103
    %v2828 = vadd.f32 %v758, %v2091
    %v2829 = vadd.f32 %v759, %v2095
    %v2830 = vadd.f32 %v760, %v2099
    %v2831 = vadd.f32 %v761, %v2103
    %v2832 = vadd.f32 %v762, %v2091
    %v2833 = vadd.f32 %v763, %v2095
    %v2834 = vadd.f32 %v764, %v2099
    %v2835 = vadd.f32 %v765, %v2103
    %v2836 = vadd.f32 %v766, %v2091
    %v2837 = vadd.f32 %v767, %v2095
    %v2838 = vadd.f32 %v768, %v2099
    %v2839 = vadd.f32 %v769, %v2103
    %v2840 = vadd.f32 %v770, %v2091
    %v2841 = vadd.f32 %v771, %v2095
    %v2842 = vadd.f32 %v772, %v2099
    %v2843 = vadd.f32 %v773, %v2103
    %v2844 = vadd.f32 %v774, %v2091
    %v2845 = vadd.f32 %v775, %v2095
    %v2846 = vadd.f32 %v776, %v2099
    %v2847 = vadd.f32 %v777, %v2103
    %v2848 = vadd.f32 %v778, %v2091
    %v2849 = vadd.f32 %v779, %v2095
    %v2850 = vadd.f32 %v780, %v2099
    %v2851 = vadd.f32 %v781, %v2103
    %v2852 = vadd.f32 %v782, %v2091
    %v2853 = vadd.f32 %v783, %v2095
    %v2854 = vadd.f32 %v784, %v2099
    %v2855 = vadd.f32 %v785, %v2103
    %v2856 = vadd.f32 %v786, %v2091
    %v2857 = vadd.f32 %v787, %v2095
    %v2858 = vadd.f32 %v788, %v2099
    %v2859 = vadd.f32 %v789, %v2103
    %v2860 = vadd.f32 %v790, %v2091
    %v2861 = vadd.f32 %v791, %v2095
    %v2862 = vadd.f32 %v792, %v2099
    %v2863 = vadd.f32 %v793, %v2103
    %v2864 = vadd.f32 %v794, %v2091
    %v2865 = vadd.f32 %v795, %v2095
    %v2866 = vadd.f32 %v796, %v2099
    %v2867 = vadd.f32 %v797, %v2103
    %v2868 = vadd.f32 %v798, %v2091
    %v2869 = vadd.f32 %v799, %v2095
    %v2870 = vadd.f32 %v800, %v2099
    %v2871 = vadd.f32 %v801, %v2103
    %v2872 = vadd.f32 %v802, %v2091
    %v2873 = vadd.f32 %v803, %v2095
    %v2874 = vadd.f32 %v804, %v2099
    %v2875 = vadd.f32 %v805, %v2103
    %v2876 = vadd.f32 %v806, %v2091
    %v2877 = vadd.f32 %v807, %v2095
    %v2878 = vadd.f32 %v808, %v2099
    %v2879 = vadd.f32 %v809, %v2103
    %v2880 = vadd.f32 %v810, %v2091
    %v2881 = vadd.f32 %v811, %v2095
    %v2882 = vadd.f32 %v812, %v2099
    %v2883 = vadd.f32 %v813, %v2103
    %v2884 = vadd.f32 %v814, %v2091
    %v2885 = vadd.f32 %v815, %v2095
    %v2886 = vadd.f32 %v816, %v2099
    %v2887 = vadd.f32 %v817, %v2103
    %v2888 = vadd.f32 %v818, %v2091
    %v2889 = vadd.f32 %v819, %v2095
    %v2890 = vadd.f32 %v820, %v2099
    %v2891 = vadd.f32 %v821, %v2103
    %v2892 = vadd.f32 %v822, %v2091
    %v2893 = vadd.f32 %v823, %v2095
    %v2894 = vadd.f32 %v824, %v2099
    %v2895 = vadd.f32 %v825, %v2103
    %v2896 = vadd.f32 %v826, %v2091
    %v2897 = vadd.f32 %v827, %v2095
    %v2898 = vadd.f32 %v828, %v2099
    %v2899 = vadd.f32 %v829, %v2103
    %v2900 = vadd.f32 %v830, %v2091
    %v2901 = vadd.f32 %v831, %v2095
    %v2902 = vadd.f32 %v832, %v2099
    %v2903 = vadd.f32 %v833, %v2103
    %v2904 = vadd.f32 %v834, %v2091
    %v2905 = vadd.f32 %v835, %v2095
    %v2906 = vadd.f32 %v836, %v2099
    %v2907 = vadd.f32 %v837, %v2103
    %v2908 = vadd.f32 %v838, %v2091
    %v2909 = vadd.f32 %v839, %v2095
    %v2910 = vadd.f32 %v840, %v2099
    %v2911 = vadd.f32 %v841, %v2103
    %v2912 = vadd.f32 %v842, %v2091
    %v2913 = vadd.f32 %v843, %v2095
    %v2914 = vadd.f32 %v844, %v2099
    %v2915 = vadd.f32 %v845, %v2103
    %v2916 = vadd.f32 %v846, %v2091
    %v2917 = vadd.f32 %v847, %v2095
    %v2918 = vadd.f32 %v848, %v2099
    %v2919 = vadd.f32 %v849, %v2103
    %v2920 = vadd.f32 %v850, %v2091
    %v2921 = vadd.f32 %v851, %v2095
    %v2922 = vadd.f32 %v852, %v2099
    %v2923 = vadd.f32 %v853, %v2103
    %v2924 = vadd.f32 %v854, %v2091
    %v2925 = vadd.f32 %v855, %v2095
    %v2926 = vadd.f32 %v856, %v2099
    %v2927 = vadd.f32 %v857, %v2103
    %v2928 = vadd.f32 %v858, %v2091
    %v2929 = vadd.f32 %v859, %v2095
    %v2930 = vadd.f32 %v860, %v2099
    %v2931 = vadd.f32 %v861, %v2103
    %v2932 = vadd.f32 %v862, %v2091
    %v2933 = vadd.f32 %v863, %v2095
    %v2934 = vadd.f32 %v864, %v2099
    %v2935 = vadd.f32 %v865, %v2103
    %v2936 = vadd.f32 %v866, %v2091
    %v2937 = vadd.f32 %v867, %v2095
    %v2938 = vadd.f32 %v868, %v2099
    %v2939 = vadd.f32 %v869, %v2103
    %v2940 = vadd.f32 %v870, %v2091
    %v2941 = vadd.f32 %v871, %v2095
    %v2942 = vadd.f32 %v872, %v2099
    %v2943 = vadd.f32 %v873, %v2103
    %v2944 = vadd.f32 %v874, %v2091
    %v2945 = vadd.f32 %v875, %v2095
    %v2946 = vadd.f32 %v876, %v2099
    %v2947 = vadd.f32 %v877, %v2103
    %v2948 = vadd.f32 %v878, %v2091
    %v2949 = vadd.f32 %v879, %v2095
    %v2950 = vadd.f32 %v880, %v2099
    %v2951 = vadd.f32 %v881, %v2103
    %v2952 = vadd.f32 %v882, %v2091
    %v2953 = vadd.f32 %v883, %v2095
    %v2954 = vadd.f32 %v884, %v2099
    %v2955 = vadd.f32 %v885, %v2103
    %v2956 = vadd.f32 %v886, %v2091
    %v2957 = vadd.f32 %v887, %v2095
    %v2958 = vadd.f32 %v888, %v2099
    %v2959 = vadd.f32 %v889, %v2103
    %v2960 = vadd.f32 %v890, %v2091
    %v2961 = vadd.f32 %v891, %v2095
    %v2962 = vadd.f32 %v892, %v2099
    %v2963 = vadd.f32 %v893, %v2103
    %v2964 = vadd.f32 %v894, %v2091
    %v2965 = vadd.f32 %v895, %v2095
    %v2966 = vadd.f32 %v896, %v2099
    %v2967 = vadd.f32 %v897, %v2103
    %v2968 = vadd.f32 %v898, %v2091
    %v2969 = vadd.f32 %v899, %v2095
    %v2970 = vadd.f32 %v900, %v2099
    %v2971 = vadd.f32 %v901, %v2103
    %v2972 = vadd.f32 %v902, %v2091
    %v2973 = vadd.f32 %v903, %v2095
    %v2974 = vadd.f32 %v904, %v2099
    %v2975 = vadd.f32 %v905, %v2103
    %v2976 = vadd.f32 %v906, %v2091
    %v2977 = vadd.f32 %v907, %v2095
    %v2978 = vadd.f32 %v908, %v2099
    %v2979 = vadd.f32 %v909, %v2103
    %v2980 = vadd.f32 %v910, %v2091
    %v2981 = vadd.f32 %v911, %v2095
    %v2982 = vadd.f32 %v912, %v2099
    %v2983 = vadd.f32 %v913, %v2103
    %v2984 = vadd.f32 %v914, %v2091
    %v2985 = vadd.f32 %v915, %v2095
    %v2986 = vadd.f32 %v916, %v2099
    %v2987 = vadd.f32 %v917, %v2103
    %v2988 = vadd.f32 %v918, %v2091
    %v2989 = vadd.f32 %v919, %v2095
    %v2990 = vadd.f32 %v920, %v2099
    %v2991 = vadd.f32 %v921, %v2103
    %v2992 = vadd.f32 %v922, %v2091
    %v2993 = vadd.f32 %v923, %v2095
    %v2994 = vadd.f32 %v924, %v2099
    %v2995 = vadd.f32 %v925, %v2103
    %v2996 = vadd.f32 %v926, %v2091
    %v2997 = vadd.f32 %v927, %v2095
    %v2998 = vadd.f32 %v928, %v2099
    %v2999 = vadd.f32 %v929, %v2103
    %v3000 = vadd.f32 %v930, %v2091
    %v3001 = vadd.f32 %v931, %v2095
    %v3002 = vadd.f32 %v932, %v2099
    %v3003 = vadd.f32 %v933, %v2103
    %v3004 = vadd.f32 %v934, %v2091
    %v3005 = vadd.f32 %v935, %v2095
    %v3006 = vadd.f32 %v936, %v2099
    %v3007 = vadd.f32 %v937, %v2103
    %v3008 = vadd.f32 %v938, %v2091
    %v3009 = vadd.f32 %v939, %v2095
    %v3010 = vadd.f32 %v940, %v2099
    %v3011 = vadd.f32 %v941, %v2103
    %v3012 = vadd.f32 %v942, %v2091
    %v3013 = vadd.f32 %v943, %v2095
    %v3014 = vadd.f32 %v944, %v2099
    %v3015 = vadd.f32 %v945, %v2103
    %v3016 = vadd.f32 %v946, %v2091
    %v3017 = vadd.f32 %v947, %v2095
    %v3018 = vadd.f32 %v948, %v2099
    %v3019 = vadd.f32 %v949, %v2103
    %v3020 = vadd.f32 %v950, %v2091
    %v3021 = vadd.f32 %v951, %v2095
    %v3022 = vadd.f32 %v952, %v2099
    %v3023 = vadd.f32 %v953, %v2103
    %v3024 = vadd.f32 %v954, %v2091
    %v3025 = vadd.f32 %v955, %v2095
    %v3026 = vadd.f32 %v956, %v2099
    %v3027 = vadd.f32 %v957, %v2103
    %v3028 = vadd.f32 %v958, %v2091
    %v3029 = vadd.f32 %v959, %v2095
    %v3030 = vadd.f32 %v960, %v2099
    %v3031 = vadd.f32 %v961, %v2103
    %v3032 = vadd.f32 %v962, %v2091
    %v3033 = vadd.f32 %v963, %v2095
    %v3034 = vadd.f32 %v964, %v2099
    %v3035 = vadd.f32 %v965, %v2103
    %v3036 = vadd.f32 %v966, %v2091
    %v3037 = vadd.f32 %v967, %v2095
    %v3038 = vadd.f32 %v968, %v2099
    %v3039 = vadd.f32 %v969, %v2103
    %v3040 = vadd.f32 %v970, %v2091
    %v3041 = vadd.f32 %v971, %v2095
    %v3042 = vadd.f32 %v972, %v2099
    %v3043 = vadd.f32 %v973, %v2103
    %v3044 = vadd.f32 %v974, %v2091
    %v3045 = vadd.f32 %v975, %v2095
    %v3046 = vadd.f32 %v976, %v2099
    %v3047 = vadd.f32 %v977, %v2103
    %v3048 = vadd.f32 %v978, %v2091
    %v3049 = vadd.f32 %v979, %v2095
    %v3050 = vadd.f32 %v980, %v2099
    %v3051 = vadd.f32 %v981, %v2103
    %v3052 = vadd.f32 %v982, %v2091
    %v3053 = vadd.f32 %v983, %v2095
    %v3054 = vadd.f32 %v984, %v2099
    %v3055 = vadd.f32 %v985, %v2103
    %v3056 = vadd.f32 %v986, %v2091
    %v3057 = vadd.f32 %v987, %v2095
    %v3058 = vadd.f32 %v988, %v2099
    %v3059 = vadd.f32 %v989, %v2103
    %v3060 = vadd.f32 %v990, %v2091
    %v3061 = vadd.f32 %v991, %v2095
    %v3062 = vadd.f32 %v992, %v2099
    %v3063 = vadd.f32 %v993, %v2103
    %v3064 = vadd.f32 %v994, %v2091
    %v3065 = vadd.f32 %v995, %v2095
    %v3066 = vadd.f32 %v996, %v2099
    %v3067 = vadd.f32 %v997, %v2103
    %v3068 = vadd.f32 %v998, %v2091
    %v3069 = vadd.f32 %v999, %v2095
    %v3070 = vadd.f32 %v1000, %v2099
    %v3071 = vadd.f32 %v1001, %v2103
    %v3072 = vadd.f32 %v1002, %v2091
    %v3073 = vadd.f32 %v1003, %v2095
    %v3074 = vadd.f32 %v1004, %v2099
    %v3075 = vadd.f32 %v1005, %v2103
    %v3076 = vadd.f32 %v1006, %v2091
    %v3077 = vadd.f32 %v1007, %v2095
    %v3078 = vadd.f32 %v1008, %v2099
    %v3079 = vadd.f32 %v1009, %v2103
    %v3080 = vadd.f32 %v1010, %v2091
    %v3081 = vadd.f32 %v1011, %v2095
    %v3082 = vadd.f32 %v1012, %v2099
    %v3083 = vadd.f32 %v1013, %v2103
    %v3084 = vadd.f32 %v1014, %v2091
    %v3085 = vadd.f32 %v1015, %v2095
    %v3086 = vadd.f32 %v1016, %v2099
    %v3087 = vadd.f32 %v1017, %v2103
    %v3088 = vadd.f32 %v1018, %v2091
    %v3089 = vadd.f32 %v1019, %v2095
    %v3090 = vadd.f32 %v1020, %v2099
    %v3091 = vadd.f32 %v1021, %v2103
    %v3092 = vadd.f32 %v1022, %v2091
    %v3093 = vadd.f32 %v1023, %v2095
    %v3094 = vadd.f32 %v1024, %v2099
    %v3095 = vadd.f32 %v1025, %v2103
    %v3096 = vadd.f32 %v1026, %v2091
    %v3097 = vadd.f32 %v1027, %v2095
    %v3098 = vadd.f32 %v1028, %v2099
    %v3099 = vadd.f32 %v1029, %v2103
    %v3100 = vadd.f32 %v1030, %v2091
    %v3101 = vadd.f32 %v1031, %v2095
    %v3102 = vadd.f32 %v1032, %v2099
    %v3103 = vadd.f32 %v1033, %v2103
    %v3104 = vadd.f32 %v1034, %v2091
    %v3105 = vadd.f32 %v1035, %v2095
    %v3106 = vadd.f32 %v1036, %v2099
    %v3107 = vadd.f32 %v1037, %v2103
    %v3108 = vadd.f32 %v1038, %v2091
    %v3109 = vadd.f32 %v1039, %v2095
    %v3110 = vadd.f32 %v1040, %v2099
    %v3111 = vadd.f32 %v1041, %v2103
    %v3112 = vadd.f32 %v1042, %v2091
    %v3113 = vadd.f32 %v1043, %v2095
    %v3114 = vadd.f32 %v1044, %v2099
    %v3115 = vadd.f32 %v1045, %v2103
    %v3116 = vadd.f32 %v1046, %v2091
    %v3117 = vadd.f32 %v1047, %v2095
    %v3118 = vadd.f32 %v1048, %v2099
    %v3119 = vadd.f32 %v1049, %v2103
    %v3120 = vadd.f32 %v1050, %v2091
    %v3121 = vadd.f32 %v1051, %v2095
    %v3122 = vadd.f32 %v1052, %v2099
    %v3123 = vadd.f32 %v1053, %v2103
    %v3124 = vadd.f32 %v1054, %v2091
    %v3125 = vadd.f32 %v1055, %v2095
    %v3126 = vadd.f32 %v1056, %v2099
    %v3127 = vadd.f32 %v1057, %v2103
    %v3128 = vadd.f32 %v1058, %v2091
    %v3129 = vadd.f32 %v1059, %v2095
    %v3130 = vadd.f32 %v1060, %v2099
    %v3131 = vadd.f32 %v1061, %v2103
    %v3132 = vadd.f32 %v1062, %v2091
    %v3133 = vadd.f32 %v1063, %v2095
    %v3134 = vadd.f32 %v1064, %v2099
    %v3135 = vadd.f32 %v1065, %v2103
    %v3136 = vadd.f32 %v1066, %v2091
    %v3137 = vadd.f32 %v1067, %v2095
    %v3138 = vadd.f32 %v1068, %v2099
    %v3139 = vadd.f32 %v1069, %v2103
    %v3140 = vadd.f32 %v1070, %v2091
    %v3141 = vadd.f32 %v1071, %v2095
    %v3142 = vadd.f32 %v1072, %v2099
    %v3143 = vadd.f32 %v1073, %v2103
    %v3144 = vadd.f32 %v1074, %v2091
    %v3145 = vadd.f32 %v1075, %v2095
    %v3146 = vadd.f32 %v1076, %v2099
    %v3147 = vadd.f32 %v1077, %v2103
    %v3148 = vadd.f32 %v1078, %v2091
    %v3149 = vadd.f32 %v1079, %v2095
    %v3150 = vadd.f32 %v1080, %v2099
    %v3151 = vadd.f32 %v1081, %v2103
    %v3152 = vadd.f32 %v1082, %v2091
    %v3153 = vadd.f32 %v1083, %v2095
    %v3154 = vadd.f32 %v1084, %v2099
    %v3155 = vadd.f32 %v1085, %v2103
    %v3156 = vadd.f32 %v1086, %v2091
    %v3157 = vadd.f32 %v1087, %v2095
    %v3158 = vadd.f32 %v1088, %v2099
    %v3159 = vadd.f32 %v1089, %v2103
    %v3160 = vadd.f32 %v1090, %v2091
    %v3161 = vadd.f32 %v1091, %v2095
    %v3162 = vadd.f32 %v1092, %v2099
    %v3163 = vadd.f32 %v1093, %v2103
    %v3164 = vadd.f32 %v1094, %v2091
    %v3165 = vadd.f32 %v1095, %v2095
    %v3166 = vadd.f32 %v1096, %v2099
    %v3167 = vadd.f32 %v1097, %v2103
    %v3168 = vadd.f32 %v1098, %v2091
    %v3169 = vadd.f32 %v1099, %v2095
    %v3170 = vadd.f32 %v1100, %v2099
    %v3171 = vadd.f32 %v1101, %v2103
    %v3172 = vadd.f32 %v1102, %v2091
    %v3173 = vadd.f32 %v1103, %v2095
    %v3174 = vadd.f32 %v1104, %v2099
    %v3175 = vadd.f32 %v1105, %v2103
    %v3176 = vadd.f32 %v1106, %v2091
    %v3177 = vadd.f32 %v1107, %v2095
    %v3178 = vadd.f32 %v1108, %v2099
    %v3179 = vadd.f32 %v1109, %v2103
    %v3180 = vadd.f32 %v1110, %v2091
    %v3181 = vadd.f32 %v1111, %v2095
    %v3182 = vadd.f32 %v1112, %v2099
    %v3183 = vadd.f32 %v1113, %v2103
    %v3184 = vadd.f32 %v1114, %v2091
    %v3185 = vadd.f32 %v1115, %v2095
    %v3186 = vadd.f32 %v1116, %v2099
    %v3187 = vadd.f32 %v1117, %v2103
    %v3188 = vadd.f32 %v1118, %v2091
    %v3189 = vadd.f32 %v1119, %v2095
    %v3190 = vadd.f32 %v1120, %v2099
    %v3191 = vadd.f32 %v1121, %v2103
    %v3192 = vadd.f32 %v1122, %v2091
    %v3193 = vadd.f32 %v1123, %v2095
    %v3194 = vadd.f32 %v1124, %v2099
    %v3195 = vadd.f32 %v1125, %v2103
    %v3196 = vadd.f32 %v1126, %v2091
    %v3197 = vadd.f32 %v1127, %v2095
    %v3198 = vadd.f32 %v1128, %v2099
    %v3199 = vadd.f32 %v1129, %v2103
    %v3200 = vadd.f32 %v1130, %v2091
    %v3201 = vadd.f32 %v1131, %v2095
    %v3202 = vadd.f32 %v1132, %v2099
    %v3203 = vadd.f32 %v1133, %v2103
    %v3204 = vadd.f32 %v1134, %v2091
    %v3205 = vadd.f32 %v1135, %v2095
    %v3206 = vadd.f32 %v1136, %v2099
    %v3207 = vadd.f32 %v1137, %v2103
    %v3208 = vadd.f32 %v1138, %v2091
    %v3209 = vadd.f32 %v1139, %v2095
    %v3210 = vadd.f32 %v1140, %v2099
    %v3211 = vadd.f32 %v1141, %v2103
    %v3212 = vadd.f32 %v1142, %v2091
    %v3213 = vadd.f32 %v1143, %v2095
    %v3214 = vadd.f32 %v1144, %v2099
    %v3215 = vadd.f32 %v1145, %v2103
    %v3216 = vadd.f32 %v1146, %v2091
    %v3217 = vadd.f32 %v1147, %v2095
    %v3218 = vadd.f32 %v1148, %v2099
    %v3219 = vadd.f32 %v1149, %v2103
    %v3220 = vadd.f32 %v1150, %v2091
    %v3221 = vadd.f32 %v1151, %v2095
    %v3222 = vadd.f32 %v1152, %v2099
    %v3223 = vadd.f32 %v1153, %v2103
    %v3224 = vadd.f32 %v1154, %v2091
    %v3225 = vadd.f32 %v1155, %v2095
    %v3226 = vadd.f32 %v1156, %v2099
    %v3227 = vadd.f32 %v1157, %v2103
    %v3228 = vadd.f32 %v1158, %v2091
    %v3229 = vadd.f32 %v1159, %v2095
    %v3230 = vadd.f32 %v1160, %v2099
    %v3231 = vadd.f32 %v1161, %v2103
    %v3232 = vadd.f32 %v1162, %v2091
    %v3233 = vadd.f32 %v1163, %v2095
    %v3234 = vadd.f32 %v1164, %v2099
    %v3235 = vadd.f32 %v1165, %v2103
    %v3236 = vadd.f32 %v1166, %v2091
    %v3237 = vadd.f32 %v1167, %v2095
    %v3238 = vadd.f32 %v1168, %v2099
    %v3239 = vadd.f32 %v1169, %v2103
    %v3240 = vadd.f32 %v1170, %v2091
    %v3241 = vadd.f32 %v1171, %v2095
    %v3242 = vadd.f32 %v1172, %v2099
    %v3243 = vadd.f32 %v1173, %v2103
    %v3244 = vadd.f32 %v1174, %v2091
    %v3245 = vadd.f32 %v1175, %v2095
    %v3246 = vadd.f32 %v1176, %v2099
    %v3247 = vadd.f32 %v1177, %v2103
    %v3248 = vadd.f32 %v1178, %v2091
    %v3249 = vadd.f32 %v1179, %v2095
    %v3250 = vadd.f32 %v1180, %v2099
    %v3251 = vadd.f32 %v1181, %v2103
    %v3252 = vadd.f32 %v1182, %v2091
    %v3253 = vadd.f32 %v1183, %v2095
    %v3254 = vadd.f32 %v1184, %v2099
    %v3255 = vadd.f32 %v1185, %v2103
    %v3256 = vadd.f32 %v1186, %v2091
    %v3257 = vadd.f32 %v1187, %v2095
    %v3258 = vadd.f32 %v1188, %v2099
    %v3259 = vadd.f32 %v1189, %v2103
    %v3260 = vadd.f32 %v1190, %v2091
    %v3261 = vadd.f32 %v1191, %v2095
    %v3262 = vadd.f32 %v1192, %v2099
    %v3263 = vadd.f32 %v1193, %v2103
    %v3264 = vadd.f32 %v1194, %v2091
    %v3265 = vadd.f32 %v1195, %v2095
    %v3266 = vadd.f32 %v1196, %v2099
    %v3267 = vadd.f32 %v1197, %v2103
    %v3268 = vadd.f32 %v1198, %v2091
    %v3269 = vadd.f32 %v1199, %v2095
    %v3270 = vadd.f32 %v1200, %v2099
    %v3271 = vadd.f32 %v1201, %v2103
    %v3272 = vadd.f32 %v1202, %v2091
    %v3273 = vadd.f32 %v1203, %v2095
    %v3274 = vadd.f32 %v1204, %v2099
    %v3275 = vadd.f32 %v1205, %v2103
    %v3276 = vadd.f32 %v1206, %v2091
    %v3277 = vadd.f32 %v1207, %v2095
    %v3278 = vadd.f32 %v1208, %v2099
    %v3279 = vadd.f32 %v1209, %v2103
    %v3280 = vadd.f32 %v1210, %v2091
    %v3281 = vadd.f32 %v1211, %v2095
    %v3282 = vadd.f32 %v1212, %v2099
    %v3283 = vadd.f32 %v1213, %v2103
    %v3284 = vadd.f32 %v1214, %v2091
    %v3285 = vadd.f32 %v1215, %v2095
    %v3286 = vadd.f32 %v1216, %v2099
    %v3287 = vadd.f32 %v1217, %v2103
    %v3288 = vadd.f32 %v1218, %v2091
    %v3289 = vadd.f32 %v1219, %v2095
    %v3290 = vadd.f32 %v1220, %v2099
    %v3291 = vadd.f32 %v1221, %v2103
    %v3292 = vadd.f32 %v1222, %v2091
    %v3293 = vadd.f32 %v1223, %v2095
    %v3294 = vadd.f32 %v1224, %v2099
    %v3295 = vadd.f32 %v1225, %v2103
    %v3296 = vadd.f32 %v1226, %v2091
    %v3297 = vadd.f32 %v1227, %v2095
    %v3298 = vadd.f32 %v1228, %v2099
    %v3299 = vadd.f32 %v1229, %v2103
    %v3300 = vadd.f32 %v1230, %v2091
    %v3301 = vadd.f32 %v1231, %v2095
    %v3302 = vadd.f32 %v1232, %v2099
    %v3303 = vadd.f32 %v1233, %v2103
    %v3304 = vadd.f32 %v1234, %v2091
    %v3305 = vadd.f32 %v1235, %v2095
    %v3306 = vadd.f32 %v1236, %v2099
    %v3307 = vadd.f32 %v1237, %v2103
    %v3308 = vadd.f32 %v1238, %v2091
    %v3309 = vadd.f32 %v1239, %v2095
    %v3310 = vadd.f32 %v1240, %v2099
    %v3311 = vadd.f32 %v1241, %v2103
    %v3312 = vadd.f32 %v1242, %v2091
    %v3313 = vadd.f32 %v1243, %v2095
    %v3314 = vadd.f32 %v1244, %v2099
    %v3315 = vadd.f32 %v1245, %v2103
    %v3316 = vadd.f32 %v1246, %v2091
    %v3317 = vadd.f32 %v1247, %v2095
    %v3318 = vadd.f32 %v1248, %v2099
    %v3319 = vadd.f32 %v1249, %v2103
    %v3320 = vadd.f32 %v1250, %v2091
    %v3321 = vadd.f32 %v1251, %v2095
    %v3322 = vadd.f32 %v1252, %v2099
    %v3323 = vadd.f32 %v1253, %v2103
    %v3324 = vadd.f32 %v1254, %v2091
    %v3325 = vadd.f32 %v1255, %v2095
    %v3326 = vadd.f32 %v1256, %v2099
    %v3327 = vadd.f32 %v1257, %v2103
    %v3328 = vadd.f32 %v1258, %v2091
    %v3329 = vadd.f32 %v1259, %v2095
    %v3330 = vadd.f32 %v1260, %v2099
    %v3331 = vadd.f32 %v1261, %v2103
    %v3332 = vadd.f32 %v1262, %v2091
    %v3333 = vadd.f32 %v1263, %v2095
    %v3334 = vadd.f32 %v1264, %v2099
    %v3335 = vadd.f32 %v1265, %v2103
    %v3336 = vadd.f32 %v1266, %v2091
    %v3337 = vadd.f32 %v1267, %v2095
    %v3338 = vadd.f32 %v1268, %v2099
    %v3339 = vadd.f32 %v1269, %v2103
    %v3340 = vadd.f32 %v1270, %v2091
    %v3341 = vadd.f32 %v1271, %v2095
    %v3342 = vadd.f32 %v1272, %v2099
    %v3343 = vadd.f32 %v1273, %v2103
    %v3344 = vadd.f32 %v1274, %v2091
    %v3345 = vadd.f32 %v1275, %v2095
    %v3346 = vadd.f32 %v1276, %v2099
    %v3347 = vadd.f32 %v1277, %v2103
    %v3348 = vadd.f32 %v1278, %v2091
    %v3349 = vadd.f32 %v1279, %v2095
    %v3350 = vadd.f32 %v1280, %v2099
    %v3351 = vadd.f32 %v1281, %v2103
    %v3352 = vadd.f32 %v1282, %v2091
    %v3353 = vadd.f32 %v1283, %v2095
    %v3354 = vadd.f32 %v1284, %v2099
    %v3355 = vadd.f32 %v1285, %v2103
    %v3356 = vadd.f32 %v1286, %v2091
    %v3357 = vadd.f32 %v1287, %v2095
    %v3358 = vadd.f32 %v1288, %v2099
    %v3359 = vadd.f32 %v1289, %v2103
    %v3360 = vadd.f32 %v1290, %v2091
    %v3361 = vadd.f32 %v1291, %v2095
    %v3362 = vadd.f32 %v1292, %v2099
    %v3363 = vadd.f32 %v1293, %v2103
    %v3364 = vadd.f32 %v1294, %v2091
    %v3365 = vadd.f32 %v1295, %v2095
    %v3366 = vadd.f32 %v1296, %v2099
    %v3367 = vadd.f32 %v1297, %v2103
    %v3368 = vadd.f32 %v1298, %v2091
    %v3369 = vadd.f32 %v1299, %v2095
    %v3370 = vadd.f32 %v1300, %v2099
    %v3371 = vadd.f32 %v1301, %v2103
    %v3372 = vadd.f32 %v1302, %v2091
    %v3373 = vadd.f32 %v1303, %v2095
    %v3374 = vadd.f32 %v1304, %v2099
    %v3375 = vadd.f32 %v1305, %v2103
    %v3376 = vadd.f32 %v1306, %v2091
    %v3377 = vadd.f32 %v1307, %v2095
    %v3378 = vadd.f32 %v1308, %v2099
    %v3379 = vadd.f32 %v1309, %v2103
    %v3380 = vadd.f32 %v1310, %v2091
    %v3381 = vadd.f32 %v1311, %v2095
    %v3382 = vadd.f32 %v1312, %v2099
    %v3383 = vadd.f32 %v1313, %v2103
    %v3384 = vadd.f32 %v1314, %v2091
    %v3385 = vadd.f32 %v1315, %v2095
    %v3386 = vadd.f32 %v1316, %v2099
    %v3387 = vadd.f32 %v1317, %v2103
    %v3388 = vadd.f32 %v1318, %v2091
    %v3389 = vadd.f32 %v1319, %v2095
    %v3390 = vadd.f32 %v1320, %v2099
    %v3391 = vadd.f32 %v1321, %v2103
    %v3392 = vadd.f32 %v1322, %v2091
    %v3393 = vadd.f32 %v1323, %v2095
    %v3394 = vadd.f32 %v1324, %v2099
    %v3395 = vadd.f32 %v1325, %v2103
    %v3396 = vadd.f32 %v1326, %v2091
    %v3397 = vadd.f32 %v1327, %v2095
    %v3398 = vadd.f32 %v1328, %v2099
    %v3399 = vadd.f32 %v1329, %v2103
    %v3400 = vadd.f32 %v1330, %v2091
    %v3401 = vadd.f32 %v1331, %v2095
    %v3402 = vadd.f32 %v1332, %v2099
    %v3403 = vadd.f32 %v1333, %v2103
    %v3404 = vadd.f32 %v1334, %v2091
    %v3405 = vadd.f32 %v1335, %v2095
    %v3406 = vadd.f32 %v1336, %v2099
    %v3407 = vadd.f32 %v1337, %v2103
    %v3408 = vadd.f32 %v1338, %v2091
    %v3409 = vadd.f32 %v1339, %v2095
    %v3410 = vadd.f32 %v1340, %v2099
    %v3411 = vadd.f32 %v1341, %v2103
    %v3412 = vadd.f32 %v1342, %v2091
    %v3413 = vadd.f32 %v1343, %v2095
    %v3414 = vadd.f32 %v1344, %v2099
    %v3415 = vadd.f32 %v1345, %v2103
    %v3416 = vadd.f32 %v1346, %v2091
    %v3417 = vadd.f32 %v1347, %v2095
    %v3418 = vadd.f32 %v1348, %v2099
    %v3419 = vadd.f32 %v1349, %v2103
    %v3420 = vadd.f32 %v1350, %v2091
    %v3421 = vadd.f32 %v1351, %v2095
    %v3422 = vadd.f32 %v1352, %v2099
    %v3423 = vadd.f32 %v1353, %v2103
    %v3424 = vadd.f32 %v1354, %v2091
    %v3425 = vadd.f32 %v1355, %v2095
    %v3426 = vadd.f32 %v1356, %v2099
    %v3427 = vadd.f32 %v1357, %v2103
    %v3428 = vadd.f32 %v1358, %v2091
    %v3429 = vadd.f32 %v1359, %v2095
    %v3430 = vadd.f32 %v1360, %v2099
    %v3431 = vadd.f32 %v1361, %v2103
    %v3432 = vadd.f32 %v1362, %v2091
    %v3433 = vadd.f32 %v1363, %v2095
    %v3434 = vadd.f32 %v1364, %v2099
    %v3435 = vadd.f32 %v1365, %v2103
    %v3436 = vadd.f32 %v1366, %v2091
    %v3437 = vadd.f32 %v1367, %v2095
    %v3438 = vadd.f32 %v1368, %v2099
    %v3439 = vadd.f32 %v1369, %v2103
    %v3440 = vadd.f32 %v1370, %v2091
    %v3441 = vadd.f32 %v1371, %v2095
    %v3442 = vadd.f32 %v1372, %v2099
    %v3443 = vadd.f32 %v1373, %v2103
    %v3444 = vadd.f32 %v1374, %v2091
    %v3445 = vadd.f32 %v1375, %v2095
    %v3446 = vadd.f32 %v1376, %v2099
    %v3447 = vadd.f32 %v1377, %v2103
    %v3448 = vadd.f32 %v1378, %v2091
    %v3449 = vadd.f32 %v1379, %v2095
    %v3450 = vadd.f32 %v1380, %v2099
    %v3451 = vadd.f32 %v1381, %v2103
    %v3452 = vadd.f32 %v1382, %v2091
    %v3453 = vadd.f32 %v1383, %v2095
    %v3454 = vadd.f32 %v1384, %v2099
    %v3455 = vadd.f32 %v1385, %v2103
    %v3456 = vadd.f32 %v1386, %v2091
    %v3457 = vadd.f32 %v1387, %v2095
    %v3458 = vadd.f32 %v1388, %v2099
    %v3459 = vadd.f32 %v1389, %v2103
    %v3460 = vadd.f32 %v1390, %v2091
    %v3461 = vadd.f32 %v1391, %v2095
    %v3462 = vadd.f32 %v1392, %v2099
    %v3463 = vadd.f32 %v1393, %v2103
    %v3464 = vadd.f32 %v1394, %v2091
    %v3465 = vadd.f32 %v1395, %v2095
    %v3466 = vadd.f32 %v1396, %v2099
    %v3467 = vadd.f32 %v1397, %v2103
    %v3468 = vadd.f32 %v1398, %v2091
    %v3469 = vadd.f32 %v1399, %v2095
    %v3470 = vadd.f32 %v1400, %v2099
    %v3471 = vadd.f32 %v1401, %v2103
    %v3472 = vadd.f32 %v1402, %v2091
    %v3473 = vadd.f32 %v1403, %v2095
    %v3474 = vadd.f32 %v1404, %v2099
    %v3475 = vadd.f32 %v1405, %v2103
    %v3476 = vadd.f32 %v1406, %v2091
    %v3477 = vadd.f32 %v1407, %v2095
    %v3478 = vadd.f32 %v1408, %v2099
    %v3479 = vadd.f32 %v1409, %v2103
    %v3480 = vadd.f32 %v1410, %v2091
    %v3481 = vadd.f32 %v1411, %v2095
    %v3482 = vadd.f32 %v1412, %v2099
    %v3483 = vadd.f32 %v1413, %v2103
    %v3484 = vadd.f32 %v1414, %v2091
    %v3485 = vadd.f32 %v1415, %v2095
    %v3486 = vadd.f32 %v1416, %v2099
    %v3487 = vadd.f32 %v1417, %v2103
    %v3488 = vadd.f32 %v1418, %v2091
    %v3489 = vadd.f32 %v1419, %v2095
    %v3490 = vadd.f32 %v1420, %v2099
    %v3491 = vadd.f32 %v1421, %v2103
    %v3492 = vadd.f32 %v1422, %v2091
    %v3493 = vadd.f32 %v1423, %v2095
    %v3494 = vadd.f32 %v1424, %v2099
    %v3495 = vadd.f32 %v1425, %v2103
    %v3496 = vadd.f32 %v1426, %v2091
    %v3497 = vadd.f32 %v1427, %v2095
    %v3498 = vadd.f32 %v1428, %v2099
    %v3499 = vadd.f32 %v1429, %v2103
    %v3500 = vadd.f32 %v1430, %v2091
    %v3501 = vadd.f32 %v1431, %v2095
    %v3502 = vadd.f32 %v1432, %v2099
    %v3503 = vadd.f32 %v1433, %v2103
    %v3504 = vadd.f32 %v1434, %v2091
    %v3505 = vadd.f32 %v1435, %v2095
    %v3506 = vadd.f32 %v1436, %v2099
    %v3507 = vadd.f32 %v1437, %v2103
    %v3508 = vadd.f32 %v1438, %v2091
    %v3509 = vadd.f32 %v1439, %v2095
    %v3510 = vadd.f32 %v1440, %v2099
    %v3511 = vadd.f32 %v1441, %v2103
    %v3512 = vadd.f32 %v1442, %v2091
    %v3513 = vadd.f32 %v1443, %v2095
    %v3514 = vadd.f32 %v1444, %v2099
    %v3515 = vadd.f32 %v1445, %v2103
    %v3516 = vadd.f32 %v1446, %v2091
    %v3517 = vadd.f32 %v1447, %v2095
    %v3518 = vadd.f32 %v1448, %v2099
    %v3519 = vadd.f32 %v1449, %v2103
    %v3520 = vadd.f32 %v1450, %v2091
    %v3521 = vadd.f32 %v1451, %v2095
    %v3522 = vadd.f32 %v1452, %v2099
    %v3523 = vadd.f32 %v1453, %v2103
    %v3524 = vadd.f32 %v1454, %v2091
    %v3525 = vadd.f32 %v1455, %v2095
    %v3526 = vadd.f32 %v1456, %v2099
    %v3527 = vadd.f32 %v1457, %v2103
    %v3528 = vadd.f32 %v1458, %v2091
    %v3529 = vadd.f32 %v1459, %v2095
    %v3530 = vadd.f32 %v1460, %v2099
    %v3531 = vadd.f32 %v1461, %v2103
    %v3532 = vadd.f32 %v1462, %v2091
    %v3533 = vadd.f32 %v1463, %v2095
    %v3534 = vadd.f32 %v1464, %v2099
    %v3535 = vadd.f32 %v1465, %v2103
    %v3536 = vadd.f32 %v1466, %v2091
    %v3537 = vadd.f32 %v1467, %v2095
    %v3538 = vadd.f32 %v1468, %v2099
    %v3539 = vadd.f32 %v1469, %v2103
    %v3540 = vadd.f32 %v1470, %v2091
    %v3541 = vadd.f32 %v1471, %v2095
    %v3542 = vadd.f32 %v1472, %v2099
    %v3543 = vadd.f32 %v1473, %v2103
    %v3544 = vadd.f32 %v1474, %v2091
    %v3545 = vadd.f32 %v1475, %v2095
    %v3546 = vadd.f32 %v1476, %v2099
    %v3547 = vadd.f32 %v1477, %v2103
    %v3548 = vadd.f32 %v1478, %v2091
    %v3549 = vadd.f32 %v1479, %v2095
    %v3550 = vadd.f32 %v1480, %v2099
    %v3551 = vadd.f32 %v1481, %v2103
    %v3552 = vadd.f32 %v1482, %v2091
    %v3553 = vadd.f32 %v1483, %v2095
    %v3554 = vadd.f32 %v1484, %v2099
    %v3555 = vadd.f32 %v1485, %v2103
    %v3556 = vadd.f32 %v1486, %v2091
    %v3557 = vadd.f32 %v1487, %v2095
    %v3558 = vadd.f32 %v1488, %v2099
    %v3559 = vadd.f32 %v1489, %v2103
    %v3560 = vadd.f32 %v1490, %v2091
    %v3561 = vadd.f32 %v1491, %v2095
    %v3562 = vadd.f32 %v1492, %v2099
    %v3563 = vadd.f32 %v1493, %v2103
    %v3564 = vadd.f32 %v1494, %v2091
    %v3565 = vadd.f32 %v1495, %v2095
    %v3566 = vadd.f32 %v1496, %v2099
    %v3567 = vadd.f32 %v1497, %v2103
    %v3568 = vadd.f32 %v1498, %v2091
    %v3569 = vadd.f32 %v1499, %v2095
    %v3570 = vadd.f32 %v1500, %v2099
    %v3571 = vadd.f32 %v1501, %v2103
    %v3572 = vadd.f32 %v1502, %v2091
    %v3573 = vadd.f32 %v1503, %v2095
    %v3574 = vadd.f32 %v1504, %v2099
    %v3575 = vadd.f32 %v1505, %v2103
    %v3576 = vadd.f32 %v1506, %v2091
    %v3577 = vadd.f32 %v1507, %v2095
    %v3578 = vadd.f32 %v1508, %v2099
    %v3579 = vadd.f32 %v1509, %v2103
    %v3580 = vadd.f32 %v1510, %v2091
    %v3581 = vadd.f32 %v1511, %v2095
    %v3582 = vadd.f32 %v1512, %v2099
    %v3583 = vadd.f32 %v1513, %v2103
    %v3584 = vadd.f32 %v1514, %v2091
    %v3585 = vadd.f32 %v1515, %v2095
    %v3586 = vadd.f32 %v1516, %v2099
    %v3587 = vadd.f32 %v1517, %v2103
    %v3588 = vadd.f32 %v1518, %v2091
    %v3589 = vadd.f32 %v1519, %v2095
    %v3590 = vadd.f32 %v1520, %v2099
    %v3591 = vadd.f32 %v1521, %v2103
    %v3592 = vadd.f32 %v1522, %v2091
    %v3593 = vadd.f32 %v1523, %v2095
    %v3594 = vadd.f32 %v1524, %v2099
    %v3595 = vadd.f32 %v1525, %v2103
    %v3596 = vadd.f32 %v1526, %v2091
    %v3597 = vadd.f32 %v1527, %v2095
    %v3598 = vadd.f32 %v1528, %v2099
    %v3599 = vadd.f32 %v1529, %v2103
    %v3600 = vadd.f32 %v1530, %v2091
    %v3601 = vadd.f32 %v1531, %v2095
    %v3602 = vadd.f32 %v1532, %v2099
    %v3603 = vadd.f32 %v1533, %v2103
    %v3604 = vadd.f32 %v1534, %v2091
    %v3605 = vadd.f32 %v1535, %v2095
    %v3606 = vadd.f32 %v1536, %v2099
    %v3607 = vadd.f32 %v1537, %v2103
    %v3608 = vadd.f32 %v1538, %v2091
    %v3609 = vadd.f32 %v1539, %v2095
    %v3610 = vadd.f32 %v1540, %v2099
    %v3611 = vadd.f32 %v1541, %v2103
    %v3612 = vadd.f32 %v1542, %v2091
    %v3613 = vadd.f32 %v1543, %v2095
    %v3614 = vadd.f32 %v1544, %v2099
    %v3615 = vadd.f32 %v1545, %v2103
    %v3616 = vadd.f32 %v1546, %v2091
    %v3617 = vadd.f32 %v1547, %v2095
    %v3618 = vadd.f32 %v1548, %v2099
    %v3619 = vadd.f32 %v1549, %v2103
    %v3620 = vadd.f32 %v1550, %v2091
    %v3621 = vadd.f32 %v1551, %v2095
    %v3622 = vadd.f32 %v1552, %v2099
    %v3623 = vadd.f32 %v1553, %v2103
    %v3624 = vadd.f32 %v1554, %v2091
    %v3625 = vadd.f32 %v1555, %v2095
    %v3626 = vadd.f32 %v1556, %v2099
    %v3627 = vadd.f32 %v1557, %v2103
    %v3628 = vadd.f32 %v1558, %v2091
    %v3629 = vadd.f32 %v1559, %v2095
    %v3630 = vadd.f32 %v1560, %v2099
    %v3631 = vadd.f32 %v1561, %v2103
    %v3632 = vadd.f32 %v1562, %v2091
    %v3633 = vadd.f32 %v1563, %v2095
    %v3634 = vadd.f32 %v1564, %v2099
    %v3635 = vadd.f32 %v1565, %v2103
    %v3636 = vadd.f32 %v1566, %v2091
    %v3637 = vadd.f32 %v1567, %v2095
    %v3638 = vadd.f32 %v1568, %v2099
    %v3639 = vadd.f32 %v1569, %v2103
    %v3640 = vadd.f32 %v1570, %v2091
    %v3641 = vadd.f32 %v1571, %v2095
    %v3642 = vadd.f32 %v1572, %v2099
    %v3643 = vadd.f32 %v1573, %v2103
    %v3644 = vadd.f32 %v1574, %v2091
    %v3645 = vadd.f32 %v1575, %v2095
    %v3646 = vadd.f32 %v1576, %v2099
    %v3647 = vadd.f32 %v1577, %v2103
    %v3648 = vadd.f32 %v1578, %v2091
    %v3649 = vadd.f32 %v1579, %v2095
    %v3650 = vadd.f32 %v1580, %v2099
    %v3651 = vadd.f32 %v1581, %v2103
    %v3652 = vadd.f32 %v1582, %v2091
    %v3653 = vadd.f32 %v1583, %v2095
    %v3654 = vadd.f32 %v1584, %v2099
    %v3655 = vadd.f32 %v1585, %v2103
    %v3656 = vadd.f32 %v1586, %v2091
    %v3657 = vadd.f32 %v1587, %v2095
    %v3658 = vadd.f32 %v1588, %v2099
    %v3659 = vadd.f32 %v1589, %v2103
    %v3660 = vadd.f32 %v1590, %v2091
    %v3661 = vadd.f32 %v1591, %v2095
    %v3662 = vadd.f32 %v1592, %v2099
    %v3663 = vadd.f32 %v1593, %v2103
    %v3664 = vadd.f32 %v1594, %v2091
    %v3665 = vadd.f32 %v1595, %v2095
    %v3666 = vadd.f32 %v1596, %v2099
    %v3667 = vadd.f32 %v1597, %v2103
    %v3668 = vadd.f32 %v1598, %v2091
    %v3669 = vadd.f32 %v1599, %v2095
    %v3670 = vadd.f32 %v1600, %v2099
    %v3671 = vadd.f32 %v1601, %v2103
    %v3672 = vadd.f32 %v1602, %v2091
    %v3673 = vadd.f32 %v1603, %v2095
    %v3674 = vadd.f32 %v1604, %v2099
    %v3675 = vadd.f32 %v1605, %v2103
    %v3676 = vadd.f32 %v1606, %v2091
    %v3677 = vadd.f32 %v1607, %v2095
    %v3678 = vadd.f32 %v1608, %v2099
    %v3679 = vadd.f32 %v1609, %v2103
    %v3680 = vadd.f32 %v1610, %v2091
    %v3681 = vadd.f32 %v1611, %v2095
    %v3682 = vadd.f32 %v1612, %v2099
    %v3683 = vadd.f32 %v1613, %v2103
    %v3684 = vadd.f32 %v1614, %v2091
    %v3685 = vadd.f32 %v1615, %v2095
    %v3686 = vadd.f32 %v1616, %v2099
    %v3687 = vadd.f32 %v1617, %v2103
    %v3688 = vadd.f32 %v1618, %v2091
    %v3689 = vadd.f32 %v1619, %v2095
    %v3690 = vadd.f32 %v1620, %v2099
    %v3691 = vadd.f32 %v1621, %v2103
    %v3692 = vadd.f32 %v1622, %v2091
    %v3693 = vadd.f32 %v1623, %v2095
    %v3694 = vadd.f32 %v1624, %v2099
    %v3695 = vadd.f32 %v1625, %v2103
    %v3696 = vadd.f32 %v1626, %v2091
    %v3697 = vadd.f32 %v1627, %v2095
    %v3698 = vadd.f32 %v1628, %v2099
    %v3699 = vadd.f32 %v1629, %v2103
    %v3700 = vadd.f32 %v1630, %v2091
    %v3701 = vadd.f32 %v1631, %v2095
    %v3702 = vadd.f32 %v1632, %v2099
    %v3703 = vadd.f32 %v1633, %v2103
    %v3704 = vadd.f32 %v1634, %v2091
    %v3705 = vadd.f32 %v1635, %v2095
    %v3706 = vadd.f32 %v1636, %v2099
    %v3707 = vadd.f32 %v1637, %v2103
    %v3708 = vadd.f32 %v1638, %v2091
    %v3709 = vadd.f32 %v1639, %v2095
    %v3710 = vadd.f32 %v1640, %v2099
    %v3711 = vadd.f32 %v1641, %v2103
    %v3712 = vadd.f32 %v1642, %v2091
    %v3713 = vadd.f32 %v1643, %v2095
    %v3714 = vadd.f32 %v1644, %v2099
    %v3715 = vadd.f32 %v1645, %v2103
    %v3716 = vadd.f32 %v1646, %v2091
    %v3717 = vadd.f32 %v1647, %v2095
    %v3718 = vadd.f32 %v1648, %v2099
    %v3719 = vadd.f32 %v1649, %v2103
    %v3720 = vadd.f32 %v1650, %v2091
    %v3721 = vadd.f32 %v1651, %v2095
    %v3722 = vadd.f32 %v1652, %v2099
    %v3723 = vadd.f32 %v1653, %v2103
    %v3724 = vadd.f32 %v1654, %v2091
    %v3725 = vadd.f32 %v1655, %v2095
    %v3726 = vadd.f32 %v1656, %v2099
    %v3727 = vadd.f32 %v1657, %v2103
    %v3728 = vadd.f32 %v1658, %v2091
    %v3729 = vadd.f32 %v1659, %v2095
    %v3730 = vadd.f32 %v1660, %v2099
    %v3731 = vadd.f32 %v1661, %v2103
    %v3732 = vadd.f32 %v1662, %v2091
    %v3733 = vadd.f32 %v1663, %v2095
    %v3734 = vadd.f32 %v1664, %v2099
    %v3735 = vadd.f32 %v1665, %v2103
    %v3736 = vadd.f32 %v1666, %v2091
    %v3737 = vadd.f32 %v1667, %v2095
    %v3738 = vadd.f32 %v1668, %v2099
    %v3739 = vadd.f32 %v1669, %v2103
    %v3740 = vadd.f32 %v1670, %v2091
    %v3741 = vadd.f32 %v1671, %v2095
    %v3742 = vadd.f32 %v1672, %v2099
    %v3743 = vadd.f32 %v1673, %v2103
    %v3744 = vadd.f32 %v1674, %v2091
    %v3745 = vadd.f32 %v1675, %v2095
    %v3746 = vadd.f32 %v1676, %v2099
    %v3747 = vadd.f32 %v1677, %v2103
    %v3748 = vadd.f32 %v1678, %v2091
    %v3749 = vadd.f32 %v1679, %v2095
    %v3750 = vadd.f32 %v1680, %v2099
    %v3751 = vadd.f32 %v1681, %v2103
    %v3752 = vadd.f32 %v1682, %v2091
    %v3753 = vadd.f32 %v1683, %v2095
    %v3754 = vadd.f32 %v1684, %v2099
    %v3755 = vadd.f32 %v1685, %v2103
    %v3756 = vadd.f32 %v1686, %v2091
    %v3757 = vadd.f32 %v1687, %v2095
    %v3758 = vadd.f32 %v1688, %v2099
    %v3759 = vadd.f32 %v1689, %v2103
    %v3760 = vadd.f32 %v1690, %v2091
    %v3761 = vadd.f32 %v1691, %v2095
    %v3762 = vadd.f32 %v1692, %v2099
    %v3763 = vadd.f32 %v1693, %v2103
    %v3764 = vadd.f32 %v1694, %v2091
    %v3765 = vadd.f32 %v1695, %v2095
    %v3766 = vadd.f32 %v1696, %v2099
    %v3767 = vadd.f32 %v1697, %v2103
    %v3768 = vadd.f32 %v1698, %v2091
    %v3769 = vadd.f32 %v1699, %v2095
    %v3770 = vadd.f32 %v1700, %v2099
    %v3771 = vadd.f32 %v1701, %v2103
    %v3772 = vadd.f32 %v1702, %v2091
    %v3773 = vadd.f32 %v1703, %v2095
    %v3774 = vadd.f32 %v1704, %v2099
    %v3775 = vadd.f32 %v1705, %v2103
    %v3776 = vadd.f32 %v1706, %v2091
    %v3777 = vadd.f32 %v1707, %v2095
    %v3778 = vadd.f32 %v1708, %v2099
    %v3779 = vadd.f32 %v1709, %v2103
    %v3780 = vadd.f32 %v1710, %v2091
    %v3781 = vadd.f32 %v1711, %v2095
    %v3782 = vadd.f32 %v1712, %v2099
    %v3783 = vadd.f32 %v1713, %v2103
    %v3784 = vadd.f32 %v1714, %v2091
    %v3785 = vadd.f32 %v1715, %v2095
    %v3786 = vadd.f32 %v1716, %v2099
    %v3787 = vadd.f32 %v1717, %v2103
    %v3788 = vadd.f32 %v1718, %v2091
    %v3789 = vadd.f32 %v1719, %v2095
    %v3790 = vadd.f32 %v1720, %v2099
    %v3791 = vadd.f32 %v1721, %v2103
    %v3792 = vadd.f32 %v1722, %v2091
    %v3793 = vadd.f32 %v1723, %v2095
    %v3794 = vadd.f32 %v1724, %v2099
    %v3795 = vadd.f32 %v1725, %v2103
    %v3796 = vadd.f32 %v1726, %v2091
    %v3797 = vadd.f32 %v1727, %v2095
    %v3798 = vadd.f32 %v1728, %v2099
    %v3799 = vadd.f32 %v1729, %v2103
    %v3800 = vadd.f32 %v1730, %v2091
    %v3801 = vadd.f32 %v1731, %v2095
    %v3802 = vadd.f32 %v1732, %v2099
    %v3803 = vadd.f32 %v1733, %v2103
    %v3804 = vadd.f32 %v1734, %v2091
    %v3805 = vadd.f32 %v1735, %v2095
    %v3806 = vadd.f32 %v1736, %v2099
    %v3807 = vadd.f32 %v1737, %v2103
    %v3808 = vadd.f32 %v1738, %v2091
    %v3809 = vadd.f32 %v1739, %v2095
    %v3810 = vadd.f32 %v1740, %v2099
    %v3811 = vadd.f32 %v1741, %v2103
    %v3812 = vadd.f32 %v1742, %v2091
    %v3813 = vadd.f32 %v1743, %v2095
    %v3814 = vadd.f32 %v1744, %v2099
    %v3815 = vadd.f32 %v1745, %v2103
    %v3816 = vadd.f32 %v1746, %v2091
    %v3817 = vadd.f32 %v1747, %v2095
    %v3818 = vadd.f32 %v1748, %v2099
    %v3819 = vadd.f32 %v1749, %v2103
    %v3820 = vadd.f32 %v1750, %v2091
    %v3821 = vadd.f32 %v1751, %v2095
    %v3822 = vadd.f32 %v1752, %v2099
    %v3823 = vadd.f32 %v1753, %v2103
    %v3824 = vadd.f32 %v1754, %v2091
    %v3825 = vadd.f32 %v1755, %v2095
    %v3826 = vadd.f32 %v1756, %v2099
    %v3827 = vadd.f32 %v1757, %v2103
    %v3828 = vadd.f32 %v1758, %v2091
    %v3829 = vadd.f32 %v1759, %v2095
    %v3830 = vadd.f32 %v1760, %v2099
    %v3831 = vadd.f32 %v1761, %v2103
    %v3832 = vadd.f32 %v1762, %v2091
    %v3833 = vadd.f32 %v1763, %v2095
    %v3834 = vadd.f32 %v1764, %v2099
    %v3835 = vadd.f32 %v1765, %v2103
    %v3836 = vadd.f32 %v1766, %v2091
    %v3837 = vadd.f32 %v1767, %v2095
    %v3838 = vadd.f32 %v1768, %v2099
    %v3839 = vadd.f32 %v1769, %v2103
    %v3840 = vadd.f32 %v1770, %v2091
    %v3841 = vadd.f32 %v1771, %v2095
    %v3842 = vadd.f32 %v1772, %v2099
    %v3843 = vadd.f32 %v1773, %v2103
    %v3844 = vadd.f32 %v1774, %v2091
    %v3845 = vadd.f32 %v1775, %v2095
    %v3846 = vadd.f32 %v1776, %v2099
    %v3847 = vadd.f32 %v1777, %v2103
    %v3848 = vadd.f32 %v1778, %v2091
    %v3849 = vadd.f32 %v1779, %v2095
    %v3850 = vadd.f32 %v1780, %v2099
    %v3851 = vadd.f32 %v1781, %v2103
    %v3852 = vadd.f32 %v1782, %v2091
    %v3853 = vadd.f32 %v1783, %v2095
    %v3854 = vadd.f32 %v1784, %v2099
    %v3855 = vadd.f32 %v1785, %v2103
    %v3856 = vadd.f32 %v1786, %v2091
    %v3857 = vadd.f32 %v1787, %v2095
    %v3858 = vadd.f32 %v1788, %v2099
    %v3859 = vadd.f32 %v1789, %v2103
    %v3860 = vadd.f32 %v1790, %v2091
    %v3861 = vadd.f32 %v1791, %v2095
    %v3862 = vadd.f32 %v1792, %v2099
    %v3863 = vadd.f32 %v1793, %v2103
    %v3864 = vadd.f32 %v1794, %v2091
    %v3865 = vadd.f32 %v1795, %v2095
    %v3866 = vadd.f32 %v1796, %v2099
    %v3867 = vadd.f32 %v1797, %v2103
    %v3868 = vadd.f32 %v1798, %v2091
    %v3869 = vadd.f32 %v1799, %v2095
    %v3870 = vadd.f32 %v1800, %v2099
    %v3871 = vadd.f32 %v1801, %v2103
    %v3872 = vadd.f32 %v1802, %v2091
    %v3873 = vadd.f32 %v1803, %v2095
    %v3874 = vadd.f32 %v1804, %v2099
    %v3875 = vadd.f32 %v1805, %v2103
    %v3876 = vadd.f32 %v1806, %v2091
    %v3877 = vadd.f32 %v1807, %v2095
    %v3878 = vadd.f32 %v1808, %v2099
    %v3879 = vadd.f32 %v1809, %v2103
    %v3880 = vadd.f32 %v1810, %v2091
    %v3881 = vadd.f32 %v1811, %v2095
    %v3882 = vadd.f32 %v1812, %v2099
    %v3883 = vadd.f32 %v1813, %v2103
    %v3884 = vadd.f32 %v1814, %v2091
    %v3885 = vadd.f32 %v1815, %v2095
    %v3886 = vadd.f32 %v1816, %v2099
    %v3887 = vadd.f32 %v1817, %v2103
    %v3888 = vadd.f32 %v1818, %v2091
    %v3889 = vadd.f32 %v1819, %v2095
    %v3890 = vadd.f32 %v1820, %v2099
    %v3891 = vadd.f32 %v1821, %v2103
    %v3892 = vadd.f32 %v1822, %v2091
    %v3893 = vadd.f32 %v1823, %v2095
    %v3894 = vadd.f32 %v1824, %v2099
    %v3895 = vadd.f32 %v1825, %v2103
    %v3896 = vadd.f32 %v1826, %v2091
    %v3897 = vadd.f32 %v1827, %v2095
    %v3898 = vadd.f32 %v1828, %v2099
    %v3899 = vadd.f32 %v1829, %v2103
    %v3900 = vadd.f32 %v1830, %v2091
    %v3901 = vadd.f32 %v1831, %v2095
    %v3902 = vadd.f32 %v1832, %v2099
    %v3903 = vadd.f32 %v1833, %v2103
    %v3904 = vadd.f32 %v1834, %v2091
    %v3905 = vadd.f32 %v1835, %v2095
    %v3906 = vadd.f32 %v1836, %v2099
    %v3907 = vadd.f32 %v1837, %v2103
    %v3908 = vadd.f32 %v1838, %v2091
    %v3909 = vadd.f32 %v1839, %v2095
    %v3910 = vadd.f32 %v1840, %v2099
    %v3911 = vadd.f32 %v1841, %v2103
    %v3912 = vadd.f32 %v1842, %v2091
    %v3913 = vadd.f32 %v1843, %v2095
    %v3914 = vadd.f32 %v1844, %v2099
    %v3915 = vadd.f32 %v1845, %v2103
    %v3916 = vadd.f32 %v1846, %v2091
    %v3917 = vadd.f32 %v1847, %v2095
    %v3918 = vadd.f32 %v1848, %v2099
    %v3919 = vadd.f32 %v1849, %v2103
    %v3920 = vadd.f32 %v1850, %v2091
    %v3921 = vadd.f32 %v1851, %v2095
    %v3922 = vadd.f32 %v1852, %v2099
    %v3923 = vadd.f32 %v1853, %v2103
    %v3924 = vadd.f32 %v1854, %v2091
    %v3925 = vadd.f32 %v1855, %v2095
    %v3926 = vadd.f32 %v1856, %v2099
    %v3927 = vadd.f32 %v1857, %v2103
    %v3928 = vadd.f32 %v1858, %v2091
    %v3929 = vadd.f32 %v1859, %v2095
    %v3930 = vadd.f32 %v1860, %v2099
    %v3931 = vadd.f32 %v1861, %v2103
    %v3932 = vadd.f32 %v1862, %v2091
    %v3933 = vadd.f32 %v1863, %v2095
    %v3934 = vadd.f32 %v1864, %v2099
    %v3935 = vadd.f32 %v1865, %v2103
    %v3936 = vadd.f32 %v1866, %v2091
    %v3937 = vadd.f32 %v1867, %v2095
    %v3938 = vadd.f32 %v1868, %v2099
    %v3939 = vadd.f32 %v1869, %v2103
    %v3940 = vadd.f32 %v1870, %v2091
    %v3941 = vadd.f32 %v1871, %v2095
    %v3942 = vadd.f32 %v1872, %v2099
    %v3943 = vadd.f32 %v1873, %v2103
    %v3944 = vadd.f32 %v1874, %v2091
    %v3945 = vadd.f32 %v1875, %v2095
    %v3946 = vadd.f32 %v1876, %v2099
    %v3947 = vadd.f32 %v1877, %v2103
    %v3948 = vadd.f32 %v1878, %v2091
    %v3949 = vadd.f32 %v1879, %v2095
    %v3950 = vadd.f32 %v1880, %v2099
    %v3951 = vadd.f32 %v1881, %v2103
    %v3952 = vadd.f32 %v1882, %v2091
    %v3953 = vadd.f32 %v1883, %v2095
    %v3954 = vadd.f32 %v1884, %v2099
    %v3955 = vadd.f32 %v1885, %v2103
    %v3956 = vadd.f32 %v1886, %v2091
    %v3957 = vadd.f32 %v1887, %v2095
    %v3958 = vadd.f32 %v1888, %v2099
    %v3959 = vadd.f32 %v1889, %v2103
    %v3960 = vadd.f32 %v1890, %v2091
    %v3961 = vadd.f32 %v1891, %v2095
    %v3962 = vadd.f32 %v1892, %v2099
    %v3963 = vadd.f32 %v1893, %v2103
    %v3964 = vadd.f32 %v1894, %v2091
    %v3965 = vadd.f32 %v1895, %v2095
    %v3966 = vadd.f32 %v1896, %v2099
    %v3967 = vadd.f32 %v1897, %v2103
    %v3968 = vadd.f32 %v1898, %v2091
    %v3969 = vadd.f32 %v1899, %v2095
    %v3970 = vadd.f32 %v1900, %v2099
    %v3971 = vadd.f32 %v1901, %v2103
    %v3972 = vadd.f32 %v1902, %v2091
    %v3973 = vadd.f32 %v1903, %v2095
    %v3974 = vadd.f32 %v1904, %v2099
    %v3975 = vadd.f32 %v1905, %v2103
    %v3976 = vadd.f32 %v1906, %v2091
    %v3977 = vadd.f32 %v1907, %v2095
    %v3978 = vadd.f32 %v1908, %v2099
    %v3979 = vadd.f32 %v1909, %v2103
    %v3980 = vadd.f32 %v1910, %v2091
    %v3981 = vadd.f32 %v1911, %v2095
    %v3982 = vadd.f32 %v1912, %v2099
    %v3983 = vadd.f32 %v1913, %v2103
    %v3984 = vadd.f32 %v1914, %v2091
    %v3985 = vadd.f32 %v1915, %v2095
    %v3986 = vadd.f32 %v1916, %v2099
    %v3987 = vadd.f32 %v1917, %v2103
    %v3988 = vadd.f32 %v1918, %v2091
    %v3989 = vadd.f32 %v1919, %v2095
    %v3990 = vadd.f32 %v1920, %v2099
    %v3991 = vadd.f32 %v1921, %v2103
    %v3992 = vadd.f32 %v1922, %v2091
    %v3993 = vadd.f32 %v1923, %v2095
    %v3994 = vadd.f32 %v1924, %v2099
    %v3995 = vadd.f32 %v1925, %v2103
    %v3996 = vadd.f32 %v1926, %v2091
    %v3997 = vadd.f32 %v1927, %v2095
    %v3998 = vadd.f32 %v1928, %v2099
    %v3999 = vadd.f32 %v1929, %v2103
    %v4000 = vadd.f32 %v1930, %v2091
    %v4001 = vadd.f32 %v1931, %v2095
    %v4002 = vadd.f32 %v1932, %v2099
    %v4003 = vadd.f32 %v1933, %v2103
    %v4004 = vadd.f32 %v1934, %v2091
    %v4005 = vadd.f32 %v1935, %v2095
    %v4006 = vadd.f32 %v1936, %v2099
    %v4007 = vadd.f32 %v1937, %v2103
    %v4008 = vadd.f32 %v1938, %v2091
    %v4009 = vadd.f32 %v1939, %v2095
    %v4010 = vadd.f32 %v1940, %v2099
    %v4011 = vadd.f32 %v1941, %v2103
    %v4012 = vadd.f32 %v1942, %v2091
    %v4013 = vadd.f32 %v1943, %v2095
    %v4014 = vadd.f32 %v1944, %v2099
    %v4015 = vadd.f32 %v1945, %v2103
    %v4016 = vadd.f32 %v1946, %v2091
    %v4017 = vadd.f32 %v1947, %v2095
    %v4018 = vadd.f32 %v1948, %v2099
    %v4019 = vadd.f32 %v1949, %v2103
    %v4020 = vadd.f32 %v1950, %v2091
    %v4021 = vadd.f32 %v1951, %v2095
    %v4022 = vadd.f32 %v1952, %v2099
    %v4023 = vadd.f32 %v1953, %v2103
    %v4024 = vadd.f32 %v1954, %v2091
    %v4025 = vadd.f32 %v1955, %v2095
    %v4026 = vadd.f32 %v1956, %v2099
    %v4027 = vadd.f32 %v1957, %v2103
    %v4028 = vadd.f32 %v1958, %v2091
    %v4029 = vadd.f32 %v1959, %v2095
    %v4030 = vadd.f32 %v1960, %v2099
    %v4031 = vadd.f32 %v1961, %v2103
    %v4032 = vadd.f32 %v1962, %v2091
    %v4033 = vadd.f32 %v1963, %v2095
    %v4034 = vadd.f32 %v1964, %v2099
    %v4035 = vadd.f32 %v1965, %v2103
    %v4036 = vadd.f32 %v1966, %v2091
    %v4037 = vadd.f32 %v1967, %v2095
    %v4038 = vadd.f32 %v1968, %v2099
    %v4039 = vadd.f32 %v1969, %v2103
    %v4040 = vadd.f32 %v1970, %v2091
    %v4041 = vadd.f32 %v1971, %v2095
    %v4042 = vadd.f32 %v1972, %v2099
    %v4043 = vadd.f32 %v1973, %v2103
    %v4044 = vadd.f32 %v1974, %v2091
    %v4045 = vadd.f32 %v1975, %v2095
    %v4046 = vadd.f32 %v1976, %v2099
    %v4047 = vadd.f32 %v1977, %v2103
    %v4048 = vadd.f32 %v1978, %v2091
    %v4049 = vadd.f32 %v1979, %v2095
    %v4050 = vadd.f32 %v1980, %v2099
    %v4051 = vadd.f32 %v1981, %v2103
    %v4052 = vadd.f32 %v1982, %v2091
    %v4053 = vadd.f32 %v1983, %v2095
    %v4054 = vadd.f32 %v1984, %v2099
    %v4055 = vadd.f32 %v1985, %v2103
    %v4056 = vadd.f32 %v1986, %v2091
    %v4057 = vadd.f32 %v1987, %v2095
    %v4058 = vadd.f32 %v1988, %v2099
    %v4059 = vadd.f32 %v1989, %v2103
    %v4060 = vadd.f32 %v1990, %v2091
    %v4061 = vadd.f32 %v1991, %v2095
    %v4062 = vadd.f32 %v1992, %v2099
    %v4063 = vadd.f32 %v1993, %v2103
    %v4064 = vadd.f32 %v1994, %v2091
    %v4065 = vadd.f32 %v1995, %v2095
    %v4066 = vadd.f32 %v1996, %v2099
    %v4067 = vadd.f32 %v1997, %v2103
    %v4068 = vadd.f32 %v1998, %v2091
    %v4069 = vadd.f32 %v1999, %v2095
    %v4070 = vadd.f32 %v2000, %v2099
    %v4071 = vadd.f32 %v2001, %v2103
    %v4072 = vadd.f32 %v2002, %v2091
    %v4073 = vadd.f32 %v2003, %v2095
    %v4074 = vadd.f32 %v2004, %v2099
    %v4075 = vadd.f32 %v2005, %v2103
    %v4076 = vadd.f32 %v2006, %v2091
    %v4077 = vadd.f32 %v2007, %v2095
    %v4078 = vadd.f32 %v2008, %v2099
    %v4079 = vadd.f32 %v2009, %v2103
    %v4080 = vadd.f32 %v2010, %v2091
    %v4081 = vadd.f32 %v2011, %v2095
    %v4082 = vadd.f32 %v2012, %v2099
    %v4083 = vadd.f32 %v2013, %v2103
    %v4084 = vadd.f32 %v2014, %v2091
    %v4085 = vadd.f32 %v2015, %v2095
    %v4086 = vadd.f32 %v2016, %v2099
    %v4087 = vadd.f32 %v2017, %v2103
    %v4088 = vadd.f32 %v2018, %v2091
    %v4089 = vadd.f32 %v2019, %v2095
    %v4090 = vadd.f32 %v2020, %v2099
    %v4091 = vadd.f32 %v2021, %v2103
    %v4092 = vadd.f32 %v2022, %v2091
    %v4093 = vadd.f32 %v2023, %v2095
    %v4094 = vadd.f32 %v2024, %v2099
    %v4095 = vadd.f32 %v2025, %v2103
    %v4096 = vadd.f32 %v2026, %v2091
    %v4097 = vadd.f32 %v2027, %v2095
    %v4098 = vadd.f32 %v2028, %v2099
    %v4099 = vadd.f32 %v2029, %v2103
    %v4100 = vadd.f32 %v2030, %v2091
    %v4101 = vadd.f32 %v2031, %v2095
    %v4102 = vadd.f32 %v2032, %v2099
    %v4103 = vadd.f32 %v2033, %v2103
    %v4104 = vadd.f32 %v2034, %v2091
    %v4105 = vadd.f32 %v2035, %v2095
    %v4106 = vadd.f32 %v2036, %v2099
    %v4107 = vadd.f32 %v2037, %v2103
    %v4108 = vadd.f32 %v2038, %v2091
    %v4109 = vadd.f32 %v2039, %v2095
    %v4110 = vadd.f32 %v2040, %v2099
    %v4111 = vadd.f32 %v2041, %v2103
    %v4112 = vadd.f32 %v2042, %v2091
    %v4113 = vadd.f32 %v2043, %v2095
    %v4114 = vadd.f32 %v2044, %v2099
    %v4115 = vadd.f32 %v2045, %v2103
    %v4116 = vadd.f32 %v2046, %v2091
    %v4117 = vadd.f32 %v2047, %v2095
    %v4118 = vadd.f32 %v2048, %v2099
    %v4119 = vadd.f32 %v2049, %v2103
    %v4120 = vadd.f32 %v2050, %v2091
    %v4121 = vadd.f32 %v2051, %v2095
    %v4122 = vadd.f32 %v2052, %v2099
    %v4123 = vadd.f32 %v2053, %v2103
    %v4124 = vadd.f32 %v2054, %v2091
    %v4125 = vadd.f32 %v2055, %v2095
    %v4126 = vadd.f32 %v2056, %v2099
    %v4127 = vadd.f32 %v2057, %v2103
    %v4128 = vadd.f32 %v2058, %v2091
    %v4129 = vadd.f32 %v2059, %v2095
    %v4130 = vadd.f32 %v2060, %v2099
    %v4131 = vadd.f32 %v2061, %v2103
    %v4132 = vadd.f32 %v2062, %v2091
    %v4133 = vadd.f32 %v2063, %v2095
    %v4134 = vadd.f32 %v2064, %v2099
    %v4135 = vadd.f32 %v2065, %v2103
    %v4136 = vadd.f32 %v2066, %v2091
    %v4137 = vadd.f32 %v2067, %v2095
    %v4138 = vadd.f32 %v2068, %v2099
    %v4139 = vadd.f32 %v2069, %v2103
    %v4140 = vadd.f32 %v2070, %v2091
    %v4141 = vadd.f32 %v2071, %v2095
    %v4142 = vadd.f32 %v2072, %v2099
    %v4143 = vadd.f32 %v2073, %v2103
    %v4144 = vadd.f32 %v2074, %v2091
    %v4145 = vadd.f32 %v2075, %v2095
    %v4146 = vadd.f32 %v2076, %v2099
    %v4147 = vadd.f32 %v2077, %v2103
    %v4148 = vadd.f32 %v2078, %v2091
    %v4149 = vadd.f32 %v2079, %v2095
    %v4150 = vadd.f32 %v2080, %v2099
    %v4151 = vadd.f32 %v2081, %v2103
    %v4152 = vadd.f32 %v2082, %v2091
    %v4153 = vadd.f32 %v2083, %v2095
    %v4154 = vadd.f32 %v2084, %v2099
    %v4155 = vadd.f32 %v2085, %v2103
    %4156 = vst [vmem:[#allocation7] sm:$0xff] %v2108
    %4157 = vst [vmem:[#allocation7 + $0x8] sm:$0xff] %v2109
    %4158 = vst [vmem:[#allocation7 + $0x10] sm:$0xff] %v2110
    %4159 = vst [vmem:[#allocation7 + $0x18] sm:$0xff] %v2111
    %4160 = vst [vmem:[#allocation7 + $0x20] sm:$0xff] %v2112
    %4161 = vst [vmem:[#allocation7 + $0x28] sm:$0xff] %v2113
    %4162 = vst [vmem:[#allocation7 + $0x30] sm:$0xff] %v2114
    %4163 = vst [vmem:[#allocation7 + $0x38] sm:$0xff] %v2115
    %4164 = vst [vmem:[#allocation7 + $0x40] sm:$0xff] %v2116
    %4165 = vst [vmem:[#allocation7 + $0x48] sm:$0xff] %v2117
    %4166 = vst [vmem:[#allocation7 + $0x50] sm:$0xff] %v2118
    %4167 = vst [vmem:[#allocation7 + $0x58] sm:$0xff] %v2119
    %4168 = vst [vmem:[#allocation7 + $0x60] sm:$0xff] %v2120
    %4169 = vst [vmem:[#allocation7 + $0x68] sm:$0xff] %v2121
    %4170 = vst [vmem:[#allocation7 + $0x70] sm:$0xff] %v2122
    %4171 = vst [vmem:[#allocation7 + $0x78] sm:$0xff] %v2123
    %4172 = vst [vmem:[#allocation7 + $0x80] sm:$0xff] %v2124
    %4173 = vst [vmem:[#allocation7 + $0x88] sm:$0xff] %v2125
    %4174 = vst [vmem:[#allocation7 + $0x90] sm:$0xff] %v2126
    %4175 = vst [vmem:[#allocation7 + $0x98] sm:$0xff] %v2127
    %4176 = vst [vmem:[#allocation7 + $0xa0] sm:$0xff] %v2128
    %4177 = vst [vmem:[#allocation7 + $0xa8] sm:$0xff] %v2129
    %4178 = vst [vmem:[#allocation7 + $0xb0] sm:$0xff] %v2130
    %4179 = vst [vmem:[#allocation7 + $0xb8] sm:$0xff] %v2131
    %4180 = vst [vmem:[#allocation7 + $0xc0] sm:$0xff] %v2132
    %4181 = vst [vmem:[#allocation7 + $0xc8] sm:$0xff] %v2133
    %4182 = vst [vmem:[#allocation7 + $0xd0] sm:$0xff] %v2134
    %4183 = vst [vmem:[#allocation7 + $0xd8] sm:$0xff] %v2135
    %4184 = vst [vmem:[#allocation7 + $0xe0] sm:$0xff] %v2136
    %4185 = vst [vmem:[#allocation7 + $0xe8] sm:$0xff] %v2137
    %4186 = vst [vmem:[#allocation7 + $0xf0] sm:$0xff] %v2138
    %4187 = vst [vmem:[#allocation7 + $0xf8] sm:$0xff] %v2139
    %4188 = vst [vmem:[#allocation7 + $0x100] sm:$0xff] %v2140
    %4189 = vst [vmem:[#allocation7 + $0x108] sm:$0xff] %v2141
    %4190 = vst [vmem:[#allocation7 + $0x110] sm:$0xff] %v2142
    %4191 = vst [vmem:[#allocation7 + $0x118] sm:$0xff] %v2143
    %4192 = vst [vmem:[#allocation7 + $0x120] sm:$0xff] %v2144
    %4193 = vst [vmem:[#allocation7 + $0x128] sm:$0xff] %v2145
    %4194 = vst [vmem:[#allocation7 + $0x130] sm:$0xff] %v2146
    %4195 = vst [vmem:[#allocation7 + $0x138] sm:$0xff] %v2147
    %4196 = vst [vmem:[#allocation7 + $0x140] sm:$0xff] %v2148
    %4197 = vst [vmem:[#allocation7 + $0x148] sm:$0xff] %v2149
    %4198 = vst [vmem:[#allocation7 + $0x150] sm:$0xff] %v2150
    %4199 = vst [vmem:[#allocation7 + $0x158] sm:$0xff] %v2151
    %4200 = vst [vmem:[#allocation7 + $0x160] sm:$0xff] %v2152
    %4201 = vst [vmem:[#allocation7 + $0x168] sm:$0xff] %v2153
    %4202 = vst [vmem:[#allocation7 + $0x170] sm:$0xff] %v2154
    %4203 = vst [vmem:[#allocation7 + $0x178] sm:$0xff] %v2155
    %4204 = vst [vmem:[#allocation7 + $0x180] sm:$0xff] %v2156
    %4205 = vst [vmem:[#allocation7 + $0x188] sm:$0xff] %v2157
    %4206 = vst [vmem:[#allocation7 + $0x190] sm:$0xff] %v2158
    %4207 = vst [vmem:[#allocation7 + $0x198] sm:$0xff] %v2159
    %4208 = vst [vmem:[#allocation7 + $0x1a0] sm:$0xff] %v2160
    %4209 = vst [vmem:[#allocation7 + $0x1a8] sm:$0xff] %v2161
    %4210 = vst [vmem:[#allocation7 + $0x1b0] sm:$0xff] %v2162
    %4211 = vst [vmem:[#allocation7 + $0x1b8] sm:$0xff] %v2163
    %4212 = vst [vmem:[#allocation7 + $0x1c0] sm:$0xff] %v2164
    %4213 = vst [vmem:[#allocation7 + $0x1c8] sm:$0xff] %v2165
    %4214 = vst [vmem:[#allocation7 + $0x1d0] sm:$0xff] %v2166
    %4215 = vst [vmem:[#allocation7 + $0x1d8] sm:$0xff] %v2167
    %4216 = vst [vmem:[#allocation7 + $0x1e0] sm:$0xff] %v2168
    %4217 = vst [vmem:[#allocation7 + $0x1e8] sm:$0xff] %v2169
    %4218 = vst [vmem:[#allocation7 + $0x1f0] sm:$0xff] %v2170
    %4219 = vst [vmem:[#allocation7 + $0x1f8] sm:$0xff] %v2171
    %4220 = vst [vmem:[#allocation7 + $0x200] sm:$0xff] %v2172
    %4221 = vst [vmem:[#allocation7 + $0x208] sm:$0xff] %v2173
    %4222 = vst [vmem:[#allocation7 + $0x210] sm:$0xff] %v2174
    %4223 = vst [vmem:[#allocation7 + $0x218] sm:$0xff] %v2175
    %4224 = vst [vmem:[#allocation7 + $0x220] sm:$0xff] %v2176
    %4225 = vst [vmem:[#allocation7 + $0x228] sm:$0xff] %v2177
    %4226 = vst [vmem:[#allocation7 + $0x230] sm:$0xff] %v2178
    %4227 = vst [vmem:[#allocation7 + $0x238] sm:$0xff] %v2179
    %4228 = vst [vmem:[#allocation7 + $0x240] sm:$0xff] %v2180
    %4229 = vst [vmem:[#allocation7 + $0x248] sm:$0xff] %v2181
    %4230 = vst [vmem:[#allocation7 + $0x250] sm:$0xff] %v2182
    %4231 = vst [vmem:[#allocation7 + $0x258] sm:$0xff] %v2183
    %4232 = vst [vmem:[#allocation7 + $0x260] sm:$0xff] %v2184
    %4233 = vst [vmem:[#allocation7 + $0x268] sm:$0xff] %v2185
    %4234 = vst [vmem:[#allocation7 + $0x270] sm:$0xff] %v2186
    %4235 = vst [vmem:[#allocation7 + $0x278] sm:$0xff] %v2187
    %4236 = vst [vmem:[#allocation7 + $0x280] sm:$0xff] %v2188
    %4237 = vst [vmem:[#allocation7 + $0x288] sm:$0xff] %v2189
    %4238 = vst [vmem:[#allocation7 + $0x290] sm:$0xff] %v2190
    %4239 = vst [vmem:[#allocation7 + $0x298] sm:$0xff] %v2191
    %4240 = vst [vmem:[#allocation7 + $0x2a0] sm:$0xff] %v2192
    %4241 = vst [vmem:[#allocation7 + $0x2a8] sm:$0xff] %v2193
    %4242 = vst [vmem:[#allocation7 + $0x2b0] sm:$0xff] %v2194
    %4243 = vst [vmem:[#allocation7 + $0x2b8] sm:$0xff] %v2195
    %4244 = vst [vmem:[#allocation7 + $0x2c0] sm:$0xff] %v2196
    %4245 = vst [vmem:[#allocation7 + $0x2c8] sm:$0xff] %v2197
    %4246 = vst [vmem:[#allocation7 + $0x2d0] sm:$0xff] %v2198
    %4247 = vst [vmem:[#allocation7 + $0x2d8] sm:$0xff] %v2199
    %4248 = vst [vmem:[#allocation7 + $0x2e0] sm:$0xff] %v2200
    %4249 = vst [vmem:[#allocation7 + $0x2e8] sm:$0xff] %v2201
    %4250 = vst [vmem:[#allocation7 + $0x2f0] sm:$0xff] %v2202
    %4251 = vst [vmem:[#allocation7 + $0x2f8] sm:$0xff] %v2203
    %4252 = vst [vmem:[#allocation7 + $0x300] sm:$0xff] %v2204
    %4253 = vst [vmem:[#allocation7 + $0x308] sm:$0xff] %v2205
    %4254 = vst [vmem:[#allocation7 + $0x310] sm:$0xff] %v2206
    %4255 = vst [vmem:[#allocation7 + $0x318] sm:$0xff] %v2207
    %4256 = vst [vmem:[#allocation7 + $0x320] sm:$0xff] %v2208
    %4257 = vst [vmem:[#allocation7 + $0x328] sm:$0xff] %v2209
    %4258 = vst [vmem:[#allocation7 + $0x330] sm:$0xff] %v2210
    %4259 = vst [vmem:[#allocation7 + $0x338] sm:$0xff] %v2211
    %4260 = vst [vmem:[#allocation7 + $0x340] sm:$0xff] %v2212
    %4261 = vst [vmem:[#allocation7 + $0x348] sm:$0xff] %v2213
    %4262 = vst [vmem:[#allocation7 + $0x350] sm:$0xff] %v2214
    %4263 = vst [vmem:[#allocation7 + $0x358] sm:$0xff] %v2215
    %4264 = vst [vmem:[#allocation7 + $0x360] sm:$0xff] %v2216
    %4265 = vst [vmem:[#allocation7 + $0x368] sm:$0xff] %v2217
    %4266 = vst [vmem:[#allocation7 + $0x370] sm:$0xff] %v2218
    %4267 = vst [vmem:[#allocation7 + $0x378] sm:$0xff] %v2219
    %4268 = vst [vmem:[#allocation7 + $0x380] sm:$0xff] %v2220
    %4269 = vst [vmem:[#allocation7 + $0x388] sm:$0xff] %v2221
    %4270 = vst [vmem:[#allocation7 + $0x390] sm:$0xff] %v2222
    %4271 = vst [vmem:[#allocation7 + $0x398] sm:$0xff] %v2223
    %4272 = vst [vmem:[#allocation7 + $0x3a0] sm:$0xff] %v2224
    %4273 = vst [vmem:[#allocation7 + $0x3a8] sm:$0xff] %v2225
    %4274 = vst [vmem:[#allocation7 + $0x3b0] sm:$0xff] %v2226
    %4275 = vst [vmem:[#allocation7 + $0x3b8] sm:$0xff] %v2227
    %4276 = vst [vmem:[#allocation7 + $0x3c0] sm:$0xff] %v2228
    %4277 = vst [vmem:[#allocation7 + $0x3c8] sm:$0xff] %v2229
    %4278 = vst [vmem:[#allocation7 + $0x3d0] sm:$0xff] %v2230
    %4279 = vst [vmem:[#allocation7 + $0x3d8] sm:$0xff] %v2231
    %4280 = vst [vmem:[#allocation7 + $0x3e0] sm:$0xff] %v2232
    %4281 = vst [vmem:[#allocation7 + $0x3e8] sm:$0xff] %v2233
    %4282 = vst [vmem:[#allocation7 + $0x3f0] sm:$0xff] %v2234
    %4283 = vst [vmem:[#allocation7 + $0x3f8] sm:$0xff] %v2235
    %4284 = vst [vmem:[#allocation7 + $0x400] sm:$0xff] %v2236
    %4285 = vst [vmem:[#allocation7 + $0x408] sm:$0xff] %v2237
    %4286 = vst [vmem:[#allocation7 + $0x410] sm:$0xff] %v2238
    %4287 = vst [vmem:[#allocation7 + $0x418] sm:$0xff] %v2239
    %4288 = vst [vmem:[#allocation7 + $0x420] sm:$0xff] %v2240
    %4289 = vst [vmem:[#allocation7 + $0x428] sm:$0xff] %v2241
    %4290 = vst [vmem:[#allocation7 + $0x430] sm:$0xff] %v2242
    %4291 = vst [vmem:[#allocation7 + $0x438] sm:$0xff] %v2243
    %4292 = vst [vmem:[#allocation7 + $0x440] sm:$0xff] %v2244
    %4293 = vst [vmem:[#allocation7 + $0x448] sm:$0xff] %v2245
    %4294 = vst [vmem:[#allocation7 + $0x450] sm:$0xff] %v2246
    %4295 = vst [vmem:[#allocation7 + $0x458] sm:$0xff] %v2247
    %4296 = vst [vmem:[#allocation7 + $0x460] sm:$0xff] %v2248
    %4297 = vst [vmem:[#allocation7 + $0x468] sm:$0xff] %v2249
    %4298 = vst [vmem:[#allocation7 + $0x470] sm:$0xff] %v2250
    %4299 = vst [vmem:[#allocation7 + $0x478] sm:$0xff] %v2251
    %4300 = vst [vmem:[#allocation7 + $0x480] sm:$0xff] %v2252
    %4301 = vst [vmem:[#allocation7 + $0x488] sm:$0xff] %v2253
    %4302 = vst [vmem:[#allocation7 + $0x490] sm:$0xff] %v2254
    %4303 = vst [vmem:[#allocation7 + $0x498] sm:$0xff] %v2255
    %4304 = vst [vmem:[#allocation7 + $0x4a0] sm:$0xff] %v2256
    %4305 = vst [vmem:[#allocation7 + $0x4a8] sm:$0xff] %v2257
    %4306 = vst [vmem:[#allocation7 + $0x4b0] sm:$0xff] %v2258
    %4307 = vst [vmem:[#allocation7 + $0x4b8] sm:$0xff] %v2259
    %4308 = vst [vmem:[#allocation7 + $0x4c0] sm:$0xff] %v2260
    %4309 = vst [vmem:[#allocation7 + $0x4c8] sm:$0xff] %v2261
    %4310 = vst [vmem:[#allocation7 + $0x4d0] sm:$0xff] %v2262
    %4311 = vst [vmem:[#allocation7 + $0x4d8] sm:$0xff] %v2263
    %4312 = vst [vmem:[#allocation7 + $0x4e0] sm:$0xff] %v2264
    %4313 = vst [vmem:[#allocation7 + $0x4e8] sm:$0xff] %v2265
    %4314 = vst [vmem:[#allocation7 + $0x4f0] sm:$0xff] %v2266
    %4315 = vst [vmem:[#allocation7 + $0x4f8] sm:$0xff] %v2267
    %4316 = vst [vmem:[#allocation7 + $0x500] sm:$0xff] %v2268
    %4317 = vst [vmem:[#allocation7 + $0x508] sm:$0xff] %v2269
    %4318 = vst [vmem:[#allocation7 + $0x510] sm:$0xff] %v2270
    %4319 = vst [vmem:[#allocation7 + $0x518] sm:$0xff] %v2271
    %4320 = vst [vmem:[#allocation7 + $0x520] sm:$0xff] %v2272
    %4321 = vst [vmem:[#allocation7 + $0x528] sm:$0xff] %v2273
    %4322 = vst [vmem:[#allocation7 + $0x530] sm:$0xff] %v2274
    %4323 = vst [vmem:[#allocation7 + $0x538] sm:$0xff] %v2275
    %4324 = vst [vmem:[#allocation7 + $0x540] sm:$0xff] %v2276
    %4325 = vst [vmem:[#allocation7 + $0x548] sm:$0xff] %v2277
    %4326 = vst [vmem:[#allocation7 + $0x550] sm:$0xff] %v2278
    %4327 = vst [vmem:[#allocation7 + $0x558] sm:$0xff] %v2279
    %4328 = vst [vmem:[#allocation7 + $0x560] sm:$0xff] %v2280
    %4329 = vst [vmem:[#allocation7 + $0x568] sm:$0xff] %v2281
    %4330 = vst [vmem:[#allocation7 + $0x570] sm:$0xff] %v2282
    %4331 = vst [vmem:[#allocation7 + $0x578] sm:$0xff] %v2283
    %4332 = vst [vmem:[#allocation7 + $0x580] sm:$0xff] %v2284
    %4333 = vst [vmem:[#allocation7 + $0x588] sm:$0xff] %v2285
    %4334 = vst [vmem:[#allocation7 + $0x590] sm:$0xff] %v2286
    %4335 = vst [vmem:[#allocation7 + $0x598] sm:$0xff] %v2287
    %4336 = vst [vmem:[#allocation7 + $0x5a0] sm:$0xff] %v2288
    %4337 = vst [vmem:[#allocation7 + $0x5a8] sm:$0xff] %v2289
    %4338 = vst [vmem:[#allocation7 + $0x5b0] sm:$0xff] %v2290
    %4339 = vst [vmem:[#allocation7 + $0x5b8] sm:$0xff] %v2291
    %4340 = vst [vmem:[#allocation7 + $0x5c0] sm:$0xff] %v2292
    %4341 = vst [vmem:[#allocation7 + $0x5c8] sm:$0xff] %v2293
    %4342 = vst [vmem:[#allocation7 + $0x5d0] sm:$0xff] %v2294
    %4343 = vst [vmem:[#allocation7 + $0x5d8] sm:$0xff] %v2295
    %4344 = vst [vmem:[#allocation7 + $0x5e0] sm:$0xff] %v2296
    %4345 = vst [vmem:[#allocation7 + $0x5e8] sm:$0xff] %v2297
    %4346 = vst [vmem:[#allocation7 + $0x5f0] sm:$0xff] %v2298
    %4347 = vst [vmem:[#allocation7 + $0x5f8] sm:$0xff] %v2299
    %4348 = vst [vmem:[#allocation7 + $0x600] sm:$0xff] %v2300
    %4349 = vst [vmem:[#allocation7 + $0x608] sm:$0xff] %v2301
    %4350 = vst [vmem:[#allocation7 + $0x610] sm:$0xff] %v2302
    %4351 = vst [vmem:[#allocation7 + $0x618] sm:$0xff] %v2303
    %4352 = vst [vmem:[#allocation7 + $0x620] sm:$0xff] %v2304
    %4353 = vst [vmem:[#allocation7 + $0x628] sm:$0xff] %v2305
    %4354 = vst [vmem:[#allocation7 + $0x630] sm:$0xff] %v2306
    %4355 = vst [vmem:[#allocation7 + $0x638] sm:$0xff] %v2307
    %4356 = vst [vmem:[#allocation7 + $0x640] sm:$0xff] %v2308
    %4357 = vst [vmem:[#allocation7 + $0x648] sm:$0xff] %v2309
    %4358 = vst [vmem:[#allocation7 + $0x650] sm:$0xff] %v2310
    %4359 = vst [vmem:[#allocation7 + $0x658] sm:$0xff] %v2311
    %4360 = vst [vmem:[#allocation7 + $0x660] sm:$0xff] %v2312
    %4361 = vst [vmem:[#allocation7 + $0x668] sm:$0xff] %v2313
    %4362 = vst [vmem:[#allocation7 + $0x670] sm:$0xff] %v2314
    %4363 = vst [vmem:[#allocation7 + $0x678] sm:$0xff] %v2315
    %4364 = vst [vmem:[#allocation7 + $0x680] sm:$0xff] %v2316
    %4365 = vst [vmem:[#allocation7 + $0x688] sm:$0xff] %v2317
    %4366 = vst [vmem:[#allocation7 + $0x690] sm:$0xff] %v2318
    %4367 = vst [vmem:[#allocation7 + $0x698] sm:$0xff] %v2319
    %4368 = vst [vmem:[#allocation7 + $0x6a0] sm:$0xff] %v2320
    %4369 = vst [vmem:[#allocation7 + $0x6a8] sm:$0xff] %v2321
    %4370 = vst [vmem:[#allocation7 + $0x6b0] sm:$0xff] %v2322
    %4371 = vst [vmem:[#allocation7 + $0x6b8] sm:$0xff] %v2323
    %4372 = vst [vmem:[#allocation7 + $0x6c0] sm:$0xff] %v2324
    %4373 = vst [vmem:[#allocation7 + $0x6c8] sm:$0xff] %v2325
    %4374 = vst [vmem:[#allocation7 + $0x6d0] sm:$0xff] %v2326
    %4375 = vst [vmem:[#allocation7 + $0x6d8] sm:$0xff] %v2327
    %4376 = vst [vmem:[#allocation7 + $0x6e0] sm:$0xff] %v2328
    %4377 = vst [vmem:[#allocation7 + $0x6e8] sm:$0xff] %v2329
    %4378 = vst [vmem:[#allocation7 + $0x6f0] sm:$0xff] %v2330
    %4379 = vst [vmem:[#allocation7 + $0x6f8] sm:$0xff] %v2331
    %4380 = vst [vmem:[#allocation7 + $0x700] sm:$0xff] %v2332
    %4381 = vst [vmem:[#allocation7 + $0x708] sm:$0xff] %v2333
    %4382 = vst [vmem:[#allocation7 + $0x710] sm:$0xff] %v2334
    %4383 = vst [vmem:[#allocation7 + $0x718] sm:$0xff] %v2335
    %4384 = vst [vmem:[#allocation7 + $0x720] sm:$0xff] %v2336
    %4385 = vst [vmem:[#allocation7 + $0x728] sm:$0xff] %v2337
    %4386 = vst [vmem:[#allocation7 + $0x730] sm:$0xff] %v2338
    %4387 = vst [vmem:[#allocation7 + $0x738] sm:$0xff] %v2339
    %4388 = vst [vmem:[#allocation7 + $0x740] sm:$0xff] %v2340
    %4389 = vst [vmem:[#allocation7 + $0x748] sm:$0xff] %v2341
    %4390 = vst [vmem:[#allocation7 + $0x750] sm:$0xff] %v2342
    %4391 = vst [vmem:[#allocation7 + $0x758] sm:$0xff] %v2343
    %4392 = vst [vmem:[#allocation7 + $0x760] sm:$0xff] %v2344
    %4393 = vst [vmem:[#allocation7 + $0x768] sm:$0xff] %v2345
    %4394 = vst [vmem:[#allocation7 + $0x770] sm:$0xff] %v2346
    %4395 = vst [vmem:[#allocation7 + $0x778] sm:$0xff] %v2347
    %4396 = vst [vmem:[#allocation7 + $0x780] sm:$0xff] %v2348
    %4397 = vst [vmem:[#allocation7 + $0x788] sm:$0xff] %v2349
    %4398 = vst [vmem:[#allocation7 + $0x790] sm:$0xff] %v2350
    %4399 = vst [vmem:[#allocation7 + $0x798] sm:$0xff] %v2351
    %4400 = vst [vmem:[#allocation7 + $0x7a0] sm:$0xff] %v2352
    %4401 = vst [vmem:[#allocation7 + $0x7a8] sm:$0xff] %v2353
    %4402 = vst [vmem:[#allocation7 + $0x7b0] sm:$0xff] %v2354
    %4403 = vst [vmem:[#allocation7 + $0x7b8] sm:$0xff] %v2355
    %4404 = vst [vmem:[#allocation7 + $0x7c0] sm:$0xff] %v2356
    %4405 = vst [vmem:[#allocation7 + $0x7c8] sm:$0xff] %v2357
    %4406 = vst [vmem:[#allocation7 + $0x7d0] sm:$0xff] %v2358
    %4407 = vst [vmem:[#allocation7 + $0x7d8] sm:$0xff] %v2359
    %4408 = vst [vmem:[#allocation7 + $0x7e0] sm:$0xff] %v2360
    %4409 = vst [vmem:[#allocation7 + $0x7e8] sm:$0xff] %v2361
    %4410 = vst [vmem:[#allocation7 + $0x7f0] sm:$0xff] %v2362
    %4411 = vst [vmem:[#allocation7 + $0x7f8] sm:$0xff] %v2363
    %4412 = vst [vmem:[#allocation7 + $0x800] sm:$0xff] %v2364
    %4413 = vst [vmem:[#allocation7 + $0x808] sm:$0xff] %v2365
    %4414 = vst [vmem:[#allocation7 + $0x810] sm:$0xff] %v2366
    %4415 = vst [vmem:[#allocation7 + $0x818] sm:$0xff] %v2367
    %4416 = vst [vmem:[#allocation7 + $0x820] sm:$0xff] %v2368
    %4417 = vst [vmem:[#allocation7 + $0x828] sm:$0xff] %v2369
    %4418 = vst [vmem:[#allocation7 + $0x830] sm:$0xff] %v2370
    %4419 = vst [vmem:[#allocation7 + $0x838] sm:$0xff] %v2371
    %4420 = vst [vmem:[#allocation7 + $0x840] sm:$0xff] %v2372
    %4421 = vst [vmem:[#allocation7 + $0x848] sm:$0xff] %v2373
    %4422 = vst [vmem:[#allocation7 + $0x850] sm:$0xff] %v2374
    %4423 = vst [vmem:[#allocation7 + $0x858] sm:$0xff] %v2375
    %4424 = vst [vmem:[#allocation7 + $0x860] sm:$0xff] %v2376
    %4425 = vst [vmem:[#allocation7 + $0x868] sm:$0xff] %v2377
    %4426 = vst [vmem:[#allocation7 + $0x870] sm:$0xff] %v2378
    %4427 = vst [vmem:[#allocation7 + $0x878] sm:$0xff] %v2379
    %4428 = vst [vmem:[#allocation7 + $0x880] sm:$0xff] %v2380
    %4429 = vst [vmem:[#allocation7 + $0x888] sm:$0xff] %v2381
    %4430 = vst [vmem:[#allocation7 + $0x890] sm:$0xff] %v2382
    %4431 = vst [vmem:[#allocation7 + $0x898] sm:$0xff] %v2383
    %4432 = vst [vmem:[#allocation7 + $0x8a0] sm:$0xff] %v2384
    %4433 = vst [vmem:[#allocation7 + $0x8a8] sm:$0xff] %v2385
    %4434 = vst [vmem:[#allocation7 + $0x8b0] sm:$0xff] %v2386
    %4435 = vst [vmem:[#allocation7 + $0x8b8] sm:$0xff] %v2387
    %4436 = vst [vmem:[#allocation7 + $0x8c0] sm:$0xff] %v2388
    %4437 = vst [vmem:[#allocation7 + $0x8c8] sm:$0xff] %v2389
    %4438 = vst [vmem:[#allocation7 + $0x8d0] sm:$0xff] %v2390
    %4439 = vst [vmem:[#allocation7 + $0x8d8] sm:$0xff] %v2391
    %4440 = vst [vmem:[#allocation7 + $0x8e0] sm:$0xff] %v2392
    %4441 = vst [vmem:[#allocation7 + $0x8e8] sm:$0xff] %v2393
    %4442 = vst [vmem:[#allocation7 + $0x8f0] sm:$0xff] %v2394
    %4443 = vst [vmem:[#allocation7 + $0x8f8] sm:$0xff] %v2395
    %4444 = vst [vmem:[#allocation7 + $0x900] sm:$0xff] %v2396
    %4445 = vst [vmem:[#allocation7 + $0x908] sm:$0xff] %v2397
    %4446 = vst [vmem:[#allocation7 + $0x910] sm:$0xff] %v2398
    %4447 = vst [vmem:[#allocation7 + $0x918] sm:$0xff] %v2399
    %4448 = vst [vmem:[#allocation7 + $0x920] sm:$0xff] %v2400
    %4449 = vst [vmem:[#allocation7 + $0x928] sm:$0xff] %v2401
    %4450 = vst [vmem:[#allocation7 + $0x930] sm:$0xff] %v2402
    %4451 = vst [vmem:[#allocation7 + $0x938] sm:$0xff] %v2403
    %4452 = vst [vmem:[#allocation7 + $0x940] sm:$0xff] %v2404
    %4453 = vst [vmem:[#allocation7 + $0x948] sm:$0xff] %v2405
    %4454 = vst [vmem:[#allocation7 + $0x950] sm:$0xff] %v2406
    %4455 = vst [vmem:[#allocation7 + $0x958] sm:$0xff] %v2407
    %4456 = vst [vmem:[#allocation7 + $0x960] sm:$0xff] %v2408
    %4457 = vst [vmem:[#allocation7 + $0x968] sm:$0xff] %v2409
    %4458 = vst [vmem:[#allocation7 + $0x970] sm:$0xff] %v2410
    %4459 = vst [vmem:[#allocation7 + $0x978] sm:$0xff] %v2411
    %4460 = vst [vmem:[#allocation7 + $0x980] sm:$0xff] %v2412
    %4461 = vst [vmem:[#allocation7 + $0x988] sm:$0xff] %v2413
    %4462 = vst [vmem:[#allocation7 + $0x990] sm:$0xff] %v2414
    %4463 = vst [vmem:[#allocation7 + $0x998] sm:$0xff] %v2415
    %4464 = vst [vmem:[#allocation7 + $0x9a0] sm:$0xff] %v2416
    %4465 = vst [vmem:[#allocation7 + $0x9a8] sm:$0xff] %v2417
    %4466 = vst [vmem:[#allocation7 + $0x9b0] sm:$0xff] %v2418
    %4467 = vst [vmem:[#allocation7 + $0x9b8] sm:$0xff] %v2419
    %4468 = vst [vmem:[#allocation7 + $0x9c0] sm:$0xff] %v2420
    %4469 = vst [vmem:[#allocation7 + $0x9c8] sm:$0xff] %v2421
    %4470 = vst [vmem:[#allocation7 + $0x9d0] sm:$0xff] %v2422
    %4471 = vst [vmem:[#allocation7 + $0x9d8] sm:$0xff] %v2423
    %4472 = vst [vmem:[#allocation7 + $0x9e0] sm:$0xff] %v2424
    %4473 = vst [vmem:[#allocation7 + $0x9e8] sm:$0xff] %v2425
    %4474 = vst [vmem:[#allocation7 + $0x9f0] sm:$0xff] %v2426
    %4475 = vst [vmem:[#allocation7 + $0x9f8] sm:$0xff] %v2427
    %4476 = vst [vmem:[#allocation7 + $0xa00] sm:$0xff] %v2428
    %4477 = vst [vmem:[#allocation7 + $0xa08] sm:$0xff] %v2429
    %4478 = vst [vmem:[#allocation7 + $0xa10] sm:$0xff] %v2430
    %4479 = vst [vmem:[#allocation7 + $0xa18] sm:$0xff] %v2431
    %4480 = vst [vmem:[#allocation7 + $0xa20] sm:$0xff] %v2432
    %4481 = vst [vmem:[#allocation7 + $0xa28] sm:$0xff] %v2433
    %4482 = vst [vmem:[#allocation7 + $0xa30] sm:$0xff] %v2434
    %4483 = vst [vmem:[#allocation7 + $0xa38] sm:$0xff] %v2435
    %4484 = vst [vmem:[#allocation7 + $0xa40] sm:$0xff] %v2436
    %4485 = vst [vmem:[#allocation7 + $0xa48] sm:$0xff] %v2437
    %4486 = vst [vmem:[#allocation7 + $0xa50] sm:$0xff] %v2438
    %4487 = vst [vmem:[#allocation7 + $0xa58] sm:$0xff] %v2439
    %4488 = vst [vmem:[#allocation7 + $0xa60] sm:$0xff] %v2440
    %4489 = vst [vmem:[#allocation7 + $0xa68] sm:$0xff] %v2441
    %4490 = vst [vmem:[#allocation7 + $0xa70] sm:$0xff] %v2442
    %4491 = vst [vmem:[#allocation7 + $0xa78] sm:$0xff] %v2443
    %4492 = vst [vmem:[#allocation7 + $0xa80] sm:$0xff] %v2444
    %4493 = vst [vmem:[#allocation7 + $0xa88] sm:$0xff] %v2445
    %4494 = vst [vmem:[#allocation7 + $0xa90] sm:$0xff] %v2446
    %4495 = vst [vmem:[#allocation7 + $0xa98] sm:$0xff] %v2447
    %4496 = vst [vmem:[#allocation7 + $0xaa0] sm:$0xff] %v2448
    %4497 = vst [vmem:[#allocation7 + $0xaa8] sm:$0xff] %v2449
    %4498 = vst [vmem:[#allocation7 + $0xab0] sm:$0xff] %v2450
    %4499 = vst [vmem:[#allocation7 + $0xab8] sm:$0xff] %v2451
    %4500 = vst [vmem:[#allocation7 + $0xac0] sm:$0xff] %v2452
    %4501 = vst [vmem:[#allocation7 + $0xac8] sm:$0xff] %v2453
    %4502 = vst [vmem:[#allocation7 + $0xad0] sm:$0xff] %v2454
    %4503 = vst [vmem:[#allocation7 + $0xad8] sm:$0xff] %v2455
    %4504 = vst [vmem:[#allocation7 + $0xae0] sm:$0xff] %v2456
    %4505 = vst [vmem:[#allocation7 + $0xae8] sm:$0xff] %v2457
    %4506 = vst [vmem:[#allocation7 + $0xaf0] sm:$0xff] %v2458
    %4507 = vst [vmem:[#allocation7 + $0xaf8] sm:$0xff] %v2459
    %4508 = vst [vmem:[#allocation7 + $0xb00] sm:$0xff] %v2460
    %4509 = vst [vmem:[#allocation7 + $0xb08] sm:$0xff] %v2461
    %4510 = vst [vmem:[#allocation7 + $0xb10] sm:$0xff] %v2462
    %4511 = vst [vmem:[#allocation7 + $0xb18] sm:$0xff] %v2463
    %4512 = vst [vmem:[#allocation7 + $0xb20] sm:$0xff] %v2464
    %4513 = vst [vmem:[#allocation7 + $0xb28] sm:$0xff] %v2465
    %4514 = vst [vmem:[#allocation7 + $0xb30] sm:$0xff] %v2466
    %4515 = vst [vmem:[#allocation7 + $0xb38] sm:$0xff] %v2467
    %4516 = vst [vmem:[#allocation7 + $0xb40] sm:$0xff] %v2468
    %4517 = vst [vmem:[#allocation7 + $0xb48] sm:$0xff] %v2469
    %4518 = vst [vmem:[#allocation7 + $0xb50] sm:$0xff] %v2470
    %4519 = vst [vmem:[#allocation7 + $0xb58] sm:$0xff] %v2471
    %4520 = vst [vmem:[#allocation7 + $0xb60] sm:$0xff] %v2472
    %4521 = vst [vmem:[#allocation7 + $0xb68] sm:$0xff] %v2473
    %4522 = vst [vmem:[#allocation7 + $0xb70] sm:$0xff] %v2474
    %4523 = vst [vmem:[#allocation7 + $0xb78] sm:$0xff] %v2475
    %4524 = vst [vmem:[#allocation7 + $0xb80] sm:$0xff] %v2476
    %4525 = vst [vmem:[#allocation7 + $0xb88] sm:$0xff] %v2477
    %4526 = vst [vmem:[#allocation7 + $0xb90] sm:$0xff] %v2478
    %4527 = vst [vmem:[#allocation7 + $0xb98] sm:$0xff] %v2479
    %4528 = vst [vmem:[#allocation7 + $0xba0] sm:$0xff] %v2480
    %4529 = vst [vmem:[#allocation7 + $0xba8] sm:$0xff] %v2481
    %4530 = vst [vmem:[#allocation7 + $0xbb0] sm:$0xff] %v2482
    %4531 = vst [vmem:[#allocation7 + $0xbb8] sm:$0xff] %v2483
    %4532 = vst [vmem:[#allocation7 + $0xbc0] sm:$0xff] %v2484
    %4533 = vst [vmem:[#allocation7 + $0xbc8] sm:$0xff] %v2485
    %4534 = vst [vmem:[#allocation7 + $0xbd0] sm:$0xff] %v2486
    %4535 = vst [vmem:[#allocation7 + $0xbd8] sm:$0xff] %v2487
    %4536 = vst [vmem:[#allocation7 + $0xbe0] sm:$0xff] %v2488
    %4537 = vst [vmem:[#allocation7 + $0xbe8] sm:$0xff] %v2489
    %4538 = vst [vmem:[#allocation7 + $0xbf0] sm:$0xff] %v2490
    %4539 = vst [vmem:[#allocation7 + $0xbf8] sm:$0xff] %v2491
    %4540 = vst [vmem:[#allocation7 + $0xc00] sm:$0xff] %v2492
    %4541 = vst [vmem:[#allocation7 + $0xc08] sm:$0xff] %v2493
    %4542 = vst [vmem:[#allocation7 + $0xc10] sm:$0xff] %v2494
    %4543 = vst [vmem:[#allocation7 + $0xc18] sm:$0xff] %v2495
    %4544 = vst [vmem:[#allocation7 + $0xc20] sm:$0xff] %v2496
    %4545 = vst [vmem:[#allocation7 + $0xc28] sm:$0xff] %v2497
    %4546 = vst [vmem:[#allocation7 + $0xc30] sm:$0xff] %v2498
    %4547 = vst [vmem:[#allocation7 + $0xc38] sm:$0xff] %v2499
    %4548 = vst [vmem:[#allocation7 + $0xc40] sm:$0xff] %v2500
    %4549 = vst [vmem:[#allocation7 + $0xc48] sm:$0xff] %v2501
    %4550 = vst [vmem:[#allocation7 + $0xc50] sm:$0xff] %v2502
    %4551 = vst [vmem:[#allocation7 + $0xc58] sm:$0xff] %v2503
    %4552 = vst [vmem:[#allocation7 + $0xc60] sm:$0xff] %v2504
    %4553 = vst [vmem:[#allocation7 + $0xc68] sm:$0xff] %v2505
    %4554 = vst [vmem:[#allocation7 + $0xc70] sm:$0xff] %v2506
    %4555 = vst [vmem:[#allocation7 + $0xc78] sm:$0xff] %v2507
    %4556 = vst [vmem:[#allocation7 + $0xc80] sm:$0xff] %v2508
    %4557 = vst [vmem:[#allocation7 + $0xc88] sm:$0xff] %v2509
    %4558 = vst [vmem:[#allocation7 + $0xc90] sm:$0xff] %v2510
    %4559 = vst [vmem:[#allocation7 + $0xc98] sm:$0xff] %v2511
    %4560 = vst [vmem:[#allocation7 + $0xca0] sm:$0xff] %v2512
    %4561 = vst [vmem:[#allocation7 + $0xca8] sm:$0xff] %v2513
    %4562 = vst [vmem:[#allocation7 + $0xcb0] sm:$0xff] %v2514
    %4563 = vst [vmem:[#allocation7 + $0xcb8] sm:$0xff] %v2515
    %4564 = vst [vmem:[#allocation7 + $0xcc0] sm:$0xff] %v2516
    %4565 = vst [vmem:[#allocation7 + $0xcc8] sm:$0xff] %v2517
    %4566 = vst [vmem:[#allocation7 + $0xcd0] sm:$0xff] %v2518
    %4567 = vst [vmem:[#allocation7 + $0xcd8] sm:$0xff] %v2519
    %4568 = vst [vmem:[#allocation7 + $0xce0] sm:$0xff] %v2520
    %4569 = vst [vmem:[#allocation7 + $0xce8] sm:$0xff] %v2521
    %4570 = vst [vmem:[#allocation7 + $0xcf0] sm:$0xff] %v2522
    %4571 = vst [vmem:[#allocation7 + $0xcf8] sm:$0xff] %v2523
    %4572 = vst [vmem:[#allocation7 + $0xd00] sm:$0xff] %v2524
    %4573 = vst [vmem:[#allocation7 + $0xd08] sm:$0xff] %v2525
    %4574 = vst [vmem:[#allocation7 + $0xd10] sm:$0xff] %v2526
    %4575 = vst [vmem:[#allocation7 + $0xd18] sm:$0xff] %v2527
    %4576 = vst [vmem:[#allocation7 + $0xd20] sm:$0xff] %v2528
    %4577 = vst [vmem:[#allocation7 + $0xd28] sm:$0xff] %v2529
    %4578 = vst [vmem:[#allocation7 + $0xd30] sm:$0xff] %v2530
    %4579 = vst [vmem:[#allocation7 + $0xd38] sm:$0xff] %v2531
    %4580 = vst [vmem:[#allocation7 + $0xd40] sm:$0xff] %v2532
    %4581 = vst [vmem:[#allocation7 + $0xd48] sm:$0xff] %v2533
    %4582 = vst [vmem:[#allocation7 + $0xd50] sm:$0xff] %v2534
    %4583 = vst [vmem:[#allocation7 + $0xd58] sm:$0xff] %v2535
    %4584 = vst [vmem:[#allocation7 + $0xd60] sm:$0xff] %v2536
    %4585 = vst [vmem:[#allocation7 + $0xd68] sm:$0xff] %v2537
    %4586 = vst [vmem:[#allocation7 + $0xd70] sm:$0xff] %v2538
    %4587 = vst [vmem:[#allocation7 + $0xd78] sm:$0xff] %v2539
    %4588 = vst [vmem:[#allocation7 + $0xd80] sm:$0xff] %v2540
    %4589 = vst [vmem:[#allocation7 + $0xd88] sm:$0xff] %v2541
    %4590 = vst [vmem:[#allocation7 + $0xd90] sm:$0xff] %v2542
    %4591 = vst [vmem:[#allocation7 + $0xd98] sm:$0xff] %v2543
    %4592 = vst [vmem:[#allocation7 + $0xda0] sm:$0xff] %v2544
    %4593 = vst [vmem:[#allocation7 + $0xda8] sm:$0xff] %v2545
    %4594 = vst [vmem:[#allocation7 + $0xdb0] sm:$0xff] %v2546
    %4595 = vst [vmem:[#allocation7 + $0xdb8] sm:$0xff] %v2547
    %4596 = vst [vmem:[#allocation7 + $0xdc0] sm:$0xff] %v2548
    %4597 = vst [vmem:[#allocation7 + $0xdc8] sm:$0xff] %v2549
    %4598 = vst [vmem:[#allocation7 + $0xdd0] sm:$0xff] %v2550
    %4599 = vst [vmem:[#allocation7 + $0xdd8] sm:$0xff] %v2551
    %4600 = vst [vmem:[#allocation7 + $0xde0] sm:$0xff] %v2552
    %4601 = vst [vmem:[#allocation7 + $0xde8] sm:$0xff] %v2553
    %4602 = vst [vmem:[#allocation7 + $0xdf0] sm:$0xff] %v2554
    %4603 = vst [vmem:[#allocation7 + $0xdf8] sm:$0xff] %v2555
    %4604 = vst [vmem:[#allocation7 + $0xe00] sm:$0xff] %v2556
    %4605 = vst [vmem:[#allocation7 + $0xe08] sm:$0xff] %v2557
    %4606 = vst [vmem:[#allocation7 + $0xe10] sm:$0xff] %v2558
    %4607 = vst [vmem:[#allocation7 + $0xe18] sm:$0xff] %v2559
    %4608 = vst [vmem:[#allocation7 + $0xe20] sm:$0xff] %v2560
    %4609 = vst [vmem:[#allocation7 + $0xe28] sm:$0xff] %v2561
    %4610 = vst [vmem:[#allocation7 + $0xe30] sm:$0xff] %v2562
    %4611 = vst [vmem:[#allocation7 + $0xe38] sm:$0xff] %v2563
    %4612 = vst [vmem:[#allocation7 + $0xe40] sm:$0xff] %v2564
    %4613 = vst [vmem:[#allocation7 + $0xe48] sm:$0xff] %v2565
    %4614 = vst [vmem:[#allocation7 + $0xe50] sm:$0xff] %v2566
    %4615 = vst [vmem:[#allocation7 + $0xe58] sm:$0xff] %v2567
    %4616 = vst [vmem:[#allocation7 + $0xe60] sm:$0xff] %v2568
    %4617 = vst [vmem:[#allocation7 + $0xe68] sm:$0xff] %v2569
    %4618 = vst [vmem:[#allocation7 + $0xe70] sm:$0xff] %v2570
    %4619 = vst [vmem:[#allocation7 + $0xe78] sm:$0xff] %v2571
    %4620 = vst [vmem:[#allocation7 + $0xe80] sm:$0xff] %v2572
    %4621 = vst [vmem:[#allocation7 + $0xe88] sm:$0xff] %v2573
    %4622 = vst [vmem:[#allocation7 + $0xe90] sm:$0xff] %v2574
    %4623 = vst [vmem:[#allocation7 + $0xe98] sm:$0xff] %v2575
    %4624 = vst [vmem:[#allocation7 + $0xea0] sm:$0xff] %v2576
    %4625 = vst [vmem:[#allocation7 + $0xea8] sm:$0xff] %v2577
    %4626 = vst [vmem:[#allocation7 + $0xeb0] sm:$0xff] %v2578
    %4627 = vst [vmem:[#allocation7 + $0xeb8] sm:$0xff] %v2579
    %4628 = vst [vmem:[#allocation7 + $0xec0] sm:$0xff] %v2580
    %4629 = vst [vmem:[#allocation7 + $0xec8] sm:$0xff] %v2581
    %4630 = vst [vmem:[#allocation7 + $0xed0] sm:$0xff] %v2582
    %4631 = vst [vmem:[#allocation7 + $0xed8] sm:$0xff] %v2583
    %4632 = vst [vmem:[#allocation7 + $0xee0] sm:$0xff] %v2584
    %4633 = vst [vmem:[#allocation7 + $0xee8] sm:$0xff] %v2585
    %4634 = vst [vmem:[#allocation7 + $0xef0] sm:$0xff] %v2586
    %4635 = vst [vmem:[#allocation7 + $0xef8] sm:$0xff] %v2587
    %4636 = vst [vmem:[#allocation7 + $0xf00] sm:$0xff] %v2588
    %4637 = vst [vmem:[#allocation7 + $0xf08] sm:$0xff] %v2589
    %4638 = vst [vmem:[#allocation7 + $0xf10] sm:$0xff] %v2590
    %4639 = vst [vmem:[#allocation7 + $0xf18] sm:$0xff] %v2591
    %4640 = vst [vmem:[#allocation7 + $0xf20] sm:$0xff] %v2592
    %4641 = vst [vmem:[#allocation7 + $0xf28] sm:$0xff] %v2593
    %4642 = vst [vmem:[#allocation7 + $0xf30] sm:$0xff] %v2594
    %4643 = vst [vmem:[#allocation7 + $0xf38] sm:$0xff] %v2595
    %4644 = vst [vmem:[#allocation7 + $0xf40] sm:$0xff] %v2596
    %4645 = vst [vmem:[#allocation7 + $0xf48] sm:$0xff] %v2597
    %4646 = vst [vmem:[#allocation7 + $0xf50] sm:$0xff] %v2598
    %4647 = vst [vmem:[#allocation7 + $0xf58] sm:$0xff] %v2599
    %4648 = vst [vmem:[#allocation7 + $0xf60] sm:$0xff] %v2600
    %4649 = vst [vmem:[#allocation7 + $0xf68] sm:$0xff] %v2601
    %4650 = vst [vmem:[#allocation7 + $0xf70] sm:$0xff] %v2602
    %4651 = vst [vmem:[#allocation7 + $0xf78] sm:$0xff] %v2603
    %4652 = vst [vmem:[#allocation7 + $0xf80] sm:$0xff] %v2604
    %4653 = vst [vmem:[#allocation7 + $0xf88] sm:$0xff] %v2605
    %4654 = vst [vmem:[#allocation7 + $0xf90] sm:$0xff] %v2606
    %4655 = vst [vmem:[#allocation7 + $0xf98] sm:$0xff] %v2607
    %4656 = vst [vmem:[#allocation7 + $0xfa0] sm:$0xff] %v2608
    %4657 = vst [vmem:[#allocation7 + $0xfa8] sm:$0xff] %v2609
    %4658 = vst [vmem:[#allocation7 + $0xfb0] sm:$0xff] %v2610
    %4659 = vst [vmem:[#allocation7 + $0xfb8] sm:$0xff] %v2611
    %4660 = vst [vmem:[#allocation7 + $0xfc0] sm:$0xff] %v2612
    %4661 = vst [vmem:[#allocation7 + $0xfc8] sm:$0xff] %v2613
    %4662 = vst [vmem:[#allocation7 + $0xfd0] sm:$0xff] %v2614
    %4663 = vst [vmem:[#allocation7 + $0xfd8] sm:$0xff] %v2615
    %4664 = vst [vmem:[#allocation7 + $0xfe0] sm:$0xff] %v2616
    %4665 = vst [vmem:[#allocation7 + $0xfe8] sm:$0xff] %v2617
    %4666 = vst [vmem:[#allocation7 + $0xff0] sm:$0xff] %v2618
    %4667 = vst [vmem:[#allocation7 + $0xff8] sm:$0xff] %v2619
    %4668 = vst [vmem:[#allocation7 + $0x1000] sm:$0xff] %v2620
    %4669 = vst [vmem:[#allocation7 + $0x1008] sm:$0xff] %v2621
    %4670 = vst [vmem:[#allocation7 + $0x1010] sm:$0xff] %v2622
    %4671 = vst [vmem:[#allocation7 + $0x1018] sm:$0xff] %v2623
    %4672 = vst [vmem:[#allocation7 + $0x1020] sm:$0xff] %v2624
    %4673 = vst [vmem:[#allocation7 + $0x1028] sm:$0xff] %v2625
    %4674 = vst [vmem:[#allocation7 + $0x1030] sm:$0xff] %v2626
    %4675 = vst [vmem:[#allocation7 + $0x1038] sm:$0xff] %v2627
    %4676 = vst [vmem:[#allocation7 + $0x1040] sm:$0xff] %v2628
    %4677 = vst [vmem:[#allocation7 + $0x1048] sm:$0xff] %v2629
    %4678 = vst [vmem:[#allocation7 + $0x1050] sm:$0xff] %v2630
    %4679 = vst [vmem:[#allocation7 + $0x1058] sm:$0xff] %v2631
    %4680 = vst [vmem:[#allocation7 + $0x1060] sm:$0xff] %v2632
    %4681 = vst [vmem:[#allocation7 + $0x1068] sm:$0xff] %v2633
    %4682 = vst [vmem:[#allocation7 + $0x1070] sm:$0xff] %v2634
    %4683 = vst [vmem:[#allocation7 + $0x1078] sm:$0xff] %v2635
    %4684 = vst [vmem:[#allocation7 + $0x1080] sm:$0xff] %v2636
    %4685 = vst [vmem:[#allocation7 + $0x1088] sm:$0xff] %v2637
    %4686 = vst [vmem:[#allocation7 + $0x1090] sm:$0xff] %v2638
    %4687 = vst [vmem:[#allocation7 + $0x1098] sm:$0xff] %v2639
    %4688 = vst [vmem:[#allocation7 + $0x10a0] sm:$0xff] %v2640
    %4689 = vst [vmem:[#allocation7 + $0x10a8] sm:$0xff] %v2641
    %4690 = vst [vmem:[#allocation7 + $0x10b0] sm:$0xff] %v2642
    %4691 = vst [vmem:[#allocation7 + $0x10b8] sm:$0xff] %v2643
    %4692 = vst [vmem:[#allocation7 + $0x10c0] sm:$0xff] %v2644
    %4693 = vst [vmem:[#allocation7 + $0x10c8] sm:$0xff] %v2645
    %4694 = vst [vmem:[#allocation7 + $0x10d0] sm:$0xff] %v2646
    %4695 = vst [vmem:[#allocation7 + $0x10d8] sm:$0xff] %v2647
    %4696 = vst [vmem:[#allocation7 + $0x10e0] sm:$0xff] %v2648
    %4697 = vst [vmem:[#allocation7 + $0x10e8] sm:$0xff] %v2649
    %4698 = vst [vmem:[#allocation7 + $0x10f0] sm:$0xff] %v2650
    %4699 = vst [vmem:[#allocation7 + $0x10f8] sm:$0xff] %v2651
    %4700 = vst [vmem:[#allocation7 + $0x1100] sm:$0xff] %v2652
    %4701 = vst [vmem:[#allocation7 + $0x1108] sm:$0xff] %v2653
    %4702 = vst [vmem:[#allocation7 + $0x1110] sm:$0xff] %v2654
    %4703 = vst [vmem:[#allocation7 + $0x1118] sm:$0xff] %v2655
    %4704 = vst [vmem:[#allocation7 + $0x1120] sm:$0xff] %v2656
    %4705 = vst [vmem:[#allocation7 + $0x1128] sm:$0xff] %v2657
    %4706 = vst [vmem:[#allocation7 + $0x1130] sm:$0xff] %v2658
    %4707 = vst [vmem:[#allocation7 + $0x1138] sm:$0xff] %v2659
    %4708 = vst [vmem:[#allocation7 + $0x1140] sm:$0xff] %v2660
    %4709 = vst [vmem:[#allocation7 + $0x1148] sm:$0xff] %v2661
    %4710 = vst [vmem:[#allocation7 + $0x1150] sm:$0xff] %v2662
    %4711 = vst [vmem:[#allocation7 + $0x1158] sm:$0xff] %v2663
    %4712 = vst [vmem:[#allocation7 + $0x1160] sm:$0xff] %v2664
    %4713 = vst [vmem:[#allocation7 + $0x1168] sm:$0xff] %v2665
    %4714 = vst [vmem:[#allocation7 + $0x1170] sm:$0xff] %v2666
    %4715 = vst [vmem:[#allocation7 + $0x1178] sm:$0xff] %v2667
    %4716 = vst [vmem:[#allocation7 + $0x1180] sm:$0xff] %v2668
    %4717 = vst [vmem:[#allocation7 + $0x1188] sm:$0xff] %v2669
    %4718 = vst [vmem:[#allocation7 + $0x1190] sm:$0xff] %v2670
    %4719 = vst [vmem:[#allocation7 + $0x1198] sm:$0xff] %v2671
    %4720 = vst [vmem:[#allocation7 + $0x11a0] sm:$0xff] %v2672
    %4721 = vst [vmem:[#allocation7 + $0x11a8] sm:$0xff] %v2673
    %4722 = vst [vmem:[#allocation7 + $0x11b0] sm:$0xff] %v2674
    %4723 = vst [vmem:[#allocation7 + $0x11b8] sm:$0xff] %v2675
    %4724 = vst [vmem:[#allocation7 + $0x11c0] sm:$0xff] %v2676
    %4725 = vst [vmem:[#allocation7 + $0x11c8] sm:$0xff] %v2677
    %4726 = vst [vmem:[#allocation7 + $0x11d0] sm:$0xff] %v2678
    %4727 = vst [vmem:[#allocation7 + $0x11d8] sm:$0xff] %v2679
    %4728 = vst [vmem:[#allocation7 + $0x11e0] sm:$0xff] %v2680
    %4729 = vst [vmem:[#allocation7 + $0x11e8] sm:$0xff] %v2681
    %4730 = vst [vmem:[#allocation7 + $0x11f0] sm:$0xff] %v2682
    %4731 = vst [vmem:[#allocation7 + $0x11f8] sm:$0xff] %v2683
    %4732 = vst [vmem:[#allocation7 + $0x1200] sm:$0xff] %v2684
    %4733 = vst [vmem:[#allocation7 + $0x1208] sm:$0xff] %v2685
    %4734 = vst [vmem:[#allocation7 + $0x1210] sm:$0xff] %v2686
    %4735 = vst [vmem:[#allocation7 + $0x1218] sm:$0xff] %v2687
    %4736 = vst [vmem:[#allocation7 + $0x1220] sm:$0xff] %v2688
    %4737 = vst [vmem:[#allocation7 + $0x1228] sm:$0xff] %v2689
    %4738 = vst [vmem:[#allocation7 + $0x1230] sm:$0xff] %v2690
    %4739 = vst [vmem:[#allocation7 + $0x1238] sm:$0xff] %v2691
    %4740 = vst [vmem:[#allocation7 + $0x1240] sm:$0xff] %v2692
    %4741 = vst [vmem:[#allocation7 + $0x1248] sm:$0xff] %v2693
    %4742 = vst [vmem:[#allocation7 + $0x1250] sm:$0xff] %v2694
    %4743 = vst [vmem:[#allocation7 + $0x1258] sm:$0xff] %v2695
    %4744 = vst [vmem:[#allocation7 + $0x1260] sm:$0xff] %v2696
    %4745 = vst [vmem:[#allocation7 + $0x1268] sm:$0xff] %v2697
    %4746 = vst [vmem:[#allocation7 + $0x1270] sm:$0xff] %v2698
    %4747 = vst [vmem:[#allocation7 + $0x1278] sm:$0xff] %v2699
    %4748 = vst [vmem:[#allocation7 + $0x1280] sm:$0xff] %v2700
    %4749 = vst [vmem:[#allocation7 + $0x1288] sm:$0xff] %v2701
    %4750 = vst [vmem:[#allocation7 + $0x1290] sm:$0xff] %v2702
    %4751 = vst [vmem:[#allocation7 + $0x1298] sm:$0xff] %v2703
    %4752 = vst [vmem:[#allocation7 + $0x12a0] sm:$0xff] %v2704
    %4753 = vst [vmem:[#allocation7 + $0x12a8] sm:$0xff] %v2705
    %4754 = vst [vmem:[#allocation7 + $0x12b0] sm:$0xff] %v2706
    %4755 = vst [vmem:[#allocation7 + $0x12b8] sm:$0xff] %v2707
    %4756 = vst [vmem:[#allocation7 + $0x12c0] sm:$0xff] %v2708
    %4757 = vst [vmem:[#allocation7 + $0x12c8] sm:$0xff] %v2709
    %4758 = vst [vmem:[#allocation7 + $0x12d0] sm:$0xff] %v2710
    %4759 = vst [vmem:[#allocation7 + $0x12d8] sm:$0xff] %v2711
    %4760 = vst [vmem:[#allocation7 + $0x12e0] sm:$0xff] %v2712
    %4761 = vst [vmem:[#allocation7 + $0x12e8] sm:$0xff] %v2713
    %4762 = vst [vmem:[#allocation7 + $0x12f0] sm:$0xff] %v2714
    %4763 = vst [vmem:[#allocation7 + $0x12f8] sm:$0xff] %v2715
    %4764 = vst [vmem:[#allocation7 + $0x1300] sm:$0xff] %v2716
    %4765 = vst [vmem:[#allocation7 + $0x1308] sm:$0xff] %v2717
    %4766 = vst [vmem:[#allocation7 + $0x1310] sm:$0xff] %v2718
    %4767 = vst [vmem:[#allocation7 + $0x1318] sm:$0xff] %v2719
    %4768 = vst [vmem:[#allocation7 + $0x1320] sm:$0xff] %v2720
    %4769 = vst [vmem:[#allocation7 + $0x1328] sm:$0xff] %v2721
    %4770 = vst [vmem:[#allocation7 + $0x1330] sm:$0xff] %v2722
    %4771 = vst [vmem:[#allocation7 + $0x1338] sm:$0xff] %v2723
    %4772 = vst [vmem:[#allocation7 + $0x1340] sm:$0xff] %v2724
    %4773 = vst [vmem:[#allocation7 + $0x1348] sm:$0xff] %v2725
    %4774 = vst [vmem:[#allocation7 + $0x1350] sm:$0xff] %v2726
    %4775 = vst [vmem:[#allocation7 + $0x1358] sm:$0xff] %v2727
    %4776 = vst [vmem:[#allocation7 + $0x1360] sm:$0xff] %v2728
    %4777 = vst [vmem:[#allocation7 + $0x1368] sm:$0xff] %v2729
    %4778 = vst [vmem:[#allocation7 + $0x1370] sm:$0xff] %v2730
    %4779 = vst [vmem:[#allocation7 + $0x1378] sm:$0xff] %v2731
    %4780 = vst [vmem:[#allocation7 + $0x1380] sm:$0xff] %v2732
    %4781 = vst [vmem:[#allocation7 + $0x1388] sm:$0xff] %v2733
    %4782 = vst [vmem:[#allocation7 + $0x1390] sm:$0xff] %v2734
    %4783 = vst [vmem:[#allocation7 + $0x1398] sm:$0xff] %v2735
    %4784 = vst [vmem:[#allocation7 + $0x13a0] sm:$0xff] %v2736
    %4785 = vst [vmem:[#allocation7 + $0x13a8] sm:$0xff] %v2737
    %4786 = vst [vmem:[#allocation7 + $0x13b0] sm:$0xff] %v2738
    %4787 = vst [vmem:[#allocation7 + $0x13b8] sm:$0xff] %v2739
    %4788 = vst [vmem:[#allocation7 + $0x13c0] sm:$0xff] %v2740
    %4789 = vst [vmem:[#allocation7 + $0x13c8] sm:$0xff] %v2741
    %4790 = vst [vmem:[#allocation7 + $0x13d0] sm:$0xff] %v2742
    %4791 = vst [vmem:[#allocation7 + $0x13d8] sm:$0xff] %v2743
    %4792 = vst [vmem:[#allocation7 + $0x13e0] sm:$0xff] %v2744
    %4793 = vst [vmem:[#allocation7 + $0x13e8] sm:$0xff] %v2745
    %4794 = vst [vmem:[#allocation7 + $0x13f0] sm:$0xff] %v2746
    %4795 = vst [vmem:[#allocation7 + $0x13f8] sm:$0xff] %v2747
    %4796 = vst [vmem:[#allocation7 + $0x1400] sm:$0xff] %v2748
    %4797 = vst [vmem:[#allocation7 + $0x1408] sm:$0xff] %v2749
    %4798 = vst [vmem:[#allocation7 + $0x1410] sm:$0xff] %v2750
    %4799 = vst [vmem:[#allocation7 + $0x1418] sm:$0xff] %v2751
    %4800 = vst [vmem:[#allocation7 + $0x1420] sm:$0xff] %v2752
    %4801 = vst [vmem:[#allocation7 + $0x1428] sm:$0xff] %v2753
    %4802 = vst [vmem:[#allocation7 + $0x1430] sm:$0xff] %v2754
    %4803 = vst [vmem:[#allocation7 + $0x1438] sm:$0xff] %v2755
    %4804 = vst [vmem:[#allocation7 + $0x1440] sm:$0xff] %v2756
    %4805 = vst [vmem:[#allocation7 + $0x1448] sm:$0xff] %v2757
    %4806 = vst [vmem:[#allocation7 + $0x1450] sm:$0xff] %v2758
    %4807 = vst [vmem:[#allocation7 + $0x1458] sm:$0xff] %v2759
    %4808 = vst [vmem:[#allocation7 + $0x1460] sm:$0xff] %v2760
    %4809 = vst [vmem:[#allocation7 + $0x1468] sm:$0xff] %v2761
    %4810 = vst [vmem:[#allocation7 + $0x1470] sm:$0xff] %v2762
    %4811 = vst [vmem:[#allocation7 + $0x1478] sm:$0xff] %v2763
    %4812 = vst [vmem:[#allocation7 + $0x1480] sm:$0xff] %v2764
    %4813 = vst [vmem:[#allocation7 + $0x1488] sm:$0xff] %v2765
    %4814 = vst [vmem:[#allocation7 + $0x1490] sm:$0xff] %v2766
    %4815 = vst [vmem:[#allocation7 + $0x1498] sm:$0xff] %v2767
    %4816 = vst [vmem:[#allocation7 + $0x14a0] sm:$0xff] %v2768
    %4817 = vst [vmem:[#allocation7 + $0x14a8] sm:$0xff] %v2769
    %4818 = vst [vmem:[#allocation7 + $0x14b0] sm:$0xff] %v2770
    %4819 = vst [vmem:[#allocation7 + $0x14b8] sm:$0xff] %v2771
    %4820 = vst [vmem:[#allocation7 + $0x14c0] sm:$0xff] %v2772
    %4821 = vst [vmem:[#allocation7 + $0x14c8] sm:$0xff] %v2773
    %4822 = vst [vmem:[#allocation7 + $0x14d0] sm:$0xff] %v2774
    %4823 = vst [vmem:[#allocation7 + $0x14d8] sm:$0xff] %v2775
    %4824 = vst [vmem:[#allocation7 + $0x14e0] sm:$0xff] %v2776
    %4825 = vst [vmem:[#allocation7 + $0x14e8] sm:$0xff] %v2777
    %4826 = vst [vmem:[#allocation7 + $0x14f0] sm:$0xff] %v2778
    %4827 = vst [vmem:[#allocation7 + $0x14f8] sm:$0xff] %v2779
    %4828 = vst [vmem:[#allocation7 + $0x1500] sm:$0xff] %v2780
    %4829 = vst [vmem:[#allocation7 + $0x1508] sm:$0xff] %v2781
    %4830 = vst [vmem:[#allocation7 + $0x1510] sm:$0xff] %v2782
    %4831 = vst [vmem:[#allocation7 + $0x1518] sm:$0xff] %v2783
    %4832 = vst [vmem:[#allocation7 + $0x1520] sm:$0xff] %v2784
    %4833 = vst [vmem:[#allocation7 + $0x1528] sm:$0xff] %v2785
    %4834 = vst [vmem:[#allocation7 + $0x1530] sm:$0xff] %v2786
    %4835 = vst [vmem:[#allocation7 + $0x1538] sm:$0xff] %v2787
    %4836 = vst [vmem:[#allocation7 + $0x1540] sm:$0xff] %v2788
    %4837 = vst [vmem:[#allocation7 + $0x1548] sm:$0xff] %v2789
    %4838 = vst [vmem:[#allocation7 + $0x1550] sm:$0xff] %v2790
    %4839 = vst [vmem:[#allocation7 + $0x1558] sm:$0xff] %v2791
    %4840 = vst [vmem:[#allocation7 + $0x1560] sm:$0xff] %v2792
    %4841 = vst [vmem:[#allocation7 + $0x1568] sm:$0xff] %v2793
    %4842 = vst [vmem:[#allocation7 + $0x1570] sm:$0xff] %v2794
    %4843 = vst [vmem:[#allocation7 + $0x1578] sm:$0xff] %v2795
    %4844 = vst [vmem:[#allocation7 + $0x1580] sm:$0xff] %v2796
    %4845 = vst [vmem:[#allocation7 + $0x1588] sm:$0xff] %v2797
    %4846 = vst [vmem:[#allocation7 + $0x1590] sm:$0xff] %v2798
    %4847 = vst [vmem:[#allocation7 + $0x1598] sm:$0xff] %v2799
    %4848 = vst [vmem:[#allocation7 + $0x15a0] sm:$0xff] %v2800
    %4849 = vst [vmem:[#allocation7 + $0x15a8] sm:$0xff] %v2801
    %4850 = vst [vmem:[#allocation7 + $0x15b0] sm:$0xff] %v2802
    %4851 = vst [vmem:[#allocation7 + $0x15b8] sm:$0xff] %v2803
    %4852 = vst [vmem:[#allocation7 + $0x15c0] sm:$0xff] %v2804
    %4853 = vst [vmem:[#allocation7 + $0x15c8] sm:$0xff] %v2805
    %4854 = vst [vmem:[#allocation7 + $0x15d0] sm:$0xff] %v2806
    %4855 = vst [vmem:[#allocation7 + $0x15d8] sm:$0xff] %v2807
    %4856 = vst [vmem:[#allocation7 + $0x15e0] sm:$0xff] %v2808
    %4857 = vst [vmem:[#allocation7 + $0x15e8] sm:$0xff] %v2809
    %4858 = vst [vmem:[#allocation7 + $0x15f0] sm:$0xff] %v2810
    %4859 = vst [vmem:[#allocation7 + $0x15f8] sm:$0xff] %v2811
    %4860 = vst [vmem:[#allocation7 + $0x1600] sm:$0xff] %v2812
    %4861 = vst [vmem:[#allocation7 + $0x1608] sm:$0xff] %v2813
    %4862 = vst [vmem:[#allocation7 + $0x1610] sm:$0xff] %v2814
    %4863 = vst [vmem:[#allocation7 + $0x1618] sm:$0xff] %v2815
    %4864 = vst [vmem:[#allocation7 + $0x1620] sm:$0xff] %v2816
    %4865 = vst [vmem:[#allocation7 + $0x1628] sm:$0xff] %v2817
    %4866 = vst [vmem:[#allocation7 + $0x1630] sm:$0xff] %v2818
    %4867 = vst [vmem:[#allocation7 + $0x1638] sm:$0xff] %v2819
    %4868 = vst [vmem:[#allocation7 + $0x1640] sm:$0xff] %v2820
    %4869 = vst [vmem:[#allocation7 + $0x1648] sm:$0xff] %v2821
    %4870 = vst [vmem:[#allocation7 + $0x1650] sm:$0xff] %v2822
    %4871 = vst [vmem:[#allocation7 + $0x1658] sm:$0xff] %v2823
    %4872 = vst [vmem:[#allocation7 + $0x1660] sm:$0xff] %v2824
    %4873 = vst [vmem:[#allocation7 + $0x1668] sm:$0xff] %v2825
    %4874 = vst [vmem:[#allocation7 + $0x1670] sm:$0xff] %v2826
    %4875 = vst [vmem:[#allocation7 + $0x1678] sm:$0xff] %v2827
    %4876 = vst [vmem:[#allocation7 + $0x1680] sm:$0xff] %v2828
    %4877 = vst [vmem:[#allocation7 + $0x1688] sm:$0xff] %v2829
    %4878 = vst [vmem:[#allocation7 + $0x1690] sm:$0xff] %v2830
    %4879 = vst [vmem:[#allocation7 + $0x1698] sm:$0xff] %v2831
    %4880 = vst [vmem:[#allocation7 + $0x16a0] sm:$0xff] %v2832
    %4881 = vst [vmem:[#allocation7 + $0x16a8] sm:$0xff] %v2833
    %4882 = vst [vmem:[#allocation7 + $0x16b0] sm:$0xff] %v2834
    %4883 = vst [vmem:[#allocation7 + $0x16b8] sm:$0xff] %v2835
    %4884 = vst [vmem:[#allocation7 + $0x16c0] sm:$0xff] %v2836
    %4885 = vst [vmem:[#allocation7 + $0x16c8] sm:$0xff] %v2837
    %4886 = vst [vmem:[#allocation7 + $0x16d0] sm:$0xff] %v2838
    %4887 = vst [vmem:[#allocation7 + $0x16d8] sm:$0xff] %v2839
    %4888 = vst [vmem:[#allocation7 + $0x16e0] sm:$0xff] %v2840
    %4889 = vst [vmem:[#allocation7 + $0x16e8] sm:$0xff] %v2841
    %4890 = vst [vmem:[#allocation7 + $0x16f0] sm:$0xff] %v2842
    %4891 = vst [vmem:[#allocation7 + $0x16f8] sm:$0xff] %v2843
    %4892 = vst [vmem:[#allocation7 + $0x1700] sm:$0xff] %v2844
    %4893 = vst [vmem:[#allocation7 + $0x1708] sm:$0xff] %v2845
    %4894 = vst [vmem:[#allocation7 + $0x1710] sm:$0xff] %v2846
    %4895 = vst [vmem:[#allocation7 + $0x1718] sm:$0xff] %v2847
    %4896 = vst [vmem:[#allocation7 + $0x1720] sm:$0xff] %v2848
    %4897 = vst [vmem:[#allocation7 + $0x1728] sm:$0xff] %v2849
    %4898 = vst [vmem:[#allocation7 + $0x1730] sm:$0xff] %v2850
    %4899 = vst [vmem:[#allocation7 + $0x1738] sm:$0xff] %v2851
    %4900 = vst [vmem:[#allocation7 + $0x1740] sm:$0xff] %v2852
    %4901 = vst [vmem:[#allocation7 + $0x1748] sm:$0xff] %v2853
    %4902 = vst [vmem:[#allocation7 + $0x1750] sm:$0xff] %v2854
    %4903 = vst [vmem:[#allocation7 + $0x1758] sm:$0xff] %v2855
    %4904 = vst [vmem:[#allocation7 + $0x1760] sm:$0xff] %v2856
    %4905 = vst [vmem:[#allocation7 + $0x1768] sm:$0xff] %v2857
    %4906 = vst [vmem:[#allocation7 + $0x1770] sm:$0xff] %v2858
    %4907 = vst [vmem:[#allocation7 + $0x1778] sm:$0xff] %v2859
    %4908 = vst [vmem:[#allocation7 + $0x1780] sm:$0xff] %v2860
    %4909 = vst [vmem:[#allocation7 + $0x1788] sm:$0xff] %v2861
    %4910 = vst [vmem:[#allocation7 + $0x1790] sm:$0xff] %v2862
    %4911 = vst [vmem:[#allocation7 + $0x1798] sm:$0xff] %v2863
    %4912 = vst [vmem:[#allocation7 + $0x17a0] sm:$0xff] %v2864
    %4913 = vst [vmem:[#allocation7 + $0x17a8] sm:$0xff] %v2865
    %4914 = vst [vmem:[#allocation7 + $0x17b0] sm:$0xff] %v2866
    %4915 = vst [vmem:[#allocation7 + $0x17b8] sm:$0xff] %v2867
    %4916 = vst [vmem:[#allocation7 + $0x17c0] sm:$0xff] %v2868
    %4917 = vst [vmem:[#allocation7 + $0x17c8] sm:$0xff] %v2869
    %4918 = vst [vmem:[#allocation7 + $0x17d0] sm:$0xff] %v2870
    %4919 = vst [vmem:[#allocation7 + $0x17d8] sm:$0xff] %v2871
    %4920 = vst [vmem:[#allocation7 + $0x17e0] sm:$0xff] %v2872
    %4921 = vst [vmem:[#allocation7 + $0x17e8] sm:$0xff] %v2873
    %4922 = vst [vmem:[#allocation7 + $0x17f0] sm:$0xff] %v2874
    %4923 = vst [vmem:[#allocation7 + $0x17f8] sm:$0xff] %v2875
    %4924 = vst [vmem:[#allocation7 + $0x1800] sm:$0xff] %v2876
    %4925 = vst [vmem:[#allocation7 + $0x1808] sm:$0xff] %v2877
    %4926 = vst [vmem:[#allocation7 + $0x1810] sm:$0xff] %v2878
    %4927 = vst [vmem:[#allocation7 + $0x1818] sm:$0xff] %v2879
    %4928 = vst [vmem:[#allocation7 + $0x1820] sm:$0xff] %v2880
    %4929 = vst [vmem:[#allocation7 + $0x1828] sm:$0xff] %v2881
    %4930 = vst [vmem:[#allocation7 + $0x1830] sm:$0xff] %v2882
    %4931 = vst [vmem:[#allocation7 + $0x1838] sm:$0xff] %v2883
    %4932 = vst [vmem:[#allocation7 + $0x1840] sm:$0xff] %v2884
    %4933 = vst [vmem:[#allocation7 + $0x1848] sm:$0xff] %v2885
    %4934 = vst [vmem:[#allocation7 + $0x1850] sm:$0xff] %v2886
    %4935 = vst [vmem:[#allocation7 + $0x1858] sm:$0xff] %v2887
    %4936 = vst [vmem:[#allocation7 + $0x1860] sm:$0xff] %v2888
    %4937 = vst [vmem:[#allocation7 + $0x1868] sm:$0xff] %v2889
    %4938 = vst [vmem:[#allocation7 + $0x1870] sm:$0xff] %v2890
    %4939 = vst [vmem:[#allocation7 + $0x1878] sm:$0xff] %v2891
    %4940 = vst [vmem:[#allocation7 + $0x1880] sm:$0xff] %v2892
    %4941 = vst [vmem:[#allocation7 + $0x1888] sm:$0xff] %v2893
    %4942 = vst [vmem:[#allocation7 + $0x1890] sm:$0xff] %v2894
    %4943 = vst [vmem:[#allocation7 + $0x1898] sm:$0xff] %v2895
    %4944 = vst [vmem:[#allocation7 + $0x18a0] sm:$0xff] %v2896
    %4945 = vst [vmem:[#allocation7 + $0x18a8] sm:$0xff] %v2897
    %4946 = vst [vmem:[#allocation7 + $0x18b0] sm:$0xff] %v2898
    %4947 = vst [vmem:[#allocation7 + $0x18b8] sm:$0xff] %v2899
    %4948 = vst [vmem:[#allocation7 + $0x18c0] sm:$0xff] %v2900
    %4949 = vst [vmem:[#allocation7 + $0x18c8] sm:$0xff] %v2901
    %4950 = vst [vmem:[#allocation7 + $0x18d0] sm:$0xff] %v2902
    %4951 = vst [vmem:[#allocation7 + $0x18d8] sm:$0xff] %v2903
    %4952 = vst [vmem:[#allocation7 + $0x18e0] sm:$0xff] %v2904
    %4953 = vst [vmem:[#allocation7 + $0x18e8] sm:$0xff] %v2905
    %4954 = vst [vmem:[#allocation7 + $0x18f0] sm:$0xff] %v2906
    %4955 = vst [vmem:[#allocation7 + $0x18f8] sm:$0xff] %v2907
    %4956 = vst [vmem:[#allocation7 + $0x1900] sm:$0xff] %v2908
    %4957 = vst [vmem:[#allocation7 + $0x1908] sm:$0xff] %v2909
    %4958 = vst [vmem:[#allocation7 + $0x1910] sm:$0xff] %v2910
    %4959 = vst [vmem:[#allocation7 + $0x1918] sm:$0xff] %v2911
    %4960 = vst [vmem:[#allocation7 + $0x1920] sm:$0xff] %v2912
    %4961 = vst [vmem:[#allocation7 + $0x1928] sm:$0xff] %v2913
    %4962 = vst [vmem:[#allocation7 + $0x1930] sm:$0xff] %v2914
    %4963 = vst [vmem:[#allocation7 + $0x1938] sm:$0xff] %v2915
    %4964 = vst [vmem:[#allocation7 + $0x1940] sm:$0xff] %v2916
    %4965 = vst [vmem:[#allocation7 + $0x1948] sm:$0xff] %v2917
    %4966 = vst [vmem:[#allocation7 + $0x1950] sm:$0xff] %v2918
    %4967 = vst [vmem:[#allocation7 + $0x1958] sm:$0xff] %v2919
    %4968 = vst [vmem:[#allocation7 + $0x1960] sm:$0xff] %v2920
    %4969 = vst [vmem:[#allocation7 + $0x1968] sm:$0xff] %v2921
    %4970 = vst [vmem:[#allocation7 + $0x1970] sm:$0xff] %v2922
    %4971 = vst [vmem:[#allocation7 + $0x1978] sm:$0xff] %v2923
    %4972 = vst [vmem:[#allocation7 + $0x1980] sm:$0xff] %v2924
    %4973 = vst [vmem:[#allocation7 + $0x1988] sm:$0xff] %v2925
    %4974 = vst [vmem:[#allocation7 + $0x1990] sm:$0xff] %v2926
    %4975 = vst [vmem:[#allocation7 + $0x1998] sm:$0xff] %v2927
    %4976 = vst [vmem:[#allocation7 + $0x19a0] sm:$0xff] %v2928
    %4977 = vst [vmem:[#allocation7 + $0x19a8] sm:$0xff] %v2929
    %4978 = vst [vmem:[#allocation7 + $0x19b0] sm:$0xff] %v2930
    %4979 = vst [vmem:[#allocation7 + $0x19b8] sm:$0xff] %v2931
    %4980 = vst [vmem:[#allocation7 + $0x19c0] sm:$0xff] %v2932
    %4981 = vst [vmem:[#allocation7 + $0x19c8] sm:$0xff] %v2933
    %4982 = vst [vmem:[#allocation7 + $0x19d0] sm:$0xff] %v2934
    %4983 = vst [vmem:[#allocation7 + $0x19d8] sm:$0xff] %v2935
    %4984 = vst [vmem:[#allocation7 + $0x19e0] sm:$0xff] %v2936
    %4985 = vst [vmem:[#allocation7 + $0x19e8] sm:$0xff] %v2937
    %4986 = vst [vmem:[#allocation7 + $0x19f0] sm:$0xff] %v2938
    %4987 = vst [vmem:[#allocation7 + $0x19f8] sm:$0xff] %v2939
    %4988 = vst [vmem:[#allocation7 + $0x1a00] sm:$0xff] %v2940
    %4989 = vst [vmem:[#allocation7 + $0x1a08] sm:$0xff] %v2941
    %4990 = vst [vmem:[#allocation7 + $0x1a10] sm:$0xff] %v2942
    %4991 = vst [vmem:[#allocation7 + $0x1a18] sm:$0xff] %v2943
    %4992 = vst [vmem:[#allocation7 + $0x1a20] sm:$0xff] %v2944
    %4993 = vst [vmem:[#allocation7 + $0x1a28] sm:$0xff] %v2945
    %4994 = vst [vmem:[#allocation7 + $0x1a30] sm:$0xff] %v2946
    %4995 = vst [vmem:[#allocation7 + $0x1a38] sm:$0xff] %v2947
    %4996 = vst [vmem:[#allocation7 + $0x1a40] sm:$0xff] %v2948
    %4997 = vst [vmem:[#allocation7 + $0x1a48] sm:$0xff] %v2949
    %4998 = vst [vmem:[#allocation7 + $0x1a50] sm:$0xff] %v2950
    %4999 = vst [vmem:[#allocation7 + $0x1a58] sm:$0xff] %v2951
    %5000 = vst [vmem:[#allocation7 + $0x1a60] sm:$0xff] %v2952
    %5001 = vst [vmem:[#allocation7 + $0x1a68] sm:$0xff] %v2953
    %5002 = vst [vmem:[#allocation7 + $0x1a70] sm:$0xff] %v2954
    %5003 = vst [vmem:[#allocation7 + $0x1a78] sm:$0xff] %v2955
    %5004 = vst [vmem:[#allocation7 + $0x1a80] sm:$0xff] %v2956
    %5005 = vst [vmem:[#allocation7 + $0x1a88] sm:$0xff] %v2957
    %5006 = vst [vmem:[#allocation7 + $0x1a90] sm:$0xff] %v2958
    %5007 = vst [vmem:[#allocation7 + $0x1a98] sm:$0xff] %v2959
    %5008 = vst [vmem:[#allocation7 + $0x1aa0] sm:$0xff] %v2960
    %5009 = vst [vmem:[#allocation7 + $0x1aa8] sm:$0xff] %v2961
    %5010 = vst [vmem:[#allocation7 + $0x1ab0] sm:$0xff] %v2962
    %5011 = vst [vmem:[#allocation7 + $0x1ab8] sm:$0xff] %v2963
    %5012 = vst [vmem:[#allocation7 + $0x1ac0] sm:$0xff] %v2964
    %5013 = vst [vmem:[#allocation7 + $0x1ac8] sm:$0xff] %v2965
    %5014 = vst [vmem:[#allocation7 + $0x1ad0] sm:$0xff] %v2966
    %5015 = vst [vmem:[#allocation7 + $0x1ad8] sm:$0xff] %v2967
    %5016 = vst [vmem:[#allocation7 + $0x1ae0] sm:$0xff] %v2968
    %5017 = vst [vmem:[#allocation7 + $0x1ae8] sm:$0xff] %v2969
    %5018 = vst [vmem:[#allocation7 + $0x1af0] sm:$0xff] %v2970
    %5019 = vst [vmem:[#allocation7 + $0x1af8] sm:$0xff] %v2971
    %5020 = vst [vmem:[#allocation7 + $0x1b00] sm:$0xff] %v2972
    %5021 = vst [vmem:[#allocation7 + $0x1b08] sm:$0xff] %v2973
    %5022 = vst [vmem:[#allocation7 + $0x1b10] sm:$0xff] %v2974
    %5023 = vst [vmem:[#allocation7 + $0x1b18] sm:$0xff] %v2975
    %5024 = vst [vmem:[#allocation7 + $0x1b20] sm:$0xff] %v2976
    %5025 = vst [vmem:[#allocation7 + $0x1b28] sm:$0xff] %v2977
    %5026 = vst [vmem:[#allocation7 + $0x1b30] sm:$0xff] %v2978
    %5027 = vst [vmem:[#allocation7 + $0x1b38] sm:$0xff] %v2979
    %5028 = vst [vmem:[#allocation7 + $0x1b40] sm:$0xff] %v2980
    %5029 = vst [vmem:[#allocation7 + $0x1b48] sm:$0xff] %v2981
    %5030 = vst [vmem:[#allocation7 + $0x1b50] sm:$0xff] %v2982
    %5031 = vst [vmem:[#allocation7 + $0x1b58] sm:$0xff] %v2983
    %5032 = vst [vmem:[#allocation7 + $0x1b60] sm:$0xff] %v2984
    %5033 = vst [vmem:[#allocation7 + $0x1b68] sm:$0xff] %v2985
    %5034 = vst [vmem:[#allocation7 + $0x1b70] sm:$0xff] %v2986
    %5035 = vst [vmem:[#allocation7 + $0x1b78] sm:$0xff] %v2987
    %5036 = vst [vmem:[#allocation7 + $0x1b80] sm:$0xff] %v2988
    %5037 = vst [vmem:[#allocation7 + $0x1b88] sm:$0xff] %v2989
    %5038 = vst [vmem:[#allocation7 + $0x1b90] sm:$0xff] %v2990
    %5039 = vst [vmem:[#allocation7 + $0x1b98] sm:$0xff] %v2991
    %5040 = vst [vmem:[#allocation7 + $0x1ba0] sm:$0xff] %v2992
    %5041 = vst [vmem:[#allocation7 + $0x1ba8] sm:$0xff] %v2993
    %5042 = vst [vmem:[#allocation7 + $0x1bb0] sm:$0xff] %v2994
    %5043 = vst [vmem:[#allocation7 + $0x1bb8] sm:$0xff] %v2995
    %5044 = vst [vmem:[#allocation7 + $0x1bc0] sm:$0xff] %v2996
    %5045 = vst [vmem:[#allocation7 + $0x1bc8] sm:$0xff] %v2997
    %5046 = vst [vmem:[#allocation7 + $0x1bd0] sm:$0xff] %v2998
    %5047 = vst [vmem:[#allocation7 + $0x1bd8] sm:$0xff] %v2999
    %5048 = vst [vmem:[#allocation7 + $0x1be0] sm:$0xff] %v3000
    %5049 = vst [vmem:[#allocation7 + $0x1be8] sm:$0xff] %v3001
    %5050 = vst [vmem:[#allocation7 + $0x1bf0] sm:$0xff] %v3002
    %5051 = vst [vmem:[#allocation7 + $0x1bf8] sm:$0xff] %v3003
    %5052 = vst [vmem:[#allocation7 + $0x1c00] sm:$0xff] %v3004
    %5053 = vst [vmem:[#allocation7 + $0x1c08] sm:$0xff] %v3005
    %5054 = vst [vmem:[#allocation7 + $0x1c10] sm:$0xff] %v3006
    %5055 = vst [vmem:[#allocation7 + $0x1c18] sm:$0xff] %v3007
    %5056 = vst [vmem:[#allocation7 + $0x1c20] sm:$0xff] %v3008
    %5057 = vst [vmem:[#allocation7 + $0x1c28] sm:$0xff] %v3009
    %5058 = vst [vmem:[#allocation7 + $0x1c30] sm:$0xff] %v3010
    %5059 = vst [vmem:[#allocation7 + $0x1c38] sm:$0xff] %v3011
    %5060 = vst [vmem:[#allocation7 + $0x1c40] sm:$0xff] %v3012
    %5061 = vst [vmem:[#allocation7 + $0x1c48] sm:$0xff] %v3013
    %5062 = vst [vmem:[#allocation7 + $0x1c50] sm:$0xff] %v3014
    %5063 = vst [vmem:[#allocation7 + $0x1c58] sm:$0xff] %v3015
    %5064 = vst [vmem:[#allocation7 + $0x1c60] sm:$0xff] %v3016
    %5065 = vst [vmem:[#allocation7 + $0x1c68] sm:$0xff] %v3017
    %5066 = vst [vmem:[#allocation7 + $0x1c70] sm:$0xff] %v3018
    %5067 = vst [vmem:[#allocation7 + $0x1c78] sm:$0xff] %v3019
    %5068 = vst [vmem:[#allocation7 + $0x1c80] sm:$0xff] %v3020
    %5069 = vst [vmem:[#allocation7 + $0x1c88] sm:$0xff] %v3021
    %5070 = vst [vmem:[#allocation7 + $0x1c90] sm:$0xff] %v3022
    %5071 = vst [vmem:[#allocation7 + $0x1c98] sm:$0xff] %v3023
    %5072 = vst [vmem:[#allocation7 + $0x1ca0] sm:$0xff] %v3024
    %5073 = vst [vmem:[#allocation7 + $0x1ca8] sm:$0xff] %v3025
    %5074 = vst [vmem:[#allocation7 + $0x1cb0] sm:$0xff] %v3026
    %5075 = vst [vmem:[#allocation7 + $0x1cb8] sm:$0xff] %v3027
    %5076 = vst [vmem:[#allocation7 + $0x1cc0] sm:$0xff] %v3028
    %5077 = vst [vmem:[#allocation7 + $0x1cc8] sm:$0xff] %v3029
    %5078 = vst [vmem:[#allocation7 + $0x1cd0] sm:$0xff] %v3030
    %5079 = vst [vmem:[#allocation7 + $0x1cd8] sm:$0xff] %v3031
    %5080 = vst [vmem:[#allocation7 + $0x1ce0] sm:$0xff] %v3032
    %5081 = vst [vmem:[#allocation7 + $0x1ce8] sm:$0xff] %v3033
    %5082 = vst [vmem:[#allocation7 + $0x1cf0] sm:$0xff] %v3034
    %5083 = vst [vmem:[#allocation7 + $0x1cf8] sm:$0xff] %v3035
    %5084 = vst [vmem:[#allocation7 + $0x1d00] sm:$0xff] %v3036
    %5085 = vst [vmem:[#allocation7 + $0x1d08] sm:$0xff] %v3037
    %5086 = vst [vmem:[#allocation7 + $0x1d10] sm:$0xff] %v3038
    %5087 = vst [vmem:[#allocation7 + $0x1d18] sm:$0xff] %v3039
    %5088 = vst [vmem:[#allocation7 + $0x1d20] sm:$0xff] %v3040
    %5089 = vst [vmem:[#allocation7 + $0x1d28] sm:$0xff] %v3041
    %5090 = vst [vmem:[#allocation7 + $0x1d30] sm:$0xff] %v3042
    %5091 = vst [vmem:[#allocation7 + $0x1d38] sm:$0xff] %v3043
    %5092 = vst [vmem:[#allocation7 + $0x1d40] sm:$0xff] %v3044
    %5093 = vst [vmem:[#allocation7 + $0x1d48] sm:$0xff] %v3045
    %5094 = vst [vmem:[#allocation7 + $0x1d50] sm:$0xff] %v3046
    %5095 = vst [vmem:[#allocation7 + $0x1d58] sm:$0xff] %v3047
    %5096 = vst [vmem:[#allocation7 + $0x1d60] sm:$0xff] %v3048
    %5097 = vst [vmem:[#allocation7 + $0x1d68] sm:$0xff] %v3049
    %5098 = vst [vmem:[#allocation7 + $0x1d70] sm:$0xff] %v3050
    %5099 = vst [vmem:[#allocation7 + $0x1d78] sm:$0xff] %v3051
    %5100 = vst [vmem:[#allocation7 + $0x1d80] sm:$0xff] %v3052
    %5101 = vst [vmem:[#allocation7 + $0x1d88] sm:$0xff] %v3053
    %5102 = vst [vmem:[#allocation7 + $0x1d90] sm:$0xff] %v3054
    %5103 = vst [vmem:[#allocation7 + $0x1d98] sm:$0xff] %v3055
    %5104 = vst [vmem:[#allocation7 + $0x1da0] sm:$0xff] %v3056
    %5105 = vst [vmem:[#allocation7 + $0x1da8] sm:$0xff] %v3057
    %5106 = vst [vmem:[#allocation7 + $0x1db0] sm:$0xff] %v3058
    %5107 = vst [vmem:[#allocation7 + $0x1db8] sm:$0xff] %v3059
    %5108 = vst [vmem:[#allocation7 + $0x1dc0] sm:$0xff] %v3060
    %5109 = vst [vmem:[#allocation7 + $0x1dc8] sm:$0xff] %v3061
    %5110 = vst [vmem:[#allocation7 + $0x1dd0] sm:$0xff] %v3062
    %5111 = vst [vmem:[#allocation7 + $0x1dd8] sm:$0xff] %v3063
    %5112 = vst [vmem:[#allocation7 + $0x1de0] sm:$0xff] %v3064
    %5113 = vst [vmem:[#allocation7 + $0x1de8] sm:$0xff] %v3065
    %5114 = vst [vmem:[#allocation7 + $0x1df0] sm:$0xff] %v3066
    %5115 = vst [vmem:[#allocation7 + $0x1df8] sm:$0xff] %v3067
    %5116 = vst [vmem:[#allocation7 + $0x1e00] sm:$0xff] %v3068
    %5117 = vst [vmem:[#allocation7 + $0x1e08] sm:$0xff] %v3069
    %5118 = vst [vmem:[#allocation7 + $0x1e10] sm:$0xff] %v3070
    %5119 = vst [vmem:[#allocation7 + $0x1e18] sm:$0xff] %v3071
    %5120 = vst [vmem:[#allocation7 + $0x1e20] sm:$0xff] %v3072
    %5121 = vst [vmem:[#allocation7 + $0x1e28] sm:$0xff] %v3073
    %5122 = vst [vmem:[#allocation7 + $0x1e30] sm:$0xff] %v3074
    %5123 = vst [vmem:[#allocation7 + $0x1e38] sm:$0xff] %v3075
    %5124 = vst [vmem:[#allocation7 + $0x1e40] sm:$0xff] %v3076
    %5125 = vst [vmem:[#allocation7 + $0x1e48] sm:$0xff] %v3077
    %5126 = vst [vmem:[#allocation7 + $0x1e50] sm:$0xff] %v3078
    %5127 = vst [vmem:[#allocation7 + $0x1e58] sm:$0xff] %v3079
    %5128 = vst [vmem:[#allocation7 + $0x1e60] sm:$0xff] %v3080
    %5129 = vst [vmem:[#allocation7 + $0x1e68] sm:$0xff] %v3081
    %5130 = vst [vmem:[#allocation7 + $0x1e70] sm:$0xff] %v3082
    %5131 = vst [vmem:[#allocation7 + $0x1e78] sm:$0xff] %v3083
    %5132 = vst [vmem:[#allocation7 + $0x1e80] sm:$0xff] %v3084
    %5133 = vst [vmem:[#allocation7 + $0x1e88] sm:$0xff] %v3085
    %5134 = vst [vmem:[#allocation7 + $0x1e90] sm:$0xff] %v3086
    %5135 = vst [vmem:[#allocation7 + $0x1e98] sm:$0xff] %v3087
    %5136 = vst [vmem:[#allocation7 + $0x1ea0] sm:$0xff] %v3088
    %5137 = vst [vmem:[#allocation7 + $0x1ea8] sm:$0xff] %v3089
    %5138 = vst [vmem:[#allocation7 + $0x1eb0] sm:$0xff] %v3090
    %5139 = vst [vmem:[#allocation7 + $0x1eb8] sm:$0xff] %v3091
    %5140 = vst [vmem:[#allocation7 + $0x1ec0] sm:$0xff] %v3092
    %5141 = vst [vmem:[#allocation7 + $0x1ec8] sm:$0xff] %v3093
    %5142 = vst [vmem:[#allocation7 + $0x1ed0] sm:$0xff] %v3094
    %5143 = vst [vmem:[#allocation7 + $0x1ed8] sm:$0xff] %v3095
    %5144 = vst [vmem:[#allocation7 + $0x1ee0] sm:$0xff] %v3096
    %5145 = vst [vmem:[#allocation7 + $0x1ee8] sm:$0xff] %v3097
    %5146 = vst [vmem:[#allocation7 + $0x1ef0] sm:$0xff] %v3098
    %5147 = vst [vmem:[#allocation7 + $0x1ef8] sm:$0xff] %v3099
    %5148 = vst [vmem:[#allocation7 + $0x1f00] sm:$0xff] %v3100
    %5149 = vst [vmem:[#allocation7 + $0x1f08] sm:$0xff] %v3101
    %5150 = vst [vmem:[#allocation7 + $0x1f10] sm:$0xff] %v3102
    %5151 = vst [vmem:[#allocation7 + $0x1f18] sm:$0xff] %v3103
    %5152 = vst [vmem:[#allocation7 + $0x1f20] sm:$0xff] %v3104
    %5153 = vst [vmem:[#allocation7 + $0x1f28] sm:$0xff] %v3105
    %5154 = vst [vmem:[#allocation7 + $0x1f30] sm:$0xff] %v3106
    %5155 = vst [vmem:[#allocation7 + $0x1f38] sm:$0xff] %v3107
    %5156 = vst [vmem:[#allocation7 + $0x1f40] sm:$0xff] %v3108
    %5157 = vst [vmem:[#allocation7 + $0x1f48] sm:$0xff] %v3109
    %5158 = vst [vmem:[#allocation7 + $0x1f50] sm:$0xff] %v3110
    %5159 = vst [vmem:[#allocation7 + $0x1f58] sm:$0xff] %v3111
    %5160 = vst [vmem:[#allocation7 + $0x1f60] sm:$0xff] %v3112
    %5161 = vst [vmem:[#allocation7 + $0x1f68] sm:$0xff] %v3113
    %5162 = vst [vmem:[#allocation7 + $0x1f70] sm:$0xff] %v3114
    %5163 = vst [vmem:[#allocation7 + $0x1f78] sm:$0xff] %v3115
    %5164 = vst [vmem:[#allocation7 + $0x1f80] sm:$0xff] %v3116
    %5165 = vst [vmem:[#allocation7 + $0x1f88] sm:$0xff] %v3117
    %5166 = vst [vmem:[#allocation7 + $0x1f90] sm:$0xff] %v3118
    %5167 = vst [vmem:[#allocation7 + $0x1f98] sm:$0xff] %v3119
    %5168 = vst [vmem:[#allocation7 + $0x1fa0] sm:$0xff] %v3120
    %5169 = vst [vmem:[#allocation7 + $0x1fa8] sm:$0xff] %v3121
    %5170 = vst [vmem:[#allocation7 + $0x1fb0] sm:$0xff] %v3122
    %5171 = vst [vmem:[#allocation7 + $0x1fb8] sm:$0xff] %v3123
    %5172 = vst [vmem:[#allocation7 + $0x1fc0] sm:$0xff] %v3124
    %5173 = vst [vmem:[#allocation7 + $0x1fc8] sm:$0xff] %v3125
    %5174 = vst [vmem:[#allocation7 + $0x1fd0] sm:$0xff] %v3126
    %5175 = vst [vmem:[#allocation7 + $0x1fd8] sm:$0xff] %v3127
    %5176 = vst [vmem:[#allocation7 + $0x1fe0] sm:$0xff] %v3128
    %5177 = vst [vmem:[#allocation7 + $0x1fe8] sm:$0xff] %v3129
    %5178 = vst [vmem:[#allocation7 + $0x1ff0] sm:$0xff] %v3130
    %5179 = vst [vmem:[#allocation7 + $0x1ff8] sm:$0xff] %v3131
    %5180 = vst [vmem:[#allocation7 + $0x2000] sm:$0xff] %v3132
    %5181 = vst [vmem:[#allocation7 + $0x2008] sm:$0xff] %v3133
    %5182 = vst [vmem:[#allocation7 + $0x2010] sm:$0xff] %v3134
    %5183 = vst [vmem:[#allocation7 + $0x2018] sm:$0xff] %v3135
    %5184 = vst [vmem:[#allocation7 + $0x2020] sm:$0xff] %v3136
    %5185 = vst [vmem:[#allocation7 + $0x2028] sm:$0xff] %v3137
    %5186 = vst [vmem:[#allocation7 + $0x2030] sm:$0xff] %v3138
    %5187 = vst [vmem:[#allocation7 + $0x2038] sm:$0xff] %v3139
    %5188 = vst [vmem:[#allocation7 + $0x2040] sm:$0xff] %v3140
    %5189 = vst [vmem:[#allocation7 + $0x2048] sm:$0xff] %v3141
    %5190 = vst [vmem:[#allocation7 + $0x2050] sm:$0xff] %v3142
    %5191 = vst [vmem:[#allocation7 + $0x2058] sm:$0xff] %v3143
    %5192 = vst [vmem:[#allocation7 + $0x2060] sm:$0xff] %v3144
    %5193 = vst [vmem:[#allocation7 + $0x2068] sm:$0xff] %v3145
    %5194 = vst [vmem:[#allocation7 + $0x2070] sm:$0xff] %v3146
    %5195 = vst [vmem:[#allocation7 + $0x2078] sm:$0xff] %v3147
    %5196 = vst [vmem:[#allocation7 + $0x2080] sm:$0xff] %v3148
    %5197 = vst [vmem:[#allocation7 + $0x2088] sm:$0xff] %v3149
    %5198 = vst [vmem:[#allocation7 + $0x2090] sm:$0xff] %v3150
    %5199 = vst [vmem:[#allocation7 + $0x2098] sm:$0xff] %v3151
    %5200 = vst [vmem:[#allocation7 + $0x20a0] sm:$0xff] %v3152
    %5201 = vst [vmem:[#allocation7 + $0x20a8] sm:$0xff] %v3153
    %5202 = vst [vmem:[#allocation7 + $0x20b0] sm:$0xff] %v3154
    %5203 = vst [vmem:[#allocation7 + $0x20b8] sm:$0xff] %v3155
    %5204 = vst [vmem:[#allocation7 + $0x20c0] sm:$0xff] %v3156
    %5205 = vst [vmem:[#allocation7 + $0x20c8] sm:$0xff] %v3157
    %5206 = vst [vmem:[#allocation7 + $0x20d0] sm:$0xff] %v3158
    %5207 = vst [vmem:[#allocation7 + $0x20d8] sm:$0xff] %v3159
    %5208 = vst [vmem:[#allocation7 + $0x20e0] sm:$0xff] %v3160
    %5209 = vst [vmem:[#allocation7 + $0x20e8] sm:$0xff] %v3161
    %5210 = vst [vmem:[#allocation7 + $0x20f0] sm:$0xff] %v3162
    %5211 = vst [vmem:[#allocation7 + $0x20f8] sm:$0xff] %v3163
    %5212 = vst [vmem:[#allocation7 + $0x2100] sm:$0xff] %v3164
    %5213 = vst [vmem:[#allocation7 + $0x2108] sm:$0xff] %v3165
    %5214 = vst [vmem:[#allocation7 + $0x2110] sm:$0xff] %v3166
    %5215 = vst [vmem:[#allocation7 + $0x2118] sm:$0xff] %v3167
    %5216 = vst [vmem:[#allocation7 + $0x2120] sm:$0xff] %v3168
    %5217 = vst [vmem:[#allocation7 + $0x2128] sm:$0xff] %v3169
    %5218 = vst [vmem:[#allocation7 + $0x2130] sm:$0xff] %v3170
    %5219 = vst [vmem:[#allocation7 + $0x2138] sm:$0xff] %v3171
    %5220 = vst [vmem:[#allocation7 + $0x2140] sm:$0xff] %v3172
    %5221 = vst [vmem:[#allocation7 + $0x2148] sm:$0xff] %v3173
    %5222 = vst [vmem:[#allocation7 + $0x2150] sm:$0xff] %v3174
    %5223 = vst [vmem:[#allocation7 + $0x2158] sm:$0xff] %v3175
    %5224 = vst [vmem:[#allocation7 + $0x2160] sm:$0xff] %v3176
    %5225 = vst [vmem:[#allocation7 + $0x2168] sm:$0xff] %v3177
    %5226 = vst [vmem:[#allocation7 + $0x2170] sm:$0xff] %v3178
    %5227 = vst [vmem:[#allocation7 + $0x2178] sm:$0xff] %v3179
    %5228 = vst [vmem:[#allocation7 + $0x2180] sm:$0xff] %v3180
    %5229 = vst [vmem:[#allocation7 + $0x2188] sm:$0xff] %v3181
    %5230 = vst [vmem:[#allocation7 + $0x2190] sm:$0xff] %v3182
    %5231 = vst [vmem:[#allocation7 + $0x2198] sm:$0xff] %v3183
    %5232 = vst [vmem:[#allocation7 + $0x21a0] sm:$0xff] %v3184
    %5233 = vst [vmem:[#allocation7 + $0x21a8] sm:$0xff] %v3185
    %5234 = vst [vmem:[#allocation7 + $0x21b0] sm:$0xff] %v3186
    %5235 = vst [vmem:[#allocation7 + $0x21b8] sm:$0xff] %v3187
    %5236 = vst [vmem:[#allocation7 + $0x21c0] sm:$0xff] %v3188
    %5237 = vst [vmem:[#allocation7 + $0x21c8] sm:$0xff] %v3189
    %5238 = vst [vmem:[#allocation7 + $0x21d0] sm:$0xff] %v3190
    %5239 = vst [vmem:[#allocation7 + $0x21d8] sm:$0xff] %v3191
    %5240 = vst [vmem:[#allocation7 + $0x21e0] sm:$0xff] %v3192
    %5241 = vst [vmem:[#allocation7 + $0x21e8] sm:$0xff] %v3193
    %5242 = vst [vmem:[#allocation7 + $0x21f0] sm:$0xff] %v3194
    %5243 = vst [vmem:[#allocation7 + $0x21f8] sm:$0xff] %v3195
    %5244 = vst [vmem:[#allocation7 + $0x2200] sm:$0xff] %v3196
    %5245 = vst [vmem:[#allocation7 + $0x2208] sm:$0xff] %v3197
    %5246 = vst [vmem:[#allocation7 + $0x2210] sm:$0xff] %v3198
    %5247 = vst [vmem:[#allocation7 + $0x2218] sm:$0xff] %v3199
    %5248 = vst [vmem:[#allocation7 + $0x2220] sm:$0xff] %v3200
    %5249 = vst [vmem:[#allocation7 + $0x2228] sm:$0xff] %v3201
    %5250 = vst [vmem:[#allocation7 + $0x2230] sm:$0xff] %v3202
    %5251 = vst [vmem:[#allocation7 + $0x2238] sm:$0xff] %v3203
    %5252 = vst [vmem:[#allocation7 + $0x2240] sm:$0xff] %v3204
    %5253 = vst [vmem:[#allocation7 + $0x2248] sm:$0xff] %v3205
    %5254 = vst [vmem:[#allocation7 + $0x2250] sm:$0xff] %v3206
    %5255 = vst [vmem:[#allocation7 + $0x2258] sm:$0xff] %v3207
    %5256 = vst [vmem:[#allocation7 + $0x2260] sm:$0xff] %v3208
    %5257 = vst [vmem:[#allocation7 + $0x2268] sm:$0xff] %v3209
    %5258 = vst [vmem:[#allocation7 + $0x2270] sm:$0xff] %v3210
    %5259 = vst [vmem:[#allocation7 + $0x2278] sm:$0xff] %v3211
    %5260 = vst [vmem:[#allocation7 + $0x2280] sm:$0xff] %v3212
    %5261 = vst [vmem:[#allocation7 + $0x2288] sm:$0xff] %v3213
    %5262 = vst [vmem:[#allocation7 + $0x2290] sm:$0xff] %v3214
    %5263 = vst [vmem:[#allocation7 + $0x2298] sm:$0xff] %v3215
    %5264 = vst [vmem:[#allocation7 + $0x22a0] sm:$0xff] %v3216
    %5265 = vst [vmem:[#allocation7 + $0x22a8] sm:$0xff] %v3217
    %5266 = vst [vmem:[#allocation7 + $0x22b0] sm:$0xff] %v3218
    %5267 = vst [vmem:[#allocation7 + $0x22b8] sm:$0xff] %v3219
    %5268 = vst [vmem:[#allocation7 + $0x22c0] sm:$0xff] %v3220
    %5269 = vst [vmem:[#allocation7 + $0x22c8] sm:$0xff] %v3221
    %5270 = vst [vmem:[#allocation7 + $0x22d0] sm:$0xff] %v3222
    %5271 = vst [vmem:[#allocation7 + $0x22d8] sm:$0xff] %v3223
    %5272 = vst [vmem:[#allocation7 + $0x22e0] sm:$0xff] %v3224
    %5273 = vst [vmem:[#allocation7 + $0x22e8] sm:$0xff] %v3225
    %5274 = vst [vmem:[#allocation7 + $0x22f0] sm:$0xff] %v3226
    %5275 = vst [vmem:[#allocation7 + $0x22f8] sm:$0xff] %v3227
    %5276 = vst [vmem:[#allocation7 + $0x2300] sm:$0xff] %v3228
    %5277 = vst [vmem:[#allocation7 + $0x2308] sm:$0xff] %v3229
    %5278 = vst [vmem:[#allocation7 + $0x2310] sm:$0xff] %v3230
    %5279 = vst [vmem:[#allocation7 + $0x2318] sm:$0xff] %v3231
    %5280 = vst [vmem:[#allocation7 + $0x2320] sm:$0xff] %v3232
    %5281 = vst [vmem:[#allocation7 + $0x2328] sm:$0xff] %v3233
    %5282 = vst [vmem:[#allocation7 + $0x2330] sm:$0xff] %v3234
    %5283 = vst [vmem:[#allocation7 + $0x2338] sm:$0xff] %v3235
    %5284 = vst [vmem:[#allocation7 + $0x2340] sm:$0xff] %v3236
    %5285 = vst [vmem:[#allocation7 + $0x2348] sm:$0xff] %v3237
    %5286 = vst [vmem:[#allocation7 + $0x2350] sm:$0xff] %v3238
    %5287 = vst [vmem:[#allocation7 + $0x2358] sm:$0xff] %v3239
    %5288 = vst [vmem:[#allocation7 + $0x2360] sm:$0xff] %v3240
    %5289 = vst [vmem:[#allocation7 + $0x2368] sm:$0xff] %v3241
    %5290 = vst [vmem:[#allocation7 + $0x2370] sm:$0xff] %v3242
    %5291 = vst [vmem:[#allocation7 + $0x2378] sm:$0xff] %v3243
    %5292 = vst [vmem:[#allocation7 + $0x2380] sm:$0xff] %v3244
    %5293 = vst [vmem:[#allocation7 + $0x2388] sm:$0xff] %v3245
    %5294 = vst [vmem:[#allocation7 + $0x2390] sm:$0xff] %v3246
    %5295 = vst [vmem:[#allocation7 + $0x2398] sm:$0xff] %v3247
    %5296 = vst [vmem:[#allocation7 + $0x23a0] sm:$0xff] %v3248
    %5297 = vst [vmem:[#allocation7 + $0x23a8] sm:$0xff] %v3249
    %5298 = vst [vmem:[#allocation7 + $0x23b0] sm:$0xff] %v3250
    %5299 = vst [vmem:[#allocation7 + $0x23b8] sm:$0xff] %v3251
    %5300 = vst [vmem:[#allocation7 + $0x23c0] sm:$0xff] %v3252
    %5301 = vst [vmem:[#allocation7 + $0x23c8] sm:$0xff] %v3253
    %5302 = vst [vmem:[#allocation7 + $0x23d0] sm:$0xff] %v3254
    %5303 = vst [vmem:[#allocation7 + $0x23d8] sm:$0xff] %v3255
    %5304 = vst [vmem:[#allocation7 + $0x23e0] sm:$0xff] %v3256
    %5305 = vst [vmem:[#allocation7 + $0x23e8] sm:$0xff] %v3257
    %5306 = vst [vmem:[#allocation7 + $0x23f0] sm:$0xff] %v3258
    %5307 = vst [vmem:[#allocation7 + $0x23f8] sm:$0xff] %v3259
    %5308 = vst [vmem:[#allocation7 + $0x2400] sm:$0xff] %v3260
    %5309 = vst [vmem:[#allocation7 + $0x2408] sm:$0xff] %v3261
    %5310 = vst [vmem:[#allocation7 + $0x2410] sm:$0xff] %v3262
    %5311 = vst [vmem:[#allocation7 + $0x2418] sm:$0xff] %v3263
    %5312 = vst [vmem:[#allocation7 + $0x2420] sm:$0xff] %v3264
    %5313 = vst [vmem:[#allocation7 + $0x2428] sm:$0xff] %v3265
    %5314 = vst [vmem:[#allocation7 + $0x2430] sm:$0xff] %v3266
    %5315 = vst [vmem:[#allocation7 + $0x2438] sm:$0xff] %v3267
    %5316 = vst [vmem:[#allocation7 + $0x2440] sm:$0xff] %v3268
    %5317 = vst [vmem:[#allocation7 + $0x2448] sm:$0xff] %v3269
    %5318 = vst [vmem:[#allocation7 + $0x2450] sm:$0xff] %v3270
    %5319 = vst [vmem:[#allocation7 + $0x2458] sm:$0xff] %v3271
    %5320 = vst [vmem:[#allocation7 + $0x2460] sm:$0xff] %v3272
    %5321 = vst [vmem:[#allocation7 + $0x2468] sm:$0xff] %v3273
    %5322 = vst [vmem:[#allocation7 + $0x2470] sm:$0xff] %v3274
    %5323 = vst [vmem:[#allocation7 + $0x2478] sm:$0xff] %v3275
    %5324 = vst [vmem:[#allocation7 + $0x2480] sm:$0xff] %v3276
    %5325 = vst [vmem:[#allocation7 + $0x2488] sm:$0xff] %v3277
    %5326 = vst [vmem:[#allocation7 + $0x2490] sm:$0xff] %v3278
    %5327 = vst [vmem:[#allocation7 + $0x2498] sm:$0xff] %v3279
    %5328 = vst [vmem:[#allocation7 + $0x24a0] sm:$0xff] %v3280
    %5329 = vst [vmem:[#allocation7 + $0x24a8] sm:$0xff] %v3281
    %5330 = vst [vmem:[#allocation7 + $0x24b0] sm:$0xff] %v3282
    %5331 = vst [vmem:[#allocation7 + $0x24b8] sm:$0xff] %v3283
    %5332 = vst [vmem:[#allocation7 + $0x24c0] sm:$0xff] %v3284
    %5333 = vst [vmem:[#allocation7 + $0x24c8] sm:$0xff] %v3285
    %5334 = vst [vmem:[#allocation7 + $0x24d0] sm:$0xff] %v3286
    %5335 = vst [vmem:[#allocation7 + $0x24d8] sm:$0xff] %v3287
    %5336 = vst [vmem:[#allocation7 + $0x24e0] sm:$0xff] %v3288
    %5337 = vst [vmem:[#allocation7 + $0x24e8] sm:$0xff] %v3289
    %5338 = vst [vmem:[#allocation7 + $0x24f0] sm:$0xff] %v3290
    %5339 = vst [vmem:[#allocation7 + $0x24f8] sm:$0xff] %v3291
    %5340 = vst [vmem:[#allocation7 + $0x2500] sm:$0xff] %v3292
    %5341 = vst [vmem:[#allocation7 + $0x2508] sm:$0xff] %v3293
    %5342 = vst [vmem:[#allocation7 + $0x2510] sm:$0xff] %v3294
    %5343 = vst [vmem:[#allocation7 + $0x2518] sm:$0xff] %v3295
    %5344 = vst [vmem:[#allocation7 + $0x2520] sm:$0xff] %v3296
    %5345 = vst [vmem:[#allocation7 + $0x2528] sm:$0xff] %v3297
    %5346 = vst [vmem:[#allocation7 + $0x2530] sm:$0xff] %v3298
    %5347 = vst [vmem:[#allocation7 + $0x2538] sm:$0xff] %v3299
    %5348 = vst [vmem:[#allocation7 + $0x2540] sm:$0xff] %v3300
    %5349 = vst [vmem:[#allocation7 + $0x2548] sm:$0xff] %v3301
    %5350 = vst [vmem:[#allocation7 + $0x2550] sm:$0xff] %v3302
    %5351 = vst [vmem:[#allocation7 + $0x2558] sm:$0xff] %v3303
    %5352 = vst [vmem:[#allocation7 + $0x2560] sm:$0xff] %v3304
    %5353 = vst [vmem:[#allocation7 + $0x2568] sm:$0xff] %v3305
    %5354 = vst [vmem:[#allocation7 + $0x2570] sm:$0xff] %v3306
    %5355 = vst [vmem:[#allocation7 + $0x2578] sm:$0xff] %v3307
    %5356 = vst [vmem:[#allocation7 + $0x2580] sm:$0xff] %v3308
    %5357 = vst [vmem:[#allocation7 + $0x2588] sm:$0xff] %v3309
    %5358 = vst [vmem:[#allocation7 + $0x2590] sm:$0xff] %v3310
    %5359 = vst [vmem:[#allocation7 + $0x2598] sm:$0xff] %v3311
    %5360 = vst [vmem:[#allocation7 + $0x25a0] sm:$0xff] %v3312
    %5361 = vst [vmem:[#allocation7 + $0x25a8] sm:$0xff] %v3313
    %5362 = vst [vmem:[#allocation7 + $0x25b0] sm:$0xff] %v3314
    %5363 = vst [vmem:[#allocation7 + $0x25b8] sm:$0xff] %v3315
    %5364 = vst [vmem:[#allocation7 + $0x25c0] sm:$0xff] %v3316
    %5365 = vst [vmem:[#allocation7 + $0x25c8] sm:$0xff] %v3317
    %5366 = vst [vmem:[#allocation7 + $0x25d0] sm:$0xff] %v3318
    %5367 = vst [vmem:[#allocation7 + $0x25d8] sm:$0xff] %v3319
    %5368 = vst [vmem:[#allocation7 + $0x25e0] sm:$0xff] %v3320
    %5369 = vst [vmem:[#allocation7 + $0x25e8] sm:$0xff] %v3321
    %5370 = vst [vmem:[#allocation7 + $0x25f0] sm:$0xff] %v3322
    %5371 = vst [vmem:[#allocation7 + $0x25f8] sm:$0xff] %v3323
    %5372 = vst [vmem:[#allocation7 + $0x2600] sm:$0xff] %v3324
    %5373 = vst [vmem:[#allocation7 + $0x2608] sm:$0xff] %v3325
    %5374 = vst [vmem:[#allocation7 + $0x2610] sm:$0xff] %v3326
    %5375 = vst [vmem:[#allocation7 + $0x2618] sm:$0xff] %v3327
    %5376 = vst [vmem:[#allocation7 + $0x2620] sm:$0xff] %v3328
    %5377 = vst [vmem:[#allocation7 + $0x2628] sm:$0xff] %v3329
    %5378 = vst [vmem:[#allocation7 + $0x2630] sm:$0xff] %v3330
    %5379 = vst [vmem:[#allocation7 + $0x2638] sm:$0xff] %v3331
    %5380 = vst [vmem:[#allocation7 + $0x2640] sm:$0xff] %v3332
    %5381 = vst [vmem:[#allocation7 + $0x2648] sm:$0xff] %v3333
    %5382 = vst [vmem:[#allocation7 + $0x2650] sm:$0xff] %v3334
    %5383 = vst [vmem:[#allocation7 + $0x2658] sm:$0xff] %v3335
    %5384 = vst [vmem:[#allocation7 + $0x2660] sm:$0xff] %v3336
    %5385 = vst [vmem:[#allocation7 + $0x2668] sm:$0xff] %v3337
    %5386 = vst [vmem:[#allocation7 + $0x2670] sm:$0xff] %v3338
    %5387 = vst [vmem:[#allocation7 + $0x2678] sm:$0xff] %v3339
    %5388 = vst [vmem:[#allocation7 + $0x2680] sm:$0xff] %v3340
    %5389 = vst [vmem:[#allocation7 + $0x2688] sm:$0xff] %v3341
    %5390 = vst [vmem:[#allocation7 + $0x2690] sm:$0xff] %v3342
    %5391 = vst [vmem:[#allocation7 + $0x2698] sm:$0xff] %v3343
    %5392 = vst [vmem:[#allocation7 + $0x26a0] sm:$0xff] %v3344
    %5393 = vst [vmem:[#allocation7 + $0x26a8] sm:$0xff] %v3345
    %5394 = vst [vmem:[#allocation7 + $0x26b0] sm:$0xff] %v3346
    %5395 = vst [vmem:[#allocation7 + $0x26b8] sm:$0xff] %v3347
    %5396 = vst [vmem:[#allocation7 + $0x26c0] sm:$0xff] %v3348
    %5397 = vst [vmem:[#allocation7 + $0x26c8] sm:$0xff] %v3349
    %5398 = vst [vmem:[#allocation7 + $0x26d0] sm:$0xff] %v3350
    %5399 = vst [vmem:[#allocation7 + $0x26d8] sm:$0xff] %v3351
    %5400 = vst [vmem:[#allocation7 + $0x26e0] sm:$0xff] %v3352
    %5401 = vst [vmem:[#allocation7 + $0x26e8] sm:$0xff] %v3353
    %5402 = vst [vmem:[#allocation7 + $0x26f0] sm:$0xff] %v3354
    %5403 = vst [vmem:[#allocation7 + $0x26f8] sm:$0xff] %v3355
    %5404 = vst [vmem:[#allocation7 + $0x2700] sm:$0xff] %v3356
    %5405 = vst [vmem:[#allocation7 + $0x2708] sm:$0xff] %v3357
    %5406 = vst [vmem:[#allocation7 + $0x2710] sm:$0xff] %v3358
    %5407 = vst [vmem:[#allocation7 + $0x2718] sm:$0xff] %v3359
    %5408 = vst [vmem:[#allocation7 + $0x2720] sm:$0xff] %v3360
    %5409 = vst [vmem:[#allocation7 + $0x2728] sm:$0xff] %v3361
    %5410 = vst [vmem:[#allocation7 + $0x2730] sm:$0xff] %v3362
    %5411 = vst [vmem:[#allocation7 + $0x2738] sm:$0xff] %v3363
    %5412 = vst [vmem:[#allocation7 + $0x2740] sm:$0xff] %v3364
    %5413 = vst [vmem:[#allocation7 + $0x2748] sm:$0xff] %v3365
    %5414 = vst [vmem:[#allocation7 + $0x2750] sm:$0xff] %v3366
    %5415 = vst [vmem:[#allocation7 + $0x2758] sm:$0xff] %v3367
    %5416 = vst [vmem:[#allocation7 + $0x2760] sm:$0xff] %v3368
    %5417 = vst [vmem:[#allocation7 + $0x2768] sm:$0xff] %v3369
    %5418 = vst [vmem:[#allocation7 + $0x2770] sm:$0xff] %v3370
    %5419 = vst [vmem:[#allocation7 + $0x2778] sm:$0xff] %v3371
    %5420 = vst [vmem:[#allocation7 + $0x2780] sm:$0xff] %v3372
    %5421 = vst [vmem:[#allocation7 + $0x2788] sm:$0xff] %v3373
    %5422 = vst [vmem:[#allocation7 + $0x2790] sm:$0xff] %v3374
    %5423 = vst [vmem:[#allocation7 + $0x2798] sm:$0xff] %v3375
    %5424 = vst [vmem:[#allocation7 + $0x27a0] sm:$0xff] %v3376
    %5425 = vst [vmem:[#allocation7 + $0x27a8] sm:$0xff] %v3377
    %5426 = vst [vmem:[#allocation7 + $0x27b0] sm:$0xff] %v3378
    %5427 = vst [vmem:[#allocation7 + $0x27b8] sm:$0xff] %v3379
    %5428 = vst [vmem:[#allocation7 + $0x27c0] sm:$0xff] %v3380
    %5429 = vst [vmem:[#allocation7 + $0x27c8] sm:$0xff] %v3381
    %5430 = vst [vmem:[#allocation7 + $0x27d0] sm:$0xff] %v3382
    %5431 = vst [vmem:[#allocation7 + $0x27d8] sm:$0xff] %v3383
    %5432 = vst [vmem:[#allocation7 + $0x27e0] sm:$0xff] %v3384
    %5433 = vst [vmem:[#allocation7 + $0x27e8] sm:$0xff] %v3385
    %5434 = vst [vmem:[#allocation7 + $0x27f0] sm:$0xff] %v3386
    %5435 = vst [vmem:[#allocation7 + $0x27f8] sm:$0xff] %v3387
    %5436 = vst [vmem:[#allocation7 + $0x2800] sm:$0xff] %v3388
    %5437 = vst [vmem:[#allocation7 + $0x2808] sm:$0xff] %v3389
    %5438 = vst [vmem:[#allocation7 + $0x2810] sm:$0xff] %v3390
    %5439 = vst [vmem:[#allocation7 + $0x2818] sm:$0xff] %v3391
    %5440 = vst [vmem:[#allocation7 + $0x2820] sm:$0xff] %v3392
    %5441 = vst [vmem:[#allocation7 + $0x2828] sm:$0xff] %v3393
    %5442 = vst [vmem:[#allocation7 + $0x2830] sm:$0xff] %v3394
    %5443 = vst [vmem:[#allocation7 + $0x2838] sm:$0xff] %v3395
    %5444 = vst [vmem:[#allocation7 + $0x2840] sm:$0xff] %v3396
    %5445 = vst [vmem:[#allocation7 + $0x2848] sm:$0xff] %v3397
    %5446 = vst [vmem:[#allocation7 + $0x2850] sm:$0xff] %v3398
    %5447 = vst [vmem:[#allocation7 + $0x2858] sm:$0xff] %v3399
    %5448 = vst [vmem:[#allocation7 + $0x2860] sm:$0xff] %v3400
    %5449 = vst [vmem:[#allocation7 + $0x2868] sm:$0xff] %v3401
    %5450 = vst [vmem:[#allocation7 + $0x2870] sm:$0xff] %v3402
    %5451 = vst [vmem:[#allocation7 + $0x2878] sm:$0xff] %v3403
    %5452 = vst [vmem:[#allocation7 + $0x2880] sm:$0xff] %v3404
    %5453 = vst [vmem:[#allocation7 + $0x2888] sm:$0xff] %v3405
    %5454 = vst [vmem:[#allocation7 + $0x2890] sm:$0xff] %v3406
    %5455 = vst [vmem:[#allocation7 + $0x2898] sm:$0xff] %v3407
    %5456 = vst [vmem:[#allocation7 + $0x28a0] sm:$0xff] %v3408
    %5457 = vst [vmem:[#allocation7 + $0x28a8] sm:$0xff] %v3409
    %5458 = vst [vmem:[#allocation7 + $0x28b0] sm:$0xff] %v3410
    %5459 = vst [vmem:[#allocation7 + $0x28b8] sm:$0xff] %v3411
    %5460 = vst [vmem:[#allocation7 + $0x28c0] sm:$0xff] %v3412
    %5461 = vst [vmem:[#allocation7 + $0x28c8] sm:$0xff] %v3413
    %5462 = vst [vmem:[#allocation7 + $0x28d0] sm:$0xff] %v3414
    %5463 = vst [vmem:[#allocation7 + $0x28d8] sm:$0xff] %v3415
    %5464 = vst [vmem:[#allocation7 + $0x28e0] sm:$0xff] %v3416
    %5465 = vst [vmem:[#allocation7 + $0x28e8] sm:$0xff] %v3417
    %5466 = vst [vmem:[#allocation7 + $0x28f0] sm:$0xff] %v3418
    %5467 = vst [vmem:[#allocation7 + $0x28f8] sm:$0xff] %v3419
    %5468 = vst [vmem:[#allocation7 + $0x2900] sm:$0xff] %v3420
    %5469 = vst [vmem:[#allocation7 + $0x2908] sm:$0xff] %v3421
    %5470 = vst [vmem:[#allocation7 + $0x2910] sm:$0xff] %v3422
    %5471 = vst [vmem:[#allocation7 + $0x2918] sm:$0xff] %v3423
    %5472 = vst [vmem:[#allocation7 + $0x2920] sm:$0xff] %v3424
    %5473 = vst [vmem:[#allocation7 + $0x2928] sm:$0xff] %v3425
    %5474 = vst [vmem:[#allocation7 + $0x2930] sm:$0xff] %v3426
    %5475 = vst [vmem:[#allocation7 + $0x2938] sm:$0xff] %v3427
    %5476 = vst [vmem:[#allocation7 + $0x2940] sm:$0xff] %v3428
    %5477 = vst [vmem:[#allocation7 + $0x2948] sm:$0xff] %v3429
    %5478 = vst [vmem:[#allocation7 + $0x2950] sm:$0xff] %v3430
    %5479 = vst [vmem:[#allocation7 + $0x2958] sm:$0xff] %v3431
    %5480 = vst [vmem:[#allocation7 + $0x2960] sm:$0xff] %v3432
    %5481 = vst [vmem:[#allocation7 + $0x2968] sm:$0xff] %v3433
    %5482 = vst [vmem:[#allocation7 + $0x2970] sm:$0xff] %v3434
    %5483 = vst [vmem:[#allocation7 + $0x2978] sm:$0xff] %v3435
    %5484 = vst [vmem:[#allocation7 + $0x2980] sm:$0xff] %v3436
    %5485 = vst [vmem:[#allocation7 + $0x2988] sm:$0xff] %v3437
    %5486 = vst [vmem:[#allocation7 + $0x2990] sm:$0xff] %v3438
    %5487 = vst [vmem:[#allocation7 + $0x2998] sm:$0xff] %v3439
    %5488 = vst [vmem:[#allocation7 + $0x29a0] sm:$0xff] %v3440
    %5489 = vst [vmem:[#allocation7 + $0x29a8] sm:$0xff] %v3441
    %5490 = vst [vmem:[#allocation7 + $0x29b0] sm:$0xff] %v3442
    %5491 = vst [vmem:[#allocation7 + $0x29b8] sm:$0xff] %v3443
    %5492 = vst [vmem:[#allocation7 + $0x29c0] sm:$0xff] %v3444
    %5493 = vst [vmem:[#allocation7 + $0x29c8] sm:$0xff] %v3445
    %5494 = vst [vmem:[#allocation7 + $0x29d0] sm:$0xff] %v3446
    %5495 = vst [vmem:[#allocation7 + $0x29d8] sm:$0xff] %v3447
    %5496 = vst [vmem:[#allocation7 + $0x29e0] sm:$0xff] %v3448
    %5497 = vst [vmem:[#allocation7 + $0x29e8] sm:$0xff] %v3449
    %5498 = vst [vmem:[#allocation7 + $0x29f0] sm:$0xff] %v3450
    %5499 = vst [vmem:[#allocation7 + $0x29f8] sm:$0xff] %v3451
    %5500 = vst [vmem:[#allocation7 + $0x2a00] sm:$0xff] %v3452
    %5501 = vst [vmem:[#allocation7 + $0x2a08] sm:$0xff] %v3453
    %5502 = vst [vmem:[#allocation7 + $0x2a10] sm:$0xff] %v3454
    %5503 = vst [vmem:[#allocation7 + $0x2a18] sm:$0xff] %v3455
    %5504 = vst [vmem:[#allocation7 + $0x2a20] sm:$0xff] %v3456
    %5505 = vst [vmem:[#allocation7 + $0x2a28] sm:$0xff] %v3457
    %5506 = vst [vmem:[#allocation7 + $0x2a30] sm:$0xff] %v3458
    %5507 = vst [vmem:[#allocation7 + $0x2a38] sm:$0xff] %v3459
    %5508 = vst [vmem:[#allocation7 + $0x2a40] sm:$0xff] %v3460
    %5509 = vst [vmem:[#allocation7 + $0x2a48] sm:$0xff] %v3461
    %5510 = vst [vmem:[#allocation7 + $0x2a50] sm:$0xff] %v3462
    %5511 = vst [vmem:[#allocation7 + $0x2a58] sm:$0xff] %v3463
    %5512 = vst [vmem:[#allocation7 + $0x2a60] sm:$0xff] %v3464
    %5513 = vst [vmem:[#allocation7 + $0x2a68] sm:$0xff] %v3465
    %5514 = vst [vmem:[#allocation7 + $0x2a70] sm:$0xff] %v3466
    %5515 = vst [vmem:[#allocation7 + $0x2a78] sm:$0xff] %v3467
    %5516 = vst [vmem:[#allocation7 + $0x2a80] sm:$0xff] %v3468
    %5517 = vst [vmem:[#allocation7 + $0x2a88] sm:$0xff] %v3469
    %5518 = vst [vmem:[#allocation7 + $0x2a90] sm:$0xff] %v3470
    %5519 = vst [vmem:[#allocation7 + $0x2a98] sm:$0xff] %v3471
    %5520 = vst [vmem:[#allocation7 + $0x2aa0] sm:$0xff] %v3472
    %5521 = vst [vmem:[#allocation7 + $0x2aa8] sm:$0xff] %v3473
    %5522 = vst [vmem:[#allocation7 + $0x2ab0] sm:$0xff] %v3474
    %5523 = vst [vmem:[#allocation7 + $0x2ab8] sm:$0xff] %v3475
    %5524 = vst [vmem:[#allocation7 + $0x2ac0] sm:$0xff] %v3476
    %5525 = vst [vmem:[#allocation7 + $0x2ac8] sm:$0xff] %v3477
    %5526 = vst [vmem:[#allocation7 + $0x2ad0] sm:$0xff] %v3478
    %5527 = vst [vmem:[#allocation7 + $0x2ad8] sm:$0xff] %v3479
    %5528 = vst [vmem:[#allocation7 + $0x2ae0] sm:$0xff] %v3480
    %5529 = vst [vmem:[#allocation7 + $0x2ae8] sm:$0xff] %v3481
    %5530 = vst [vmem:[#allocation7 + $0x2af0] sm:$0xff] %v3482
    %5531 = vst [vmem:[#allocation7 + $0x2af8] sm:$0xff] %v3483
    %5532 = vst [vmem:[#allocation7 + $0x2b00] sm:$0xff] %v3484
    %5533 = vst [vmem:[#allocation7 + $0x2b08] sm:$0xff] %v3485
    %5534 = vst [vmem:[#allocation7 + $0x2b10] sm:$0xff] %v3486
    %5535 = vst [vmem:[#allocation7 + $0x2b18] sm:$0xff] %v3487
    %5536 = vst [vmem:[#allocation7 + $0x2b20] sm:$0xff] %v3488
    %5537 = vst [vmem:[#allocation7 + $0x2b28] sm:$0xff] %v3489
    %5538 = vst [vmem:[#allocation7 + $0x2b30] sm:$0xff] %v3490
    %5539 = vst [vmem:[#allocation7 + $0x2b38] sm:$0xff] %v3491
    %5540 = vst [vmem:[#allocation7 + $0x2b40] sm:$0xff] %v3492
    %5541 = vst [vmem:[#allocation7 + $0x2b48] sm:$0xff] %v3493
    %5542 = vst [vmem:[#allocation7 + $0x2b50] sm:$0xff] %v3494
    %5543 = vst [vmem:[#allocation7 + $0x2b58] sm:$0xff] %v3495
    %5544 = vst [vmem:[#allocation7 + $0x2b60] sm:$0xff] %v3496
    %5545 = vst [vmem:[#allocation7 + $0x2b68] sm:$0xff] %v3497
    %5546 = vst [vmem:[#allocation7 + $0x2b70] sm:$0xff] %v3498
    %5547 = vst [vmem:[#allocation7 + $0x2b78] sm:$0xff] %v3499
    %5548 = vst [vmem:[#allocation7 + $0x2b80] sm:$0xff] %v3500
    %5549 = vst [vmem:[#allocation7 + $0x2b88] sm:$0xff] %v3501
    %5550 = vst [vmem:[#allocation7 + $0x2b90] sm:$0xff] %v3502
    %5551 = vst [vmem:[#allocation7 + $0x2b98] sm:$0xff] %v3503
    %5552 = vst [vmem:[#allocation7 + $0x2ba0] sm:$0xff] %v3504
    %5553 = vst [vmem:[#allocation7 + $0x2ba8] sm:$0xff] %v3505
    %5554 = vst [vmem:[#allocation7 + $0x2bb0] sm:$0xff] %v3506
    %5555 = vst [vmem:[#allocation7 + $0x2bb8] sm:$0xff] %v3507
    %5556 = vst [vmem:[#allocation7 + $0x2bc0] sm:$0xff] %v3508
    %5557 = vst [vmem:[#allocation7 + $0x2bc8] sm:$0xff] %v3509
    %5558 = vst [vmem:[#allocation7 + $0x2bd0] sm:$0xff] %v3510
    %5559 = vst [vmem:[#allocation7 + $0x2bd8] sm:$0xff] %v3511
    %5560 = vst [vmem:[#allocation7 + $0x2be0] sm:$0xff] %v3512
    %5561 = vst [vmem:[#allocation7 + $0x2be8] sm:$0xff] %v3513
    %5562 = vst [vmem:[#allocation7 + $0x2bf0] sm:$0xff] %v3514
    %5563 = vst [vmem:[#allocation7 + $0x2bf8] sm:$0xff] %v3515
    %5564 = vst [vmem:[#allocation7 + $0x2c00] sm:$0xff] %v3516
    %5565 = vst [vmem:[#allocation7 + $0x2c08] sm:$0xff] %v3517
    %5566 = vst [vmem:[#allocation7 + $0x2c10] sm:$0xff] %v3518
    %5567 = vst [vmem:[#allocation7 + $0x2c18] sm:$0xff] %v3519
    %5568 = vst [vmem:[#allocation7 + $0x2c20] sm:$0xff] %v3520
    %5569 = vst [vmem:[#allocation7 + $0x2c28] sm:$0xff] %v3521
    %5570 = vst [vmem:[#allocation7 + $0x2c30] sm:$0xff] %v3522
    %5571 = vst [vmem:[#allocation7 + $0x2c38] sm:$0xff] %v3523
    %5572 = vst [vmem:[#allocation7 + $0x2c40] sm:$0xff] %v3524
    %5573 = vst [vmem:[#allocation7 + $0x2c48] sm:$0xff] %v3525
    %5574 = vst [vmem:[#allocation7 + $0x2c50] sm:$0xff] %v3526
    %5575 = vst [vmem:[#allocation7 + $0x2c58] sm:$0xff] %v3527
    %5576 = vst [vmem:[#allocation7 + $0x2c60] sm:$0xff] %v3528
    %5577 = vst [vmem:[#allocation7 + $0x2c68] sm:$0xff] %v3529
    %5578 = vst [vmem:[#allocation7 + $0x2c70] sm:$0xff] %v3530
    %5579 = vst [vmem:[#allocation7 + $0x2c78] sm:$0xff] %v3531
    %5580 = vst [vmem:[#allocation7 + $0x2c80] sm:$0xff] %v3532
    %5581 = vst [vmem:[#allocation7 + $0x2c88] sm:$0xff] %v3533
    %5582 = vst [vmem:[#allocation7 + $0x2c90] sm:$0xff] %v3534
    %5583 = vst [vmem:[#allocation7 + $0x2c98] sm:$0xff] %v3535
    %5584 = vst [vmem:[#allocation7 + $0x2ca0] sm:$0xff] %v3536
    %5585 = vst [vmem:[#allocation7 + $0x2ca8] sm:$0xff] %v3537
    %5586 = vst [vmem:[#allocation7 + $0x2cb0] sm:$0xff] %v3538
    %5587 = vst [vmem:[#allocation7 + $0x2cb8] sm:$0xff] %v3539
    %5588 = vst [vmem:[#allocation7 + $0x2cc0] sm:$0xff] %v3540
    %5589 = vst [vmem:[#allocation7 + $0x2cc8] sm:$0xff] %v3541
    %5590 = vst [vmem:[#allocation7 + $0x2cd0] sm:$0xff] %v3542
    %5591 = vst [vmem:[#allocation7 + $0x2cd8] sm:$0xff] %v3543
    %5592 = vst [vmem:[#allocation7 + $0x2ce0] sm:$0xff] %v3544
    %5593 = vst [vmem:[#allocation7 + $0x2ce8] sm:$0xff] %v3545
    %5594 = vst [vmem:[#allocation7 + $0x2cf0] sm:$0xff] %v3546
    %5595 = vst [vmem:[#allocation7 + $0x2cf8] sm:$0xff] %v3547
    %5596 = vst [vmem:[#allocation7 + $0x2d00] sm:$0xff] %v3548
    %5597 = vst [vmem:[#allocation7 + $0x2d08] sm:$0xff] %v3549
    %5598 = vst [vmem:[#allocation7 + $0x2d10] sm:$0xff] %v3550
    %5599 = vst [vmem:[#allocation7 + $0x2d18] sm:$0xff] %v3551
    %5600 = vst [vmem:[#allocation7 + $0x2d20] sm:$0xff] %v3552
    %5601 = vst [vmem:[#allocation7 + $0x2d28] sm:$0xff] %v3553
    %5602 = vst [vmem:[#allocation7 + $0x2d30] sm:$0xff] %v3554
    %5603 = vst [vmem:[#allocation7 + $0x2d38] sm:$0xff] %v3555
    %5604 = vst [vmem:[#allocation7 + $0x2d40] sm:$0xff] %v3556
    %5605 = vst [vmem:[#allocation7 + $0x2d48] sm:$0xff] %v3557
    %5606 = vst [vmem:[#allocation7 + $0x2d50] sm:$0xff] %v3558
    %5607 = vst [vmem:[#allocation7 + $0x2d58] sm:$0xff] %v3559
    %5608 = vst [vmem:[#allocation7 + $0x2d60] sm:$0xff] %v3560
    %5609 = vst [vmem:[#allocation7 + $0x2d68] sm:$0xff] %v3561
    %5610 = vst [vmem:[#allocation7 + $0x2d70] sm:$0xff] %v3562
    %5611 = vst [vmem:[#allocation7 + $0x2d78] sm:$0xff] %v3563
    %5612 = vst [vmem:[#allocation7 + $0x2d80] sm:$0xff] %v3564
    %5613 = vst [vmem:[#allocation7 + $0x2d88] sm:$0xff] %v3565
    %5614 = vst [vmem:[#allocation7 + $0x2d90] sm:$0xff] %v3566
    %5615 = vst [vmem:[#allocation7 + $0x2d98] sm:$0xff] %v3567
    %5616 = vst [vmem:[#allocation7 + $0x2da0] sm:$0xff] %v3568
    %5617 = vst [vmem:[#allocation7 + $0x2da8] sm:$0xff] %v3569
    %5618 = vst [vmem:[#allocation7 + $0x2db0] sm:$0xff] %v3570
    %5619 = vst [vmem:[#allocation7 + $0x2db8] sm:$0xff] %v3571
    %5620 = vst [vmem:[#allocation7 + $0x2dc0] sm:$0xff] %v3572
    %5621 = vst [vmem:[#allocation7 + $0x2dc8] sm:$0xff] %v3573
    %5622 = vst [vmem:[#allocation7 + $0x2dd0] sm:$0xff] %v3574
    %5623 = vst [vmem:[#allocation7 + $0x2dd8] sm:$0xff] %v3575
    %5624 = vst [vmem:[#allocation7 + $0x2de0] sm:$0xff] %v3576
    %5625 = vst [vmem:[#allocation7 + $0x2de8] sm:$0xff] %v3577
    %5626 = vst [vmem:[#allocation7 + $0x2df0] sm:$0xff] %v3578
    %5627 = vst [vmem:[#allocation7 + $0x2df8] sm:$0xff] %v3579
    %5628 = vst [vmem:[#allocation7 + $0x2e00] sm:$0xff] %v3580
    %5629 = vst [vmem:[#allocation7 + $0x2e08] sm:$0xff] %v3581
    %5630 = vst [vmem:[#allocation7 + $0x2e10] sm:$0xff] %v3582
    %5631 = vst [vmem:[#allocation7 + $0x2e18] sm:$0xff] %v3583
    %5632 = vst [vmem:[#allocation7 + $0x2e20] sm:$0xff] %v3584
    %5633 = vst [vmem:[#allocation7 + $0x2e28] sm:$0xff] %v3585
    %5634 = vst [vmem:[#allocation7 + $0x2e30] sm:$0xff] %v3586
    %5635 = vst [vmem:[#allocation7 + $0x2e38] sm:$0xff] %v3587
    %5636 = vst [vmem:[#allocation7 + $0x2e40] sm:$0xff] %v3588
    %5637 = vst [vmem:[#allocation7 + $0x2e48] sm:$0xff] %v3589
    %5638 = vst [vmem:[#allocation7 + $0x2e50] sm:$0xff] %v3590
    %5639 = vst [vmem:[#allocation7 + $0x2e58] sm:$0xff] %v3591
    %5640 = vst [vmem:[#allocation7 + $0x2e60] sm:$0xff] %v3592
    %5641 = vst [vmem:[#allocation7 + $0x2e68] sm:$0xff] %v3593
    %5642 = vst [vmem:[#allocation7 + $0x2e70] sm:$0xff] %v3594
    %5643 = vst [vmem:[#allocation7 + $0x2e78] sm:$0xff] %v3595
    %5644 = vst [vmem:[#allocation7 + $0x2e80] sm:$0xff] %v3596
    %5645 = vst [vmem:[#allocation7 + $0x2e88] sm:$0xff] %v3597
    %5646 = vst [vmem:[#allocation7 + $0x2e90] sm:$0xff] %v3598
    %5647 = vst [vmem:[#allocation7 + $0x2e98] sm:$0xff] %v3599
    %5648 = vst [vmem:[#allocation7 + $0x2ea0] sm:$0xff] %v3600
    %5649 = vst [vmem:[#allocation7 + $0x2ea8] sm:$0xff] %v3601
    %5650 = vst [vmem:[#allocation7 + $0x2eb0] sm:$0xff] %v3602
    %5651 = vst [vmem:[#allocation7 + $0x2eb8] sm:$0xff] %v3603
    %5652 = vst [vmem:[#allocation7 + $0x2ec0] sm:$0xff] %v3604
    %5653 = vst [vmem:[#allocation7 + $0x2ec8] sm:$0xff] %v3605
    %5654 = vst [vmem:[#allocation7 + $0x2ed0] sm:$0xff] %v3606
    %5655 = vst [vmem:[#allocation7 + $0x2ed8] sm:$0xff] %v3607
    %5656 = vst [vmem:[#allocation7 + $0x2ee0] sm:$0xff] %v3608
    %5657 = vst [vmem:[#allocation7 + $0x2ee8] sm:$0xff] %v3609
    %5658 = vst [vmem:[#allocation7 + $0x2ef0] sm:$0xff] %v3610
    %5659 = vst [vmem:[#allocation7 + $0x2ef8] sm:$0xff] %v3611
    %5660 = vst [vmem:[#allocation7 + $0x2f00] sm:$0xff] %v3612
    %5661 = vst [vmem:[#allocation7 + $0x2f08] sm:$0xff] %v3613
    %5662 = vst [vmem:[#allocation7 + $0x2f10] sm:$0xff] %v3614
    %5663 = vst [vmem:[#allocation7 + $0x2f18] sm:$0xff] %v3615
    %5664 = vst [vmem:[#allocation7 + $0x2f20] sm:$0xff] %v3616
    %5665 = vst [vmem:[#allocation7 + $0x2f28] sm:$0xff] %v3617
    %5666 = vst [vmem:[#allocation7 + $0x2f30] sm:$0xff] %v3618
    %5667 = vst [vmem:[#allocation7 + $0x2f38] sm:$0xff] %v3619
    %5668 = vst [vmem:[#allocation7 + $0x2f40] sm:$0xff] %v3620
    %5669 = vst [vmem:[#allocation7 + $0x2f48] sm:$0xff] %v3621
    %5670 = vst [vmem:[#allocation7 + $0x2f50] sm:$0xff] %v3622
    %5671 = vst [vmem:[#allocation7 + $0x2f58] sm:$0xff] %v3623
    %5672 = vst [vmem:[#allocation7 + $0x2f60] sm:$0xff] %v3624
    %5673 = vst [vmem:[#allocation7 + $0x2f68] sm:$0xff] %v3625
    %5674 = vst [vmem:[#allocation7 + $0x2f70] sm:$0xff] %v3626
    %5675 = vst [vmem:[#allocation7 + $0x2f78] sm:$0xff] %v3627
    %5676 = vst [vmem:[#allocation7 + $0x2f80] sm:$0xff] %v3628
    %5677 = vst [vmem:[#allocation7 + $0x2f88] sm:$0xff] %v3629
    %5678 = vst [vmem:[#allocation7 + $0x2f90] sm:$0xff] %v3630
    %5679 = vst [vmem:[#allocation7 + $0x2f98] sm:$0xff] %v3631
    %5680 = vst [vmem:[#allocation7 + $0x2fa0] sm:$0xff] %v3632
    %5681 = vst [vmem:[#allocation7 + $0x2fa8] sm:$0xff] %v3633
    %5682 = vst [vmem:[#allocation7 + $0x2fb0] sm:$0xff] %v3634
    %5683 = vst [vmem:[#allocation7 + $0x2fb8] sm:$0xff] %v3635
    %5684 = vst [vmem:[#allocation7 + $0x2fc0] sm:$0xff] %v3636
    %5685 = vst [vmem:[#allocation7 + $0x2fc8] sm:$0xff] %v3637
    %5686 = vst [vmem:[#allocation7 + $0x2fd0] sm:$0xff] %v3638
    %5687 = vst [vmem:[#allocation7 + $0x2fd8] sm:$0xff] %v3639
    %5688 = vst [vmem:[#allocation7 + $0x2fe0] sm:$0xff] %v3640
    %5689 = vst [vmem:[#allocation7 + $0x2fe8] sm:$0xff] %v3641
    %5690 = vst [vmem:[#allocation7 + $0x2ff0] sm:$0xff] %v3642
    %5691 = vst [vmem:[#allocation7 + $0x2ff8] sm:$0xff] %v3643
    %5692 = vst [vmem:[#allocation7 + $0x3000] sm:$0xff] %v3644
    %5693 = vst [vmem:[#allocation7 + $0x3008] sm:$0xff] %v3645
    %5694 = vst [vmem:[#allocation7 + $0x3010] sm:$0xff] %v3646
    %5695 = vst [vmem:[#allocation7 + $0x3018] sm:$0xff] %v3647
    %5696 = vst [vmem:[#allocation7 + $0x3020] sm:$0xff] %v3648
    %5697 = vst [vmem:[#allocation7 + $0x3028] sm:$0xff] %v3649
    %5698 = vst [vmem:[#allocation7 + $0x3030] sm:$0xff] %v3650
    %5699 = vst [vmem:[#allocation7 + $0x3038] sm:$0xff] %v3651
    %5700 = vst [vmem:[#allocation7 + $0x3040] sm:$0xff] %v3652
    %5701 = vst [vmem:[#allocation7 + $0x3048] sm:$0xff] %v3653
    %5702 = vst [vmem:[#allocation7 + $0x3050] sm:$0xff] %v3654
    %5703 = vst [vmem:[#allocation7 + $0x3058] sm:$0xff] %v3655
    %5704 = vst [vmem:[#allocation7 + $0x3060] sm:$0xff] %v3656
    %5705 = vst [vmem:[#allocation7 + $0x3068] sm:$0xff] %v3657
    %5706 = vst [vmem:[#allocation7 + $0x3070] sm:$0xff] %v3658
    %5707 = vst [vmem:[#allocation7 + $0x3078] sm:$0xff] %v3659
    %5708 = vst [vmem:[#allocation7 + $0x3080] sm:$0xff] %v3660
    %5709 = vst [vmem:[#allocation7 + $0x3088] sm:$0xff] %v3661
    %5710 = vst [vmem:[#allocation7 + $0x3090] sm:$0xff] %v3662
    %5711 = vst [vmem:[#allocation7 + $0x3098] sm:$0xff] %v3663
    %5712 = vst [vmem:[#allocation7 + $0x30a0] sm:$0xff] %v3664
    %5713 = vst [vmem:[#allocation7 + $0x30a8] sm:$0xff] %v3665
    %5714 = vst [vmem:[#allocation7 + $0x30b0] sm:$0xff] %v3666
    %5715 = vst [vmem:[#allocation7 + $0x30b8] sm:$0xff] %v3667
    %5716 = vst [vmem:[#allocation7 + $0x30c0] sm:$0xff] %v3668
    %5717 = vst [vmem:[#allocation7 + $0x30c8] sm:$0xff] %v3669
    %5718 = vst [vmem:[#allocation7 + $0x30d0] sm:$0xff] %v3670
    %5719 = vst [vmem:[#allocation7 + $0x30d8] sm:$0xff] %v3671
    %5720 = vst [vmem:[#allocation7 + $0x30e0] sm:$0xff] %v3672
    %5721 = vst [vmem:[#allocation7 + $0x30e8] sm:$0xff] %v3673
    %5722 = vst [vmem:[#allocation7 + $0x30f0] sm:$0xff] %v3674
    %5723 = vst [vmem:[#allocation7 + $0x30f8] sm:$0xff] %v3675
    %5724 = vst [vmem:[#allocation7 + $0x3100] sm:$0xff] %v3676
    %5725 = vst [vmem:[#allocation7 + $0x3108] sm:$0xff] %v3677
    %5726 = vst [vmem:[#allocation7 + $0x3110] sm:$0xff] %v3678
    %5727 = vst [vmem:[#allocation7 + $0x3118] sm:$0xff] %v3679
    %5728 = vst [vmem:[#allocation7 + $0x3120] sm:$0xff] %v3680
    %5729 = vst [vmem:[#allocation7 + $0x3128] sm:$0xff] %v3681
    %5730 = vst [vmem:[#allocation7 + $0x3130] sm:$0xff] %v3682
    %5731 = vst [vmem:[#allocation7 + $0x3138] sm:$0xff] %v3683
    %5732 = vst [vmem:[#allocation7 + $0x3140] sm:$0xff] %v3684
    %5733 = vst [vmem:[#allocation7 + $0x3148] sm:$0xff] %v3685
    %5734 = vst [vmem:[#allocation7 + $0x3150] sm:$0xff] %v3686
    %5735 = vst [vmem:[#allocation7 + $0x3158] sm:$0xff] %v3687
    %5736 = vst [vmem:[#allocation7 + $0x3160] sm:$0xff] %v3688
    %5737 = vst [vmem:[#allocation7 + $0x3168] sm:$0xff] %v3689
    %5738 = vst [vmem:[#allocation7 + $0x3170] sm:$0xff] %v3690
    %5739 = vst [vmem:[#allocation7 + $0x3178] sm:$0xff] %v3691
    %5740 = vst [vmem:[#allocation7 + $0x3180] sm:$0xff] %v3692
    %5741 = vst [vmem:[#allocation7 + $0x3188] sm:$0xff] %v3693
    %5742 = vst [vmem:[#allocation7 + $0x3190] sm:$0xff] %v3694
    %5743 = vst [vmem:[#allocation7 + $0x3198] sm:$0xff] %v3695
    %5744 = vst [vmem:[#allocation7 + $0x31a0] sm:$0xff] %v3696
    %5745 = vst [vmem:[#allocation7 + $0x31a8] sm:$0xff] %v3697
    %5746 = vst [vmem:[#allocation7 + $0x31b0] sm:$0xff] %v3698
    %5747 = vst [vmem:[#allocation7 + $0x31b8] sm:$0xff] %v3699
    %5748 = vst [vmem:[#allocation7 + $0x31c0] sm:$0xff] %v3700
    %5749 = vst [vmem:[#allocation7 + $0x31c8] sm:$0xff] %v3701
    %5750 = vst [vmem:[#allocation7 + $0x31d0] sm:$0xff] %v3702
    %5751 = vst [vmem:[#allocation7 + $0x31d8] sm:$0xff] %v3703
    %5752 = vst [vmem:[#allocation7 + $0x31e0] sm:$0xff] %v3704
    %5753 = vst [vmem:[#allocation7 + $0x31e8] sm:$0xff] %v3705
    %5754 = vst [vmem:[#allocation7 + $0x31f0] sm:$0xff] %v3706
    %5755 = vst [vmem:[#allocation7 + $0x31f8] sm:$0xff] %v3707
    %5756 = vst [vmem:[#allocation7 + $0x3200] sm:$0xff] %v3708
    %5757 = vst [vmem:[#allocation7 + $0x3208] sm:$0xff] %v3709
    %5758 = vst [vmem:[#allocation7 + $0x3210] sm:$0xff] %v3710
    %5759 = vst [vmem:[#allocation7 + $0x3218] sm:$0xff] %v3711
    %5760 = vst [vmem:[#allocation7 + $0x3220] sm:$0xff] %v3712
    %5761 = vst [vmem:[#allocation7 + $0x3228] sm:$0xff] %v3713
    %5762 = vst [vmem:[#allocation7 + $0x3230] sm:$0xff] %v3714
    %5763 = vst [vmem:[#allocation7 + $0x3238] sm:$0xff] %v3715
    %5764 = vst [vmem:[#allocation7 + $0x3240] sm:$0xff] %v3716
    %5765 = vst [vmem:[#allocation7 + $0x3248] sm:$0xff] %v3717
    %5766 = vst [vmem:[#allocation7 + $0x3250] sm:$0xff] %v3718
    %5767 = vst [vmem:[#allocation7 + $0x3258] sm:$0xff] %v3719
    %5768 = vst [vmem:[#allocation7 + $0x3260] sm:$0xff] %v3720
    %5769 = vst [vmem:[#allocation7 + $0x3268] sm:$0xff] %v3721
    %5770 = vst [vmem:[#allocation7 + $0x3270] sm:$0xff] %v3722
    %5771 = vst [vmem:[#allocation7 + $0x3278] sm:$0xff] %v3723
    %5772 = vst [vmem:[#allocation7 + $0x3280] sm:$0xff] %v3724
    %5773 = vst [vmem:[#allocation7 + $0x3288] sm:$0xff] %v3725
    %5774 = vst [vmem:[#allocation7 + $0x3290] sm:$0xff] %v3726
    %5775 = vst [vmem:[#allocation7 + $0x3298] sm:$0xff] %v3727
    %5776 = vst [vmem:[#allocation7 + $0x32a0] sm:$0xff] %v3728
    %5777 = vst [vmem:[#allocation7 + $0x32a8] sm:$0xff] %v3729
    %5778 = vst [vmem:[#allocation7 + $0x32b0] sm:$0xff] %v3730
    %5779 = vst [vmem:[#allocation7 + $0x32b8] sm:$0xff] %v3731
    %5780 = vst [vmem:[#allocation7 + $0x32c0] sm:$0xff] %v3732
    %5781 = vst [vmem:[#allocation7 + $0x32c8] sm:$0xff] %v3733
    %5782 = vst [vmem:[#allocation7 + $0x32d0] sm:$0xff] %v3734
    %5783 = vst [vmem:[#allocation7 + $0x32d8] sm:$0xff] %v3735
    %5784 = vst [vmem:[#allocation7 + $0x32e0] sm:$0xff] %v3736
    %5785 = vst [vmem:[#allocation7 + $0x32e8] sm:$0xff] %v3737
    %5786 = vst [vmem:[#allocation7 + $0x32f0] sm:$0xff] %v3738
    %5787 = vst [vmem:[#allocation7 + $0x32f8] sm:$0xff] %v3739
    %5788 = vst [vmem:[#allocation7 + $0x3300] sm:$0xff] %v3740
    %5789 = vst [vmem:[#allocation7 + $0x3308] sm:$0xff] %v3741
    %5790 = vst [vmem:[#allocation7 + $0x3310] sm:$0xff] %v3742
    %5791 = vst [vmem:[#allocation7 + $0x3318] sm:$0xff] %v3743
    %5792 = vst [vmem:[#allocation7 + $0x3320] sm:$0xff] %v3744
    %5793 = vst [vmem:[#allocation7 + $0x3328] sm:$0xff] %v3745
    %5794 = vst [vmem:[#allocation7 + $0x3330] sm:$0xff] %v3746
    %5795 = vst [vmem:[#allocation7 + $0x3338] sm:$0xff] %v3747
    %5796 = vst [vmem:[#allocation7 + $0x3340] sm:$0xff] %v3748
    %5797 = vst [vmem:[#allocation7 + $0x3348] sm:$0xff] %v3749
    %5798 = vst [vmem:[#allocation7 + $0x3350] sm:$0xff] %v3750
    %5799 = vst [vmem:[#allocation7 + $0x3358] sm:$0xff] %v3751
    %5800 = vst [vmem:[#allocation7 + $0x3360] sm:$0xff] %v3752
    %5801 = vst [vmem:[#allocation7 + $0x3368] sm:$0xff] %v3753
    %5802 = vst [vmem:[#allocation7 + $0x3370] sm:$0xff] %v3754
    %5803 = vst [vmem:[#allocation7 + $0x3378] sm:$0xff] %v3755
    %5804 = vst [vmem:[#allocation7 + $0x3380] sm:$0xff] %v3756
    %5805 = vst [vmem:[#allocation7 + $0x3388] sm:$0xff] %v3757
    %5806 = vst [vmem:[#allocation7 + $0x3390] sm:$0xff] %v3758
    %5807 = vst [vmem:[#allocation7 + $0x3398] sm:$0xff] %v3759
    %5808 = vst [vmem:[#allocation7 + $0x33a0] sm:$0xff] %v3760
    %5809 = vst [vmem:[#allocation7 + $0x33a8] sm:$0xff] %v3761
    %5810 = vst [vmem:[#allocation7 + $0x33b0] sm:$0xff] %v3762
    %5811 = vst [vmem:[#allocation7 + $0x33b8] sm:$0xff] %v3763
    %5812 = vst [vmem:[#allocation7 + $0x33c0] sm:$0xff] %v3764
    %5813 = vst [vmem:[#allocation7 + $0x33c8] sm:$0xff] %v3765
    %5814 = vst [vmem:[#allocation7 + $0x33d0] sm:$0xff] %v3766
    %5815 = vst [vmem:[#allocation7 + $0x33d8] sm:$0xff] %v3767
    %5816 = vst [vmem:[#allocation7 + $0x33e0] sm:$0xff] %v3768
    %5817 = vst [vmem:[#allocation7 + $0x33e8] sm:$0xff] %v3769
    %5818 = vst [vmem:[#allocation7 + $0x33f0] sm:$0xff] %v3770
    %5819 = vst [vmem:[#allocation7 + $0x33f8] sm:$0xff] %v3771
    %5820 = vst [vmem:[#allocation7 + $0x3400] sm:$0xff] %v3772
    %5821 = vst [vmem:[#allocation7 + $0x3408] sm:$0xff] %v3773
    %5822 = vst [vmem:[#allocation7 + $0x3410] sm:$0xff] %v3774
    %5823 = vst [vmem:[#allocation7 + $0x3418] sm:$0xff] %v3775
    %5824 = vst [vmem:[#allocation7 + $0x3420] sm:$0xff] %v3776
    %5825 = vst [vmem:[#allocation7 + $0x3428] sm:$0xff] %v3777
    %5826 = vst [vmem:[#allocation7 + $0x3430] sm:$0xff] %v3778
    %5827 = vst [vmem:[#allocation7 + $0x3438] sm:$0xff] %v3779
    %5828 = vst [vmem:[#allocation7 + $0x3440] sm:$0xff] %v3780
    %5829 = vst [vmem:[#allocation7 + $0x3448] sm:$0xff] %v3781
    %5830 = vst [vmem:[#allocation7 + $0x3450] sm:$0xff] %v3782
    %5831 = vst [vmem:[#allocation7 + $0x3458] sm:$0xff] %v3783
    %5832 = vst [vmem:[#allocation7 + $0x3460] sm:$0xff] %v3784
    %5833 = vst [vmem:[#allocation7 + $0x3468] sm:$0xff] %v3785
    %5834 = vst [vmem:[#allocation7 + $0x3470] sm:$0xff] %v3786
    %5835 = vst [vmem:[#allocation7 + $0x3478] sm:$0xff] %v3787
    %5836 = vst [vmem:[#allocation7 + $0x3480] sm:$0xff] %v3788
    %5837 = vst [vmem:[#allocation7 + $0x3488] sm:$0xff] %v3789
    %5838 = vst [vmem:[#allocation7 + $0x3490] sm:$0xff] %v3790
    %5839 = vst [vmem:[#allocation7 + $0x3498] sm:$0xff] %v3791
    %5840 = vst [vmem:[#allocation7 + $0x34a0] sm:$0xff] %v3792
    %5841 = vst [vmem:[#allocation7 + $0x34a8] sm:$0xff] %v3793
    %5842 = vst [vmem:[#allocation7 + $0x34b0] sm:$0xff] %v3794
    %5843 = vst [vmem:[#allocation7 + $0x34b8] sm:$0xff] %v3795
    %5844 = vst [vmem:[#allocation7 + $0x34c0] sm:$0xff] %v3796
    %5845 = vst [vmem:[#allocation7 + $0x34c8] sm:$0xff] %v3797
    %5846 = vst [vmem:[#allocation7 + $0x34d0] sm:$0xff] %v3798
    %5847 = vst [vmem:[#allocation7 + $0x34d8] sm:$0xff] %v3799
    %5848 = vst [vmem:[#allocation7 + $0x34e0] sm:$0xff] %v3800
    %5849 = vst [vmem:[#allocation7 + $0x34e8] sm:$0xff] %v3801
    %5850 = vst [vmem:[#allocation7 + $0x34f0] sm:$0xff] %v3802
    %5851 = vst [vmem:[#allocation7 + $0x34f8] sm:$0xff] %v3803
    %5852 = vst [vmem:[#allocation7 + $0x3500] sm:$0xff] %v3804
    %5853 = vst [vmem:[#allocation7 + $0x3508] sm:$0xff] %v3805
    %5854 = vst [vmem:[#allocation7 + $0x3510] sm:$0xff] %v3806
    %5855 = vst [vmem:[#allocation7 + $0x3518] sm:$0xff] %v3807
    %5856 = vst [vmem:[#allocation7 + $0x3520] sm:$0xff] %v3808
    %5857 = vst [vmem:[#allocation7 + $0x3528] sm:$0xff] %v3809
    %5858 = vst [vmem:[#allocation7 + $0x3530] sm:$0xff] %v3810
    %5859 = vst [vmem:[#allocation7 + $0x3538] sm:$0xff] %v3811
    %5860 = vst [vmem:[#allocation7 + $0x3540] sm:$0xff] %v3812
    %5861 = vst [vmem:[#allocation7 + $0x3548] sm:$0xff] %v3813
    %5862 = vst [vmem:[#allocation7 + $0x3550] sm:$0xff] %v3814
    %5863 = vst [vmem:[#allocation7 + $0x3558] sm:$0xff] %v3815
    %5864 = vst [vmem:[#allocation7 + $0x3560] sm:$0xff] %v3816
    %5865 = vst [vmem:[#allocation7 + $0x3568] sm:$0xff] %v3817
    %5866 = vst [vmem:[#allocation7 + $0x3570] sm:$0xff] %v3818
    %5867 = vst [vmem:[#allocation7 + $0x3578] sm:$0xff] %v3819
    %5868 = vst [vmem:[#allocation7 + $0x3580] sm:$0xff] %v3820
    %5869 = vst [vmem:[#allocation7 + $0x3588] sm:$0xff] %v3821
    %5870 = vst [vmem:[#allocation7 + $0x3590] sm:$0xff] %v3822
    %5871 = vst [vmem:[#allocation7 + $0x3598] sm:$0xff] %v3823
    %5872 = vst [vmem:[#allocation7 + $0x35a0] sm:$0xff] %v3824
    %5873 = vst [vmem:[#allocation7 + $0x35a8] sm:$0xff] %v3825
    %5874 = vst [vmem:[#allocation7 + $0x35b0] sm:$0xff] %v3826
    %5875 = vst [vmem:[#allocation7 + $0x35b8] sm:$0xff] %v3827
    %5876 = vst [vmem:[#allocation7 + $0x35c0] sm:$0xff] %v3828
    %5877 = vst [vmem:[#allocation7 + $0x35c8] sm:$0xff] %v3829
    %5878 = vst [vmem:[#allocation7 + $0x35d0] sm:$0xff] %v3830
    %5879 = vst [vmem:[#allocation7 + $0x35d8] sm:$0xff] %v3831
    %5880 = vst [vmem:[#allocation7 + $0x35e0] sm:$0xff] %v3832
    %5881 = vst [vmem:[#allocation7 + $0x35e8] sm:$0xff] %v3833
    %5882 = vst [vmem:[#allocation7 + $0x35f0] sm:$0xff] %v3834
    %5883 = vst [vmem:[#allocation7 + $0x35f8] sm:$0xff] %v3835
    %5884 = vst [vmem:[#allocation7 + $0x3600] sm:$0xff] %v3836
    %5885 = vst [vmem:[#allocation7 + $0x3608] sm:$0xff] %v3837
    %5886 = vst [vmem:[#allocation7 + $0x3610] sm:$0xff] %v3838
    %5887 = vst [vmem:[#allocation7 + $0x3618] sm:$0xff] %v3839
    %5888 = vst [vmem:[#allocation7 + $0x3620] sm:$0xff] %v3840
    %5889 = vst [vmem:[#allocation7 + $0x3628] sm:$0xff] %v3841
    %5890 = vst [vmem:[#allocation7 + $0x3630] sm:$0xff] %v3842
    %5891 = vst [vmem:[#allocation7 + $0x3638] sm:$0xff] %v3843
    %5892 = vst [vmem:[#allocation7 + $0x3640] sm:$0xff] %v3844
    %5893 = vst [vmem:[#allocation7 + $0x3648] sm:$0xff] %v3845
    %5894 = vst [vmem:[#allocation7 + $0x3650] sm:$0xff] %v3846
    %5895 = vst [vmem:[#allocation7 + $0x3658] sm:$0xff] %v3847
    %5896 = vst [vmem:[#allocation7 + $0x3660] sm:$0xff] %v3848
    %5897 = vst [vmem:[#allocation7 + $0x3668] sm:$0xff] %v3849
    %5898 = vst [vmem:[#allocation7 + $0x3670] sm:$0xff] %v3850
    %5899 = vst [vmem:[#allocation7 + $0x3678] sm:$0xff] %v3851
    %5900 = vst [vmem:[#allocation7 + $0x3680] sm:$0xff] %v3852
    %5901 = vst [vmem:[#allocation7 + $0x3688] sm:$0xff] %v3853
    %5902 = vst [vmem:[#allocation7 + $0x3690] sm:$0xff] %v3854
    %5903 = vst [vmem:[#allocation7 + $0x3698] sm:$0xff] %v3855
    %5904 = vst [vmem:[#allocation7 + $0x36a0] sm:$0xff] %v3856
    %5905 = vst [vmem:[#allocation7 + $0x36a8] sm:$0xff] %v3857
    %5906 = vst [vmem:[#allocation7 + $0x36b0] sm:$0xff] %v3858
    %5907 = vst [vmem:[#allocation7 + $0x36b8] sm:$0xff] %v3859
    %5908 = vst [vmem:[#allocation7 + $0x36c0] sm:$0xff] %v3860
    %5909 = vst [vmem:[#allocation7 + $0x36c8] sm:$0xff] %v3861
    %5910 = vst [vmem:[#allocation7 + $0x36d0] sm:$0xff] %v3862
    %5911 = vst [vmem:[#allocation7 + $0x36d8] sm:$0xff] %v3863
    %5912 = vst [vmem:[#allocation7 + $0x36e0] sm:$0xff] %v3864
    %5913 = vst [vmem:[#allocation7 + $0x36e8] sm:$0xff] %v3865
    %5914 = vst [vmem:[#allocation7 + $0x36f0] sm:$0xff] %v3866
    %5915 = vst [vmem:[#allocation7 + $0x36f8] sm:$0xff] %v3867
    %5916 = vst [vmem:[#allocation7 + $0x3700] sm:$0xff] %v3868
    %5917 = vst [vmem:[#allocation7 + $0x3708] sm:$0xff] %v3869
    %5918 = vst [vmem:[#allocation7 + $0x3710] sm:$0xff] %v3870
    %5919 = vst [vmem:[#allocation7 + $0x3718] sm:$0xff] %v3871
    %5920 = vst [vmem:[#allocation7 + $0x3720] sm:$0xff] %v3872
    %5921 = vst [vmem:[#allocation7 + $0x3728] sm:$0xff] %v3873
    %5922 = vst [vmem:[#allocation7 + $0x3730] sm:$0xff] %v3874
    %5923 = vst [vmem:[#allocation7 + $0x3738] sm:$0xff] %v3875
    %5924 = vst [vmem:[#allocation7 + $0x3740] sm:$0xff] %v3876
    %5925 = vst [vmem:[#allocation7 + $0x3748] sm:$0xff] %v3877
    %5926 = vst [vmem:[#allocation7 + $0x3750] sm:$0xff] %v3878
    %5927 = vst [vmem:[#allocation7 + $0x3758] sm:$0xff] %v3879
    %5928 = vst [vmem:[#allocation7 + $0x3760] sm:$0xff] %v3880
    %5929 = vst [vmem:[#allocation7 + $0x3768] sm:$0xff] %v3881
    %5930 = vst [vmem:[#allocation7 + $0x3770] sm:$0xff] %v3882
    %5931 = vst [vmem:[#allocation7 + $0x3778] sm:$0xff] %v3883
    %5932 = vst [vmem:[#allocation7 + $0x3780] sm:$0xff] %v3884
    %5933 = vst [vmem:[#allocation7 + $0x3788] sm:$0xff] %v3885
    %5934 = vst [vmem:[#allocation7 + $0x3790] sm:$0xff] %v3886
    %5935 = vst [vmem:[#allocation7 + $0x3798] sm:$0xff] %v3887
    %5936 = vst [vmem:[#allocation7 + $0x37a0] sm:$0xff] %v3888
    %5937 = vst [vmem:[#allocation7 + $0x37a8] sm:$0xff] %v3889
    %5938 = vst [vmem:[#allocation7 + $0x37b0] sm:$0xff] %v3890
    %5939 = vst [vmem:[#allocation7 + $0x37b8] sm:$0xff] %v3891
    %5940 = vst [vmem:[#allocation7 + $0x37c0] sm:$0xff] %v3892
    %5941 = vst [vmem:[#allocation7 + $0x37c8] sm:$0xff] %v3893
    %5942 = vst [vmem:[#allocation7 + $0x37d0] sm:$0xff] %v3894
    %5943 = vst [vmem:[#allocation7 + $0x37d8] sm:$0xff] %v3895
    %5944 = vst [vmem:[#allocation7 + $0x37e0] sm:$0xff] %v3896
    %5945 = vst [vmem:[#allocation7 + $0x37e8] sm:$0xff] %v3897
    %5946 = vst [vmem:[#allocation7 + $0x37f0] sm:$0xff] %v3898
    %5947 = vst [vmem:[#allocation7 + $0x37f8] sm:$0xff] %v3899
    %5948 = vst [vmem:[#allocation7 + $0x3800] sm:$0xff] %v3900
    %5949 = vst [vmem:[#allocation7 + $0x3808] sm:$0xff] %v3901
    %5950 = vst [vmem:[#allocation7 + $0x3810] sm:$0xff] %v3902
    %5951 = vst [vmem:[#allocation7 + $0x3818] sm:$0xff] %v3903
    %5952 = vst [vmem:[#allocation7 + $0x3820] sm:$0xff] %v3904
    %5953 = vst [vmem:[#allocation7 + $0x3828] sm:$0xff] %v3905
    %5954 = vst [vmem:[#allocation7 + $0x3830] sm:$0xff] %v3906
    %5955 = vst [vmem:[#allocation7 + $0x3838] sm:$0xff] %v3907
    %5956 = vst [vmem:[#allocation7 + $0x3840] sm:$0xff] %v3908
    %5957 = vst [vmem:[#allocation7 + $0x3848] sm:$0xff] %v3909
    %5958 = vst [vmem:[#allocation7 + $0x3850] sm:$0xff] %v3910
    %5959 = vst [vmem:[#allocation7 + $0x3858] sm:$0xff] %v3911
    %5960 = vst [vmem:[#allocation7 + $0x3860] sm:$0xff] %v3912
    %5961 = vst [vmem:[#allocation7 + $0x3868] sm:$0xff] %v3913
    %5962 = vst [vmem:[#allocation7 + $0x3870] sm:$0xff] %v3914
    %5963 = vst [vmem:[#allocation7 + $0x3878] sm:$0xff] %v3915
    %5964 = vst [vmem:[#allocation7 + $0x3880] sm:$0xff] %v3916
    %5965 = vst [vmem:[#allocation7 + $0x3888] sm:$0xff] %v3917
    %5966 = vst [vmem:[#allocation7 + $0x3890] sm:$0xff] %v3918
    %5967 = vst [vmem:[#allocation7 + $0x3898] sm:$0xff] %v3919
    %5968 = vst [vmem:[#allocation7 + $0x38a0] sm:$0xff] %v3920
    %5969 = vst [vmem:[#allocation7 + $0x38a8] sm:$0xff] %v3921
    %5970 = vst [vmem:[#allocation7 + $0x38b0] sm:$0xff] %v3922
    %5971 = vst [vmem:[#allocation7 + $0x38b8] sm:$0xff] %v3923
    %5972 = vst [vmem:[#allocation7 + $0x38c0] sm:$0xff] %v3924
    %5973 = vst [vmem:[#allocation7 + $0x38c8] sm:$0xff] %v3925
    %5974 = vst [vmem:[#allocation7 + $0x38d0] sm:$0xff] %v3926
    %5975 = vst [vmem:[#allocation7 + $0x38d8] sm:$0xff] %v3927
    %5976 = vst [vmem:[#allocation7 + $0x38e0] sm:$0xff] %v3928
    %5977 = vst [vmem:[#allocation7 + $0x38e8] sm:$0xff] %v3929
    %5978 = vst [vmem:[#allocation7 + $0x38f0] sm:$0xff] %v3930
    %5979 = vst [vmem:[#allocation7 + $0x38f8] sm:$0xff] %v3931
    %5980 = vst [vmem:[#allocation7 + $0x3900] sm:$0xff] %v3932
    %5981 = vst [vmem:[#allocation7 + $0x3908] sm:$0xff] %v3933
    %5982 = vst [vmem:[#allocation7 + $0x3910] sm:$0xff] %v3934
    %5983 = vst [vmem:[#allocation7 + $0x3918] sm:$0xff] %v3935
    %5984 = vst [vmem:[#allocation7 + $0x3920] sm:$0xff] %v3936
    %5985 = vst [vmem:[#allocation7 + $0x3928] sm:$0xff] %v3937
    %5986 = vst [vmem:[#allocation7 + $0x3930] sm:$0xff] %v3938
    %5987 = vst [vmem:[#allocation7 + $0x3938] sm:$0xff] %v3939
    %5988 = vst [vmem:[#allocation7 + $0x3940] sm:$0xff] %v3940
    %5989 = vst [vmem:[#allocation7 + $0x3948] sm:$0xff] %v3941
    %5990 = vst [vmem:[#allocation7 + $0x3950] sm:$0xff] %v3942
    %5991 = vst [vmem:[#allocation7 + $0x3958] sm:$0xff] %v3943
    %5992 = vst [vmem:[#allocation7 + $0x3960] sm:$0xff] %v3944
    %5993 = vst [vmem:[#allocation7 + $0x3968] sm:$0xff] %v3945
    %5994 = vst [vmem:[#allocation7 + $0x3970] sm:$0xff] %v3946
    %5995 = vst [vmem:[#allocation7 + $0x3978] sm:$0xff] %v3947
    %5996 = vst [vmem:[#allocation7 + $0x3980] sm:$0xff] %v3948
    %5997 = vst [vmem:[#allocation7 + $0x3988] sm:$0xff] %v3949
    %5998 = vst [vmem:[#allocation7 + $0x3990] sm:$0xff] %v3950
    %5999 = vst [vmem:[#allocation7 + $0x3998] sm:$0xff] %v3951
    %6000 = vst [vmem:[#allocation7 + $0x39a0] sm:$0xff] %v3952
    %6001 = vst [vmem:[#allocation7 + $0x39a8] sm:$0xff] %v3953
    %6002 = vst [vmem:[#allocation7 + $0x39b0] sm:$0xff] %v3954
    %6003 = vst [vmem:[#allocation7 + $0x39b8] sm:$0xff] %v3955
    %6004 = vst [vmem:[#allocation7 + $0x39c0] sm:$0xff] %v3956
    %6005 = vst [vmem:[#allocation7 + $0x39c8] sm:$0xff] %v3957
    %6006 = vst [vmem:[#allocation7 + $0x39d0] sm:$0xff] %v3958
    %6007 = vst [vmem:[#allocation7 + $0x39d8] sm:$0xff] %v3959
    %6008 = vst [vmem:[#allocation7 + $0x39e0] sm:$0xff] %v3960
    %6009 = vst [vmem:[#allocation7 + $0x39e8] sm:$0xff] %v3961
    %6010 = vst [vmem:[#allocation7 + $0x39f0] sm:$0xff] %v3962
    %6011 = vst [vmem:[#allocation7 + $0x39f8] sm:$0xff] %v3963
    %6012 = vst [vmem:[#allocation7 + $0x3a00] sm:$0xff] %v3964
    %6013 = vst [vmem:[#allocation7 + $0x3a08] sm:$0xff] %v3965
    %6014 = vst [vmem:[#allocation7 + $0x3a10] sm:$0xff] %v3966
    %6015 = vst [vmem:[#allocation7 + $0x3a18] sm:$0xff] %v3967
    %6016 = vst [vmem:[#allocation7 + $0x3a20] sm:$0xff] %v3968
    %6017 = vst [vmem:[#allocation7 + $0x3a28] sm:$0xff] %v3969
    %6018 = vst [vmem:[#allocation7 + $0x3a30] sm:$0xff] %v3970
    %6019 = vst [vmem:[#allocation7 + $0x3a38] sm:$0xff] %v3971
    %6020 = vst [vmem:[#allocation7 + $0x3a40] sm:$0xff] %v3972
    %6021 = vst [vmem:[#allocation7 + $0x3a48] sm:$0xff] %v3973
    %6022 = vst [vmem:[#allocation7 + $0x3a50] sm:$0xff] %v3974
    %6023 = vst [vmem:[#allocation7 + $0x3a58] sm:$0xff] %v3975
    %6024 = vst [vmem:[#allocation7 + $0x3a60] sm:$0xff] %v3976
    %6025 = vst [vmem:[#allocation7 + $0x3a68] sm:$0xff] %v3977
    %6026 = vst [vmem:[#allocation7 + $0x3a70] sm:$0xff] %v3978
    %6027 = vst [vmem:[#allocation7 + $0x3a78] sm:$0xff] %v3979
    %6028 = vst [vmem:[#allocation7 + $0x3a80] sm:$0xff] %v3980
    %6029 = vst [vmem:[#allocation7 + $0x3a88] sm:$0xff] %v3981
    %6030 = vst [vmem:[#allocation7 + $0x3a90] sm:$0xff] %v3982
    %6031 = vst [vmem:[#allocation7 + $0x3a98] sm:$0xff] %v3983
    %6032 = vst [vmem:[#allocation7 + $0x3aa0] sm:$0xff] %v3984
    %6033 = vst [vmem:[#allocation7 + $0x3aa8] sm:$0xff] %v3985
    %6034 = vst [vmem:[#allocation7 + $0x3ab0] sm:$0xff] %v3986
    %6035 = vst [vmem:[#allocation7 + $0x3ab8] sm:$0xff] %v3987
    %6036 = vst [vmem:[#allocation7 + $0x3ac0] sm:$0xff] %v3988
    %6037 = vst [vmem:[#allocation7 + $0x3ac8] sm:$0xff] %v3989
    %6038 = vst [vmem:[#allocation7 + $0x3ad0] sm:$0xff] %v3990
    %6039 = vst [vmem:[#allocation7 + $0x3ad8] sm:$0xff] %v3991
    %6040 = vst [vmem:[#allocation7 + $0x3ae0] sm:$0xff] %v3992
    %6041 = vst [vmem:[#allocation7 + $0x3ae8] sm:$0xff] %v3993
    %6042 = vst [vmem:[#allocation7 + $0x3af0] sm:$0xff] %v3994
    %6043 = vst [vmem:[#allocation7 + $0x3af8] sm:$0xff] %v3995
    %6044 = vst [vmem:[#allocation7 + $0x3b00] sm:$0xff] %v3996
    %6045 = vst [vmem:[#allocation7 + $0x3b08] sm:$0xff] %v3997
    %6046 = vst [vmem:[#allocation7 + $0x3b10] sm:$0xff] %v3998
    %6047 = vst [vmem:[#allocation7 + $0x3b18] sm:$0xff] %v3999
    %6048 = vst [vmem:[#allocation7 + $0x3b20] sm:$0xff] %v4000
    %6049 = vst [vmem:[#allocation7 + $0x3b28] sm:$0xff] %v4001
    %6050 = vst [vmem:[#allocation7 + $0x3b30] sm:$0xff] %v4002
    %6051 = vst [vmem:[#allocation7 + $0x3b38] sm:$0xff] %v4003
    %6052 = vst [vmem:[#allocation7 + $0x3b40] sm:$0xff] %v4004
    %6053 = vst [vmem:[#allocation7 + $0x3b48] sm:$0xff] %v4005
    %6054 = vst [vmem:[#allocation7 + $0x3b50] sm:$0xff] %v4006
    %6055 = vst [vmem:[#allocation7 + $0x3b58] sm:$0xff] %v4007
    %6056 = vst [vmem:[#allocation7 + $0x3b60] sm:$0xff] %v4008
    %6057 = vst [vmem:[#allocation7 + $0x3b68] sm:$0xff] %v4009
    %6058 = vst [vmem:[#allocation7 + $0x3b70] sm:$0xff] %v4010
    %6059 = vst [vmem:[#allocation7 + $0x3b78] sm:$0xff] %v4011
    %6060 = vst [vmem:[#allocation7 + $0x3b80] sm:$0xff] %v4012
    %6061 = vst [vmem:[#allocation7 + $0x3b88] sm:$0xff] %v4013
    %6062 = vst [vmem:[#allocation7 + $0x3b90] sm:$0xff] %v4014
    %6063 = vst [vmem:[#allocation7 + $0x3b98] sm:$0xff] %v4015
    %6064 = vst [vmem:[#allocation7 + $0x3ba0] sm:$0xff] %v4016
    %6065 = vst [vmem:[#allocation7 + $0x3ba8] sm:$0xff] %v4017
    %6066 = vst [vmem:[#allocation7 + $0x3bb0] sm:$0xff] %v4018
    %6067 = vst [vmem:[#allocation7 + $0x3bb8] sm:$0xff] %v4019
    %6068 = vst [vmem:[#allocation7 + $0x3bc0] sm:$0xff] %v4020
    %6069 = vst [vmem:[#allocation7 + $0x3bc8] sm:$0xff] %v4021
    %6070 = vst [vmem:[#allocation7 + $0x3bd0] sm:$0xff] %v4022
    %6071 = vst [vmem:[#allocation7 + $0x3bd8] sm:$0xff] %v4023
    %6072 = vst [vmem:[#allocation7 + $0x3be0] sm:$0xff] %v4024
    %6073 = vst [vmem:[#allocation7 + $0x3be8] sm:$0xff] %v4025
    %6074 = vst [vmem:[#allocation7 + $0x3bf0] sm:$0xff] %v4026
    %6075 = vst [vmem:[#allocation7 + $0x3bf8] sm:$0xff] %v4027
    %6076 = vst [vmem:[#allocation7 + $0x3c00] sm:$0xff] %v4028
    %6077 = vst [vmem:[#allocation7 + $0x3c08] sm:$0xff] %v4029
    %6078 = vst [vmem:[#allocation7 + $0x3c10] sm:$0xff] %v4030
    %6079 = vst [vmem:[#allocation7 + $0x3c18] sm:$0xff] %v4031
    %6080 = vst [vmem:[#allocation7 + $0x3c20] sm:$0xff] %v4032
    %6081 = vst [vmem:[#allocation7 + $0x3c28] sm:$0xff] %v4033
    %6082 = vst [vmem:[#allocation7 + $0x3c30] sm:$0xff] %v4034
    %6083 = vst [vmem:[#allocation7 + $0x3c38] sm:$0xff] %v4035
    %6084 = vst [vmem:[#allocation7 + $0x3c40] sm:$0xff] %v4036
    %6085 = vst [vmem:[#allocation7 + $0x3c48] sm:$0xff] %v4037
    %6086 = vst [vmem:[#allocation7 + $0x3c50] sm:$0xff] %v4038
    %6087 = vst [vmem:[#allocation7 + $0x3c58] sm:$0xff] %v4039
    %6088 = vst [vmem:[#allocation7 + $0x3c60] sm:$0xff] %v4040
    %6089 = vst [vmem:[#allocation7 + $0x3c68] sm:$0xff] %v4041
    %6090 = vst [vmem:[#allocation7 + $0x3c70] sm:$0xff] %v4042
    %6091 = vst [vmem:[#allocation7 + $0x3c78] sm:$0xff] %v4043
    %6092 = vst [vmem:[#allocation7 + $0x3c80] sm:$0xff] %v4044
    %6093 = vst [vmem:[#allocation7 + $0x3c88] sm:$0xff] %v4045
    %6094 = vst [vmem:[#allocation7 + $0x3c90] sm:$0xff] %v4046
    %6095 = vst [vmem:[#allocation7 + $0x3c98] sm:$0xff] %v4047
    %6096 = vst [vmem:[#allocation7 + $0x3ca0] sm:$0xff] %v4048
    %6097 = vst [vmem:[#allocation7 + $0x3ca8] sm:$0xff] %v4049
    %6098 = vst [vmem:[#allocation7 + $0x3cb0] sm:$0xff] %v4050
    %6099 = vst [vmem:[#allocation7 + $0x3cb8] sm:$0xff] %v4051
    %6100 = vst [vmem:[#allocation7 + $0x3cc0] sm:$0xff] %v4052
    %6101 = vst [vmem:[#allocation7 + $0x3cc8] sm:$0xff] %v4053
    %6102 = vst [vmem:[#allocation7 + $0x3cd0] sm:$0xff] %v4054
    %6103 = vst [vmem:[#allocation7 + $0x3cd8] sm:$0xff] %v4055
    %6104 = vst [vmem:[#allocation7 + $0x3ce0] sm:$0xff] %v4056
    %6105 = vst [vmem:[#allocation7 + $0x3ce8] sm:$0xff] %v4057
    %6106 = vst [vmem:[#allocation7 + $0x3cf0] sm:$0xff] %v4058
    %6107 = vst [vmem:[#allocation7 + $0x3cf8] sm:$0xff] %v4059
    %6108 = vst [vmem:[#allocation7 + $0x3d00] sm:$0xff] %v4060
    %6109 = vst [vmem:[#allocation7 + $0x3d08] sm:$0xff] %v4061
    %6110 = vst [vmem:[#allocation7 + $0x3d10] sm:$0xff] %v4062
    %6111 = vst [vmem:[#allocation7 + $0x3d18] sm:$0xff] %v4063
    %6112 = vst [vmem:[#allocation7 + $0x3d20] sm:$0xff] %v4064
    %6113 = vst [vmem:[#allocation7 + $0x3d28] sm:$0xff] %v4065
    %6114 = vst [vmem:[#allocation7 + $0x3d30] sm:$0xff] %v4066
    %6115 = vst [vmem:[#allocation7 + $0x3d38] sm:$0xff] %v4067
    %6116 = vst [vmem:[#allocation7 + $0x3d40] sm:$0xff] %v4068
    %6117 = vst [vmem:[#allocation7 + $0x3d48] sm:$0xff] %v4069
    %6118 = vst [vmem:[#allocation7 + $0x3d50] sm:$0xff] %v4070
    %6119 = vst [vmem:[#allocation7 + $0x3d58] sm:$0xff] %v4071
    %6120 = vst [vmem:[#allocation7 + $0x3d60] sm:$0xff] %v4072
    %6121 = vst [vmem:[#allocation7 + $0x3d68] sm:$0xff] %v4073
    %6122 = vst [vmem:[#allocation7 + $0x3d70] sm:$0xff] %v4074
    %6123 = vst [vmem:[#allocation7 + $0x3d78] sm:$0xff] %v4075
    %6124 = vst [vmem:[#allocation7 + $0x3d80] sm:$0xff] %v4076
    %6125 = vst [vmem:[#allocation7 + $0x3d88] sm:$0xff] %v4077
    %6126 = vst [vmem:[#allocation7 + $0x3d90] sm:$0xff] %v4078
    %6127 = vst [vmem:[#allocation7 + $0x3d98] sm:$0xff] %v4079
    %6128 = vst [vmem:[#allocation7 + $0x3da0] sm:$0xff] %v4080
    %6129 = vst [vmem:[#allocation7 + $0x3da8] sm:$0xff] %v4081
    %6130 = vst [vmem:[#allocation7 + $0x3db0] sm:$0xff] %v4082
    %6131 = vst [vmem:[#allocation7 + $0x3db8] sm:$0xff] %v4083
    %6132 = vst [vmem:[#allocation7 + $0x3dc0] sm:$0xff] %v4084
    %6133 = vst [vmem:[#allocation7 + $0x3dc8] sm:$0xff] %v4085
    %6134 = vst [vmem:[#allocation7 + $0x3dd0] sm:$0xff] %v4086
    %6135 = vst [vmem:[#allocation7 + $0x3dd8] sm:$0xff] %v4087
    %6136 = vst [vmem:[#allocation7 + $0x3de0] sm:$0xff] %v4088
    %6137 = vst [vmem:[#allocation7 + $0x3de8] sm:$0xff] %v4089
    %6138 = vst [vmem:[#allocation7 + $0x3df0] sm:$0xff] %v4090
    %6139 = vst [vmem:[#allocation7 + $0x3df8] sm:$0xff] %v4091
    %6140 = vst [vmem:[#allocation7 + $0x3e00] sm:$0xff] %v4092
    %6141 = vst [vmem:[#allocation7 + $0x3e08] sm:$0xff] %v4093
    %6142 = vst [vmem:[#allocation7 + $0x3e10] sm:$0xff] %v4094
    %6143 = vst [vmem:[#allocation7 + $0x3e18] sm:$0xff] %v4095
    %6144 = vst [vmem:[#allocation7 + $0x3e20] sm:$0xff] %v4096
    %6145 = vst [vmem:[#allocation7 + $0x3e28] sm:$0xff] %v4097
    %6146 = vst [vmem:[#allocation7 + $0x3e30] sm:$0xff] %v4098
    %6147 = vst [vmem:[#allocation7 + $0x3e38] sm:$0xff] %v4099
    %6148 = vst [vmem:[#allocation7 + $0x3e40] sm:$0xff] %v4100
    %6149 = vst [vmem:[#allocation7 + $0x3e48] sm:$0xff] %v4101
    %6150 = vst [vmem:[#allocation7 + $0x3e50] sm:$0xff] %v4102
    %6151 = vst [vmem:[#allocation7 + $0x3e58] sm:$0xff] %v4103
    %6152 = vst [vmem:[#allocation7 + $0x3e60] sm:$0xff] %v4104
    %6153 = vst [vmem:[#allocation7 + $0x3e68] sm:$0xff] %v4105
    %6154 = vst [vmem:[#allocation7 + $0x3e70] sm:$0xff] %v4106
    %6155 = vst [vmem:[#allocation7 + $0x3e78] sm:$0xff] %v4107
    %6156 = vst [vmem:[#allocation7 + $0x3e80] sm:$0xff] %v4108
    %6157 = vst [vmem:[#allocation7 + $0x3e88] sm:$0xff] %v4109
    %6158 = vst [vmem:[#allocation7 + $0x3e90] sm:$0xff] %v4110
    %6159 = vst [vmem:[#allocation7 + $0x3e98] sm:$0xff] %v4111
    %6160 = vst [vmem:[#allocation7 + $0x3ea0] sm:$0xff] %v4112
    %6161 = vst [vmem:[#allocation7 + $0x3ea8] sm:$0xff] %v4113
    %6162 = vst [vmem:[#allocation7 + $0x3eb0] sm:$0xff] %v4114
    %6163 = vst [vmem:[#allocation7 + $0x3eb8] sm:$0xff] %v4115
    %6164 = vst [vmem:[#allocation7 + $0x3ec0] sm:$0xff] %v4116
    %6165 = vst [vmem:[#allocation7 + $0x3ec8] sm:$0xff] %v4117
    %6166 = vst [vmem:[#allocation7 + $0x3ed0] sm:$0xff] %v4118
    %6167 = vst [vmem:[#allocation7 + $0x3ed8] sm:$0xff] %v4119
    %6168 = vst [vmem:[#allocation7 + $0x3ee0] sm:$0xff] %v4120
    %6169 = vst [vmem:[#allocation7 + $0x3ee8] sm:$0xff] %v4121
    %6170 = vst [vmem:[#allocation7 + $0x3ef0] sm:$0xff] %v4122
    %6171 = vst [vmem:[#allocation7 + $0x3ef8] sm:$0xff] %v4123
    %6172 = vst [vmem:[#allocation7 + $0x3f00] sm:$0xff] %v4124
    %6173 = vst [vmem:[#allocation7 + $0x3f08] sm:$0xff] %v4125
    %6174 = vst [vmem:[#allocation7 + $0x3f10] sm:$0xff] %v4126
    %6175 = vst [vmem:[#allocation7 + $0x3f18] sm:$0xff] %v4127
    %6176 = vst [vmem:[#allocation7 + $0x3f20] sm:$0xff] %v4128
    %6177 = vst [vmem:[#allocation7 + $0x3f28] sm:$0xff] %v4129
    %6178 = vst [vmem:[#allocation7 + $0x3f30] sm:$0xff] %v4130
    %6179 = vst [vmem:[#allocation7 + $0x3f38] sm:$0xff] %v4131
    %6180 = vst [vmem:[#allocation7 + $0x3f40] sm:$0xff] %v4132
    %6181 = vst [vmem:[#allocation7 + $0x3f48] sm:$0xff] %v4133
    %6182 = vst [vmem:[#allocation7 + $0x3f50] sm:$0xff] %v4134
    %6183 = vst [vmem:[#allocation7 + $0x3f58] sm:$0xff] %v4135
    %6184 = vst [vmem:[#allocation7 + $0x3f60] sm:$0xff] %v4136
    %6185 = vst [vmem:[#allocation7 + $0x3f68] sm:$0xff] %v4137
    %6186 = vst [vmem:[#allocation7 + $0x3f70] sm:$0xff] %v4138
    %6187 = vst [vmem:[#allocation7 + $0x3f78] sm:$0xff] %v4139
    %6188 = vst [vmem:[#allocation7 + $0x3f80] sm:$0xff] %v4140
    %6189 = vst [vmem:[#allocation7 + $0x3f88] sm:$0xff] %v4141
    %6190 = vst [vmem:[#allocation7 + $0x3f90] sm:$0xff] %v4142
    %6191 = vst [vmem:[#allocation7 + $0x3f98] sm:$0xff] %v4143
    %6192 = vst [vmem:[#allocation7 + $0x3fa0] sm:$0xff] %v4144
    %6193 = vst [vmem:[#allocation7 + $0x3fa8] sm:$0xff] %v4145
    %6194 = vst [vmem:[#allocation7 + $0x3fb0] sm:$0xff] %v4146
    %6195 = vst [vmem:[#allocation7 + $0x3fb8] sm:$0xff] %v4147
    %6196 = vst [vmem:[#allocation7 + $0x3fc0] sm:$0xff] %v4148
    %6197 = vst [vmem:[#allocation7 + $0x3fc8] sm:$0xff] %v4149
    %6198 = vst [vmem:[#allocation7 + $0x3fd0] sm:$0xff] %v4150
    %6199 = vst [vmem:[#allocation7 + $0x3fd8] sm:$0xff] %v4151
    %6200 = vst [vmem:[#allocation7 + $0x3fe0] sm:$0xff] %v4152
    %6201 = vst [vmem:[#allocation7 + $0x3fe8] sm:$0xff] %v4153
    %6202 = vst [vmem:[#allocation7 + $0x3ff0] sm:$0xff] %v4154
    %6203 = vst [vmem:[#allocation7 + $0x3ff8] sm:$0xff] %v4155
    // Predicated region
    $region18: #{tpu_custom_call.1} parent=1 // pred_check
      _
    $region19: #{tpu_custom_call.1} parent=1 // pred_check_branch
      %6205 = sbr.rel (0) target = $region21
    $region20: #{tpu_custom_call.1} parent=1 // pred_region
      %s6207 = ssub.s32 262144, 262144
      %6208 = vsyncadd [#allocation4], %s6207
      %s6209 = sshll.u32 [#allocation7], 4
      %s6210 = int_to_ptr.vmem [resolvable:$true] %s6209
      %6215 = dma.vmem_to_hbm [thread:$0]  %s6210, 262144, %s2, [#allocation4], 512, 512, 32
    $region21: #{tpu_custom_call.1} parent=1 // pred_fallthru
      _
    // Predicated region
    $region22: #{tpu_custom_call.1} parent=1 // pred_check
      _
    $region23: #{tpu_custom_call.1} parent=1 // pred_check_branch
      %6217 = sbr.rel (0) target = $region25
    $region24: #{tpu_custom_call.1} parent=1 // pred_region
      %6218 = dma.done [#allocation4], 262144
    $region25: #{tpu_custom_call.1} parent=1 // pred_fallthru
      _
    %6219 = vsyncpa [#allocation3], 1
    %6220 = vsyncpa [#allocation6], 1
    %6221 = vsyncpa [#allocation4], 1

</llo_original>
